<compile_context>
chip_gen: v6e
topology: v6e:2x2x1
jax: 0.10.0
libtpu: 0.0.40
codegen_flags: <defaults>
</compile_context>

<pallas_src>
import functools

import jax
import jax.numpy as jnp
import numpy as np
from jax.experimental import pallas as pl
from jax.experimental.pallas import tpu as pltpu

EPS = 1e-5
LANE = 128


def _round_up(x, m):
    return (x + m - 1) // m * m


def _vmem_limit_bytes():
    """Generation-aware scoped-VMEM budget (v5e/v6e: 48 MiB, v7x: 40 MiB)."""
    cap = 128 * 1024 * 1024
    try:
        cap = int(pltpu.get_tpu_info().vmem_capacity_bytes)
    except Exception:
        pass
    return min(48 * 1024 * 1024, (cap * 5) // 8)


def _compiler_params(n_axes):
    return pltpu.CompilerParams(
        dimension_semantics=("parallel",) * n_axes,
        vmem_limit_bytes=_vmem_limit_bytes(),
    )


def _pick_tile_m(m, target=512):
    """Row-tile size: full array if small, else largest multiple-of-8 divisor
    <= target; if none exists, `target` itself (caller zero-pads M)."""
    if m <= target:
        return m
    t = target - target % 8
    while t >= 8:
        if m % t == 0:
            return t
        t -= 8
    return target - target % 8


# ------------------------------ kernel helpers -------------------------------
def _bn_scale_shift(st_ref, g_ref, b_ref, inv_count):
    """Training-mode BN scale/shift from per-channel (sum, sum_sq) totals."""
    mean = st_ref[0:1, :] * inv_count
    var = jnp.maximum(st_ref[1:2, :] * inv_count - mean * mean, 0.0)
    scale = g_ref[...] * jax.lax.rsqrt(var + EPS)
    shift = b_ref[...] - mean * scale
    return scale, shift


# ------------------------------ kernel bodies --------------------------------
def _make_mm_stats_kernel(tm, valid_rows=None, bn_inv_count=None):
    """1x1 conv tile: optional fused BN+ReLU prologue on the x tile, one MXU
    matmul, and per-tile channel (sum, sum_sq) partials from the f32 acc."""

    def kernel(*refs):
        if bn_inv_count is None:
            x_ref, w_ref, y_ref, st_out = refs
            lhs = x_ref[...]
        else:
            x_ref, st_ref, g_ref, b_ref, w_ref, y_ref, st_out = refs
            scale, shift = _bn_scale_shift(st_ref, g_ref, b_ref, bn_inv_count)
            lhs = jnp.maximum(x_ref[...].astype(jnp.float32) * scale + shift, 0.0)
            lhs = lhs.astype(w_ref.dtype)
        y = jnp.dot(lhs, w_ref[...], preferred_element_type=jnp.float32)
        y_ref[...] = y.astype(y_ref.dtype)
        if valid_rows is not None:                   # ragged-M fallback: mask pad rows
            ridx = (jax.lax.broadcasted_iota(jnp.int32, (tm, 1), 0)
                    + pl.program_id(0) * tm)
            ym = jnp.where(ridx < valid_rows, y, 0.0)
        else:
            ym = y
        s1 = jnp.sum(ym, axis=0, keepdims=True)
        s2 = jnp.sum(ym * ym, axis=0, keepdims=True)
        st_out[...] = jnp.concatenate([s1, s2], axis=0).reshape(1, 2, y.shape[1])

    return kernel


def _make_conv3x3_kernel(h, w, pad, dil, bn_inv_count):
    """3x3 stride-1 conv over one batch element with a fused BN+ReLU prologue.

    The conv is 9 row-batched (H*W, C) @ (C, N) MXU matmuls accumulated in a
    f32 VMEM scratch; the halo lives in a zero-filled VMEM scratch image."""

    def kernel(x_ref, st_ref, g_ref, b_ref, w_ref, y_ref, st_out,
               pad_ref, acc_ref):
        c = x_ref.shape[-1]
        n = w_ref.shape[-1]

        # --- fused stage-1 BN-apply + ReLU prologue into the padded image ----
        scale, shift = _bn_scale_shift(st_ref, g_ref, b_ref, bn_inv_count)
        img = jnp.maximum(x_ref[0].astype(jnp.float32) * scale + shift, 0.0)
        pad_ref[...] = jnp.zeros_like(pad_ref)       # zero halo every step
        pad_ref[pl.ds(pad, h), pl.ds(pad, w), :] = img.astype(pad_ref.dtype)

        # --- 3x3 conv: 9 shifted, row-batched MXU matmuls ---------------------
        acc_ref[...] = jnp.zeros_like(acc_ref)
        for kh in range(3):
            for kw in range(3):
                lhs = pad_ref[pl.ds(kh * dil, h), pl.ds(kw * dil, w), :]
                acc_ref[...] += jnp.dot(lhs.reshape(h * w, c),
                                        w_ref[kh, kw, :, :],
                                        preferred_element_type=jnp.float32)

        acc = acc_ref[...]
        y_ref[0] = acc.astype(y_ref.dtype)
        s1 = jnp.sum(acc, axis=0, keepdims=True)
        s2 = jnp.sum(acc * acc, axis=0, keepdims=True)
        st_out[...] = jnp.concatenate([s1, s2], axis=0).reshape(1, 2, n)

    return kernel


def _make_bn_res_relu_kernel(inv_count):
    """Final pass: BN3-apply + identity residual + ReLU."""

    def kernel(y_ref, st_ref, g_ref, b_ref, r_ref, o_ref):
        scale, shift = _bn_scale_shift(st_ref, g_ref, b_ref, inv_count)
        out = y_ref[...].astype(jnp.float32) * scale + shift
        out = out + r_ref[...].astype(jnp.float32)
        o_ref[...] = jnp.maximum(out, 0.0).astype(o_ref.dtype)

    return kernel


# ------------------------------ pallas wrappers -------------------------------
def matmul_with_stats(x2d, w, out_dtype, bn=None, target_tm=512):
    """y = [BN+ReLU](x2d) @ w plus per-channel (sum, sum_sq) of y over rows.

    bn = (stats_totals, gamma, beta, count) fuses the *previous* stage's
    training-mode BN + ReLU as a prologue on the loaded x tile."""
    M, K = x2d.shape
    N = w.shape[1]
    TM = _pick_tile_m(M, target_tm)
    Mp = _round_up(M, TM)
    valid_rows = M if Mp != M else None
    if Mp != M:
        x2d = jnp.pad(x2d, ((0, Mp - M), (0, 0)))
    G = Mp // TM

    if bn is None:
        kernel = _make_mm_stats_kernel(TM, valid_rows)
        args = (x2d, w)
        in_specs = [
            pl.BlockSpec((TM, K), lambda i: (i, 0)),
            pl.BlockSpec((K, N), lambda i: (0, 0)),       # resident weights
        ]
    else:
        st, g, b, count = bn
        kernel = _make_mm_stats_kernel(TM, valid_rows, 1.0 / float(count))
        args = (x2d, st, g.reshape(1, K), b.reshape(1, K), w)
        in_specs = [
            pl.BlockSpec((TM, K), lambda i: (i, 0)),
            pl.BlockSpec((2, K), lambda i: (0, 0)),
            pl.BlockSpec((1, K), lambda i: (0, 0)),
            pl.BlockSpec((1, K), lambda i: (0, 0)),
            pl.BlockSpec((K, N), lambda i: (0, 0)),
        ]

    y, part = pl.pallas_call(
        kernel,
        grid=(G,),
        in_specs=in_specs,
        out_specs=(
            pl.BlockSpec((TM, N), lambda i: (i, 0)),
            pl.BlockSpec((1, 2, N), lambda i: (i, 0, 0)),
        ),
        out_shape=(
            jax.ShapeDtypeStruct((Mp, N), out_dtype),
            jax.ShapeDtypeStruct((G, 2, N), jnp.float32),
        ),
        compiler_params=_compiler_params(1),
        cost_estimate=pl.CostEstimate(
            flops=2 * Mp * K * N,
            transcendentals=0,
            bytes_accessed=int(x2d.size * x2d.dtype.itemsize
                               + w.size * w.dtype.itemsize
                               + Mp * N * jnp.dtype(out_dtype).itemsize),
        ),
    )(*args)
    if Mp != M:
        y = y[:M]
    # Tiny (G, 2, N) cross-tile reduce keeps the grid axis fully parallel.
    return y, jnp.sum(part, axis=0)


def conv3x3_bn_fused(x_img, st, g, b, w, count, padding, dilation, out_dtype):
    """3x3 stride-1 conv with fused (previous-stage) BN+ReLU prologue.

    x_img: (B, H, W, C) raw conv1 output (un-normalized).  Returns
    y: (B, H*W, N) and per-channel (sum, sum_sq) totals (2, N)."""
    B, H, W, C = x_img.shape
    N = w.shape[-1]
    Hp, Wp = H + 2 * padding, W + 2 * padding
    kernel = _make_conv3x3_kernel(H, W, padding, dilation, 1.0 / float(count))
    y, part = pl.pallas_call(
        kernel,
        grid=(B,),
        in_specs=[
            pl.BlockSpec((1, H, W, C), lambda bi: (bi, 0, 0, 0)),
            pl.BlockSpec((2, C), lambda bi: (0, 0)),
            pl.BlockSpec((1, C), lambda bi: (0, 0)),
            pl.BlockSpec((1, C), lambda bi: (0, 0)),
            pl.BlockSpec((3, 3, C, N), lambda bi: (0, 0, 0, 0)),   # resident
        ],
        out_specs=(
            pl.BlockSpec((1, H * W, N), lambda bi: (bi, 0, 0)),
            pl.BlockSpec((1, 2, N), lambda bi: (bi, 0, 0)),
        ),
        out_shape=(
            jax.ShapeDtypeStruct((B, H * W, N), out_dtype),
            jax.ShapeDtypeStruct((B, 2, N), jnp.float32),
        ),
        scratch_shapes=[
            pltpu.VMEM((Hp, Wp, C), x_img.dtype),      # halo-padded image
            pltpu.VMEM((H * W, N), jnp.float32),       # conv accumulator
        ],
        compiler_params=_compiler_params(1),
        cost_estimate=pl.CostEstimate(
            flops=2 * B * H * W * 9 * C * N,
            transcendentals=0,
            bytes_accessed=int(x_img.size * x_img.dtype.itemsize
                               + w.size * w.dtype.itemsize
                               + B * H * W * N * jnp.dtype(out_dtype).itemsize),
        ),
    )(x_img, st, g.reshape(1, C), b.reshape(1, C), w)
    return y, jnp.sum(part, axis=0)


def bn_residual_relu(y, st, g, b, residual, count, out_dtype, target_tm=512):
    """Final tiled BN-apply + identity residual + ReLU."""
    M, N = y.shape
    TM = _pick_tile_m(M, target_tm)
    Mp = _round_up(M, TM)
    if Mp != M:
        y = jnp.pad(y, ((0, Mp - M), (0, 0)))
        residual = jnp.pad(residual, ((0, Mp - M), (0, 0)))
    out = pl.pallas_call(
        _make_bn_res_relu_kernel(1.0 / float(count)),
        grid=(Mp // TM,),
        in_specs=[
            pl.BlockSpec((TM, N), lambda i: (i, 0)),
            pl.BlockSpec((2, N), lambda i: (0, 0)),
            pl.BlockSpec((1, N), lambda i: (0, 0)),
            pl.BlockSpec((1, N), lambda i: (0, 0)),
            pl.BlockSpec((TM, N), lambda i: (i, 0)),
        ],
        out_specs=pl.BlockSpec((TM, N), lambda i: (i, 0)),
        out_shape=jax.ShapeDtypeStruct((Mp, N), out_dtype),
        compiler_params=_compiler_params(1),
    )(y, st, g.reshape(1, N), b.reshape(1, N), residual)
    return out[:M] if Mp != M else out


# ------------------------------- forward pass ---------------------------------
def _pad_channels(v, n):
    return jnp.pad(v, (0, n - v.shape[0])).astype(jnp.float32)


def bottleneck_forward(x_nchw, params, stride=1, dilation=1, padding=1,
                       mm_dtype=jnp.bfloat16):
    """BottleNeck.forward (downsample_identity=None), training-mode BatchNorm."""
    assert stride == 1, "identity residual path requires stride == 1"

    x = jnp.transpose(x_nchw, (0, 2, 3, 1)).astype(jnp.float32)   # NCHW -> NHWC
    B, H, W, Cin = x.shape
    inter = params["conv1_w"].shape[0]
    assert Cin == 4 * inter, "downsample_identity=None requires Cin == 4*inter"

    C1p = _round_up(inter, LANE)          # lane-dense intermediate channel width
    C3p = _round_up(4 * inter, LANE)      # lane-dense output channel width
    M = B * H * W

    # NOTE: conv biases (conv*_b) are never loaded -- training-mode BN's
    # batch-mean subtraction cancels them exactly.

    # ---- stage 1: 1x1 conv (+ channel stats), bf16 output --------------------
    x2d = x.reshape(M, Cin).astype(mm_dtype)
    w1 = jnp.transpose(params["conv1_w"][:, :, 0, 0])                 # (Cin, inter)
    w1 = jnp.pad(w1, ((0, 0), (0, C1p - inter))).astype(mm_dtype)
    y1, st1 = matmul_with_stats(x2d, w1, out_dtype=mm_dtype)

    # ---- stage 2: [BN1+ReLU fused] 3x3 conv (stride 1) + stats ---------------
    Ho = H + 2 * padding - 2 * dilation
    Wo = W + 2 * padding - 2 * dilation
    assert Ho == H and Wo == W, "identity residual path requires padding == dilation"
    w2 = jnp.transpose(params["conv2_w"], (2, 3, 1, 0))               # (3,3,in,out)
    w2 = jnp.pad(w2, ((0, 0), (0, 0),
                      (0, C1p - inter), (0, C1p - inter))).astype(mm_dtype)
    y2, st2 = conv3x3_bn_fused(
        y1.reshape(B, H, W, C1p), st1,
        _pad_channels(params["bn1_g"], C1p), _pad_channels(params["bn1_b"], C1p),
        w2, count=M, padding=padding, dilation=dilation, out_dtype=mm_dtype)

    # ---- stage 3: [BN2+ReLU fused] 1x1 conv + stats ---------------------------
    w3 = jnp.transpose(params["conv3_w"][:, :, 0, 0])                 # (inter, 4*inter)
    w3 = jnp.pad(w3, ((0, C1p - inter), (0, C3p - 4 * inter))).astype(mm_dtype)
    y3, st3 = matmul_with_stats(
        y2.reshape(M, C1p), w3, out_dtype=mm_dtype,
        bn=(st2, _pad_channels(params["bn2_g"], C1p),
            _pad_channels(params["bn2_b"], C1p), M))

    # ---- stage 4: BN3 + identity add + ReLU -----------------------------------
    identity = jnp.pad(x.reshape(M, Cin),
                       ((0, 0), (0, C3p - Cin))).astype(mm_dtype)
    o3 = bn_residual_relu(y3, st3, _pad_channels(params["bn3_g"], C3p),
                          _pad_channels(params["bn3_b"], C3p),
                          identity, count=M, out_dtype=jnp.float32)

    out = o3[:, :4 * inter].reshape(B, Ho, Wo, 4 * inter)
    return jnp.transpose(out, (0, 3, 1, 2))                           # back to NCHW


# ------------------------------ reference (JAX) --------------------------------
def _ref_forward(x_nchw, params, stride=1, dilation=1, padding=1):
    x = jnp.transpose(x_nchw, (0, 2, 3, 1)).astype(jnp.float32)

    def conv(x, w, b, stride=1, dilation=1, padding=0):
        w_hwio = jnp.transpose(w, (2, 3, 1, 0))
        y = jax.lax.conv_general_dilated(
            x, w_hwio, window_strides=(stride, stride),
            padding=[(padding, padding), (padding, padding)],
            rhs_dilation=(dilation, dilation),
            dimension_numbers=("NHWC", "HWIO", "NHWC"))
        return y + b

    def bn(y, g, be):
        mean = y.mean(axis=(0, 1, 2))
        var = ((y - mean) ** 2).mean(axis=(0, 1, 2))
        return (y - mean) * jax.lax.rsqrt(var + EPS) * g + be

    o = jax.nn.relu(bn(conv(x, params["conv1_w"], params["conv1_b"]),
                       params["bn1_g"], params["bn1_b"]))
    o = jax.nn.relu(bn(conv(o, params["conv2_w"], params["conv2_b"],
                            stride, dilation, padding),
                       params["bn2_g"], params["bn2_b"]))
    o = bn(conv(o, params["conv3_w"], params["conv3_b"]),
           params["bn3_g"], params["bn3_b"])
    o = jax.nn.relu(o + x)
    return jnp.transpose(o, (0, 3, 1, 2))


# ----------------------------------- main ---------------------------------------
if __name__ == "__main__":
    B, in_channels, H, W = 4, 64, 16, 16
    inter_channels = 16                  # expansion=4 -> 4*inter == in_channels
    stride, dilation, padding = 1, 1, 1  # downsample_identity=None => identity add

    key = jax.random.PRNGKey(0)
    ks = jax.random.split(key, 16)

    def nrm(k, shape, scale=0.1):
        return scale * jax.random.normal(k, shape, dtype=jnp.float32)

    params = {
        "conv1_w": nrm(ks[0], (inter_channels, in_channels, 1, 1)),
        "conv1_b": nrm(ks[1], (inter_channels,)),
        "bn1_g": 1.0 + nrm(ks[2], (inter_channels,)),
        "bn1_b": nrm(ks[3], (inter_channels,)),
        "conv2_w": nrm(ks[4], (inter_channels, inter_channels, 3, 3)),
        "conv2_b": nrm(ks[5], (inter_channels,)),
        "bn2_g": 1.0 + nrm(ks[6], (inter_channels,)),
        "bn2_b": nrm(ks[7], (inter_channels,)),
        "conv3_w": nrm(ks[8], (inter_channels * 4, inter_channels, 1, 1)),
        "conv3_b": nrm(ks[9], (inter_channels * 4,)),
        "bn3_g": 1.0 + nrm(ks[10], (inter_channels * 4,)),
        "bn3_b": nrm(ks[11], (inter_channels * 4,)),
    }

    x = jax.random.normal(ks[12], (B, in_channels, H, W), dtype=jnp.float32)

    ref = jax.block_until_ready(
        _ref_forward(x, params, stride=stride, dilation=dilation, padding=padding))

    # (1) f32-MXU mode: strict functional check of the fused kernel pipeline.
    fwd_f32 = jax.jit(functools.partial(
        bottleneck_forward, stride=stride, dilation=dilation, padding=padding,
        mm_dtype=jnp.float32))
    out_f32 = jax.block_until_ready(fwd_f32(x, params))
    np.testing.assert_allclose(np.asarray(out_f32), np.asarray(ref),
                               rtol=1e-2, atol=1e-2)

    # (2) bf16 mode (the performance configuration): bf16 intermediates/residual
    #     through three cascaded training-mode BN stages -> looser tolerance.
    fwd_bf16 = jax.jit(functools.partial(
        bottleneck_forward, stride=stride, dilation=dilation, padding=padding,
        mm_dtype=jnp.bfloat16))
    out = jax.block_until_ready(fwd_bf16(x, params))
    np.testing.assert_allclose(np.asarray(out), np.asarray(ref),
                               rtol=5e-2, atol=5e-2)

    assert out.shape == (B, inter_channels * 4, H, W)
    assert bool(jnp.all(jnp.isfinite(out)))
    print("KERNEL_OK")
</pallas_src>

<mosaic_0001>
module attributes {stable_mosaic.version = 11 : i64} {
  func.func @kernel(%arg0: i32, %arg1: memref<512x64xf32, #tpu.memory_space<vmem>>, %arg2: memref<64x128xf32, #tpu.memory_space<vmem>>, %arg3: memref<512x128xf32, #tpu.memory_space<vmem>>, %arg4: memref<1x2x128xf32, #tpu.memory_space<vmem>>) attributes {dimension_semantics = [#tpu.dimension_semantics<parallel>], iteration_bounds = array<i64: 2>, scalar_prefetch = 0 : i64, scratch_operands = 0 : i64, tpu.core_type = #tpu.core_type<tc>, window_params = [{transform_indices = @transform_0, window_bounds = array<i64: 512, 64>}, {pipeline_mode = #tpu.pipeline_mode<synchronous>, transform_indices = @transform_1, window_bounds = array<i64: 64, 128>}, {transform_indices = @transform_2, window_bounds = array<i64: 512, 128>}, {transform_indices = @transform_3, window_bounds = array<i64: 1, 2, 128>}]} {
    %c0 = arith.constant 0 : index
    %c0_0 = arith.constant 0 : index
    %0 = vector.load %arg1[%c0, %c0_0] : memref<512x64xf32, #tpu.memory_space<vmem>>, vector<512x64xf32>
    %c0_1 = arith.constant 0 : index
    %c0_2 = arith.constant 0 : index
    %1 = vector.load %arg2[%c0_1, %c0_2] : memref<64x128xf32, #tpu.memory_space<vmem>>, vector<64x128xf32>
    %cst = arith.constant dense<0.000000e+00> : vector<512x128xf32>
    %2 = tpu.matmul %0, %1, %cst {dimension_numbers = #tpu.dot_dimension_numbers<[1], [0], [0], [1], [0, 0, 1, 1], [], []>} : vector<512x64xf32>, vector<64x128xf32>, vector<512x128xf32> -> vector<512x128xf32>
    %c0_3 = arith.constant 0 : index
    %c0_4 = arith.constant 0 : index
    %3 = vector.load %arg3[%c0_3, %c0_4] : memref<512x128xf32, #tpu.memory_space<vmem>>, vector<512x128xf32>
    tpu.vector_store %arg3[%c0_3, %c0_4], %2 {strides = array<i32>} : memref<512x128xf32, #tpu.memory_space<vmem>>, vector<512x128xf32>,
    %cst_5 = arith.constant dense<0.000000e+00> : vector<128xf32>
    %4 = vector.multi_reduction <add>, %2, %cst_5 [0] : vector<512x128xf32> to vector<128xf32>
    %5 = vector.shape_cast %4 : vector<128xf32> to vector<1x128xf32>
    %6 = arith.mulf %2, %2 : vector<512x128xf32>
    %cst_6 = arith.constant dense<0.000000e+00> : vector<128xf32>
    %7 = vector.multi_reduction <add>, %6, %cst_6 [0] : vector<512x128xf32> to vector<128xf32>
    %8 = vector.shape_cast %7 : vector<128xf32> to vector<1x128xf32>
    %9 = tpu.concatenate %5, %8 in 0 : vector<1x128xf32>, vector<1x128xf32> -> vector<2x128xf32>
    %10 = vector.shape_cast %9 : vector<2x128xf32> to vector<1x2x128xf32>
    %c0_7 = arith.constant 0 : index
    %c0_8 = arith.constant 0 : index
    %c0_9 = arith.constant 0 : index
    %11 = vector.load %arg4[%c0_7, %c0_8, %c0_9] : memref<1x2x128xf32, #tpu.memory_space<vmem>>, vector<1x2x128xf32>
    tpu.vector_store %arg4[%c0_7, %c0_8, %c0_9], %10 {strides = array<i32>} : memref<1x2x128xf32, #tpu.memory_space<vmem>>, vector<1x2x128xf32>,
    return
  }
  func.func @transform_0(%arg0: i32) -> (i32, i32) {
    %c0_i32 = arith.constant 0 : i32
    %c0_i32_0 = arith.constant 0 : i32
    return %arg0, %c0_i32 : i32, i32
  }
  func.func @transform_1(%arg0: i32) -> (i32, i32) {
    %c0_i32 = arith.constant 0 : i32
    %c0_i32_0 = arith.constant 0 : i32
    %c0_i32_1 = arith.constant 0 : i32
    return %c0_i32, %c0_i32_0 : i32, i32
  }
  func.func @transform_2(%arg0: i32) -> (i32, i32) {
    %c0_i32 = arith.constant 0 : i32
    %c0_i32_0 = arith.constant 0 : i32
    return %arg0, %c0_i32 : i32, i32
  }
  func.func @transform_3(%arg0: i32) -> (i32, i32, i32) {
    %c0_i32 = arith.constant 0 : i32
    %c0_i32_0 = arith.constant 0 : i32
    %c0_i32_1 = arith.constant 0 : i32
    return %arg0, %c0_i32, %c0_i32_0 : i32, i32, i32
  }
}

module attributes {stable_mosaic.version = 11 : i64} {
  func.func @kernel(%arg0: i32, %arg1: memref<512x128xf32, #tpu.memory_space<vmem>>, %arg2: memref<2x128xf32, #tpu.memory_space<vmem>>, %arg3: memref<1x128xf32, #tpu.memory_space<vmem>>, %arg4: memref<1x128xf32, #tpu.memory_space<vmem>>, %arg5: memref<128x128xf32, #tpu.memory_space<vmem>>, %arg6: memref<512x128xf32, #tpu.memory_space<vmem>>, %arg7: memref<1x2x128xf32, #tpu.memory_space<vmem>>) attributes {dimension_semantics = [#tpu.dimension_semantics<parallel>], iteration_bounds = array<i64: 2>, scalar_prefetch = 0 : i64, scratch_operands = 0 : i64, tpu.core_type = #tpu.core_type<tc>, window_params = [{transform_indices = @transform_0, window_bounds = array<i64: 512, 128>}, {pipeline_mode = #tpu.pipeline_mode<synchronous>, transform_indices = @transform_1, window_bounds = array<i64: 2, 128>}, {pipeline_mode = #tpu.pipeline_mode<synchronous>, transform_indices = @transform_2, window_bounds = array<i64: 1, 128>}, {pipeline_mode = #tpu.pipeline_mode<synchronous>, transform_indices = @transform_3, window_bounds = array<i64: 1, 128>}, {pipeline_mode = #tpu.pipeline_mode<synchronous>, transform_indices = @transform_4, window_bounds = array<i64: 128, 128>}, {transform_indices = @transform_5, window_bounds = array<i64: 512, 128>}, {transform_indices = @transform_6, window_bounds = array<i64: 1, 2, 128>}]} {
    %c0 = arith.constant 0 : index
    %c0_0 = arith.constant 0 : index
    %0 = vector.load %arg2[%c0, %c0_0] : memref<2x128xf32, #tpu.memory_space<vmem>>, vector<1x128xf32>
    %cst = arith.constant 9.765625E-4 : f32
    %1 = vector.broadcast %cst : f32 to vector<1x128xf32>
    %2 = arith.mulf %0, %1 : vector<1x128xf32>
    %c1 = arith.constant 1 : index
    %c0_1 = arith.constant 0 : index
    %3 = vector.load %arg2[%c1, %c0_1] : memref<2x128xf32, #tpu.memory_space<vmem>>, vector<1x128xf32>
    %cst_2 = arith.constant 9.765625E-4 : f32
    %4 = vector.broadcast %cst_2 : f32 to vector<1x128xf32>
    %5 = arith.mulf %3, %4 : vector<1x128xf32>
    %6 = arith.mulf %2, %2 : vector<1x128xf32>
    %7 = arith.subf %5, %6 : vector<1x128xf32>
    %cst_3 = arith.constant 0.000000e+00 : f32
    %8 = vector.broadcast %cst_3 : f32 to vector<1x128xf32>
    %9 = arith.maximumf %7, %8 : vector<1x128xf32>
    %c0_4 = arith.constant 0 : index
    %c0_5 = arith.constant 0 : index
    %10 = vector.load %arg3[%c0_4, %c0_5] : memref<1x128xf32, #tpu.memory_space<vmem>>, vector<1x128xf32>
    %cst_6 = arith.constant 9.99999974E-6 : f32
    %11 = vector.broadcast %cst_6 : f32 to vector<1x128xf32>
    %12 = arith.addf %9, %11 : vector<1x128xf32>
    %13 = math.rsqrt %12 : vector<1x128xf32>
    %14 = arith.mulf %10, %13 : vector<1x128xf32>
    %c0_7 = arith.constant 0 : index
    %c0_8 = arith.constant 0 : index
    %15 = vector.load %arg4[%c0_7, %c0_8] : memref<1x128xf32, #tpu.memory_space<vmem>>, vector<1x128xf32>
    %16 = arith.mulf %2, %14 : vector<1x128xf32>
    %17 = arith.subf %15, %16 : vector<1x128xf32>
    %c0_9 = arith.constant 0 : index
    %c0_10 = arith.constant 0 : index
    %18 = vector.load %arg1[%c0_9, %c0_10] : memref<512x128xf32, #tpu.memory_space<vmem>>, vector<512x128xf32>
    %19 = vector.broadcast %14 : vector<1x128xf32> to vector<512x128xf32>
    %20 = arith.mulf %18, %19 : vector<512x128xf32>
    %21 = vector.broadcast %17 : vector<1x128xf32> to vector<512x128xf32>
    %22 = arith.addf %20, %21 : vector<512x128xf32>
    %cst_11 = arith.constant 0.000000e+00 : f32
    %23 = vector.broadcast %cst_11 : f32 to vector<512x128xf32>
    %24 = arith.maximumf %22, %23 : vector<512x128xf32>
    %c0_12 = arith.constant 0 : index
    %c0_13 = arith.constant 0 : index
    %25 = vector.load %arg5[%c0_12, %c0_13] : memref<128x128xf32, #tpu.memory_space<vmem>>, vector<128x128xf32>
    %cst_14 = arith.constant dense<0.000000e+00> : vector<512x128xf32>
    %26 = tpu.matmul %24, %25, %cst_14 {dimension_numbers = #tpu.dot_dimension_numbers<[1], [0], [0], [1], [0, 0, 1, 1], [], []>} : vector<512x128xf32>, vector<128x128xf32>, vector<512x128xf32> -> vector<512x128xf32>
    %c0_15 = arith.constant 0 : index
    %c0_16 = arith.constant 0 : index
    %27 = vector.load %arg6[%c0_15, %c0_16] : memref<512x128xf32, #tpu.memory_space<vmem>>, vector<512x128xf32>
    tpu.vector_store %arg6[%c0_15, %c0_16], %26 {strides = array<i32>} : memref<512x128xf32, #tpu.memory_space<vmem>>, vector<512x128xf32>,
    %cst_17 = arith.constant dense<0.000000e+00> : vector<128xf32>
    %28 = vector.multi_reduction <add>, %26, %cst_17 [0] : vector<512x128xf32> to vector<128xf32>
    %29 = vector.shape_cast %28 : vector<128xf32> to vector<1x128xf32>
    %30 = arith.mulf %26, %26 : vector<512x128xf32>
    %cst_18 = arith.constant dense<0.000000e+00> : vector<128xf32>
    %31 = vector.multi_reduction <add>, %30, %cst_18 [0] : vector<512x128xf32> to vector<128xf32>
    %32 = vector.shape_cast %31 : vector<128xf32> to vector<1x128xf32>
    %33 = tpu.concatenate %29, %32 in 0 : vector<1x128xf32>, vector<1x128xf32> -> vector<2x128xf32>
    %34 = vector.shape_cast %33 : vector<2x128xf32> to vector<1x2x128xf32>
    %c0_19 = arith.constant 0 : index
    %c0_20 = arith.constant 0 : index
    %c0_21 = arith.constant 0 : index
    %35 = vector.load %arg7[%c0_19, %c0_20, %c0_21] : memref<1x2x128xf32, #tpu.memory_space<vmem>>, vector<1x2x128xf32>
    tpu.vector_store %arg7[%c0_19, %c0_20, %c0_21], %34 {strides = array<i32>} : memref<1x2x128xf32, #tpu.memory_space<vmem>>, vector<1x2x128xf32>,
    return
  }
  func.func @transform_0(%arg0: i32) -> (i32, i32) {
    %c0_i32 = arith.constant 0 : i32
    %c0_i32_0 = arith.constant 0 : i32
    return %arg0, %c0_i32 : i32, i32
  }
  func.func @transform_1(%arg0: i32) -> (i32, i32) {
    %c0_i32 = arith.constant 0 : i32
    %c0_i32_0 = arith.constant 0 : i32
    %c0_i32_1 = arith.constant 0 : i32
    return %c0_i32, %c0_i32_0 : i32, i32
  }
  func.func @transform_2(%arg0: i32) -> (i32, i32) {
    %c0_i32 = arith.constant 0 : i32
    %c0_i32_0 = arith.constant 0 : i32
    %c0_i32_1 = arith.constant 0 : i32
    return %c0_i32, %c0_i32_0 : i32, i32
  }
  func.func @transform_3(%arg0: i32) -> (i32, i32) {
    %c0_i32 = arith.constant 0 : i32
    %c0_i32_0 = arith.constant 0 : i32
    %c0_i32_1 = arith.constant 0 : i32
    return %c0_i32, %c0_i32_0 : i32, i32
  }
  func.func @transform_4(%arg0: i32) -> (i32, i32) {
    %c0_i32 = arith.constant 0 : i32
    %c0_i32_0 = arith.constant 0 : i32
    %c0_i32_1 = arith.constant 0 : i32
    return %c0_i32, %c0_i32_0 : i32, i32
  }
  func.func @transform_5(%arg0: i32) -> (i32, i32) {
    %c0_i32 = arith.constant 0 : i32
    %c0_i32_0 = arith.constant 0 : i32
    return %arg0, %c0_i32 : i32, i32
  }
  func.func @transform_6(%arg0: i32) -> (i32, i32, i32) {
    %c0_i32 = arith.constant 0 : i32
    %c0_i32_0 = arith.constant 0 : i32
    %c0_i32_1 = arith.constant 0 : i32
    return %arg0, %c0_i32, %c0_i32_0 : i32, i32, i32
  }
}

module attributes {stable_mosaic.version = 11 : i64} {
  func.func @kernel(%arg0: i32, %arg1: memref<1x16x16x128xf32, #tpu.memory_space<vmem>>, %arg2: memref<2x128xf32, #tpu.memory_space<vmem>>, %arg3: memref<1x128xf32, #tpu.memory_space<vmem>>, %arg4: memref<1x128xf32, #tpu.memory_space<vmem>>, %arg5: memref<3x3x128x128xf32, #tpu.memory_space<vmem>>, %arg6: memref<1x256x128xf32, #tpu.memory_space<vmem>>, %arg7: memref<1x2x128xf32, #tpu.memory_space<vmem>>, %arg8: memref<18x18x128xf32, #tpu.memory_space<vmem>>, %arg9: memref<256x128xf32, #tpu.memory_space<vmem>>) attributes {dimension_semantics = [#tpu.dimension_semantics<parallel>], iteration_bounds = array<i64: 4>, scalar_prefetch = 0 : i64, scratch_operands = 2 : i64, tpu.core_type = #tpu.core_type<tc>, window_params = [{transform_indices = @transform_0, window_bounds = array<i64: 1, 16, 16, 128>}, {pipeline_mode = #tpu.pipeline_mode<synchronous>, transform_indices = @transform_1, window_bounds = array<i64: 2, 128>}, {pipeline_mode = #tpu.pipeline_mode<synchronous>, transform_indices = @transform_2, window_bounds = array<i64: 1, 128>}, {pipeline_mode = #tpu.pipeline_mode<synchronous>, transform_indices = @transform_3, window_bounds = array<i64: 1, 128>}, {pipeline_mode = #tpu.pipeline_mode<synchronous>, transform_indices = @transform_4, window_bounds = array<i64: 3, 3, 128, 128>}, {transform_indices = @transform_5, window_bounds = array<i64: 1, 256, 128>}, {transform_indices = @transform_6, window_bounds = array<i64: 1, 2, 128>}]} {
    %c0 = arith.constant 0 : index
    %c0_0 = arith.constant 0 : index
    %0 = vector.load %arg2[%c0, %c0_0] : memref<2x128xf32, #tpu.memory_space<vmem>>, vector<1x128xf32>
    %cst = arith.constant 9.765625E-4 : f32
    %1 = vector.broadcast %cst : f32 to vector<1x128xf32>
    %2 = arith.mulf %0, %1 : vector<1x128xf32>
    %c1 = arith.constant 1 : index
    %c0_1 = arith.constant 0 : index
    %3 = vector.load %arg2[%c1, %c0_1] : memref<2x128xf32, #tpu.memory_space<vmem>>, vector<1x128xf32>
    %cst_2 = arith.constant 9.765625E-4 : f32
    %4 = vector.broadcast %cst_2 : f32 to vector<1x128xf32>
    %5 = arith.mulf %3, %4 : vector<1x128xf32>
    %6 = arith.mulf %2, %2 : vector<1x128xf32>
    %7 = arith.subf %5, %6 : vector<1x128xf32>
    %cst_3 = arith.constant 0.000000e+00 : f32
    %8 = vector.broadcast %cst_3 : f32 to vector<1x128xf32>
    %9 = arith.maximumf %7, %8 : vector<1x128xf32>
    %c0_4 = arith.constant 0 : index
    %c0_5 = arith.constant 0 : index
    %10 = vector.load %arg3[%c0_4, %c0_5] : memref<1x128xf32, #tpu.memory_space<vmem>>, vector<1x128xf32>
    %cst_6 = arith.constant 9.99999974E-6 : f32
    %11 = vector.broadcast %cst_6 : f32 to vector<1x128xf32>
    %12 = arith.addf %9, %11 : vector<1x128xf32>
    %13 = math.rsqrt %12 : vector<1x128xf32>
    %14 = arith.mulf %10, %13 : vector<1x128xf32>
    %c0_7 = arith.constant 0 : index
    %c0_8 = arith.constant 0 : index
    %15 = vector.load %arg4[%c0_7, %c0_8] : memref<1x128xf32, #tpu.memory_space<vmem>>, vector<1x128xf32>
    %16 = arith.mulf %2, %14 : vector<1x128xf32>
    %17 = arith.subf %15, %16 : vector<1x128xf32>
    %c0_9 = arith.constant 0 : index
    %c0_10 = arith.constant 0 : index
    %c0_11 = arith.constant 0 : index
    %c0_12 = arith.constant 0 : index
    %18 = vector.load %arg1[%c0_9, %c0_10, %c0_11, %c0_12] : memref<1x16x16x128xf32, #tpu.memory_space<vmem>>, vector<1x16x16x128xf32>
    %19 = vector.shape_cast %18 : vector<1x16x16x128xf32> to vector<16x16x128xf32>
    %20 = vector.shape_cast %14 : vector<1x128xf32> to vector<1x1x128xf32>
    %21 = vector.broadcast %20 : vector<1x1x128xf32> to vector<16x16x128xf32>
    %22 = arith.mulf %19, %21 : vector<16x16x128xf32>
    %23 = vector.shape_cast %17 : vector<1x128xf32> to vector<1x1x128xf32>
    %24 = vector.broadcast %23 : vector<1x1x128xf32> to vector<16x16x128xf32>
    %25 = arith.addf %22, %24 : vector<16x16x128xf32>
    %cst_13 = arith.constant 0.000000e+00 : f32
    %26 = vector.broadcast %cst_13 : f32 to vector<16x16x128xf32>
    %27 = arith.maximumf %25, %26 : vector<16x16x128xf32>
    %cst_14 = arith.constant 0.000000e+00 : f32
    %28 = vector.broadcast %cst_14 : f32 to vector<18x18x128xf32>
    %c0_15 = arith.constant 0 : index
    %c0_16 = arith.constant 0 : index
    %c0_17 = arith.constant 0 : index
    %29 = vector.load %arg8[%c0_15, %c0_16, %c0_17] : memref<18x18x128xf32, #tpu.memory_space<vmem>>, vector<18x18x128xf32>
    tpu.vector_store %arg8[%c0_15, %c0_16, %c0_17], %28 {strides = array<i32>} : memref<18x18x128xf32, #tpu.memory_space<vmem>>, vector<18x18x128xf32>,
    %c1_18 = arith.constant 1 : index
    %c1_19 = arith.constant 1 : index
    %c0_20 = arith.constant 0 : index
    %30 = vector.load %arg8[%c1_18, %c1_19, %c0_20] : memref<18x18x128xf32, #tpu.memory_space<vmem>>, vector<16x16x128xf32>
    tpu.vector_store %arg8[%c1_18, %c1_19, %c0_20], %27 {strides = array<i32>} : memref<18x18x128xf32, #tpu.memory_space<vmem>>, vector<16x16x128xf32>,
    %cst_21 = arith.constant 0.000000e+00 : f32
    %31 = vector.broadcast %cst_21 : f32 to vector<256x128xf32>
    %c0_22 = arith.constant 0 : index
    %c0_23 = arith.constant 0 : index
    %32 = vector.load %arg9[%c0_22, %c0_23] : memref<256x128xf32, #tpu.memory_space<vmem>>, vector<256x128xf32>
    tpu.vector_store %arg9[%c0_22, %c0_23], %31 {strides = array<i32>} : memref<256x128xf32, #tpu.memory_space<vmem>>, vector<256x128xf32>,
    %c0_24 = arith.constant 0 : index
    %c0_25 = arith.constant 0 : index
    %c0_26 = arith.constant 0 : index
    %33 = vector.load %arg8[%c0_24, %c0_25, %c0_26] : memref<18x18x128xf32, #tpu.memory_space<vmem>>, vector<16x16x128xf32>
    %c0_27 = arith.constant 0 : index
    %c0_28 = arith.constant 0 : index
    %34 = vector.load %arg9[%c0_27, %c0_28] : memref<256x128xf32, #tpu.memory_space<vmem>>, vector<256x128xf32>
    %35 = vector.shape_cast %33 : vector<16x16x128xf32> to vector<256x128xf32>
    %c0_29 = arith.constant 0 : index
    %c0_30 = arith.constant 0 : index
    %c0_31 = arith.constant 0 : index
    %c0_32 = arith.constant 0 : index
    %36 = vector.load %arg5[%c0_29, %c0_30, %c0_31, %c0_32] : memref<3x3x128x128xf32, #tpu.memory_space<vmem>>, vector<1x1x128x128xf32>
    %37 = vector.shape_cast %36 : vector<1x1x128x128xf32> to vector<128x128xf32>
    %cst_33 = arith.constant dense<0.000000e+00> : vector<256x128xf32>
    %38 = tpu.matmul %35, %37, %cst_33 {dimension_numbers = #tpu.dot_dimension_numbers<[1], [0], [0], [1], [0, 0, 1, 1], [], []>} : vector<256x128xf32>, vector<128x128xf32>, vector<256x128xf32> -> vector<256x128xf32>
    %39 = arith.addf %34, %38 : vector<256x128xf32>
    %c0_34 = arith.constant 0 : index
    %c0_35 = arith.constant 0 : index
    %40 = vector.load %arg9[%c0_34, %c0_35] : memref<256x128xf32, #tpu.memory_space<vmem>>, vector<256x128xf32>
    tpu.vector_store %arg9[%c0_34, %c0_35], %39 {strides = array<i32>} : memref<256x128xf32, #tpu.memory_space<vmem>>, vector<256x128xf32>,
    %c0_36 = arith.constant 0 : index
    %c1_37 = arith.constant 1 : index
    %c0_38 = arith.constant 0 : index
    %41 = vector.load %arg8[%c0_36, %c1_37, %c0_38] : memref<18x18x128xf32, #tpu.memory_space<vmem>>, vector<16x16x128xf32>
    %c0_39 = arith.constant 0 : index
    %c0_40 = arith.constant 0 : index
    %42 = vector.load %arg9[%c0_39, %c0_40] : memref<256x128xf32, #tpu.memory_space<vmem>>, vector<256x128xf32>
    %43 = vector.shape_cast %41 : vector<16x16x128xf32> to vector<256x128xf32>
    %c0_41 = arith.constant 0 : index
    %c1_42 = arith.constant 1 : index
    %c0_43 = arith.constant 0 : index
    %c0_44 = arith.constant 0 : index
    %44 = vector.load %arg5[%c0_41, %c1_42, %c0_43, %c0_44] : memref<3x3x128x128xf32, #tpu.memory_space<vmem>>, vector<1x1x128x128xf32>
    %45 = vector.shape_cast %44 : vector<1x1x128x128xf32> to vector<128x128xf32>
    %cst_45 = arith.constant dense<0.000000e+00> : vector<256x128xf32>
    %46 = tpu.matmul %43, %45, %cst_45 {dimension_numbers = #tpu.dot_dimension_numbers<[1], [0], [0], [1], [0, 0, 1, 1], [], []>} : vector<256x128xf32>, vector<128x128xf32>, vector<256x128xf32> -> vector<256x128xf32>
    %47 = arith.addf %42, %46 : vector<256x128xf32>
    %c0_46 = arith.constant 0 : index
    %c0_47 = arith.constant 0 : index
    %48 = vector.load %arg9[%c0_46, %c0_47] : memref<256x128xf32, #tpu.memory_space<vmem>>, vector<256x128xf32>
    tpu.vector_store %arg9[%c0_46, %c0_47], %47 {strides = array<i32>} : memref<256x128xf32, #tpu.memory_space<vmem>>, vector<256x128xf32>,
    %c0_48 = arith.constant 0 : index
    %c2 = arith.constant 2 : index
    %c0_49 = arith.constant 0 : index
    %49 = vector.load %arg8[%c0_48, %c2, %c0_49] : memref<18x18x128xf32, #tpu.memory_space<vmem>>, vector<16x16x128xf32>
    %c0_50 = arith.constant 0 : index
    %c0_51 = arith.constant 0 : index
    %50 = vector.load %arg9[%c0_50, %c0_51] : memref<256x128xf32, #tpu.memory_space<vmem>>, vector<256x128xf32>
    %51 = vector.shape_cast %49 : vector<16x16x128xf32> to vector<256x128xf32>
    %c0_52 = arith.constant 0 : index
    %c2_53 = arith.constant 2 : index
    %c0_54 = arith.constant 0 : index
    %c0_55 = arith.constant 0 : index
    %52 = vector.load %arg5[%c0_52, %c2_53, %c0_54, %c0_55] : memref<3x3x128x128xf32, #tpu.memory_space<vmem>>, vector<1x1x128x128xf32>
    %53 = vector.shape_cast %52 : vector<1x1x128x128xf32> to vector<128x128xf32>
    %cst_56 = arith.constant dense<0.000000e+00> : vector<256x128xf32>
    %54 = tpu.matmul %51, %53, %cst_56 {dimension_numbers = #tpu.dot_dimension_numbers<[1], [0], [0], [1], [0, 0, 1, 1], [], []>} : vector<256x128xf32>, vector<128x128xf32>, vector<256x128xf32> -> vector<256x128xf32>
    %55 = arith.addf %50, %54 : vector<256x128xf32>
    %c0_57 = arith.constant 0 : index
    %c0_58 = arith.constant 0 : index
    %56 = vector.load %arg9[%c0_57, %c0_58] : memref<256x128xf32, #tpu.memory_space<vmem>>, vector<256x128xf32>
    tpu.vector_store %arg9[%c0_57, %c0_58], %55 {strides = array<i32>} : memref<256x128xf32, #tpu.memory_space<vmem>>, vector<256x128xf32>,
    %c1_59 = arith.constant 1 : index
    %c0_60 = arith.constant 0 : index
    %c0_61 = arith.constant 0 : index
    %57 = vector.load %arg8[%c1_59, %c0_60, %c0_61] : memref<18x18x128xf32, #tpu.memory_space<vmem>>, vector<16x16x128xf32>
    %c0_62 = arith.constant 0 : index
    %c0_63 = arith.constant 0 : index
    %58 = vector.load %arg9[%c0_62, %c0_63] : memref<256x128xf32, #tpu.memory_space<vmem>>, vector<256x128xf32>
    %59 = vector.shape_cast %57 : vector<16x16x128xf32> to vector<256x128xf32>
    %c1_64 = arith.constant 1 : index
    %c0_65 = arith.constant 0 : index
    %c0_66 = arith.constant 0 : index
    %c0_67 = arith.constant 0 : index
    %60 = vector.load %arg5[%c1_64, %c0_65, %c0_66, %c0_67] : memref<3x3x128x128xf32, #tpu.memory_space<vmem>>, vector<1x1x128x128xf32>
    %61 = vector.shape_cast %60 : vector<1x1x128x128xf32> to vector<128x128xf32>
    %cst_68 = arith.constant dense<0.000000e+00> : vector<256x128xf32>
    %62 = tpu.matmul %59, %61, %cst_68 {dimension_numbers = #tpu.dot_dimension_numbers<[1], [0], [0], [1], [0, 0, 1, 1], [], []>} : vector<256x128xf32>, vector<128x128xf32>, vector<256x128xf32> -> vector<256x128xf32>
    %63 = arith.addf %58, %62 : vector<256x128xf32>
    %c0_69 = arith.constant 0 : index
    %c0_70 = arith.constant 0 : index
    %64 = vector.load %arg9[%c0_69, %c0_70] : memref<256x128xf32, #tpu.memory_space<vmem>>, vector<256x128xf32>
    tpu.vector_store %arg9[%c0_69, %c0_70], %63 {strides = array<i32>} : memref<256x128xf32, #tpu.memory_space<vmem>>, vector<256x128xf32>,
    %c1_71 = arith.constant 1 : index
    %c1_72 = arith.constant 1 : index
    %c0_73 = arith.constant 0 : index
    %65 = vector.load %arg8[%c1_71, %c1_72, %c0_73] : memref<18x18x128xf32, #tpu.memory_space<vmem>>, vector<16x16x128xf32>
    %c0_74 = arith.constant 0 : index
    %c0_75 = arith.constant 0 : index
    %66 = vector.load %arg9[%c0_74, %c0_75] : memref<256x128xf32, #tpu.memory_space<vmem>>, vector<256x128xf32>
    %67 = vector.shape_cast %65 : vector<16x16x128xf32> to vector<256x128xf32>
    %c1_76 = arith.constant 1 : index
    %c1_77 = arith.constant 1 : index
    %c0_78 = arith.constant 0 : index
    %c0_79 = arith.constant 0 : index
    %68 = vector.load %arg5[%c1_76, %c1_77, %c0_78, %c0_79] : memref<3x3x128x128xf32, #tpu.memory_space<vmem>>, vector<1x1x128x128xf32>
    %69 = vector.shape_cast %68 : vector<1x1x128x128xf32> to vector<128x128xf32>
    %cst_80 = arith.constant dense<0.000000e+00> : vector<256x128xf32>
    %70 = tpu.matmul %67, %69, %cst_80 {dimension_numbers = #tpu.dot_dimension_numbers<[1], [0], [0], [1], [0, 0, 1, 1], [], []>} : vector<256x128xf32>, vector<128x128xf32>, vector<256x128xf32> -> vector<256x128xf32>
    %71 = arith.addf %66, %70 : vector<256x128xf32>
    %c0_81 = arith.constant 0 : index
    %c0_82 = arith.constant 0 : index
    %72 = vector.load %arg9[%c0_81, %c0_82] : memref<256x128xf32, #tpu.memory_space<vmem>>, vector<256x128xf32>
    tpu.vector_store %arg9[%c0_81, %c0_82], %71 {strides = array<i32>} : memref<256x128xf32, #tpu.memory_space<vmem>>, vector<256x128xf32>,
    %c1_83 = arith.constant 1 : index
    %c2_84 = arith.constant 2 : index
    %c0_85 = arith.constant 0 : index
    %73 = vector.load %arg8[%c1_83, %c2_84, %c0_85] : memref<18x18x128xf32, #tpu.memory_space<vmem>>, vector<16x16x128xf32>
    %c0_86 = arith.constant 0 : index
    %c0_87 = arith.constant 0 : index
    %74 = vector.load %arg9[%c0_86, %c0_87] : memref<256x128xf32, #tpu.memory_space<vmem>>, vector<256x128xf32>
    %75 = vector.shape_cast %73 : vector<16x16x128xf32> to vector<256x128xf32>
    %c1_88 = arith.constant 1 : index
    %c2_89 = arith.constant 2 : index
    %c0_90 = arith.constant 0 : index
    %c0_91 = arith.constant 0 : index
    %76 = vector.load %arg5[%c1_88, %c2_89, %c0_90, %c0_91] : memref<3x3x128x128xf32, #tpu.memory_space<vmem>>, vector<1x1x128x128xf32>
    %77 = vector.shape_cast %76 : vector<1x1x128x128xf32> to vector<128x128xf32>
    %cst_92 = arith.constant dense<0.000000e+00> : vector<256x128xf32>
    %78 = tpu.matmul %75, %77, %cst_92 {dimension_numbers = #tpu.dot_dimension_numbers<[1], [0], [0], [1], [0, 0, 1, 1], [], []>} : vector<256x128xf32>, vector<128x128xf32>, vector<256x128xf32> -> vector<256x128xf32>
    %79 = arith.addf %74, %78 : vector<256x128xf32>
    %c0_93 = arith.constant 0 : index
    %c0_94 = arith.constant 0 : index
    %80 = vector.load %arg9[%c0_93, %c0_94] : memref<256x128xf32, #tpu.memory_space<vmem>>, vector<256x128xf32>
    tpu.vector_store %arg9[%c0_93, %c0_94], %79 {strides = array<i32>} : memref<256x128xf32, #tpu.memory_space<vmem>>, vector<256x128xf32>,
    %c2_95 = arith.constant 2 : index
    %c0_96 = arith.constant 0 : index
    %c0_97 = arith.constant 0 : index
    %81 = vector.load %arg8[%c2_95, %c0_96, %c0_97] : memref<18x18x128xf32, #tpu.memory_space<vmem>>, vector<16x16x128xf32>
    %c0_98 = arith.constant 0 : index
    %c0_99 = arith.constant 0 : index
    %82 = vector.load %arg9[%c0_98, %c0_99] : memref<256x128xf32, #tpu.memory_space<vmem>>, vector<256x128xf32>
    %83 = vector.shape_cast %81 : vector<16x16x128xf32> to vector<256x128xf32>
    %c2_100 = arith.constant 2 : index
    %c0_101 = arith.constant 0 : index
    %c0_102 = arith.constant 0 : index
    %c0_103 = arith.constant 0 : index
    %84 = vector.load %arg5[%c2_100, %c0_101, %c0_102, %c0_103] : memref<3x3x128x128xf32, #tpu.memory_space<vmem>>, vector<1x1x128x128xf32>
    %85 = vector.shape_cast %84 : vector<1x1x128x128xf32> to vector<128x128xf32>
    %cst_104 = arith.constant dense<0.000000e+00> : vector<256x128xf32>
    %86 = tpu.matmul %83, %85, %cst_104 {dimension_numbers = #tpu.dot_dimension_numbers<[1], [0], [0], [1], [0, 0, 1, 1], [], []>} : vector<256x128xf32>, vector<128x128xf32>, vector<256x128xf32> -> vector<256x128xf32>
    %87 = arith.addf %82, %86 : vector<256x128xf32>
    %c0_105 = arith.constant 0 : index
    %c0_106 = arith.constant 0 : index
    %88 = vector.load %arg9[%c0_105, %c0_106] : memref<256x128xf32, #tpu.memory_space<vmem>>, vector<256x128xf32>
    tpu.vector_store %arg9[%c0_105, %c0_106], %87 {strides = array<i32>} : memref<256x128xf32, #tpu.memory_space<vmem>>, vector<256x128xf32>,
    %c2_107 = arith.constant 2 : index
    %c1_108 = arith.constant 1 : index
    %c0_109 = arith.constant 0 : index
    %89 = vector.load %arg8[%c2_107, %c1_108, %c0_109] : memref<18x18x128xf32, #tpu.memory_space<vmem>>, vector<16x16x128xf32>
    %c0_110 = arith.constant 0 : index
    %c0_111 = arith.constant 0 : index
    %90 = vector.load %arg9[%c0_110, %c0_111] : memref<256x128xf32, #tpu.memory_space<vmem>>, vector<256x128xf32>
    %91 = vector.shape_cast %89 : vector<16x16x128xf32> to vector<256x128xf32>
    %c2_112 = arith.constant 2 : index
    %c1_113 = arith.constant 1 : index
    %c0_114 = arith.constant 0 : index
    %c0_115 = arith.constant 0 : index
    %92 = vector.load %arg5[%c2_112, %c1_113, %c0_114, %c0_115] : memref<3x3x128x128xf32, #tpu.memory_space<vmem>>, vector<1x1x128x128xf32>
    %93 = vector.shape_cast %92 : vector<1x1x128x128xf32> to vector<128x128xf32>
    %cst_116 = arith.constant dense<0.000000e+00> : vector<256x128xf32>
    %94 = tpu.matmul %91, %93, %cst_116 {dimension_numbers = #tpu.dot_dimension_numbers<[1], [0], [0], [1], [0, 0, 1, 1], [], []>} : vector<256x128xf32>, vector<128x128xf32>, vector<256x128xf32> -> vector<256x128xf32>
    %95 = arith.addf %90, %94 : vector<256x128xf32>
    %c0_117 = arith.constant 0 : index
    %c0_118 = arith.constant 0 : index
    %96 = vector.load %arg9[%c0_117, %c0_118] : memref<256x128xf32, #tpu.memory_space<vmem>>, vector<256x128xf32>
    tpu.vector_store %arg9[%c0_117, %c0_118], %95 {strides = array<i32>} : memref<256x128xf32, #tpu.memory_space<vmem>>, vector<256x128xf32>,
    %c2_119 = arith.constant 2 : index
    %c2_120 = arith.constant 2 : index
    %c0_121 = arith.constant 0 : index
    %97 = vector.load %arg8[%c2_119, %c2_120, %c0_121] : memref<18x18x128xf32, #tpu.memory_space<vmem>>, vector<16x16x128xf32>
    %c0_122 = arith.constant 0 : index
    %c0_123 = arith.constant 0 : index
    %98 = vector.load %arg9[%c0_122, %c0_123] : memref<256x128xf32, #tpu.memory_space<vmem>>, vector<256x128xf32>
    %99 = vector.shape_cast %97 : vector<16x16x128xf32> to vector<256x128xf32>
    %c2_124 = arith.constant 2 : index
    %c2_125 = arith.constant 2 : index
    %c0_126 = arith.constant 0 : index
    %c0_127 = arith.constant 0 : index
    %100 = vector.load %arg5[%c2_124, %c2_125, %c0_126, %c0_127] : memref<3x3x128x128xf32, #tpu.memory_space<vmem>>, vector<1x1x128x128xf32>
    %101 = vector.shape_cast %100 : vector<1x1x128x128xf32> to vector<128x128xf32>
    %cst_128 = arith.constant dense<0.000000e+00> : vector<256x128xf32>
    %102 = tpu.matmul %99, %101, %cst_128 {dimension_numbers = #tpu.dot_dimension_numbers<[1], [0], [0], [1], [0, 0, 1, 1], [], []>} : vector<256x128xf32>, vector<128x128xf32>, vector<256x128xf32> -> vector<256x128xf32>
    %103 = arith.addf %98, %102 : vector<256x128xf32>
    %c0_129 = arith.constant 0 : index
    %c0_130 = arith.constant 0 : index
    %104 = vector.load %arg9[%c0_129, %c0_130] : memref<256x128xf32, #tpu.memory_space<vmem>>, vector<256x128xf32>
    tpu.vector_store %arg9[%c0_129, %c0_130], %103 {strides = array<i32>} : memref<256x128xf32, #tpu.memory_space<vmem>>, vector<256x128xf32>,
    %c0_131 = arith.constant 0 : index
    %c0_132 = arith.constant 0 : index
    %105 = vector.load %arg9[%c0_131, %c0_132] : memref<256x128xf32, #tpu.memory_space<vmem>>, vector<256x128xf32>
    %c0_133 = arith.constant 0 : index
    %c0_134 = arith.constant 0 : index
    %c0_135 = arith.constant 0 : index
    %106 = vector.load %arg6[%c0_133, %c0_134, %c0_135] : memref<1x256x128xf32, #tpu.memory_space<vmem>>, vector<1x256x128xf32>
    %107 = vector.shape_cast %106 : vector<1x256x128xf32> to vector<256x128xf32>
    %108 = vector.shape_cast %105 : vector<256x128xf32> to vector<1x256x128xf32>
    tpu.vector_store %arg6[%c0_133, %c0_134, %c0_135], %108 {strides = array<i32>} : memref<1x256x128xf32, #tpu.memory_space<vmem>>, vector<1x256x128xf32>,
    %cst_136 = arith.constant dense<0.000000e+00> : vector<128xf32>
    %109 = vector.multi_reduction <add>, %105, %cst_136 [0] : vector<256x128xf32> to vector<128xf32>
    %110 = vector.shape_cast %109 : vector<128xf32> to vector<1x128xf32>
    %111 = arith.mulf %105, %105 : vector<256x128xf32>
    %cst_137 = arith.constant dense<0.000000e+00> : vector<128xf32>
    %112 = vector.multi_reduction <add>, %111, %cst_137 [0] : vector<256x128xf32> to vector<128xf32>
    %113 = vector.shape_cast %112 : vector<128xf32> to vector<1x128xf32>
    %114 = tpu.concatenate %110, %113 in 0 : vector<1x128xf32>, vector<1x128xf32> -> vector<2x128xf32>
    %115 = vector.shape_cast %114 : vector<2x128xf32> to vector<1x2x128xf32>
    %c0_138 = arith.constant 0 : index
    %c0_139 = arith.constant 0 : index
    %c0_140 = arith.constant 0 : index
    %116 = vector.load %arg7[%c0_138, %c0_139, %c0_140] : memref<1x2x128xf32, #tpu.memory_space<vmem>>, vector<1x2x128xf32>
    tpu.vector_store %arg7[%c0_138, %c0_139, %c0_140], %115 {strides = array<i32>} : memref<1x2x128xf32, #tpu.memory_space<vmem>>, vector<1x2x128xf32>,
    return
  }
  func.func @transform_0(%arg0: i32) -> (i32, i32, i32, i32) {
    %c0_i32 = arith.constant 0 : i32
    %c0_i32_0 = arith.constant 0 : i32
    %c0_i32_1 = arith.constant 0 : i32
    %c0_i32_2 = arith.constant 0 : i32
    return %arg0, %c0_i32, %c0_i32_0, %c0_i32_1 : i32, i32, i32, i32
  }
  func.func @transform_1(%arg0: i32) -> (i32, i32) {
    %c0_i32 = arith.constant 0 : i32
    %c0_i32_0 = arith.constant 0 : i32
    %c0_i32_1 = arith.constant 0 : i32
    return %c0_i32, %c0_i32_0 : i32, i32
  }
  func.func @transform_2(%arg0: i32) -> (i32, i32) {
    %c0_i32 = arith.constant 0 : i32
    %c0_i32_0 = arith.constant 0 : i32
    %c0_i32_1 = arith.constant 0 : i32
    return %c0_i32, %c0_i32_0 : i32, i32
  }
  func.func @transform_3(%arg0: i32) -> (i32, i32) {
    %c0_i32 = arith.constant 0 : i32
    %c0_i32_0 = arith.constant 0 : i32
    %c0_i32_1 = arith.constant 0 : i32
    return %c0_i32, %c0_i32_0 : i32, i32
  }
  func.func @transform_4(%arg0: i32) -> (i32, i32, i32, i32) {
    %c0_i32 = arith.constant 0 : i32
    %c0_i32_0 = arith.constant 0 : i32
    %c0_i32_1 = arith.constant 0 : i32
    %c0_i32_2 = arith.constant 0 : i32
    %c0_i32_3 = arith.constant 0 : i32
    return %c0_i32, %c0_i32_0, %c0_i32_1, %c0_i32_2 : i32, i32, i32, i32
  }
  func.func @transform_5(%arg0: i32) -> (i32, i32, i32) {
    %c0_i32 = arith.constant 0 : i32
    %c0_i32_0 = arith.constant 0 : i32
    %c0_i32_1 = arith.constant 0 : i32
    return %arg0, %c0_i32, %c0_i32_0 : i32, i32, i32
  }
  func.func @transform_6(%arg0: i32) -> (i32, i32, i32) {
    %c0_i32 = arith.constant 0 : i32
    %c0_i32_0 = arith.constant 0 : i32
    %c0_i32_1 = arith.constant 0 : i32
    return %arg0, %c0_i32, %c0_i32_0 : i32, i32, i32
  }
}

module attributes {stable_mosaic.version = 11 : i64} {
  func.func @kernel(%arg0: i32, %arg1: memref<512x128xf32, #tpu.memory_space<vmem>>, %arg2: memref<2x128xf32, #tpu.memory_space<vmem>>, %arg3: memref<1x128xf32, #tpu.memory_space<vmem>>, %arg4: memref<1x128xf32, #tpu.memory_space<vmem>>, %arg5: memref<512x128xf32, #tpu.memory_space<vmem>>, %arg6: memref<512x128xf32, #tpu.memory_space<vmem>>) attributes {dimension_semantics = [#tpu.dimension_semantics<parallel>], iteration_bounds = array<i64: 2>, scalar_prefetch = 0 : i64, scratch_operands = 0 : i64, tpu.core_type = #tpu.core_type<tc>, window_params = [{transform_indices = @transform_0, window_bounds = array<i64: 512, 128>}, {pipeline_mode = #tpu.pipeline_mode<synchronous>, transform_indices = @transform_1, window_bounds = array<i64: 2, 128>}, {pipeline_mode = #tpu.pipeline_mode<synchronous>, transform_indices = @transform_2, window_bounds = array<i64: 1, 128>}, {pipeline_mode = #tpu.pipeline_mode<synchronous>, transform_indices = @transform_3, window_bounds = array<i64: 1, 128>}, {transform_indices = @transform_4, window_bounds = array<i64: 512, 128>}, {transform_indices = @transform_5, window_bounds = array<i64: 512, 128>}]} {
    %c0 = arith.constant 0 : index
    %c0_0 = arith.constant 0 : index
    %0 = vector.load %arg2[%c0, %c0_0] : memref<2x128xf32, #tpu.memory_space<vmem>>, vector<1x128xf32>
    %cst = arith.constant 9.765625E-4 : f32
    %1 = vector.broadcast %cst : f32 to vector<1x128xf32>
    %2 = arith.mulf %0, %1 : vector<1x128xf32>
    %c1 = arith.constant 1 : index
    %c0_1 = arith.constant 0 : index
    %3 = vector.load %arg2[%c1, %c0_1] : memref<2x128xf32, #tpu.memory_space<vmem>>, vector<1x128xf32>
    %cst_2 = arith.constant 9.765625E-4 : f32
    %4 = vector.broadcast %cst_2 : f32 to vector<1x128xf32>
    %5 = arith.mulf %3, %4 : vector<1x128xf32>
    %6 = arith.mulf %2, %2 : vector<1x128xf32>
    %7 = arith.subf %5, %6 : vector<1x128xf32>
    %cst_3 = arith.constant 0.000000e+00 : f32
    %8 = vector.broadcast %cst_3 : f32 to vector<1x128xf32>
    %9 = arith.maximumf %7, %8 : vector<1x128xf32>
    %c0_4 = arith.constant 0 : index
    %c0_5 = arith.constant 0 : index
    %10 = vector.load %arg3[%c0_4, %c0_5] : memref<1x128xf32, #tpu.memory_space<vmem>>, vector<1x128xf32>
    %cst_6 = arith.constant 9.99999974E-6 : f32
    %11 = vector.broadcast %cst_6 : f32 to vector<1x128xf32>
    %12 = arith.addf %9, %11 : vector<1x128xf32>
    %13 = math.rsqrt %12 : vector<1x128xf32>
    %14 = arith.mulf %10, %13 : vector<1x128xf32>
    %c0_7 = arith.constant 0 : index
    %c0_8 = arith.constant 0 : index
    %15 = vector.load %arg4[%c0_7, %c0_8] : memref<1x128xf32, #tpu.memory_space<vmem>>, vector<1x128xf32>
    %16 = arith.mulf %2, %14 : vector<1x128xf32>
    %17 = arith.subf %15, %16 : vector<1x128xf32>
    %c0_9 = arith.constant 0 : index
    %c0_10 = arith.constant 0 : index
    %18 = vector.load %arg1[%c0_9, %c0_10] : memref<512x128xf32, #tpu.memory_space<vmem>>, vector<512x128xf32>
    %19 = vector.broadcast %14 : vector<1x128xf32> to vector<512x128xf32>
    %20 = arith.mulf %18, %19 : vector<512x128xf32>
    %21 = vector.broadcast %17 : vector<1x128xf32> to vector<512x128xf32>
    %22 = arith.addf %20, %21 : vector<512x128xf32>
    %c0_11 = arith.constant 0 : index
    %c0_12 = arith.constant 0 : index
    %23 = vector.load %arg5[%c0_11, %c0_12] : memref<512x128xf32, #tpu.memory_space<vmem>>, vector<512x128xf32>
    %24 = arith.addf %22, %23 : vector<512x128xf32>
    %cst_13 = arith.constant 0.000000e+00 : f32
    %25 = vector.broadcast %cst_13 : f32 to vector<512x128xf32>
    %26 = arith.maximumf %24, %25 : vector<512x128xf32>
    %c0_14 = arith.constant 0 : index
    %c0_15 = arith.constant 0 : index
    %27 = vector.load %arg6[%c0_14, %c0_15] : memref<512x128xf32, #tpu.memory_space<vmem>>, vector<512x128xf32>
    tpu.vector_store %arg6[%c0_14, %c0_15], %26 {strides = array<i32>} : memref<512x128xf32, #tpu.memory_space<vmem>>, vector<512x128xf32>,
    return
  }
  func.func @transform_0(%arg0: i32) -> (i32, i32) {
    %c0_i32 = arith.constant 0 : i32
    %c0_i32_0 = arith.constant 0 : i32
    return %arg0, %c0_i32 : i32, i32
  }
  func.func @transform_1(%arg0: i32) -> (i32, i32) {
    %c0_i32 = arith.constant 0 : i32
    %c0_i32_0 = arith.constant 0 : i32
    %c0_i32_1 = arith.constant 0 : i32
    return %c0_i32, %c0_i32_0 : i32, i32
  }
  func.func @transform_2(%arg0: i32) -> (i32, i32) {
    %c0_i32 = arith.constant 0 : i32
    %c0_i32_0 = arith.constant 0 : i32
    %c0_i32_1 = arith.constant 0 : i32
    return %c0_i32, %c0_i32_0 : i32, i32
  }
  func.func @transform_3(%arg0: i32) -> (i32, i32) {
    %c0_i32 = arith.constant 0 : i32
    %c0_i32_0 = arith.constant 0 : i32
    %c0_i32_1 = arith.constant 0 : i32
    return %c0_i32, %c0_i32_0 : i32, i32
  }
  func.func @transform_4(%arg0: i32) -> (i32, i32) {
    %c0_i32 = arith.constant 0 : i32
    %c0_i32_0 = arith.constant 0 : i32
    return %arg0, %c0_i32 : i32, i32
  }
  func.func @transform_5(%arg0: i32) -> (i32, i32) {
    %c0_i32 = arith.constant 0 : i32
    %c0_i32_0 = arith.constant 0 : i32
    return %arg0, %c0_i32 : i32, i32
  }
}

</mosaic_0001>

<llo_original>
// kernel: bottleneck_forward.4
$region0: #{bottleneck_forward.4}
  #allocation0 [shape = 'u32[]', space=smem, size = 0x4, offset = 0x4, fixed_abs, tag = 'smem constant byte address 0x4 - core index']
  #allocation1 [shape = 'u32[144,128]{1,0:T(1,128)}', space=vmem, size = 0x12000, scoped, tag = 'internal scratch']
  %s0 = inlined_call_operand.hbm [shape: f32[1024,64], index: 0, kind: input, shape index: {}]
  %s1 = inlined_call_operand.vmem [shape: f32[64,128], index: 1, kind: input, shape index: {}]
  %s2 = inlined_call_operand.vmem [shape: f32[1024,128], index: 2, kind: output, shape index: {0}]
  %s3 = inlined_call_operand.vmem [shape: f32[2,2,128], index: 3, kind: output, shape index: {1}]
  %4 = xla_tuple %s2, %s3
  %s5 = sld [smem:[#allocation0]]
  $region53: #{bottleneck_forward.4} parent=0
    _
  %s7 = ssub.s32 1, %s5
  %s8 = scalar_select 0, %s7, %s5
  $region1: #{bottleneck_forward.4} parent=0
    #allocation2 [shape = 'u8[524288]{0}', space=vmem, size = 0x80000, scoped, tag = 'input window, operand 0']
    #allocation3 [shape = 's32[2]{0}', space=sflag, size = 0x8, scoped, tag = 'scoped memory for bottleneck_forward.4']
    %9 = vsyncpa [#allocation3], 0
    %s10 = scalar_lea.sflag [#allocation3], 1
    %11 = vsyncpa %s10, 0
    loop: start=0, step=1, limit=4
    $region2: #{bottleneck_forward.4} parent=1 // loop_pre_header
      _
    $region3: #{bottleneck_forward.4} parent=1 // loop_header
      %s13 = sphi 0, %s17
      %p14 = scmp.ge.s32.totalorder %s13, 4
      %s23 = sphi 0, %s25
      %s26 = sphi 0, %s23
      %s27 = sphi 0, %s26
      %s43 = sphi 0, %s27
      %s47 = sphi 0, %s47
      %s49 = sphi 0, %s47
      %s50 = sphi 0, %s49
      %s64 = sphi 0, %s50
      %s70 = sphi 0, %s72
      %s73 = sphi 0, %s70
      %s74 = sphi 0, %s73
      %s90 = sphi 0, %s74
      %s96 = sphi 0, %s98
      %s99 = sphi 0, %s96
      %s100 = sphi 0, %s99
      %s116 = sphi 0, %s100
    $region4: #{bottleneck_forward.4} parent=1 // loop_header_branch
      %16 = sbr.rel (%p14) target = $region8
    $region5: #{bottleneck_forward.4} parent=1 // loop_body
      %s18 = ssub.s32 %s13, 1
      %s19 = ssub.s32 %s13, 2
      %s20 = sadd.s32 %s13, 1
      %s21 = ssub.s32 %s13, %s20
      %p22 = scmp.eq.s32.totalorder %s21, 0
      %s24 = sadd.s32 %s23, 1
      %s25 = scalar_select %p22, %s23, %s24
      %p28 = pneg %p22
      %p29 = scmp.eq.s32.totalorder %s13, 1
      %p30 = por %p28, %p29
      %p31 = scmp.ne.s32.totalorder %s23, %s26
      %p32 = scmp.eq.s32.totalorder %s13, 0
      %p33 = por %p31, %p32
      %p34 = scmp.ne.s32.totalorder %s23, %s26
      %p35 = scmp.eq.s32.totalorder %s18, 1
      %p36 = por %p34, %p35
      %p37 = scmp.ne.s32.totalorder %s26, %s27
      %p38 = scmp.eq.s32.totalorder %s18, 0
      %p39 = por %p37, %p38
      %p40 = scmp.ne.s32.totalorder %s26, %s27
      %p41 = scmp.eq.s32.totalorder %s19, 1
      %p42 = por %p40, %p41
      %p44 = scmp.ne.s32.totalorder %s27, %s43
      %p45 = scmp.eq.s32.totalorder %s19, 0
      %p46 = por %p44, %p45
      %s48 = sadd.s32 %s47, 1
      %p51 = scmp.eq.s32.totalorder %s13, 1
      %p52 = scmp.ne.s32.totalorder %s47, %s49
      %p53 = scmp.eq.s32.totalorder %s13, 0
      %p54 = por %p52, %p53
      %p55 = scmp.ne.s32.totalorder %s47, %s49
      %p56 = scmp.eq.s32.totalorder %s18, 1
      %p57 = por %p55, %p56
      %p58 = scmp.ne.s32.totalorder %s49, %s50
      %p59 = scmp.eq.s32.totalorder %s18, 0
      %p60 = por %p58, %p59
      %p61 = scmp.ne.s32.totalorder %s49, %s50
      %p62 = scmp.eq.s32.totalorder %s19, 1
      %p63 = por %p61, %p62
      %p65 = scmp.ne.s32.totalorder %s50, %s64
      %p66 = scmp.eq.s32.totalorder %s19, 0
      %p67 = por %p65, %p66
      %s68 = ssub.s32 %s13, %s20
      %p69 = scmp.eq.s32.totalorder %s68, 0
      %s71 = sadd.s32 %s70, 1
      %s72 = scalar_select %p69, %s70, %s71
      %p75 = pneg %p69
      %p76 = scmp.eq.s32.totalorder %s13, 1
      %p77 = por %p75, %p76
      %p78 = scmp.ne.s32.totalorder %s70, %s73
      %p79 = scmp.eq.s32.totalorder %s13, 0
      %p80 = por %p78, %p79
      %p81 = scmp.ne.s32.totalorder %s70, %s73
      %p82 = scmp.eq.s32.totalorder %s18, 1
      %p83 = por %p81, %p82
      %p84 = scmp.ne.s32.totalorder %s73, %s74
      %p85 = scmp.eq.s32.totalorder %s18, 0
      %p86 = por %p84, %p85
      %p87 = scmp.ne.s32.totalorder %s73, %s74
      %p88 = scmp.eq.s32.totalorder %s19, 1
      %p89 = por %p87, %p88
      %p91 = scmp.ne.s32.totalorder %s74, %s90
      %p92 = scmp.eq.s32.totalorder %s19, 0
      %p93 = por %p91, %p92
      %s94 = ssub.s32 %s13, %s20
      %p95 = scmp.eq.s32.totalorder %s94, 0
      %s97 = sadd.s32 %s96, 1
      %s98 = scalar_select %p95, %s96, %s97
      %p101 = pneg %p95
      %p102 = scmp.eq.s32.totalorder %s13, 1
      %p103 = por %p101, %p102
      %p104 = scmp.ne.s32.totalorder %s96, %s99
      %p105 = scmp.eq.s32.totalorder %s13, 0
      %p106 = por %p104, %p105
      %p107 = scmp.ne.s32.totalorder %s96, %s99
      %p108 = scmp.eq.s32.totalorder %s18, 1
      %p109 = por %p107, %p108
      %p110 = scmp.ne.s32.totalorder %s99, %s100
      %p111 = scmp.eq.s32.totalorder %s18, 0
      %p112 = por %p110, %p111
      %p113 = scmp.ne.s32.totalorder %s99, %s100
      %p114 = scmp.eq.s32.totalorder %s19, 1
      %p115 = por %p113, %p114
      %p117 = scmp.ne.s32.totalorder %s100, %s116
      %p118 = scmp.eq.s32.totalorder %s19, 0
      %p119 = por %p117, %p118
      %p120 = scmp.le.s32.totalorder 1, %s13
      %p121 = scmp.lt.s32.totalorder %s13, 3
      %p122 = pnand %p120, %p121
      %p123 = pneg %p122
      // Predicated region
      $region9: #{bottleneck_forward.4} parent=5 // pred_check
        _
      $region10: #{bottleneck_forward.4} parent=5 // pred_check_branch
        %125 = sbr.rel (%p122) target = $region12
      $region11: #{bottleneck_forward.4} parent=5 // pred_region
        %s126 = ssub.s32 %s13, 1
        // Predicated region
        $region13: #{bottleneck_forward.4} parent=11 // pred_check
          %p127 = pneg %p60
        $region14: #{bottleneck_forward.4} parent=11 // pred_check_branch
          %129 = sbr.rel (%p127) target = $region16
        $region15: #{bottleneck_forward.4} parent=11 // pred_region
          _
        $region16: #{bottleneck_forward.4} parent=11 // pred_fallthru
          _
      $region12: #{bottleneck_forward.4} parent=5 // pred_fallthru
        _
      %p130 = scmp.lt.s32.totalorder %s13, 2
      // Predicated region
      $region17: #{bottleneck_forward.4} parent=5 // pred_check
        %p131 = pneg %p130
      $region18: #{bottleneck_forward.4} parent=5 // pred_check_branch
        %133 = sbr.rel (%p131) target = $region20
      $region19: #{bottleneck_forward.4} parent=5 // pred_region
        // Predicated region
        $region21: #{bottleneck_forward.4} parent=19 // pred_check
          %p134 = pneg %p33
        $region22: #{bottleneck_forward.4} parent=19 // pred_check_branch
          %136 = sbr.rel (%p134) target = $region24
        $region23: #{bottleneck_forward.4} parent=19 // pred_region
          %s137 = sand.u32 %s23, 1
          %s138 = scalar_lea.sflag [#allocation3], %s137
          %s139 = sand.u32 %s23, 1
          %s140 = smul.addr %s139, 512
          %s141 = scalar_lea.vmem [#allocation2], %s140
          %s142 = smul.u32 64, %s13
          %s144 = ssub.s32 8192, 8192
          %145 = vsyncadd %s138, %s144
          %s146 = smul.addr %s142, 128
          %s147 = scalar_lea.hbm %s0, %s146
          %s148 = sshll.u32 %s141, 4
          %s149 = int_to_ptr.vmem [resolvable:$true] %s148
          %154 = dma.hbm_to_vmem [thread:$0]  %s147, 8192, %s149, %s138, 128, 128, 8
        $region24: #{bottleneck_forward.4} parent=19 // pred_fallthru
          _
      $region20: #{bottleneck_forward.4} parent=5 // pred_fallthru
        _
      %p155 = scmp.le.s32.totalorder 1, %s13
      %p156 = scmp.lt.s32.totalorder %s13, 3
      %p157 = pnand %p155, %p156
      %p158 = pneg %p157
      // Predicated region
      $region25: #{bottleneck_forward.4} parent=5 // pred_check
        _
      $region26: #{bottleneck_forward.4} parent=5 // pred_check_branch
        %160 = sbr.rel (%p157) target = $region28
      $region27: #{bottleneck_forward.4} parent=5 // pred_region
        %s161 = ssub.s32 %s13, 1
        %s162 = sand.u32 %s26, 1
        %s163 = scalar_lea.sflag [#allocation3], %s162
        %s164 = sand.u32 %s26, 1
        %s165 = smul.addr %s164, 512
        %s166 = scalar_lea.vmem [#allocation2], %s165
        // Predicated region
        $region29: #{bottleneck_forward.4} parent=27 // pred_check
          %p167 = pneg %p39
        $region30: #{bottleneck_forward.4} parent=27 // pred_check_branch
          %169 = sbr.rel (%p167) target = $region32
        $region31: #{bottleneck_forward.4} parent=27 // pred_region
          %170 = dma.done %s163, 8192
        $region32: #{bottleneck_forward.4} parent=27 // pred_fallthru
          _
        %s171 = sand.u32 %s26, 1
        %s172 = scalar_lea.sflag [#allocation3], %s171
        %s173 = sand.u32 %s26, 1
        %s174 = smul.addr %s173, 512
        %s175 = scalar_lea.vmem [#allocation2], %s174
        %p176 = pneg %p39
        %p177 = pneg %p36
        %p178 = pneg %p60
        %p179 = pneg %p57
        %p180 = pneg %p86
        %p181 = pneg %p83
        %s182 = smul.u32 64, %s18
        %p183 = scmp.lt.s32.totalorder %s182, 127
        %s184 = scalar_select %p183, %s182, 127
        %s185 = smul.addr %s184, 8
        %s186 = scalar_lea.vmem %s2, %s185
        %p187 = pneg %p112
        %p188 = pneg %p109
        %p189 = scmp.lt.s32.totalorder %s18, 1
        %s190 = scalar_select %p189, %s18, 1
        %s191 = smul.addr %s190, 2
        %s192 = scalar_lea.vmem %s3, %s191
        %s193 = smul.u32 64, %s18
        %s194 = smul.u32 64, %s18
        %p195 = scmp.lt.s32.totalorder %s194, 127
        %s196 = scalar_select %p195, %s194, 127
        %s197 = smul.addr %s196, 8
        %s198 = scalar_lea.vmem %s2, %s197
        %s199 = smul.u32 64, %s18
        %p200 = scmp.lt.s32.totalorder %s18, 1
        %s201 = scalar_select %p200, %s18, 1
        %s202 = smul.addr %s201, 2
        %s203 = scalar_lea.vmem %s3, %s202
        %v204 = vld [vmem:[%s166] sm:$0xff]
        %v205 = vld [vmem:[%s166 + $0x8] sm:$0xff]
        %v206 = vld [vmem:[%s166 + $0x10] sm:$0xff]
        %v207 = vld [vmem:[%s166 + $0x18] sm:$0xff]
        %v208 = vld [vmem:[%s166 + $0x20] sm:$0xff]
        %v209 = vld [vmem:[%s166 + $0x28] sm:$0xff]
        %v210 = vld [vmem:[%s166 + $0x30] sm:$0xff]
        %v211 = vld [vmem:[%s166 + $0x38] sm:$0xff]
        %v212 = vld [vmem:[%s166 + $0x40] sm:$0xff]
        %v213 = vld [vmem:[%s166 + $0x48] sm:$0xff]
        %v214 = vld [vmem:[%s166 + $0x50] sm:$0xff]
        %v215 = vld [vmem:[%s166 + $0x58] sm:$0xff]
        %v216 = vld [vmem:[%s166 + $0x60] sm:$0xff]
        %v217 = vld [vmem:[%s166 + $0x68] sm:$0xff]
        %v218 = vld [vmem:[%s166 + $0x70] sm:$0xff]
        %v219 = vld [vmem:[%s166 + $0x78] sm:$0xff]
        %v220 = vld [vmem:[%s166 + $0x80] sm:$0xff]
        %v221 = vld [vmem:[%s166 + $0x88] sm:$0xff]
        %v222 = vld [vmem:[%s166 + $0x90] sm:$0xff]
        %v223 = vld [vmem:[%s166 + $0x98] sm:$0xff]
        %v224 = vld [vmem:[%s166 + $0xa0] sm:$0xff]
        %v225 = vld [vmem:[%s166 + $0xa8] sm:$0xff]
        %v226 = vld [vmem:[%s166 + $0xb0] sm:$0xff]
        %v227 = vld [vmem:[%s166 + $0xb8] sm:$0xff]
        %v228 = vld [vmem:[%s166 + $0xc0] sm:$0xff]
        %v229 = vld [vmem:[%s166 + $0xc8] sm:$0xff]
        %v230 = vld [vmem:[%s166 + $0xd0] sm:$0xff]
        %v231 = vld [vmem:[%s166 + $0xd8] sm:$0xff]
        %v232 = vld [vmem:[%s166 + $0xe0] sm:$0xff]
        %v233 = vld [vmem:[%s166 + $0xe8] sm:$0xff]
        %v234 = vld [vmem:[%s166 + $0xf0] sm:$0xff]
        %v235 = vld [vmem:[%s166 + $0xf8] sm:$0xff]
        %v236 = vld [vmem:[%s166 + $0x100] sm:$0xff]
        %v237 = vld [vmem:[%s166 + $0x108] sm:$0xff]
        %v238 = vld [vmem:[%s166 + $0x110] sm:$0xff]
        %v239 = vld [vmem:[%s166 + $0x118] sm:$0xff]
        %v240 = vld [vmem:[%s166 + $0x120] sm:$0xff]
        %v241 = vld [vmem:[%s166 + $0x128] sm:$0xff]
        %v242 = vld [vmem:[%s166 + $0x130] sm:$0xff]
        %v243 = vld [vmem:[%s166 + $0x138] sm:$0xff]
        %v244 = vld [vmem:[%s166 + $0x140] sm:$0xff]
        %v245 = vld [vmem:[%s166 + $0x148] sm:$0xff]
        %v246 = vld [vmem:[%s166 + $0x150] sm:$0xff]
        %v247 = vld [vmem:[%s166 + $0x158] sm:$0xff]
        %v248 = vld [vmem:[%s166 + $0x160] sm:$0xff]
        %v249 = vld [vmem:[%s166 + $0x168] sm:$0xff]
        %v250 = vld [vmem:[%s166 + $0x170] sm:$0xff]
        %v251 = vld [vmem:[%s166 + $0x178] sm:$0xff]
        %v252 = vld [vmem:[%s166 + $0x180] sm:$0xff]
        %v253 = vld [vmem:[%s166 + $0x188] sm:$0xff]
        %v254 = vld [vmem:[%s166 + $0x190] sm:$0xff]
        %v255 = vld [vmem:[%s166 + $0x198] sm:$0xff]
        %v256 = vld [vmem:[%s166 + $0x1a0] sm:$0xff]
        %v257 = vld [vmem:[%s166 + $0x1a8] sm:$0xff]
        %v258 = vld [vmem:[%s166 + $0x1b0] sm:$0xff]
        %v259 = vld [vmem:[%s166 + $0x1b8] sm:$0xff]
        %v260 = vld [vmem:[%s166 + $0x1c0] sm:$0xff]
        %v261 = vld [vmem:[%s166 + $0x1c8] sm:$0xff]
        %v262 = vld [vmem:[%s166 + $0x1d0] sm:$0xff]
        %v263 = vld [vmem:[%s166 + $0x1d8] sm:$0xff]
        %v264 = vld [vmem:[%s166 + $0x1e0] sm:$0xff]
        %v265 = vld [vmem:[%s166 + $0x1e8] sm:$0xff]
        %v266 = vld [vmem:[%s166 + $0x1f0] sm:$0xff]
        %v267 = vld [vmem:[%s166 + $0x1f8] sm:$0xff]
        %v268 = vld [vmem:[%s1] sm:$0xff]
        %v269 = vld [vmem:[%s1 + $0x8] sm:$0xff]
        %v270 = vld [vmem:[%s1 + $0x10] sm:$0xff]
        %v271 = vld [vmem:[%s1 + $0x18] sm:$0xff]
        %v272 = vld [vmem:[%s1 + $0x20] sm:$0xff]
        %v273 = vld [vmem:[%s1 + $0x28] sm:$0xff]
        %v274 = vld [vmem:[%s1 + $0x30] sm:$0xff]
        %v275 = vld [vmem:[%s1 + $0x38] sm:$0xff]
        %vm276 = vcmask 523264
        %v278 = vsel %vm276, %v204, 0
        %v281 = vsel %vm276, %v205, 0
        %v284 = vsel %vm276, %v206, 0
        %v287 = vsel %vm276, %v207, 0
        %v290 = vsel %vm276, %v208, 0
        %v293 = vsel %vm276, %v209, 0
        %v296 = vsel %vm276, %v210, 0
        %v299 = vsel %vm276, %v211, 0
        %v302 = vsel %vm276, %v212, 0
        %v305 = vsel %vm276, %v213, 0
        %v308 = vsel %vm276, %v214, 0
        %v311 = vsel %vm276, %v215, 0
        %v314 = vsel %vm276, %v216, 0
        %v317 = vsel %vm276, %v217, 0
        %v320 = vsel %vm276, %v218, 0
        %v323 = vsel %vm276, %v219, 0
        %v326 = vsel %vm276, %v220, 0
        %v329 = vsel %vm276, %v221, 0
        %v332 = vsel %vm276, %v222, 0
        %v335 = vsel %vm276, %v223, 0
        %v338 = vsel %vm276, %v224, 0
        %v341 = vsel %vm276, %v225, 0
        %v344 = vsel %vm276, %v226, 0
        %v347 = vsel %vm276, %v227, 0
        %v350 = vsel %vm276, %v228, 0
        %v353 = vsel %vm276, %v229, 0
        %v356 = vsel %vm276, %v230, 0
        %v359 = vsel %vm276, %v231, 0
        %v362 = vsel %vm276, %v232, 0
        %v365 = vsel %vm276, %v233, 0
        %v368 = vsel %vm276, %v234, 0
        %v371 = vsel %vm276, %v235, 0
        %v374 = vsel %vm276, %v236, 0
        %v377 = vsel %vm276, %v237, 0
        %v380 = vsel %vm276, %v238, 0
        %v383 = vsel %vm276, %v239, 0
        %v386 = vsel %vm276, %v240, 0
        %v389 = vsel %vm276, %v241, 0
        %v392 = vsel %vm276, %v242, 0
        %v395 = vsel %vm276, %v243, 0
        %v398 = vsel %vm276, %v244, 0
        %v401 = vsel %vm276, %v245, 0
        %v404 = vsel %vm276, %v246, 0
        %v407 = vsel %vm276, %v247, 0
        %v410 = vsel %vm276, %v248, 0
        %v413 = vsel %vm276, %v249, 0
        %v416 = vsel %vm276, %v250, 0
        %v419 = vsel %vm276, %v251, 0
        %v422 = vsel %vm276, %v252, 0
        %v425 = vsel %vm276, %v253, 0
        %v428 = vsel %vm276, %v254, 0
        %v431 = vsel %vm276, %v255, 0
        %v434 = vsel %vm276, %v256, 0
        %v437 = vsel %vm276, %v257, 0
        %v440 = vsel %vm276, %v258, 0
        %v443 = vsel %vm276, %v259, 0
        %v446 = vsel %vm276, %v260, 0
        %v449 = vsel %vm276, %v261, 0
        %v452 = vsel %vm276, %v262, 0
        %v455 = vsel %vm276, %v263, 0
        %v458 = vsel %vm276, %v264, 0
        %v461 = vsel %vm276, %v265, 0
        %v464 = vsel %vm276, %v266, 0
        %v467 = vsel %vm276, %v267, 0
        %469 = vmatprep.subr.mxu0 0.0
        %470 = vmatpush1.msra.mxu0 0.0
        %471 = vmatprep.subr.mxu0 0.0
        %472 = vmatpush1.msra.mxu0 0.0
        %473 = vmatprep.subr.mxu0 0.0
        %474 = vmatpush1.msra.mxu0 0.0
        %475 = vmatprep.subr.mxu0 0.0
        %476 = vmatpush1.msra.mxu0 0.0
        %477 = vmatprep.subr.mxu0 0.0
        %478 = vmatpush1.msra.mxu0 0.0
        %479 = vmatprep.subr.mxu0 0.0
        %480 = vmatpush1.msra.mxu0 0.0
        %481 = vmatprep.subr.mxu0 0.0
        %482 = vmatpush1.msra.mxu0 0.0
        %483 = vmatprep.subr.mxu0 0.0
        %484 = vmatpush1.msra.mxu0 0.0
        %485 = vmatprep.subr.mxu0 0.0
        %486 = vmatpush1.msra.mxu0 %v275
        %487 = vmatprep.subr.mxu0 0.0
        %488 = vmatpush1.msra.mxu0 %v274
        %489 = vmatprep.subr.mxu0 0.0
        %490 = vmatpush1.msra.mxu0 %v273
        %491 = vmatprep.subr.mxu0 0.0
        %492 = vmatpush1.msra.mxu0 %v272
        %493 = vmatprep.subr.mxu0 0.0
        %494 = vmatpush1.msra.mxu0 %v271
        %495 = vmatprep.subr.mxu0 0.0
        %496 = vmatpush1.msra.mxu0 %v270
        %497 = vmatprep.subr.mxu0 0.0
        %498 = vmatpush1.msra.mxu0 %v269
        %499 = vmatprep.subr.mxu0 0.0
        %500 = vmatpush1.msra.mxu0 %v268
        %501 = vmatprep.subr.mxu0 0.0
        %502 = vmatpush2.msra.mxu0 0.0
        %503 = vmatprep.subr.mxu0 0.0
        %504 = vmatpush2.msra.mxu0 0.0
        %505 = vmatprep.subr.mxu0 0.0
        %506 = vmatpush2.msra.mxu0 0.0
        %507 = vmatprep.subr.mxu0 0.0
        %508 = vmatpush2.msra.mxu0 0.0
        %509 = vmatprep.subr.mxu0 0.0
        %510 = vmatpush2.msra.mxu0 0.0
        %511 = vmatprep.subr.mxu0 0.0
        %512 = vmatpush2.msra.mxu0 0.0
        %513 = vmatprep.subr.mxu0 0.0
        %514 = vmatpush2.msra.mxu0 0.0
        %515 = vmatprep.subr.mxu0 0.0
        %516 = vmatpush2.msra.mxu0 0.0
        %517 = vmatprep.subr.mxu0 0.0
        %518 = vmatpush2.msra.mxu0 0.0
        %519 = vmatprep.subr.mxu0 0.0
        %520 = vmatpush2.msra.mxu0 0.0
        %521 = vmatprep.subr.mxu0 0.0
        %522 = vmatpush2.msra.mxu0 0.0
        %523 = vmatprep.subr.mxu0 0.0
        %524 = vmatpush2.msra.mxu0 0.0
        %525 = vmatprep.subr.mxu0 0.0
        %526 = vmatpush2.msra.mxu0 0.0
        %527 = vmatprep.subr.mxu0 0.0
        %528 = vmatpush2.msra.mxu0 0.0
        %529 = vmatprep.subr.mxu0 0.0
        %530 = vmatpush2.msra.mxu0 0.0
        %531 = vmatprep.subr.mxu0 0.0
        %532 = vmatpush2.msra.mxu0 0.0
        %533 = vmatprep.mubr.f32.mxu0 0.0
        %534 = vmatmul.mubr.f32.gmra.mxu0 %v278
        %v535 = vpop.f32.mrf.mxu0
        %v536 = vadd.f32 0.0, %v535
        %v537 = vpop.f32.mrf.mxu0
        %538 = vmatprep.mubr.f32.mxu0 0.0
        %539 = vmatmul.mubr.f32.gmra.mxu0 %v281
        %v540 = vpop.f32.mrf.mxu0
        %v541 = vadd.f32 0.0, %v540
        %v542 = vpop.f32.mrf.mxu0
        %543 = vmatprep.mubr.f32.mxu0 0.0
        %544 = vmatmul.mubr.f32.gmra.mxu0 %v284
        %v545 = vpop.f32.mrf.mxu0
        %v546 = vadd.f32 0.0, %v545
        %v547 = vpop.f32.mrf.mxu0
        %548 = vmatprep.mubr.f32.mxu0 0.0
        %549 = vmatmul.mubr.f32.gmra.mxu0 %v287
        %v550 = vpop.f32.mrf.mxu0
        %v551 = vadd.f32 0.0, %v550
        %v552 = vpop.f32.mrf.mxu0
        %553 = vmatprep.mubr.f32.mxu0 0.0
        %554 = vmatmul.mubr.f32.gmra.mxu0 %v290
        %v555 = vpop.f32.mrf.mxu0
        %v556 = vadd.f32 0.0, %v555
        %v557 = vpop.f32.mrf.mxu0
        %558 = vmatprep.mubr.f32.mxu0 0.0
        %559 = vmatmul.mubr.f32.gmra.mxu0 %v293
        %v560 = vpop.f32.mrf.mxu0
        %v561 = vadd.f32 0.0, %v560
        %v562 = vpop.f32.mrf.mxu0
        %563 = vmatprep.mubr.f32.mxu0 0.0
        %564 = vmatmul.mubr.f32.gmra.mxu0 %v296
        %v565 = vpop.f32.mrf.mxu0
        %v566 = vadd.f32 0.0, %v565
        %v567 = vpop.f32.mrf.mxu0
        %568 = vmatprep.mubr.f32.mxu0 0.0
        %569 = vmatmul.mubr.f32.gmra.mxu0 %v299
        %v570 = vpop.f32.mrf.mxu0
        %v571 = vadd.f32 0.0, %v570
        %v572 = vpop.f32.mrf.mxu0
        %573 = vmatprep.mubr.f32.mxu0 0.0
        %574 = vmatmul.mubr.f32.gmra.mxu0 %v302
        %v575 = vpop.f32.mrf.mxu0
        %v576 = vadd.f32 0.0, %v575
        %v577 = vpop.f32.mrf.mxu0
        %578 = vmatprep.mubr.f32.mxu0 0.0
        %579 = vmatmul.mubr.f32.gmra.mxu0 %v305
        %v580 = vpop.f32.mrf.mxu0
        %v581 = vadd.f32 0.0, %v580
        %v582 = vpop.f32.mrf.mxu0
        %583 = vmatprep.mubr.f32.mxu0 0.0
        %584 = vmatmul.mubr.f32.gmra.mxu0 %v308
        %v585 = vpop.f32.mrf.mxu0
        %v586 = vadd.f32 0.0, %v585
        %v587 = vpop.f32.mrf.mxu0
        %588 = vmatprep.mubr.f32.mxu0 0.0
        %589 = vmatmul.mubr.f32.gmra.mxu0 %v311
        %v590 = vpop.f32.mrf.mxu0
        %v591 = vadd.f32 0.0, %v590
        %v592 = vpop.f32.mrf.mxu0
        %593 = vmatprep.mubr.f32.mxu0 0.0
        %594 = vmatmul.mubr.f32.gmra.mxu0 %v314
        %v595 = vpop.f32.mrf.mxu0
        %v596 = vadd.f32 0.0, %v595
        %v597 = vpop.f32.mrf.mxu0
        %598 = vmatprep.mubr.f32.mxu0 0.0
        %599 = vmatmul.mubr.f32.gmra.mxu0 %v317
        %v600 = vpop.f32.mrf.mxu0
        %v601 = vadd.f32 0.0, %v600
        %v602 = vpop.f32.mrf.mxu0
        %603 = vmatprep.mubr.f32.mxu0 0.0
        %604 = vmatmul.mubr.f32.gmra.mxu0 %v320
        %v605 = vpop.f32.mrf.mxu0
        %v606 = vadd.f32 0.0, %v605
        %v607 = vpop.f32.mrf.mxu0
        %608 = vmatprep.mubr.f32.mxu0 0.0
        %609 = vmatmul.mubr.f32.gmra.mxu0 %v323
        %v610 = vpop.f32.mrf.mxu0
        %v611 = vadd.f32 0.0, %v610
        %v612 = vpop.f32.mrf.mxu0
        %613 = vmatprep.mubr.f32.mxu0 0.0
        %614 = vmatmul.mubr.f32.gmra.mxu0 %v326
        %v615 = vpop.f32.mrf.mxu0
        %v616 = vadd.f32 0.0, %v615
        %v617 = vpop.f32.mrf.mxu0
        %618 = vmatprep.mubr.f32.mxu0 0.0
        %619 = vmatmul.mubr.f32.gmra.mxu0 %v329
        %v620 = vpop.f32.mrf.mxu0
        %v621 = vadd.f32 0.0, %v620
        %v622 = vpop.f32.mrf.mxu0
        %623 = vmatprep.mubr.f32.mxu0 0.0
        %624 = vmatmul.mubr.f32.gmra.mxu0 %v332
        %v625 = vpop.f32.mrf.mxu0
        %v626 = vadd.f32 0.0, %v625
        %v627 = vpop.f32.mrf.mxu0
        %628 = vmatprep.mubr.f32.mxu0 0.0
        %629 = vmatmul.mubr.f32.gmra.mxu0 %v335
        %v630 = vpop.f32.mrf.mxu0
        %v631 = vadd.f32 0.0, %v630
        %v632 = vpop.f32.mrf.mxu0
        %633 = vmatprep.mubr.f32.mxu0 0.0
        %634 = vmatmul.mubr.f32.gmra.mxu0 %v338
        %v635 = vpop.f32.mrf.mxu0
        %v636 = vadd.f32 0.0, %v635
        %v637 = vpop.f32.mrf.mxu0
        %638 = vmatprep.mubr.f32.mxu0 0.0
        %639 = vmatmul.mubr.f32.gmra.mxu0 %v341
        %v640 = vpop.f32.mrf.mxu0
        %v641 = vadd.f32 0.0, %v640
        %v642 = vpop.f32.mrf.mxu0
        %643 = vmatprep.mubr.f32.mxu0 0.0
        %644 = vmatmul.mubr.f32.gmra.mxu0 %v344
        %v645 = vpop.f32.mrf.mxu0
        %v646 = vadd.f32 0.0, %v645
        %v647 = vpop.f32.mrf.mxu0
        %648 = vmatprep.mubr.f32.mxu0 0.0
        %649 = vmatmul.mubr.f32.gmra.mxu0 %v347
        %v650 = vpop.f32.mrf.mxu0
        %v651 = vadd.f32 0.0, %v650
        %v652 = vpop.f32.mrf.mxu0
        %653 = vmatprep.mubr.f32.mxu0 0.0
        %654 = vmatmul.mubr.f32.gmra.mxu0 %v350
        %v655 = vpop.f32.mrf.mxu0
        %v656 = vadd.f32 0.0, %v655
        %v657 = vpop.f32.mrf.mxu0
        %658 = vmatprep.mubr.f32.mxu0 0.0
        %659 = vmatmul.mubr.f32.gmra.mxu0 %v353
        %v660 = vpop.f32.mrf.mxu0
        %v661 = vadd.f32 0.0, %v660
        %v662 = vpop.f32.mrf.mxu0
        %663 = vmatprep.mubr.f32.mxu0 0.0
        %664 = vmatmul.mubr.f32.gmra.mxu0 %v356
        %v665 = vpop.f32.mrf.mxu0
        %v666 = vadd.f32 0.0, %v665
        %v667 = vpop.f32.mrf.mxu0
        %668 = vmatprep.mubr.f32.mxu0 0.0
        %669 = vmatmul.mubr.f32.gmra.mxu0 %v359
        %v670 = vpop.f32.mrf.mxu0
        %v671 = vadd.f32 0.0, %v670
        %v672 = vpop.f32.mrf.mxu0
        %673 = vmatprep.mubr.f32.mxu0 0.0
        %674 = vmatmul.mubr.f32.gmra.mxu0 %v362
        %v675 = vpop.f32.mrf.mxu0
        %v676 = vadd.f32 0.0, %v675
        %v677 = vpop.f32.mrf.mxu0
        %678 = vmatprep.mubr.f32.mxu0 0.0
        %679 = vmatmul.mubr.f32.gmra.mxu0 %v365
        %v680 = vpop.f32.mrf.mxu0
        %v681 = vadd.f32 0.0, %v680
        %v682 = vpop.f32.mrf.mxu0
        %683 = vmatprep.mubr.f32.mxu0 0.0
        %684 = vmatmul.mubr.f32.gmra.mxu0 %v368
        %v685 = vpop.f32.mrf.mxu0
        %v686 = vadd.f32 0.0, %v685
        %v687 = vpop.f32.mrf.mxu0
        %688 = vmatprep.mubr.f32.mxu0 0.0
        %689 = vmatmul.mubr.f32.gmra.mxu0 %v371
        %v690 = vpop.f32.mrf.mxu0
        %v691 = vadd.f32 0.0, %v690
        %v692 = vpop.f32.mrf.mxu0
        %693 = vmatprep.mubr.f32.mxu0 0.0
        %694 = vmatmul.mubr.f32.gmra.mxu0 %v374
        %v695 = vpop.f32.mrf.mxu0
        %v696 = vadd.f32 0.0, %v695
        %v697 = vpop.f32.mrf.mxu0
        %698 = vmatprep.mubr.f32.mxu0 0.0
        %699 = vmatmul.mubr.f32.gmra.mxu0 %v377
        %v700 = vpop.f32.mrf.mxu0
        %v701 = vadd.f32 0.0, %v700
        %v702 = vpop.f32.mrf.mxu0
        %703 = vmatprep.mubr.f32.mxu0 0.0
        %704 = vmatmul.mubr.f32.gmra.mxu0 %v380
        %v705 = vpop.f32.mrf.mxu0
        %v706 = vadd.f32 0.0, %v705
        %v707 = vpop.f32.mrf.mxu0
        %708 = vmatprep.mubr.f32.mxu0 0.0
        %709 = vmatmul.mubr.f32.gmra.mxu0 %v383
        %v710 = vpop.f32.mrf.mxu0
        %v711 = vadd.f32 0.0, %v710
        %v712 = vpop.f32.mrf.mxu0
        %713 = vmatprep.mubr.f32.mxu0 0.0
        %714 = vmatmul.mubr.f32.gmra.mxu0 %v386
        %v715 = vpop.f32.mrf.mxu0
        %v716 = vadd.f32 0.0, %v715
        %v717 = vpop.f32.mrf.mxu0
        %718 = vmatprep.mubr.f32.mxu0 0.0
        %719 = vmatmul.mubr.f32.gmra.mxu0 %v389
        %v720 = vpop.f32.mrf.mxu0
        %v721 = vadd.f32 0.0, %v720
        %v722 = vpop.f32.mrf.mxu0
        %723 = vmatprep.mubr.f32.mxu0 0.0
        %724 = vmatmul.mubr.f32.gmra.mxu0 %v392
        %v725 = vpop.f32.mrf.mxu0
        %v726 = vadd.f32 0.0, %v725
        %v727 = vpop.f32.mrf.mxu0
        %728 = vmatprep.mubr.f32.mxu0 0.0
        %729 = vmatmul.mubr.f32.gmra.mxu0 %v395
        %v730 = vpop.f32.mrf.mxu0
        %v731 = vadd.f32 0.0, %v730
        %v732 = vpop.f32.mrf.mxu0
        %733 = vmatprep.mubr.f32.mxu0 0.0
        %734 = vmatmul.mubr.f32.gmra.mxu0 %v398
        %v735 = vpop.f32.mrf.mxu0
        %v736 = vadd.f32 0.0, %v735
        %v737 = vpop.f32.mrf.mxu0
        %738 = vmatprep.mubr.f32.mxu0 0.0
        %739 = vmatmul.mubr.f32.gmra.mxu0 %v401
        %v740 = vpop.f32.mrf.mxu0
        %v741 = vadd.f32 0.0, %v740
        %v742 = vpop.f32.mrf.mxu0
        %743 = vmatprep.mubr.f32.mxu0 0.0
        %744 = vmatmul.mubr.f32.gmra.mxu0 %v404
        %v745 = vpop.f32.mrf.mxu0
        %v746 = vadd.f32 0.0, %v745
        %v747 = vpop.f32.mrf.mxu0
        %748 = vmatprep.mubr.f32.mxu0 0.0
        %749 = vmatmul.mubr.f32.gmra.mxu0 %v407
        %v750 = vpop.f32.mrf.mxu0
        %v751 = vadd.f32 0.0, %v750
        %v752 = vpop.f32.mrf.mxu0
        %753 = vmatprep.mubr.f32.mxu0 0.0
        %754 = vmatmul.mubr.f32.gmra.mxu0 %v410
        %v755 = vpop.f32.mrf.mxu0
        %v756 = vadd.f32 0.0, %v755
        %v757 = vpop.f32.mrf.mxu0
        %758 = vmatprep.mubr.f32.mxu0 0.0
        %759 = vmatmul.mubr.f32.gmra.mxu0 %v413
        %v760 = vpop.f32.mrf.mxu0
        %v761 = vadd.f32 0.0, %v760
        %v762 = vpop.f32.mrf.mxu0
        %763 = vmatprep.mubr.f32.mxu0 0.0
        %764 = vmatmul.mubr.f32.gmra.mxu0 %v416
        %v765 = vpop.f32.mrf.mxu0
        %v766 = vadd.f32 0.0, %v765
        %v767 = vpop.f32.mrf.mxu0
        %768 = vmatprep.mubr.f32.mxu0 0.0
        %769 = vmatmul.mubr.f32.gmra.mxu0 %v419
        %v770 = vpop.f32.mrf.mxu0
        %v771 = vadd.f32 0.0, %v770
        %v772 = vpop.f32.mrf.mxu0
        %773 = vmatprep.mubr.f32.mxu0 0.0
        %774 = vmatmul.mubr.f32.gmra.mxu0 %v422
        %v775 = vpop.f32.mrf.mxu0
        %v776 = vadd.f32 0.0, %v775
        %v777 = vpop.f32.mrf.mxu0
        %778 = vmatprep.mubr.f32.mxu0 0.0
        %779 = vmatmul.mubr.f32.gmra.mxu0 %v425
        %v780 = vpop.f32.mrf.mxu0
        %v781 = vadd.f32 0.0, %v780
        %v782 = vpop.f32.mrf.mxu0
        %783 = vmatprep.mubr.f32.mxu0 0.0
        %784 = vmatmul.mubr.f32.gmra.mxu0 %v428
        %v785 = vpop.f32.mrf.mxu0
        %v786 = vadd.f32 0.0, %v785
        %v787 = vpop.f32.mrf.mxu0
        %788 = vmatprep.mubr.f32.mxu0 0.0
        %789 = vmatmul.mubr.f32.gmra.mxu0 %v431
        %v790 = vpop.f32.mrf.mxu0
        %v791 = vadd.f32 0.0, %v790
        %v792 = vpop.f32.mrf.mxu0
        %793 = vmatprep.mubr.f32.mxu0 0.0
        %794 = vmatmul.mubr.f32.gmra.mxu0 %v434
        %v795 = vpop.f32.mrf.mxu0
        %v796 = vadd.f32 0.0, %v795
        %v797 = vpop.f32.mrf.mxu0
        %798 = vmatprep.mubr.f32.mxu0 0.0
        %799 = vmatmul.mubr.f32.gmra.mxu0 %v437
        %v800 = vpop.f32.mrf.mxu0
        %v801 = vadd.f32 0.0, %v800
        %v802 = vpop.f32.mrf.mxu0
        %803 = vmatprep.mubr.f32.mxu0 0.0
        %804 = vmatmul.mubr.f32.gmra.mxu0 %v440
        %v805 = vpop.f32.mrf.mxu0
        %v806 = vadd.f32 0.0, %v805
        %v807 = vpop.f32.mrf.mxu0
        %808 = vmatprep.mubr.f32.mxu0 0.0
        %809 = vmatmul.mubr.f32.gmra.mxu0 %v443
        %v810 = vpop.f32.mrf.mxu0
        %v811 = vadd.f32 0.0, %v810
        %v812 = vpop.f32.mrf.mxu0
        %813 = vmatprep.mubr.f32.mxu0 0.0
        %814 = vmatmul.mubr.f32.gmra.mxu0 %v446
        %v815 = vpop.f32.mrf.mxu0
        %v816 = vadd.f32 0.0, %v815
        %v817 = vpop.f32.mrf.mxu0
        %818 = vmatprep.mubr.f32.mxu0 0.0
        %819 = vmatmul.mubr.f32.gmra.mxu0 %v449
        %v820 = vpop.f32.mrf.mxu0
        %v821 = vadd.f32 0.0, %v820
        %v822 = vpop.f32.mrf.mxu0
        %823 = vmatprep.mubr.f32.mxu0 0.0
        %824 = vmatmul.mubr.f32.gmra.mxu0 %v452
        %v825 = vpop.f32.mrf.mxu0
        %v826 = vadd.f32 0.0, %v825
        %v827 = vpop.f32.mrf.mxu0
        %828 = vmatprep.mubr.f32.mxu0 0.0
        %829 = vmatmul.mubr.f32.gmra.mxu0 %v455
        %v830 = vpop.f32.mrf.mxu0
        %v831 = vadd.f32 0.0, %v830
        %v832 = vpop.f32.mrf.mxu0
        %833 = vmatprep.mubr.f32.mxu0 0.0
        %834 = vmatmul.mubr.f32.gmra.mxu0 %v458
        %v835 = vpop.f32.mrf.mxu0
        %v836 = vadd.f32 0.0, %v835
        %v837 = vpop.f32.mrf.mxu0
        %838 = vmatprep.mubr.f32.mxu0 0.0
        %839 = vmatmul.mubr.f32.gmra.mxu0 %v461
        %v840 = vpop.f32.mrf.mxu0
        %v841 = vadd.f32 0.0, %v840
        %v842 = vpop.f32.mrf.mxu0
        %843 = vmatprep.mubr.f32.mxu0 0.0
        %844 = vmatmul.mubr.f32.gmra.mxu0 %v464
        %v845 = vpop.f32.mrf.mxu0
        %v846 = vadd.f32 0.0, %v845
        %v847 = vpop.f32.mrf.mxu0
        %848 = vmatprep.mubr.f32.mxu0 0.0
        %849 = vmatmul.mubr.f32.gmra.mxu0 %v467
        %v850 = vpop.f32.mrf.mxu0
        %v851 = vadd.f32 0.0, %v850
        %v852 = vpop.f32.mrf.mxu0
        %853 = vdwg.mxu0
        %854 = vst [vmem:[%s198] sm:$0xff] %v536
        %855 = vst [vmem:[%s198 + $0x8] sm:$0xff] %v541
        %856 = vst [vmem:[%s198 + $0x10] sm:$0xff] %v546
        %857 = vst [vmem:[%s198 + $0x18] sm:$0xff] %v551
        %858 = vst [vmem:[%s198 + $0x20] sm:$0xff] %v556
        %859 = vst [vmem:[%s198 + $0x28] sm:$0xff] %v561
        %860 = vst [vmem:[%s198 + $0x30] sm:$0xff] %v566
        %861 = vst [vmem:[%s198 + $0x38] sm:$0xff] %v571
        %862 = vst [vmem:[%s198 + $0x40] sm:$0xff] %v576
        %863 = vst [vmem:[%s198 + $0x48] sm:$0xff] %v581
        %864 = vst [vmem:[%s198 + $0x50] sm:$0xff] %v586
        %865 = vst [vmem:[%s198 + $0x58] sm:$0xff] %v591
        %866 = vst [vmem:[%s198 + $0x60] sm:$0xff] %v596
        %867 = vst [vmem:[%s198 + $0x68] sm:$0xff] %v601
        %868 = vst [vmem:[%s198 + $0x70] sm:$0xff] %v606
        %869 = vst [vmem:[%s198 + $0x78] sm:$0xff] %v611
        %870 = vst [vmem:[%s198 + $0x80] sm:$0xff] %v616
        %871 = vst [vmem:[%s198 + $0x88] sm:$0xff] %v621
        %872 = vst [vmem:[%s198 + $0x90] sm:$0xff] %v626
        %873 = vst [vmem:[%s198 + $0x98] sm:$0xff] %v631
        %874 = vst [vmem:[%s198 + $0xa0] sm:$0xff] %v636
        %875 = vst [vmem:[%s198 + $0xa8] sm:$0xff] %v641
        %876 = vst [vmem:[%s198 + $0xb0] sm:$0xff] %v646
        %877 = vst [vmem:[%s198 + $0xb8] sm:$0xff] %v651
        %878 = vst [vmem:[%s198 + $0xc0] sm:$0xff] %v656
        %879 = vst [vmem:[%s198 + $0xc8] sm:$0xff] %v661
        %880 = vst [vmem:[%s198 + $0xd0] sm:$0xff] %v666
        %881 = vst [vmem:[%s198 + $0xd8] sm:$0xff] %v671
        %882 = vst [vmem:[%s198 + $0xe0] sm:$0xff] %v676
        %883 = vst [vmem:[%s198 + $0xe8] sm:$0xff] %v681
        %884 = vst [vmem:[%s198 + $0xf0] sm:$0xff] %v686
        %885 = vst [vmem:[%s198 + $0xf8] sm:$0xff] %v691
        %886 = vst [vmem:[%s198 + $0x100] sm:$0xff] %v696
        %887 = vst [vmem:[%s198 + $0x108] sm:$0xff] %v701
        %888 = vst [vmem:[%s198 + $0x110] sm:$0xff] %v706
        %889 = vst [vmem:[%s198 + $0x118] sm:$0xff] %v711
        %890 = vst [vmem:[%s198 + $0x120] sm:$0xff] %v716
        %891 = vst [vmem:[%s198 + $0x128] sm:$0xff] %v721
        %892 = vst [vmem:[%s198 + $0x130] sm:$0xff] %v726
        %893 = vst [vmem:[%s198 + $0x138] sm:$0xff] %v731
        %894 = vst [vmem:[%s198 + $0x140] sm:$0xff] %v736
        %895 = vst [vmem:[%s198 + $0x148] sm:$0xff] %v741
        %896 = vst [vmem:[%s198 + $0x150] sm:$0xff] %v746
        %897 = vst [vmem:[%s198 + $0x158] sm:$0xff] %v751
        %898 = vst [vmem:[%s198 + $0x160] sm:$0xff] %v756
        %899 = vst [vmem:[%s198 + $0x168] sm:$0xff] %v761
        %900 = vst [vmem:[%s198 + $0x170] sm:$0xff] %v766
        %901 = vst [vmem:[%s198 + $0x178] sm:$0xff] %v771
        %902 = vst [vmem:[%s198 + $0x180] sm:$0xff] %v776
        %903 = vst [vmem:[%s198 + $0x188] sm:$0xff] %v781
        %904 = vst [vmem:[%s198 + $0x190] sm:$0xff] %v786
        %905 = vst [vmem:[%s198 + $0x198] sm:$0xff] %v791
        %906 = vst [vmem:[%s198 + $0x1a0] sm:$0xff] %v796
        %907 = vst [vmem:[%s198 + $0x1a8] sm:$0xff] %v801
        %908 = vst [vmem:[%s198 + $0x1b0] sm:$0xff] %v806
        %909 = vst [vmem:[%s198 + $0x1b8] sm:$0xff] %v811
        %910 = vst [vmem:[%s198 + $0x1c0] sm:$0xff] %v816
        %911 = vst [vmem:[%s198 + $0x1c8] sm:$0xff] %v821
        %912 = vst [vmem:[%s198 + $0x1d0] sm:$0xff] %v826
        %913 = vst [vmem:[%s198 + $0x1d8] sm:$0xff] %v831
        %914 = vst [vmem:[%s198 + $0x1e0] sm:$0xff] %v836
        %915 = vst [vmem:[%s198 + $0x1e8] sm:$0xff] %v841
        %916 = vst [vmem:[%s198 + $0x1f0] sm:$0xff] %v846
        %917 = vst [vmem:[%s198 + $0x1f8] sm:$0xff] %v851
        %v918 = vadd.f32 %v536, %v541
        %v919 = vadd.f32 %v918, %v546
        %v920 = vadd.f32 %v919, %v551
        %v921 = vadd.f32 %v920, %v556
        %v922 = vadd.f32 %v921, %v561
        %v923 = vadd.f32 %v922, %v566
        %v924 = vadd.f32 %v923, %v571
        %v925 = vadd.f32 %v924, %v576
        %v926 = vadd.f32 %v925, %v581
        %v927 = vadd.f32 %v926, %v586
        %v928 = vadd.f32 %v927, %v591
        %v929 = vadd.f32 %v928, %v596
        %v930 = vadd.f32 %v929, %v601
        %v931 = vadd.f32 %v930, %v606
        %v932 = vadd.f32 %v931, %v611
        %v933 = vadd.f32 %v932, %v616
        %v934 = vadd.f32 %v933, %v621
        %v935 = vadd.f32 %v934, %v626
        %v936 = vadd.f32 %v935, %v631
        %v937 = vadd.f32 %v936, %v636
        %v938 = vadd.f32 %v937, %v641
        %v939 = vadd.f32 %v938, %v646
        %v940 = vadd.f32 %v939, %v651
        %v941 = vadd.f32 %v940, %v656
        %v942 = vadd.f32 %v941, %v661
        %v943 = vadd.f32 %v942, %v666
        %v944 = vadd.f32 %v943, %v671
        %v945 = vadd.f32 %v944, %v676
        %v946 = vadd.f32 %v945, %v681
        %v947 = vadd.f32 %v946, %v686
        %v948 = vadd.f32 %v947, %v691
        %v949 = vadd.f32 %v948, %v696
        %v950 = vadd.f32 %v949, %v701
        %v951 = vadd.f32 %v950, %v706
        %v952 = vadd.f32 %v951, %v711
        %v953 = vadd.f32 %v952, %v716
        %v954 = vadd.f32 %v953, %v721
        %v955 = vadd.f32 %v954, %v726
        %v956 = vadd.f32 %v955, %v731
        %v957 = vadd.f32 %v956, %v736
        %v958 = vadd.f32 %v957, %v741
        %v959 = vadd.f32 %v958, %v746
        %v960 = vadd.f32 %v959, %v751
        %v961 = vadd.f32 %v960, %v756
        %v962 = vadd.f32 %v961, %v761
        %v963 = vadd.f32 %v962, %v766
        %v964 = vadd.f32 %v963, %v771
        %v965 = vadd.f32 %v964, %v776
        %v966 = vadd.f32 %v965, %v781
        %v967 = vadd.f32 %v966, %v786
        %v968 = vadd.f32 %v967, %v791
        %v969 = vadd.f32 %v968, %v796
        %v970 = vadd.f32 %v969, %v801
        %v971 = vadd.f32 %v970, %v806
        %v972 = vadd.f32 %v971, %v811
        %v973 = vadd.f32 %v972, %v816
        %v974 = vadd.f32 %v973, %v821
        %v975 = vadd.f32 %v974, %v826
        %v976 = vadd.f32 %v975, %v831
        %v977 = vadd.f32 %v976, %v836
        %v978 = vadd.f32 %v977, %v841
        %v979 = vadd.f32 %v978, %v846
        %v980 = vadd.f32 %v979, %v851
        %v981 = vrot.slane %v980, 4
        %v982 = vadd.f32 %v980, %v981
        %v983 = vrot.slane %v982, 2
        %v984 = vadd.f32 %v982, %v983
        %v985 = vrot.slane %v984, 1
        %v986 = vadd.f32 %v984, %v985
        %v987 = vmul.f32 %v536, %v536
        %v988 = vmul.f32 %v541, %v541
        %v989 = vmul.f32 %v546, %v546
        %v990 = vmul.f32 %v551, %v551
        %v991 = vmul.f32 %v556, %v556
        %v992 = vmul.f32 %v561, %v561
        %v993 = vmul.f32 %v566, %v566
        %v994 = vmul.f32 %v571, %v571
        %v995 = vmul.f32 %v576, %v576
        %v996 = vmul.f32 %v581, %v581
        %v997 = vmul.f32 %v586, %v586
        %v998 = vmul.f32 %v591, %v591
        %v999 = vmul.f32 %v596, %v596
        %v1000 = vmul.f32 %v601, %v601
        %v1001 = vmul.f32 %v606, %v606
        %v1002 = vmul.f32 %v611, %v611
        %v1003 = vmul.f32 %v616, %v616
        %v1004 = vmul.f32 %v621, %v621
        %v1005 = vmul.f32 %v626, %v626
        %v1006 = vmul.f32 %v631, %v631
        %v1007 = vmul.f32 %v636, %v636
        %v1008 = vmul.f32 %v641, %v641
        %v1009 = vmul.f32 %v646, %v646
        %v1010 = vmul.f32 %v651, %v651
        %v1011 = vmul.f32 %v656, %v656
        %v1012 = vmul.f32 %v661, %v661
        %v1013 = vmul.f32 %v666, %v666
        %v1014 = vmul.f32 %v671, %v671
        %v1015 = vmul.f32 %v676, %v676
        %v1016 = vmul.f32 %v681, %v681
        %v1017 = vmul.f32 %v686, %v686
        %v1018 = vmul.f32 %v691, %v691
        %v1019 = vmul.f32 %v696, %v696
        %v1020 = vmul.f32 %v701, %v701
        %v1021 = vmul.f32 %v706, %v706
        %v1022 = vmul.f32 %v711, %v711
        %v1023 = vmul.f32 %v716, %v716
        %v1024 = vmul.f32 %v721, %v721
        %v1025 = vmul.f32 %v726, %v726
        %v1026 = vmul.f32 %v731, %v731
        %v1027 = vmul.f32 %v736, %v736
        %v1028 = vmul.f32 %v741, %v741
        %v1029 = vmul.f32 %v746, %v746
        %v1030 = vmul.f32 %v751, %v751
        %v1031 = vmul.f32 %v756, %v756
        %v1032 = vmul.f32 %v761, %v761
        %v1033 = vmul.f32 %v766, %v766
        %v1034 = vmul.f32 %v771, %v771
        %v1035 = vmul.f32 %v776, %v776
        %v1036 = vmul.f32 %v781, %v781
        %v1037 = vmul.f32 %v786, %v786
        %v1038 = vmul.f32 %v791, %v791
        %v1039 = vmul.f32 %v796, %v796
        %v1040 = vmul.f32 %v801, %v801
        %v1041 = vmul.f32 %v806, %v806
        %v1042 = vmul.f32 %v811, %v811
        %v1043 = vmul.f32 %v816, %v816
        %v1044 = vmul.f32 %v821, %v821
        %v1045 = vmul.f32 %v826, %v826
        %v1046 = vmul.f32 %v831, %v831
        %v1047 = vmul.f32 %v836, %v836
        %v1048 = vmul.f32 %v841, %v841
        %v1049 = vmul.f32 %v846, %v846
        %v1050 = vmul.f32 %v851, %v851
        %v1051 = vadd.f32 %v987, %v988
        %v1052 = vadd.f32 %v1051, %v989
        %v1053 = vadd.f32 %v1052, %v990
        %v1054 = vadd.f32 %v1053, %v991
        %v1055 = vadd.f32 %v1054, %v992
        %v1056 = vadd.f32 %v1055, %v993
        %v1057 = vadd.f32 %v1056, %v994
        %v1058 = vadd.f32 %v1057, %v995
        %v1059 = vadd.f32 %v1058, %v996
        %v1060 = vadd.f32 %v1059, %v997
        %v1061 = vadd.f32 %v1060, %v998
        %v1062 = vadd.f32 %v1061, %v999
        %v1063 = vadd.f32 %v1062, %v1000
        %v1064 = vadd.f32 %v1063, %v1001
        %v1065 = vadd.f32 %v1064, %v1002
        %v1066 = vadd.f32 %v1065, %v1003
        %v1067 = vadd.f32 %v1066, %v1004
        %v1068 = vadd.f32 %v1067, %v1005
        %v1069 = vadd.f32 %v1068, %v1006
        %v1070 = vadd.f32 %v1069, %v1007
        %v1071 = vadd.f32 %v1070, %v1008
        %v1072 = vadd.f32 %v1071, %v1009
        %v1073 = vadd.f32 %v1072, %v1010
        %v1074 = vadd.f32 %v1073, %v1011
        %v1075 = vadd.f32 %v1074, %v1012
        %v1076 = vadd.f32 %v1075, %v1013
        %v1077 = vadd.f32 %v1076, %v1014
        %v1078 = vadd.f32 %v1077, %v1015
        %v1079 = vadd.f32 %v1078, %v1016
        %v1080 = vadd.f32 %v1079, %v1017
        %v1081 = vadd.f32 %v1080, %v1018
        %v1082 = vadd.f32 %v1081, %v1019
        %v1083 = vadd.f32 %v1082, %v1020
        %v1084 = vadd.f32 %v1083, %v1021
        %v1085 = vadd.f32 %v1084, %v1022
        %v1086 = vadd.f32 %v1085, %v1023
        %v1087 = vadd.f32 %v1086, %v1024
        %v1088 = vadd.f32 %v1087, %v1025
        %v1089 = vadd.f32 %v1088, %v1026
        %v1090 = vadd.f32 %v1089, %v1027
        %v1091 = vadd.f32 %v1090, %v1028
        %v1092 = vadd.f32 %v1091, %v1029
        %v1093 = vadd.f32 %v1092, %v1030
        %v1094 = vadd.f32 %v1093, %v1031
        %v1095 = vadd.f32 %v1094, %v1032
        %v1096 = vadd.f32 %v1095, %v1033
        %v1097 = vadd.f32 %v1096, %v1034
        %v1098 = vadd.f32 %v1097, %v1035
        %v1099 = vadd.f32 %v1098, %v1036
        %v1100 = vadd.f32 %v1099, %v1037
        %v1101 = vadd.f32 %v1100, %v1038
        %v1102 = vadd.f32 %v1101, %v1039
        %v1103 = vadd.f32 %v1102, %v1040
        %v1104 = vadd.f32 %v1103, %v1041
        %v1105 = vadd.f32 %v1104, %v1042
        %v1106 = vadd.f32 %v1105, %v1043
        %v1107 = vadd.f32 %v1106, %v1044
        %v1108 = vadd.f32 %v1107, %v1045
        %v1109 = vadd.f32 %v1108, %v1046
        %v1110 = vadd.f32 %v1109, %v1047
        %v1111 = vadd.f32 %v1110, %v1048
        %v1112 = vadd.f32 %v1111, %v1049
        %v1113 = vadd.f32 %v1112, %v1050
        %v1114 = vrot.slane %v1113, 4
        %v1115 = vadd.f32 %v1113, %v1114
        %v1116 = vrot.slane %v1115, 2
        %v1117 = vadd.f32 %v1115, %v1116
        %v1118 = vrot.slane %v1117, 1
        %v1119 = vadd.f32 %v1117, %v1118
        %vm1120 = vcmask 1040384
        %v1121 = vsel %vm1120, %v986, %v1119
        %1122 = vst [vmem:[%s203] sm:$0x3] %v1121
        %s1123 = smul.u32 64, %s18
        %p1124 = scmp.lt.s32.totalorder %s1123, 127
        %s1125 = scalar_select %p1124, %s1123, 127
        %s1126 = smul.addr %s1125, 8
        %s1127 = scalar_lea.vmem %s2, %s1126
        %p1128 = scmp.lt.s32.totalorder %s18, 1
        %s1129 = scalar_select %p1128, %s18, 1
        %s1130 = smul.addr %s1129, 2
        %s1131 = scalar_lea.vmem %s3, %s1130
        // Predicated region
        $region33: #{bottleneck_forward.4} parent=27 // pred_check
          %p1132 = pneg %p83
        $region34: #{bottleneck_forward.4} parent=27 // pred_check_branch
          %1134 = sbr.rel (%p1132) target = $region36
        $region35: #{bottleneck_forward.4} parent=27 // pred_region
          %s1135 = smul.u32 64, %s18
        $region36: #{bottleneck_forward.4} parent=27 // pred_fallthru
          _
        // Predicated region
        $region37: #{bottleneck_forward.4} parent=27 // pred_check
          %p1136 = pneg %p109
        $region38: #{bottleneck_forward.4} parent=27 // pred_check_branch
          %1138 = sbr.rel (%p1136) target = $region40
        $region39: #{bottleneck_forward.4} parent=27 // pred_region
          _
        $region40: #{bottleneck_forward.4} parent=27 // pred_fallthru
          _
      $region28: #{bottleneck_forward.4} parent=5 // pred_fallthru
        _
      %p1139 = scmp.le.s32.totalorder 2, %s13
      // Predicated region
      $region41: #{bottleneck_forward.4} parent=5 // pred_check
        %p1140 = pneg %p1139
      $region42: #{bottleneck_forward.4} parent=5 // pred_check_branch
        %1142 = sbr.rel (%p1140) target = $region44
      $region43: #{bottleneck_forward.4} parent=5 // pred_region
        %s1143 = ssub.s32 %s13, 2
        // Predicated region
        $region45: #{bottleneck_forward.4} parent=43 // pred_check
          %p1144 = pneg %p89
        $region46: #{bottleneck_forward.4} parent=43 // pred_check_branch
          %1146 = sbr.rel (%p1144) target = $region48
        $region47: #{bottleneck_forward.4} parent=43 // pred_region
          %s1147 = smul.u32 64, %s19
          %p1148 = scmp.lt.s32.totalorder %s1147, 127
          %s1149 = scalar_select %p1148, %s1147, 127
          %s1150 = smul.addr %s1149, 8
          %s1151 = scalar_lea.vmem %s2, %s1150
        $region48: #{bottleneck_forward.4} parent=43 // pred_fallthru
          _
        // Predicated region
        $region49: #{bottleneck_forward.4} parent=43 // pred_check
          %p1152 = pneg %p115
        $region50: #{bottleneck_forward.4} parent=43 // pred_check_branch
          %1154 = sbr.rel (%p1152) target = $region52
        $region51: #{bottleneck_forward.4} parent=43 // pred_region
          %p1155 = scmp.lt.s32.totalorder %s19, 1
          %s1156 = scalar_select %p1155, %s19, 1
          %s1157 = smul.addr %s1156, 2
          %s1158 = scalar_lea.vmem %s3, %s1157
        $region52: #{bottleneck_forward.4} parent=43 // pred_fallthru
          _
      $region44: #{bottleneck_forward.4} parent=5 // pred_fallthru
        _
    $region6: #{bottleneck_forward.4} parent=1 // loop_footer
      %s17 = sadd.s32 1, %s13
    $region7: #{bottleneck_forward.4} parent=1 // loop_footer_branch
      %12 = sbr.rel target = $region3
    $region8: #{bottleneck_forward.4} parent=1 // loop_exit
      _
    %1159 = vsyncpa [#allocation3], 1
    %s1160 = scalar_lea.sflag [#allocation3], 1
    %1161 = vsyncpa %s1160, 1

// kernel: bottleneck_forward.6
$region0: #{bottleneck_forward.6}
  #allocation0 [shape = 'u32[]', space=smem, size = 0x4, offset = 0x4, fixed_abs, tag = 'smem constant byte address 0x4 - core index']
  #allocation1 [shape = 'u32[144,128]{1,0:T(1,128)}', space=vmem, size = 0x12000, scoped, tag = 'internal scratch']
  %s0 = inlined_call_operand.vmem [shape: f32[1024,128], index: 0, kind: input, shape index: {}]
  %s1 = inlined_call_operand.vmem [shape: f32[2,128], index: 1, kind: input, shape index: {}]
  %s2 = inlined_call_operand.vmem [shape: f32[1,128], index: 2, kind: input, shape index: {}]
  %s3 = inlined_call_operand.vmem [shape: f32[1,128], index: 3, kind: input, shape index: {}]
  %s4 = inlined_call_operand.vmem [shape: f32[128,128], index: 4, kind: input, shape index: {}]
  %s5 = inlined_call_operand.vmem [shape: f32[1024,128], index: 5, kind: output, shape index: {0}]
  %s6 = inlined_call_operand.vmem [shape: f32[2,2,128], index: 6, kind: output, shape index: {1}]
  %7 = xla_tuple %s5, %s6
  %s8 = sld [smem:[#allocation0]]
  $region61: #{bottleneck_forward.6} parent=0
    _
  %s10 = ssub.s32 1, %s8
  %s11 = scalar_select 0, %s10, %s8
  loop: start=0, step=1, limit=4
  $region2: #{bottleneck_forward.6} parent=0 // loop_pre_header
    _
  $region3: #{bottleneck_forward.6} parent=0 // loop_header
    %s13 = sphi 0, %s17
    %p14 = scmp.ge.s32.totalorder %s13, 4
    %s23 = sphi 0, %s25
    %s26 = sphi 0, %s23
    %s27 = sphi 0, %s26
    %s43 = sphi 0, %s27
    %s47 = sphi 0, %s47
    %s49 = sphi 0, %s47
    %s50 = sphi 0, %s49
    %s64 = sphi 0, %s50
    %s68 = sphi 0, %s68
    %s70 = sphi 0, %s68
    %s71 = sphi 0, %s70
    %s85 = sphi 0, %s71
    %s89 = sphi 0, %s89
    %s91 = sphi 0, %s89
    %s92 = sphi 0, %s91
    %s106 = sphi 0, %s92
    %s110 = sphi 0, %s110
    %s112 = sphi 0, %s110
    %s113 = sphi 0, %s112
    %s127 = sphi 0, %s113
    %s133 = sphi 0, %s135
    %s136 = sphi 0, %s133
    %s137 = sphi 0, %s136
    %s153 = sphi 0, %s137
    %s159 = sphi 0, %s161
    %s162 = sphi 0, %s159
    %s163 = sphi 0, %s162
    %s179 = sphi 0, %s163
  $region4: #{bottleneck_forward.6} parent=0 // loop_header_branch
    %16 = sbr.rel (%p14) target = $region8
  $region5: #{bottleneck_forward.6} parent=0 // loop_body
    %s18 = ssub.s32 %s13, 1
    %s19 = ssub.s32 %s13, 2
    %s20 = sadd.s32 %s13, 1
    %s21 = ssub.s32 %s13, %s20
    %p22 = scmp.eq.s32.totalorder %s21, 0
    %s24 = sadd.s32 %s23, 1
    %s25 = scalar_select %p22, %s23, %s24
    %p28 = pneg %p22
    %p29 = scmp.eq.s32.totalorder %s13, 1
    %p30 = por %p28, %p29
    %p31 = scmp.ne.s32.totalorder %s23, %s26
    %p32 = scmp.eq.s32.totalorder %s13, 0
    %p33 = por %p31, %p32
    %p34 = scmp.ne.s32.totalorder %s23, %s26
    %p35 = scmp.eq.s32.totalorder %s18, 1
    %p36 = por %p34, %p35
    %p37 = scmp.ne.s32.totalorder %s26, %s27
    %p38 = scmp.eq.s32.totalorder %s18, 0
    %p39 = por %p37, %p38
    %p40 = scmp.ne.s32.totalorder %s26, %s27
    %p41 = scmp.eq.s32.totalorder %s19, 1
    %p42 = por %p40, %p41
    %p44 = scmp.ne.s32.totalorder %s27, %s43
    %p45 = scmp.eq.s32.totalorder %s19, 0
    %p46 = por %p44, %p45
    %s48 = sadd.s32 %s47, 1
    %p51 = scmp.eq.s32.totalorder %s13, 1
    %p52 = scmp.ne.s32.totalorder %s47, %s49
    %p53 = scmp.eq.s32.totalorder %s13, 0
    %p54 = por %p52, %p53
    %p55 = scmp.ne.s32.totalorder %s47, %s49
    %p56 = scmp.eq.s32.totalorder %s18, 1
    %p57 = por %p55, %p56
    %p58 = scmp.ne.s32.totalorder %s49, %s50
    %p59 = scmp.eq.s32.totalorder %s18, 0
    %p60 = por %p58, %p59
    %p61 = scmp.ne.s32.totalorder %s49, %s50
    %p62 = scmp.eq.s32.totalorder %s19, 1
    %p63 = por %p61, %p62
    %p65 = scmp.ne.s32.totalorder %s50, %s64
    %p66 = scmp.eq.s32.totalorder %s19, 0
    %p67 = por %p65, %p66
    %s69 = sadd.s32 %s68, 1
    %p72 = scmp.eq.s32.totalorder %s13, 1
    %p73 = scmp.ne.s32.totalorder %s68, %s70
    %p74 = scmp.eq.s32.totalorder %s13, 0
    %p75 = por %p73, %p74
    %p76 = scmp.ne.s32.totalorder %s68, %s70
    %p77 = scmp.eq.s32.totalorder %s18, 1
    %p78 = por %p76, %p77
    %p79 = scmp.ne.s32.totalorder %s70, %s71
    %p80 = scmp.eq.s32.totalorder %s18, 0
    %p81 = por %p79, %p80
    %p82 = scmp.ne.s32.totalorder %s70, %s71
    %p83 = scmp.eq.s32.totalorder %s19, 1
    %p84 = por %p82, %p83
    %p86 = scmp.ne.s32.totalorder %s71, %s85
    %p87 = scmp.eq.s32.totalorder %s19, 0
    %p88 = por %p86, %p87
    %s90 = sadd.s32 %s89, 1
    %p93 = scmp.eq.s32.totalorder %s13, 1
    %p94 = scmp.ne.s32.totalorder %s89, %s91
    %p95 = scmp.eq.s32.totalorder %s13, 0
    %p96 = por %p94, %p95
    %p97 = scmp.ne.s32.totalorder %s89, %s91
    %p98 = scmp.eq.s32.totalorder %s18, 1
    %p99 = por %p97, %p98
    %p100 = scmp.ne.s32.totalorder %s91, %s92
    %p101 = scmp.eq.s32.totalorder %s18, 0
    %p102 = por %p100, %p101
    %p103 = scmp.ne.s32.totalorder %s91, %s92
    %p104 = scmp.eq.s32.totalorder %s19, 1
    %p105 = por %p103, %p104
    %p107 = scmp.ne.s32.totalorder %s92, %s106
    %p108 = scmp.eq.s32.totalorder %s19, 0
    %p109 = por %p107, %p108
    %s111 = sadd.s32 %s110, 1
    %p114 = scmp.eq.s32.totalorder %s13, 1
    %p115 = scmp.ne.s32.totalorder %s110, %s112
    %p116 = scmp.eq.s32.totalorder %s13, 0
    %p117 = por %p115, %p116
    %p118 = scmp.ne.s32.totalorder %s110, %s112
    %p119 = scmp.eq.s32.totalorder %s18, 1
    %p120 = por %p118, %p119
    %p121 = scmp.ne.s32.totalorder %s112, %s113
    %p122 = scmp.eq.s32.totalorder %s18, 0
    %p123 = por %p121, %p122
    %p124 = scmp.ne.s32.totalorder %s112, %s113
    %p125 = scmp.eq.s32.totalorder %s19, 1
    %p126 = por %p124, %p125
    %p128 = scmp.ne.s32.totalorder %s113, %s127
    %p129 = scmp.eq.s32.totalorder %s19, 0
    %p130 = por %p128, %p129
    %s131 = ssub.s32 %s13, %s20
    %p132 = scmp.eq.s32.totalorder %s131, 0
    %s134 = sadd.s32 %s133, 1
    %s135 = scalar_select %p132, %s133, %s134
    %p138 = pneg %p132
    %p139 = scmp.eq.s32.totalorder %s13, 1
    %p140 = por %p138, %p139
    %p141 = scmp.ne.s32.totalorder %s133, %s136
    %p142 = scmp.eq.s32.totalorder %s13, 0
    %p143 = por %p141, %p142
    %p144 = scmp.ne.s32.totalorder %s133, %s136
    %p145 = scmp.eq.s32.totalorder %s18, 1
    %p146 = por %p144, %p145
    %p147 = scmp.ne.s32.totalorder %s136, %s137
    %p148 = scmp.eq.s32.totalorder %s18, 0
    %p149 = por %p147, %p148
    %p150 = scmp.ne.s32.totalorder %s136, %s137
    %p151 = scmp.eq.s32.totalorder %s19, 1
    %p152 = por %p150, %p151
    %p154 = scmp.ne.s32.totalorder %s137, %s153
    %p155 = scmp.eq.s32.totalorder %s19, 0
    %p156 = por %p154, %p155
    %s157 = ssub.s32 %s13, %s20
    %p158 = scmp.eq.s32.totalorder %s157, 0
    %s160 = sadd.s32 %s159, 1
    %s161 = scalar_select %p158, %s159, %s160
    %p164 = pneg %p158
    %p165 = scmp.eq.s32.totalorder %s13, 1
    %p166 = por %p164, %p165
    %p167 = scmp.ne.s32.totalorder %s159, %s162
    %p168 = scmp.eq.s32.totalorder %s13, 0
    %p169 = por %p167, %p168
    %p170 = scmp.ne.s32.totalorder %s159, %s162
    %p171 = scmp.eq.s32.totalorder %s18, 1
    %p172 = por %p170, %p171
    %p173 = scmp.ne.s32.totalorder %s162, %s163
    %p174 = scmp.eq.s32.totalorder %s18, 0
    %p175 = por %p173, %p174
    %p176 = scmp.ne.s32.totalorder %s162, %s163
    %p177 = scmp.eq.s32.totalorder %s19, 1
    %p178 = por %p176, %p177
    %p180 = scmp.ne.s32.totalorder %s163, %s179
    %p181 = scmp.eq.s32.totalorder %s19, 0
    %p182 = por %p180, %p181
    %p183 = scmp.le.s32.totalorder 1, %s13
    %p184 = scmp.lt.s32.totalorder %s13, 3
    %p185 = pnand %p183, %p184
    %p186 = pneg %p185
    // Predicated region
    $region9: #{bottleneck_forward.6} parent=5 // pred_check
      _
    $region10: #{bottleneck_forward.6} parent=5 // pred_check_branch
      %188 = sbr.rel (%p185) target = $region12
    $region11: #{bottleneck_forward.6} parent=5 // pred_region
      %s189 = ssub.s32 %s13, 1
      // Predicated region
      $region13: #{bottleneck_forward.6} parent=11 // pred_check
        %p190 = pneg %p60
      $region14: #{bottleneck_forward.6} parent=11 // pred_check_branch
        %192 = sbr.rel (%p190) target = $region16
      $region15: #{bottleneck_forward.6} parent=11 // pred_region
        _
      $region16: #{bottleneck_forward.6} parent=11 // pred_fallthru
        _
      // Predicated region
      $region17: #{bottleneck_forward.6} parent=11 // pred_check
        %p193 = pneg %p81
      $region18: #{bottleneck_forward.6} parent=11 // pred_check_branch
        %195 = sbr.rel (%p193) target = $region20
      $region19: #{bottleneck_forward.6} parent=11 // pred_region
        _
      $region20: #{bottleneck_forward.6} parent=11 // pred_fallthru
        _
      // Predicated region
      $region21: #{bottleneck_forward.6} parent=11 // pred_check
        %p196 = pneg %p102
      $region22: #{bottleneck_forward.6} parent=11 // pred_check_branch
        %198 = sbr.rel (%p196) target = $region24
      $region23: #{bottleneck_forward.6} parent=11 // pred_region
        _
      $region24: #{bottleneck_forward.6} parent=11 // pred_fallthru
        _
      // Predicated region
      $region25: #{bottleneck_forward.6} parent=11 // pred_check
        %p199 = pneg %p123
      $region26: #{bottleneck_forward.6} parent=11 // pred_check_branch
        %201 = sbr.rel (%p199) target = $region28
      $region27: #{bottleneck_forward.6} parent=11 // pred_region
        _
      $region28: #{bottleneck_forward.6} parent=11 // pred_fallthru
        _
    $region12: #{bottleneck_forward.6} parent=5 // pred_fallthru
      _
    %p202 = scmp.lt.s32.totalorder %s13, 2
    // Predicated region
    $region29: #{bottleneck_forward.6} parent=5 // pred_check
      %p203 = pneg %p202
    $region30: #{bottleneck_forward.6} parent=5 // pred_check_branch
      %205 = sbr.rel (%p203) target = $region32
    $region31: #{bottleneck_forward.6} parent=5 // pred_region
      // Predicated region
      $region33: #{bottleneck_forward.6} parent=31 // pred_check
        %p206 = pneg %p33
      $region34: #{bottleneck_forward.6} parent=31 // pred_check_branch
        %208 = sbr.rel (%p206) target = $region36
      $region35: #{bottleneck_forward.6} parent=31 // pred_region
        %s209 = smul.u32 64, %s13
        %p210 = scmp.lt.s32.totalorder %s209, 127
        %s211 = scalar_select %p210, %s209, 127
        %s212 = smul.addr %s211, 8
        %s213 = scalar_lea.vmem %s0, %s212
        %s214 = smul.u32 64, %s13
      $region36: #{bottleneck_forward.6} parent=31 // pred_fallthru
        _
    $region32: #{bottleneck_forward.6} parent=5 // pred_fallthru
      _
    %p215 = scmp.le.s32.totalorder 1, %s13
    %p216 = scmp.lt.s32.totalorder %s13, 3
    %p217 = pnand %p215, %p216
    %p218 = pneg %p217
    // Predicated region
    $region37: #{bottleneck_forward.6} parent=5 // pred_check
      _
    $region38: #{bottleneck_forward.6} parent=5 // pred_check_branch
      %220 = sbr.rel (%p217) target = $region40
    $region39: #{bottleneck_forward.6} parent=5 // pred_region
      %s221 = ssub.s32 %s13, 1
      %s222 = smul.u32 64, %s18
      %p223 = scmp.lt.s32.totalorder %s222, 127
      %s224 = scalar_select %p223, %s222, 127
      %s225 = smul.addr %s224, 8
      %s226 = scalar_lea.vmem %s0, %s225
      %p227 = pneg %p39
      %p228 = pneg %p36
      %p229 = pneg %p60
      %p230 = pneg %p57
      %p231 = pneg %p81
      %p232 = pneg %p78
      %p233 = pneg %p102
      %p234 = pneg %p99
      %p235 = pneg %p123
      %p236 = pneg %p120
      %p237 = pneg %p149
      %p238 = pneg %p146
      %s239 = smul.u32 64, %s18
      %p240 = scmp.lt.s32.totalorder %s239, 127
      %s241 = scalar_select %p240, %s239, 127
      %s242 = smul.addr %s241, 8
      %s243 = scalar_lea.vmem %s5, %s242
      %p244 = pneg %p175
      %p245 = pneg %p172
      %p246 = scmp.lt.s32.totalorder %s18, 1
      %s247 = scalar_select %p246, %s18, 1
      %s248 = smul.addr %s247, 2
      %s249 = scalar_lea.vmem %s6, %s248
      %s250 = smul.u32 64, %s18
      %p251 = scmp.lt.s32.totalorder %s250, 127
      %s252 = scalar_select %p251, %s250, 127
      %s253 = smul.addr %s252, 8
      %s254 = scalar_lea.vmem %s0, %s253
      %s255 = smul.u32 64, %s18
      %s256 = smul.u32 64, %s18
      %p257 = scmp.lt.s32.totalorder %s256, 127
      %s258 = scalar_select %p257, %s256, 127
      %s259 = smul.addr %s258, 8
      %s260 = scalar_lea.vmem %s5, %s259
      %s261 = smul.u32 64, %s18
      %p262 = scmp.lt.s32.totalorder %s18, 1
      %s263 = scalar_select %p262, %s18, 1
      %s264 = smul.addr %s263, 2
      %s265 = scalar_lea.vmem %s6, %s264
      %v266 = vld [vmem:[%s1] sm:$0x1]
      %v267 = vmul.f32 %v266, 0.0009765625
      %v268 = vld [vmem:[%s1 + $0x1] sm:$0x1]
      %v269 = vmul.f32 %v268, 0.0009765625
      %v270 = vmul.f32 %v267, %v267
      %v271 = vsub.f32 %v269, %v270
      %v272 = vmax.f32 %v271, 0.0
      %v273 = vld [vmem:[%s2] sm:$0x1]
      %v274 = vadd.f32 %v272, 1e-05
      %v275 = vrsqrt.pop %v274
      %v276 = vmul.f32 %v273, %v275
      %v277 = vld [vmem:[%s3] sm:$0x1]
      %v278 = vmul.f32 %v267, %v276
      %v279 = vsub.f32 %v277, %v278
      %v280 = vld [vmem:[%s254] sm:$0xff]
      %v281 = vld [vmem:[%s254 + $0x8] sm:$0xff]
      %v282 = vld [vmem:[%s254 + $0x10] sm:$0xff]
      %v283 = vld [vmem:[%s254 + $0x18] sm:$0xff]
      %v284 = vld [vmem:[%s254 + $0x20] sm:$0xff]
      %v285 = vld [vmem:[%s254 + $0x28] sm:$0xff]
      %v286 = vld [vmem:[%s254 + $0x30] sm:$0xff]
      %v287 = vld [vmem:[%s254 + $0x38] sm:$0xff]
      %v288 = vld [vmem:[%s254 + $0x40] sm:$0xff]
      %v289 = vld [vmem:[%s254 + $0x48] sm:$0xff]
      %v290 = vld [vmem:[%s254 + $0x50] sm:$0xff]
      %v291 = vld [vmem:[%s254 + $0x58] sm:$0xff]
      %v292 = vld [vmem:[%s254 + $0x60] sm:$0xff]
      %v293 = vld [vmem:[%s254 + $0x68] sm:$0xff]
      %v294 = vld [vmem:[%s254 + $0x70] sm:$0xff]
      %v295 = vld [vmem:[%s254 + $0x78] sm:$0xff]
      %v296 = vld [vmem:[%s254 + $0x80] sm:$0xff]
      %v297 = vld [vmem:[%s254 + $0x88] sm:$0xff]
      %v298 = vld [vmem:[%s254 + $0x90] sm:$0xff]
      %v299 = vld [vmem:[%s254 + $0x98] sm:$0xff]
      %v300 = vld [vmem:[%s254 + $0xa0] sm:$0xff]
      %v301 = vld [vmem:[%s254 + $0xa8] sm:$0xff]
      %v302 = vld [vmem:[%s254 + $0xb0] sm:$0xff]
      %v303 = vld [vmem:[%s254 + $0xb8] sm:$0xff]
      %v304 = vld [vmem:[%s254 + $0xc0] sm:$0xff]
      %v305 = vld [vmem:[%s254 + $0xc8] sm:$0xff]
      %v306 = vld [vmem:[%s254 + $0xd0] sm:$0xff]
      %v307 = vld [vmem:[%s254 + $0xd8] sm:$0xff]
      %v308 = vld [vmem:[%s254 + $0xe0] sm:$0xff]
      %v309 = vld [vmem:[%s254 + $0xe8] sm:$0xff]
      %v310 = vld [vmem:[%s254 + $0xf0] sm:$0xff]
      %v311 = vld [vmem:[%s254 + $0xf8] sm:$0xff]
      %v312 = vld [vmem:[%s254 + $0x100] sm:$0xff]
      %v313 = vld [vmem:[%s254 + $0x108] sm:$0xff]
      %v314 = vld [vmem:[%s254 + $0x110] sm:$0xff]
      %v315 = vld [vmem:[%s254 + $0x118] sm:$0xff]
      %v316 = vld [vmem:[%s254 + $0x120] sm:$0xff]
      %v317 = vld [vmem:[%s254 + $0x128] sm:$0xff]
      %v318 = vld [vmem:[%s254 + $0x130] sm:$0xff]
      %v319 = vld [vmem:[%s254 + $0x138] sm:$0xff]
      %v320 = vld [vmem:[%s254 + $0x140] sm:$0xff]
      %v321 = vld [vmem:[%s254 + $0x148] sm:$0xff]
      %v322 = vld [vmem:[%s254 + $0x150] sm:$0xff]
      %v323 = vld [vmem:[%s254 + $0x158] sm:$0xff]
      %v324 = vld [vmem:[%s254 + $0x160] sm:$0xff]
      %v325 = vld [vmem:[%s254 + $0x168] sm:$0xff]
      %v326 = vld [vmem:[%s254 + $0x170] sm:$0xff]
      %v327 = vld [vmem:[%s254 + $0x178] sm:$0xff]
      %v328 = vld [vmem:[%s254 + $0x180] sm:$0xff]
      %v329 = vld [vmem:[%s254 + $0x188] sm:$0xff]
      %v330 = vld [vmem:[%s254 + $0x190] sm:$0xff]
      %v331 = vld [vmem:[%s254 + $0x198] sm:$0xff]
      %v332 = vld [vmem:[%s254 + $0x1a0] sm:$0xff]
      %v333 = vld [vmem:[%s254 + $0x1a8] sm:$0xff]
      %v334 = vld [vmem:[%s254 + $0x1b0] sm:$0xff]
      %v335 = vld [vmem:[%s254 + $0x1b8] sm:$0xff]
      %v336 = vld [vmem:[%s254 + $0x1c0] sm:$0xff]
      %v337 = vld [vmem:[%s254 + $0x1c8] sm:$0xff]
      %v338 = vld [vmem:[%s254 + $0x1d0] sm:$0xff]
      %v339 = vld [vmem:[%s254 + $0x1d8] sm:$0xff]
      %v340 = vld [vmem:[%s254 + $0x1e0] sm:$0xff]
      %v341 = vld [vmem:[%s254 + $0x1e8] sm:$0xff]
      %v342 = vld [vmem:[%s254 + $0x1f0] sm:$0xff]
      %v343 = vld [vmem:[%s254 + $0x1f8] sm:$0xff]
      %v345 = vlaneseq
      %v346 = vshrl.u32 %v345, 7
      %v347 = vsub.s32 0, %v346
      %v348 = vrot.slane %v276, %v347
      %v350 = vmul.f32 %v280, %v348
      %v351 = vmul.f32 %v281, %v348
      %v352 = vmul.f32 %v282, %v348
      %v353 = vmul.f32 %v283, %v348
      %v354 = vmul.f32 %v284, %v348
      %v355 = vmul.f32 %v285, %v348
      %v356 = vmul.f32 %v286, %v348
      %v357 = vmul.f32 %v287, %v348
      %v358 = vmul.f32 %v288, %v348
      %v359 = vmul.f32 %v289, %v348
      %v360 = vmul.f32 %v290, %v348
      %v361 = vmul.f32 %v291, %v348
      %v362 = vmul.f32 %v292, %v348
      %v363 = vmul.f32 %v293, %v348
      %v364 = vmul.f32 %v294, %v348
      %v365 = vmul.f32 %v295, %v348
      %v366 = vmul.f32 %v296, %v348
      %v367 = vmul.f32 %v297, %v348
      %v368 = vmul.f32 %v298, %v348
      %v369 = vmul.f32 %v299, %v348
      %v370 = vmul.f32 %v300, %v348
      %v371 = vmul.f32 %v301, %v348
      %v372 = vmul.f32 %v302, %v348
      %v373 = vmul.f32 %v303, %v348
      %v374 = vmul.f32 %v304, %v348
      %v375 = vmul.f32 %v305, %v348
      %v376 = vmul.f32 %v306, %v348
      %v377 = vmul.f32 %v307, %v348
      %v378 = vmul.f32 %v308, %v348
      %v379 = vmul.f32 %v309, %v348
      %v380 = vmul.f32 %v310, %v348
      %v381 = vmul.f32 %v311, %v348
      %v382 = vmul.f32 %v312, %v348
      %v383 = vmul.f32 %v313, %v348
      %v384 = vmul.f32 %v314, %v348
      %v385 = vmul.f32 %v315, %v348
      %v386 = vmul.f32 %v316, %v348
      %v387 = vmul.f32 %v317, %v348
      %v388 = vmul.f32 %v318, %v348
      %v389 = vmul.f32 %v319, %v348
      %v390 = vmul.f32 %v320, %v348
      %v391 = vmul.f32 %v321, %v348
      %v392 = vmul.f32 %v322, %v348
      %v393 = vmul.f32 %v323, %v348
      %v394 = vmul.f32 %v324, %v348
      %v395 = vmul.f32 %v325, %v348
      %v396 = vmul.f32 %v326, %v348
      %v397 = vmul.f32 %v327, %v348
      %v398 = vmul.f32 %v328, %v348
      %v399 = vmul.f32 %v329, %v348
      %v400 = vmul.f32 %v330, %v348
      %v401 = vmul.f32 %v331, %v348
      %v402 = vmul.f32 %v332, %v348
      %v403 = vmul.f32 %v333, %v348
      %v404 = vmul.f32 %v334, %v348
      %v405 = vmul.f32 %v335, %v348
      %v406 = vmul.f32 %v336, %v348
      %v407 = vmul.f32 %v337, %v348
      %v408 = vmul.f32 %v338, %v348
      %v409 = vmul.f32 %v339, %v348
      %v410 = vmul.f32 %v340, %v348
      %v411 = vmul.f32 %v341, %v348
      %v412 = vmul.f32 %v342, %v348
      %v413 = vmul.f32 %v343, %v348
      %v415 = vlaneseq
      %v416 = vshrl.u32 %v415, 7
      %v417 = vsub.s32 0, %v416
      %v418 = vrot.slane %v279, %v417
      %v420 = vadd.f32 %v350, %v418
      %v421 = vadd.f32 %v351, %v418
      %v422 = vadd.f32 %v352, %v418
      %v423 = vadd.f32 %v353, %v418
      %v424 = vadd.f32 %v354, %v418
      %v425 = vadd.f32 %v355, %v418
      %v426 = vadd.f32 %v356, %v418
      %v427 = vadd.f32 %v357, %v418
      %v428 = vadd.f32 %v358, %v418
      %v429 = vadd.f32 %v359, %v418
      %v430 = vadd.f32 %v360, %v418
      %v431 = vadd.f32 %v361, %v418
      %v432 = vadd.f32 %v362, %v418
      %v433 = vadd.f32 %v363, %v418
      %v434 = vadd.f32 %v364, %v418
      %v435 = vadd.f32 %v365, %v418
      %v436 = vadd.f32 %v366, %v418
      %v437 = vadd.f32 %v367, %v418
      %v438 = vadd.f32 %v368, %v418
      %v439 = vadd.f32 %v369, %v418
      %v440 = vadd.f32 %v370, %v418
      %v441 = vadd.f32 %v371, %v418
      %v442 = vadd.f32 %v372, %v418
      %v443 = vadd.f32 %v373, %v418
      %v444 = vadd.f32 %v374, %v418
      %v445 = vadd.f32 %v375, %v418
      %v446 = vadd.f32 %v376, %v418
      %v447 = vadd.f32 %v377, %v418
      %v448 = vadd.f32 %v378, %v418
      %v449 = vadd.f32 %v379, %v418
      %v450 = vadd.f32 %v380, %v418
      %v451 = vadd.f32 %v381, %v418
      %v452 = vadd.f32 %v382, %v418
      %v453 = vadd.f32 %v383, %v418
      %v454 = vadd.f32 %v384, %v418
      %v455 = vadd.f32 %v385, %v418
      %v456 = vadd.f32 %v386, %v418
      %v457 = vadd.f32 %v387, %v418
      %v458 = vadd.f32 %v388, %v418
      %v459 = vadd.f32 %v389, %v418
      %v460 = vadd.f32 %v390, %v418
      %v461 = vadd.f32 %v391, %v418
      %v462 = vadd.f32 %v392, %v418
      %v463 = vadd.f32 %v393, %v418
      %v464 = vadd.f32 %v394, %v418
      %v465 = vadd.f32 %v395, %v418
      %v466 = vadd.f32 %v396, %v418
      %v467 = vadd.f32 %v397, %v418
      %v468 = vadd.f32 %v398, %v418
      %v469 = vadd.f32 %v399, %v418
      %v470 = vadd.f32 %v400, %v418
      %v471 = vadd.f32 %v401, %v418
      %v472 = vadd.f32 %v402, %v418
      %v473 = vadd.f32 %v403, %v418
      %v474 = vadd.f32 %v404, %v418
      %v475 = vadd.f32 %v405, %v418
      %v476 = vadd.f32 %v406, %v418
      %v477 = vadd.f32 %v407, %v418
      %v478 = vadd.f32 %v408, %v418
      %v479 = vadd.f32 %v409, %v418
      %v480 = vadd.f32 %v410, %v418
      %v481 = vadd.f32 %v411, %v418
      %v482 = vadd.f32 %v412, %v418
      %v483 = vadd.f32 %v413, %v418
      %v484 = vmax.f32 %v420, 0.0
      %v485 = vmax.f32 %v421, 0.0
      %v486 = vmax.f32 %v422, 0.0
      %v487 = vmax.f32 %v423, 0.0
      %v488 = vmax.f32 %v424, 0.0
      %v489 = vmax.f32 %v425, 0.0
      %v490 = vmax.f32 %v426, 0.0
      %v491 = vmax.f32 %v427, 0.0
      %v492 = vmax.f32 %v428, 0.0
      %v493 = vmax.f32 %v429, 0.0
      %v494 = vmax.f32 %v430, 0.0
      %v495 = vmax.f32 %v431, 0.0
      %v496 = vmax.f32 %v432, 0.0
      %v497 = vmax.f32 %v433, 0.0
      %v498 = vmax.f32 %v434, 0.0
      %v499 = vmax.f32 %v435, 0.0
      %v500 = vmax.f32 %v436, 0.0
      %v501 = vmax.f32 %v437, 0.0
      %v502 = vmax.f32 %v438, 0.0
      %v503 = vmax.f32 %v439, 0.0
      %v504 = vmax.f32 %v440, 0.0
      %v505 = vmax.f32 %v441, 0.0
      %v506 = vmax.f32 %v442, 0.0
      %v507 = vmax.f32 %v443, 0.0
      %v508 = vmax.f32 %v444, 0.0
      %v509 = vmax.f32 %v445, 0.0
      %v510 = vmax.f32 %v446, 0.0
      %v511 = vmax.f32 %v447, 0.0
      %v512 = vmax.f32 %v448, 0.0
      %v513 = vmax.f32 %v449, 0.0
      %v514 = vmax.f32 %v450, 0.0
      %v515 = vmax.f32 %v451, 0.0
      %v516 = vmax.f32 %v452, 0.0
      %v517 = vmax.f32 %v453, 0.0
      %v518 = vmax.f32 %v454, 0.0
      %v519 = vmax.f32 %v455, 0.0
      %v520 = vmax.f32 %v456, 0.0
      %v521 = vmax.f32 %v457, 0.0
      %v522 = vmax.f32 %v458, 0.0
      %v523 = vmax.f32 %v459, 0.0
      %v524 = vmax.f32 %v460, 0.0
      %v525 = vmax.f32 %v461, 0.0
      %v526 = vmax.f32 %v462, 0.0
      %v527 = vmax.f32 %v463, 0.0
      %v528 = vmax.f32 %v464, 0.0
      %v529 = vmax.f32 %v465, 0.0
      %v530 = vmax.f32 %v466, 0.0
      %v531 = vmax.f32 %v467, 0.0
      %v532 = vmax.f32 %v468, 0.0
      %v533 = vmax.f32 %v469, 0.0
      %v534 = vmax.f32 %v470, 0.0
      %v535 = vmax.f32 %v471, 0.0
      %v536 = vmax.f32 %v472, 0.0
      %v537 = vmax.f32 %v473, 0.0
      %v538 = vmax.f32 %v474, 0.0
      %v539 = vmax.f32 %v475, 0.0
      %v540 = vmax.f32 %v476, 0.0
      %v541 = vmax.f32 %v477, 0.0
      %v542 = vmax.f32 %v478, 0.0
      %v543 = vmax.f32 %v479, 0.0
      %v544 = vmax.f32 %v480, 0.0
      %v545 = vmax.f32 %v481, 0.0
      %v546 = vmax.f32 %v482, 0.0
      %v547 = vmax.f32 %v483, 0.0
      %v548 = vld [vmem:[%s4] sm:$0xff]
      %v549 = vld [vmem:[%s4 + $0x8] sm:$0xff]
      %v550 = vld [vmem:[%s4 + $0x10] sm:$0xff]
      %v551 = vld [vmem:[%s4 + $0x18] sm:$0xff]
      %v552 = vld [vmem:[%s4 + $0x20] sm:$0xff]
      %v553 = vld [vmem:[%s4 + $0x28] sm:$0xff]
      %v554 = vld [vmem:[%s4 + $0x30] sm:$0xff]
      %v555 = vld [vmem:[%s4 + $0x38] sm:$0xff]
      %v556 = vld [vmem:[%s4 + $0x40] sm:$0xff]
      %v557 = vld [vmem:[%s4 + $0x48] sm:$0xff]
      %v558 = vld [vmem:[%s4 + $0x50] sm:$0xff]
      %v559 = vld [vmem:[%s4 + $0x58] sm:$0xff]
      %v560 = vld [vmem:[%s4 + $0x60] sm:$0xff]
      %v561 = vld [vmem:[%s4 + $0x68] sm:$0xff]
      %v562 = vld [vmem:[%s4 + $0x70] sm:$0xff]
      %v563 = vld [vmem:[%s4 + $0x78] sm:$0xff]
      %564 = vmatprep.subr.mxu0 0.0
      %565 = vmatpush1.msra.mxu0 %v563
      %566 = vmatprep.subr.mxu0 0.0
      %567 = vmatpush1.msra.mxu0 %v562
      %568 = vmatprep.subr.mxu0 0.0
      %569 = vmatpush1.msra.mxu0 %v561
      %570 = vmatprep.subr.mxu0 0.0
      %571 = vmatpush1.msra.mxu0 %v560
      %572 = vmatprep.subr.mxu0 0.0
      %573 = vmatpush1.msra.mxu0 %v559
      %574 = vmatprep.subr.mxu0 0.0
      %575 = vmatpush1.msra.mxu0 %v558
      %576 = vmatprep.subr.mxu0 0.0
      %577 = vmatpush1.msra.mxu0 %v557
      %578 = vmatprep.subr.mxu0 0.0
      %579 = vmatpush1.msra.mxu0 %v556
      %580 = vmatprep.subr.mxu0 0.0
      %581 = vmatpush1.msra.mxu0 %v555
      %582 = vmatprep.subr.mxu0 0.0
      %583 = vmatpush1.msra.mxu0 %v554
      %584 = vmatprep.subr.mxu0 0.0
      %585 = vmatpush1.msra.mxu0 %v553
      %586 = vmatprep.subr.mxu0 0.0
      %587 = vmatpush1.msra.mxu0 %v552
      %588 = vmatprep.subr.mxu0 0.0
      %589 = vmatpush1.msra.mxu0 %v551
      %590 = vmatprep.subr.mxu0 0.0
      %591 = vmatpush1.msra.mxu0 %v550
      %592 = vmatprep.subr.mxu0 0.0
      %593 = vmatpush1.msra.mxu0 %v549
      %594 = vmatprep.subr.mxu0 0.0
      %595 = vmatpush1.msra.mxu0 %v548
      %596 = vmatprep.subr.mxu0 0.0
      %597 = vmatpush2.msra.mxu0 0.0
      %598 = vmatprep.subr.mxu0 0.0
      %599 = vmatpush2.msra.mxu0 0.0
      %600 = vmatprep.subr.mxu0 0.0
      %601 = vmatpush2.msra.mxu0 0.0
      %602 = vmatprep.subr.mxu0 0.0
      %603 = vmatpush2.msra.mxu0 0.0
      %604 = vmatprep.subr.mxu0 0.0
      %605 = vmatpush2.msra.mxu0 0.0
      %606 = vmatprep.subr.mxu0 0.0
      %607 = vmatpush2.msra.mxu0 0.0
      %608 = vmatprep.subr.mxu0 0.0
      %609 = vmatpush2.msra.mxu0 0.0
      %610 = vmatprep.subr.mxu0 0.0
      %611 = vmatpush2.msra.mxu0 0.0
      %612 = vmatprep.subr.mxu0 0.0
      %613 = vmatpush2.msra.mxu0 0.0
      %614 = vmatprep.subr.mxu0 0.0
      %615 = vmatpush2.msra.mxu0 0.0
      %616 = vmatprep.subr.mxu0 0.0
      %617 = vmatpush2.msra.mxu0 0.0
      %618 = vmatprep.subr.mxu0 0.0
      %619 = vmatpush2.msra.mxu0 0.0
      %620 = vmatprep.subr.mxu0 0.0
      %621 = vmatpush2.msra.mxu0 0.0
      %622 = vmatprep.subr.mxu0 0.0
      %623 = vmatpush2.msra.mxu0 0.0
      %624 = vmatprep.subr.mxu0 0.0
      %625 = vmatpush2.msra.mxu0 0.0
      %626 = vmatprep.subr.mxu0 0.0
      %627 = vmatpush2.msra.mxu0 0.0
      %628 = vmatprep.mubr.f32.mxu0 0.0
      %629 = vmatmul.mubr.f32.gmra.mxu0 %v484
      %v630 = vpop.f32.mrf.mxu0
      %v631 = vadd.f32 0.0, %v630
      %v632 = vpop.f32.mrf.mxu0
      %633 = vmatprep.mubr.f32.mxu0 0.0
      %634 = vmatmul.mubr.f32.gmra.mxu0 %v485
      %v635 = vpop.f32.mrf.mxu0
      %v636 = vadd.f32 0.0, %v635
      %v637 = vpop.f32.mrf.mxu0
      %638 = vmatprep.mubr.f32.mxu0 0.0
      %639 = vmatmul.mubr.f32.gmra.mxu0 %v486
      %v640 = vpop.f32.mrf.mxu0
      %v641 = vadd.f32 0.0, %v640
      %v642 = vpop.f32.mrf.mxu0
      %643 = vmatprep.mubr.f32.mxu0 0.0
      %644 = vmatmul.mubr.f32.gmra.mxu0 %v487
      %v645 = vpop.f32.mrf.mxu0
      %v646 = vadd.f32 0.0, %v645
      %v647 = vpop.f32.mrf.mxu0
      %648 = vmatprep.mubr.f32.mxu0 0.0
      %649 = vmatmul.mubr.f32.gmra.mxu0 %v488
      %v650 = vpop.f32.mrf.mxu0
      %v651 = vadd.f32 0.0, %v650
      %v652 = vpop.f32.mrf.mxu0
      %653 = vmatprep.mubr.f32.mxu0 0.0
      %654 = vmatmul.mubr.f32.gmra.mxu0 %v489
      %v655 = vpop.f32.mrf.mxu0
      %v656 = vadd.f32 0.0, %v655
      %v657 = vpop.f32.mrf.mxu0
      %658 = vmatprep.mubr.f32.mxu0 0.0
      %659 = vmatmul.mubr.f32.gmra.mxu0 %v490
      %v660 = vpop.f32.mrf.mxu0
      %v661 = vadd.f32 0.0, %v660
      %v662 = vpop.f32.mrf.mxu0
      %663 = vmatprep.mubr.f32.mxu0 0.0
      %664 = vmatmul.mubr.f32.gmra.mxu0 %v491
      %v665 = vpop.f32.mrf.mxu0
      %v666 = vadd.f32 0.0, %v665
      %v667 = vpop.f32.mrf.mxu0
      %668 = vmatprep.mubr.f32.mxu0 0.0
      %669 = vmatmul.mubr.f32.gmra.mxu0 %v492
      %v670 = vpop.f32.mrf.mxu0
      %v671 = vadd.f32 0.0, %v670
      %v672 = vpop.f32.mrf.mxu0
      %673 = vmatprep.mubr.f32.mxu0 0.0
      %674 = vmatmul.mubr.f32.gmra.mxu0 %v493
      %v675 = vpop.f32.mrf.mxu0
      %v676 = vadd.f32 0.0, %v675
      %v677 = vpop.f32.mrf.mxu0
      %678 = vmatprep.mubr.f32.mxu0 0.0
      %679 = vmatmul.mubr.f32.gmra.mxu0 %v494
      %v680 = vpop.f32.mrf.mxu0
      %v681 = vadd.f32 0.0, %v680
      %v682 = vpop.f32.mrf.mxu0
      %683 = vmatprep.mubr.f32.mxu0 0.0
      %684 = vmatmul.mubr.f32.gmra.mxu0 %v495
      %v685 = vpop.f32.mrf.mxu0
      %v686 = vadd.f32 0.0, %v685
      %v687 = vpop.f32.mrf.mxu0
      %688 = vmatprep.mubr.f32.mxu0 0.0
      %689 = vmatmul.mubr.f32.gmra.mxu0 %v496
      %v690 = vpop.f32.mrf.mxu0
      %v691 = vadd.f32 0.0, %v690
      %v692 = vpop.f32.mrf.mxu0
      %693 = vmatprep.mubr.f32.mxu0 0.0
      %694 = vmatmul.mubr.f32.gmra.mxu0 %v497
      %v695 = vpop.f32.mrf.mxu0
      %v696 = vadd.f32 0.0, %v695
      %v697 = vpop.f32.mrf.mxu0
      %698 = vmatprep.mubr.f32.mxu0 0.0
      %699 = vmatmul.mubr.f32.gmra.mxu0 %v498
      %v700 = vpop.f32.mrf.mxu0
      %v701 = vadd.f32 0.0, %v700
      %v702 = vpop.f32.mrf.mxu0
      %703 = vmatprep.mubr.f32.mxu0 0.0
      %704 = vmatmul.mubr.f32.gmra.mxu0 %v499
      %v705 = vpop.f32.mrf.mxu0
      %v706 = vadd.f32 0.0, %v705
      %v707 = vpop.f32.mrf.mxu0
      %708 = vmatprep.mubr.f32.mxu0 0.0
      %709 = vmatmul.mubr.f32.gmra.mxu0 %v500
      %v710 = vpop.f32.mrf.mxu0
      %v711 = vadd.f32 0.0, %v710
      %v712 = vpop.f32.mrf.mxu0
      %713 = vmatprep.mubr.f32.mxu0 0.0
      %714 = vmatmul.mubr.f32.gmra.mxu0 %v501
      %v715 = vpop.f32.mrf.mxu0
      %v716 = vadd.f32 0.0, %v715
      %v717 = vpop.f32.mrf.mxu0
      %718 = vmatprep.mubr.f32.mxu0 0.0
      %719 = vmatmul.mubr.f32.gmra.mxu0 %v502
      %v720 = vpop.f32.mrf.mxu0
      %v721 = vadd.f32 0.0, %v720
      %v722 = vpop.f32.mrf.mxu0
      %723 = vmatprep.mubr.f32.mxu0 0.0
      %724 = vmatmul.mubr.f32.gmra.mxu0 %v503
      %v725 = vpop.f32.mrf.mxu0
      %v726 = vadd.f32 0.0, %v725
      %v727 = vpop.f32.mrf.mxu0
      %728 = vmatprep.mubr.f32.mxu0 0.0
      %729 = vmatmul.mubr.f32.gmra.mxu0 %v504
      %v730 = vpop.f32.mrf.mxu0
      %v731 = vadd.f32 0.0, %v730
      %v732 = vpop.f32.mrf.mxu0
      %733 = vmatprep.mubr.f32.mxu0 0.0
      %734 = vmatmul.mubr.f32.gmra.mxu0 %v505
      %v735 = vpop.f32.mrf.mxu0
      %v736 = vadd.f32 0.0, %v735
      %v737 = vpop.f32.mrf.mxu0
      %738 = vmatprep.mubr.f32.mxu0 0.0
      %739 = vmatmul.mubr.f32.gmra.mxu0 %v506
      %v740 = vpop.f32.mrf.mxu0
      %v741 = vadd.f32 0.0, %v740
      %v742 = vpop.f32.mrf.mxu0
      %743 = vmatprep.mubr.f32.mxu0 0.0
      %744 = vmatmul.mubr.f32.gmra.mxu0 %v507
      %v745 = vpop.f32.mrf.mxu0
      %v746 = vadd.f32 0.0, %v745
      %v747 = vpop.f32.mrf.mxu0
      %748 = vmatprep.mubr.f32.mxu0 0.0
      %749 = vmatmul.mubr.f32.gmra.mxu0 %v508
      %v750 = vpop.f32.mrf.mxu0
      %v751 = vadd.f32 0.0, %v750
      %v752 = vpop.f32.mrf.mxu0
      %753 = vmatprep.mubr.f32.mxu0 0.0
      %754 = vmatmul.mubr.f32.gmra.mxu0 %v509
      %v755 = vpop.f32.mrf.mxu0
      %v756 = vadd.f32 0.0, %v755
      %v757 = vpop.f32.mrf.mxu0
      %758 = vmatprep.mubr.f32.mxu0 0.0
      %759 = vmatmul.mubr.f32.gmra.mxu0 %v510
      %v760 = vpop.f32.mrf.mxu0
      %v761 = vadd.f32 0.0, %v760
      %v762 = vpop.f32.mrf.mxu0
      %763 = vmatprep.mubr.f32.mxu0 0.0
      %764 = vmatmul.mubr.f32.gmra.mxu0 %v511
      %v765 = vpop.f32.mrf.mxu0
      %v766 = vadd.f32 0.0, %v765
      %v767 = vpop.f32.mrf.mxu0
      %768 = vmatprep.mubr.f32.mxu0 0.0
      %769 = vmatmul.mubr.f32.gmra.mxu0 %v512
      %v770 = vpop.f32.mrf.mxu0
      %v771 = vadd.f32 0.0, %v770
      %v772 = vpop.f32.mrf.mxu0
      %773 = vmatprep.mubr.f32.mxu0 0.0
      %774 = vmatmul.mubr.f32.gmra.mxu0 %v513
      %v775 = vpop.f32.mrf.mxu0
      %v776 = vadd.f32 0.0, %v775
      %v777 = vpop.f32.mrf.mxu0
      %778 = vmatprep.mubr.f32.mxu0 0.0
      %779 = vmatmul.mubr.f32.gmra.mxu0 %v514
      %v780 = vpop.f32.mrf.mxu0
      %v781 = vadd.f32 0.0, %v780
      %v782 = vpop.f32.mrf.mxu0
      %783 = vmatprep.mubr.f32.mxu0 0.0
      %784 = vmatmul.mubr.f32.gmra.mxu0 %v515
      %v785 = vpop.f32.mrf.mxu0
      %v786 = vadd.f32 0.0, %v785
      %v787 = vpop.f32.mrf.mxu0
      %788 = vmatprep.mubr.f32.mxu0 0.0
      %789 = vmatmul.mubr.f32.gmra.mxu0 %v516
      %v790 = vpop.f32.mrf.mxu0
      %v791 = vadd.f32 0.0, %v790
      %v792 = vpop.f32.mrf.mxu0
      %793 = vmatprep.mubr.f32.mxu0 0.0
      %794 = vmatmul.mubr.f32.gmra.mxu0 %v517
      %v795 = vpop.f32.mrf.mxu0
      %v796 = vadd.f32 0.0, %v795
      %v797 = vpop.f32.mrf.mxu0
      %798 = vmatprep.mubr.f32.mxu0 0.0
      %799 = vmatmul.mubr.f32.gmra.mxu0 %v518
      %v800 = vpop.f32.mrf.mxu0
      %v801 = vadd.f32 0.0, %v800
      %v802 = vpop.f32.mrf.mxu0
      %803 = vmatprep.mubr.f32.mxu0 0.0
      %804 = vmatmul.mubr.f32.gmra.mxu0 %v519
      %v805 = vpop.f32.mrf.mxu0
      %v806 = vadd.f32 0.0, %v805
      %v807 = vpop.f32.mrf.mxu0
      %808 = vmatprep.mubr.f32.mxu0 0.0
      %809 = vmatmul.mubr.f32.gmra.mxu0 %v520
      %v810 = vpop.f32.mrf.mxu0
      %v811 = vadd.f32 0.0, %v810
      %v812 = vpop.f32.mrf.mxu0
      %813 = vmatprep.mubr.f32.mxu0 0.0
      %814 = vmatmul.mubr.f32.gmra.mxu0 %v521
      %v815 = vpop.f32.mrf.mxu0
      %v816 = vadd.f32 0.0, %v815
      %v817 = vpop.f32.mrf.mxu0
      %818 = vmatprep.mubr.f32.mxu0 0.0
      %819 = vmatmul.mubr.f32.gmra.mxu0 %v522
      %v820 = vpop.f32.mrf.mxu0
      %v821 = vadd.f32 0.0, %v820
      %v822 = vpop.f32.mrf.mxu0
      %823 = vmatprep.mubr.f32.mxu0 0.0
      %824 = vmatmul.mubr.f32.gmra.mxu0 %v523
      %v825 = vpop.f32.mrf.mxu0
      %v826 = vadd.f32 0.0, %v825
      %v827 = vpop.f32.mrf.mxu0
      %828 = vmatprep.mubr.f32.mxu0 0.0
      %829 = vmatmul.mubr.f32.gmra.mxu0 %v524
      %v830 = vpop.f32.mrf.mxu0
      %v831 = vadd.f32 0.0, %v830
      %v832 = vpop.f32.mrf.mxu0
      %833 = vmatprep.mubr.f32.mxu0 0.0
      %834 = vmatmul.mubr.f32.gmra.mxu0 %v525
      %v835 = vpop.f32.mrf.mxu0
      %v836 = vadd.f32 0.0, %v835
      %v837 = vpop.f32.mrf.mxu0
      %838 = vmatprep.mubr.f32.mxu0 0.0
      %839 = vmatmul.mubr.f32.gmra.mxu0 %v526
      %v840 = vpop.f32.mrf.mxu0
      %v841 = vadd.f32 0.0, %v840
      %v842 = vpop.f32.mrf.mxu0
      %843 = vmatprep.mubr.f32.mxu0 0.0
      %844 = vmatmul.mubr.f32.gmra.mxu0 %v527
      %v845 = vpop.f32.mrf.mxu0
      %v846 = vadd.f32 0.0, %v845
      %v847 = vpop.f32.mrf.mxu0
      %848 = vmatprep.mubr.f32.mxu0 0.0
      %849 = vmatmul.mubr.f32.gmra.mxu0 %v528
      %v850 = vpop.f32.mrf.mxu0
      %v851 = vadd.f32 0.0, %v850
      %v852 = vpop.f32.mrf.mxu0
      %853 = vmatprep.mubr.f32.mxu0 0.0
      %854 = vmatmul.mubr.f32.gmra.mxu0 %v529
      %v855 = vpop.f32.mrf.mxu0
      %v856 = vadd.f32 0.0, %v855
      %v857 = vpop.f32.mrf.mxu0
      %858 = vmatprep.mubr.f32.mxu0 0.0
      %859 = vmatmul.mubr.f32.gmra.mxu0 %v530
      %v860 = vpop.f32.mrf.mxu0
      %v861 = vadd.f32 0.0, %v860
      %v862 = vpop.f32.mrf.mxu0
      %863 = vmatprep.mubr.f32.mxu0 0.0
      %864 = vmatmul.mubr.f32.gmra.mxu0 %v531
      %v865 = vpop.f32.mrf.mxu0
      %v866 = vadd.f32 0.0, %v865
      %v867 = vpop.f32.mrf.mxu0
      %868 = vmatprep.mubr.f32.mxu0 0.0
      %869 = vmatmul.mubr.f32.gmra.mxu0 %v532
      %v870 = vpop.f32.mrf.mxu0
      %v871 = vadd.f32 0.0, %v870
      %v872 = vpop.f32.mrf.mxu0
      %873 = vmatprep.mubr.f32.mxu0 0.0
      %874 = vmatmul.mubr.f32.gmra.mxu0 %v533
      %v875 = vpop.f32.mrf.mxu0
      %v876 = vadd.f32 0.0, %v875
      %v877 = vpop.f32.mrf.mxu0
      %878 = vmatprep.mubr.f32.mxu0 0.0
      %879 = vmatmul.mubr.f32.gmra.mxu0 %v534
      %v880 = vpop.f32.mrf.mxu0
      %v881 = vadd.f32 0.0, %v880
      %v882 = vpop.f32.mrf.mxu0
      %883 = vmatprep.mubr.f32.mxu0 0.0
      %884 = vmatmul.mubr.f32.gmra.mxu0 %v535
      %v885 = vpop.f32.mrf.mxu0
      %v886 = vadd.f32 0.0, %v885
      %v887 = vpop.f32.mrf.mxu0
      %888 = vmatprep.mubr.f32.mxu0 0.0
      %889 = vmatmul.mubr.f32.gmra.mxu0 %v536
      %v890 = vpop.f32.mrf.mxu0
      %v891 = vadd.f32 0.0, %v890
      %v892 = vpop.f32.mrf.mxu0
      %893 = vmatprep.mubr.f32.mxu0 0.0
      %894 = vmatmul.mubr.f32.gmra.mxu0 %v537
      %v895 = vpop.f32.mrf.mxu0
      %v896 = vadd.f32 0.0, %v895
      %v897 = vpop.f32.mrf.mxu0
      %898 = vmatprep.mubr.f32.mxu0 0.0
      %899 = vmatmul.mubr.f32.gmra.mxu0 %v538
      %v900 = vpop.f32.mrf.mxu0
      %v901 = vadd.f32 0.0, %v900
      %v902 = vpop.f32.mrf.mxu0
      %903 = vmatprep.mubr.f32.mxu0 0.0
      %904 = vmatmul.mubr.f32.gmra.mxu0 %v539
      %v905 = vpop.f32.mrf.mxu0
      %v906 = vadd.f32 0.0, %v905
      %v907 = vpop.f32.mrf.mxu0
      %908 = vmatprep.mubr.f32.mxu0 0.0
      %909 = vmatmul.mubr.f32.gmra.mxu0 %v540
      %v910 = vpop.f32.mrf.mxu0
      %v911 = vadd.f32 0.0, %v910
      %v912 = vpop.f32.mrf.mxu0
      %913 = vmatprep.mubr.f32.mxu0 0.0
      %914 = vmatmul.mubr.f32.gmra.mxu0 %v541
      %v915 = vpop.f32.mrf.mxu0
      %v916 = vadd.f32 0.0, %v915
      %v917 = vpop.f32.mrf.mxu0
      %918 = vmatprep.mubr.f32.mxu0 0.0
      %919 = vmatmul.mubr.f32.gmra.mxu0 %v542
      %v920 = vpop.f32.mrf.mxu0
      %v921 = vadd.f32 0.0, %v920
      %v922 = vpop.f32.mrf.mxu0
      %923 = vmatprep.mubr.f32.mxu0 0.0
      %924 = vmatmul.mubr.f32.gmra.mxu0 %v543
      %v925 = vpop.f32.mrf.mxu0
      %v926 = vadd.f32 0.0, %v925
      %v927 = vpop.f32.mrf.mxu0
      %928 = vmatprep.mubr.f32.mxu0 0.0
      %929 = vmatmul.mubr.f32.gmra.mxu0 %v544
      %v930 = vpop.f32.mrf.mxu0
      %v931 = vadd.f32 0.0, %v930
      %v932 = vpop.f32.mrf.mxu0
      %933 = vmatprep.mubr.f32.mxu0 0.0
      %934 = vmatmul.mubr.f32.gmra.mxu0 %v545
      %v935 = vpop.f32.mrf.mxu0
      %v936 = vadd.f32 0.0, %v935
      %v937 = vpop.f32.mrf.mxu0
      %938 = vmatprep.mubr.f32.mxu0 0.0
      %939 = vmatmul.mubr.f32.gmra.mxu0 %v546
      %v940 = vpop.f32.mrf.mxu0
      %v941 = vadd.f32 0.0, %v940
      %v942 = vpop.f32.mrf.mxu0
      %943 = vmatprep.mubr.f32.mxu0 0.0
      %944 = vmatmul.mubr.f32.gmra.mxu0 %v547
      %v945 = vpop.f32.mrf.mxu0
      %v946 = vadd.f32 0.0, %v945
      %v947 = vpop.f32.mrf.mxu0
      %948 = vdwg.mxu0
      %949 = vst [vmem:[%s260] sm:$0xff] %v631
      %950 = vst [vmem:[%s260 + $0x8] sm:$0xff] %v636
      %951 = vst [vmem:[%s260 + $0x10] sm:$0xff] %v641
      %952 = vst [vmem:[%s260 + $0x18] sm:$0xff] %v646
      %953 = vst [vmem:[%s260 + $0x20] sm:$0xff] %v651
      %954 = vst [vmem:[%s260 + $0x28] sm:$0xff] %v656
      %955 = vst [vmem:[%s260 + $0x30] sm:$0xff] %v661
      %956 = vst [vmem:[%s260 + $0x38] sm:$0xff] %v666
      %957 = vst [vmem:[%s260 + $0x40] sm:$0xff] %v671
      %958 = vst [vmem:[%s260 + $0x48] sm:$0xff] %v676
      %959 = vst [vmem:[%s260 + $0x50] sm:$0xff] %v681
      %960 = vst [vmem:[%s260 + $0x58] sm:$0xff] %v686
      %961 = vst [vmem:[%s260 + $0x60] sm:$0xff] %v691
      %962 = vst [vmem:[%s260 + $0x68] sm:$0xff] %v696
      %963 = vst [vmem:[%s260 + $0x70] sm:$0xff] %v701
      %964 = vst [vmem:[%s260 + $0x78] sm:$0xff] %v706
      %965 = vst [vmem:[%s260 + $0x80] sm:$0xff] %v711
      %966 = vst [vmem:[%s260 + $0x88] sm:$0xff] %v716
      %967 = vst [vmem:[%s260 + $0x90] sm:$0xff] %v721
      %968 = vst [vmem:[%s260 + $0x98] sm:$0xff] %v726
      %969 = vst [vmem:[%s260 + $0xa0] sm:$0xff] %v731
      %970 = vst [vmem:[%s260 + $0xa8] sm:$0xff] %v736
      %971 = vst [vmem:[%s260 + $0xb0] sm:$0xff] %v741
      %972 = vst [vmem:[%s260 + $0xb8] sm:$0xff] %v746
      %973 = vst [vmem:[%s260 + $0xc0] sm:$0xff] %v751
      %974 = vst [vmem:[%s260 + $0xc8] sm:$0xff] %v756
      %975 = vst [vmem:[%s260 + $0xd0] sm:$0xff] %v761
      %976 = vst [vmem:[%s260 + $0xd8] sm:$0xff] %v766
      %977 = vst [vmem:[%s260 + $0xe0] sm:$0xff] %v771
      %978 = vst [vmem:[%s260 + $0xe8] sm:$0xff] %v776
      %979 = vst [vmem:[%s260 + $0xf0] sm:$0xff] %v781
      %980 = vst [vmem:[%s260 + $0xf8] sm:$0xff] %v786
      %981 = vst [vmem:[%s260 + $0x100] sm:$0xff] %v791
      %982 = vst [vmem:[%s260 + $0x108] sm:$0xff] %v796
      %983 = vst [vmem:[%s260 + $0x110] sm:$0xff] %v801
      %984 = vst [vmem:[%s260 + $0x118] sm:$0xff] %v806
      %985 = vst [vmem:[%s260 + $0x120] sm:$0xff] %v811
      %986 = vst [vmem:[%s260 + $0x128] sm:$0xff] %v816
      %987 = vst [vmem:[%s260 + $0x130] sm:$0xff] %v821
      %988 = vst [vmem:[%s260 + $0x138] sm:$0xff] %v826
      %989 = vst [vmem:[%s260 + $0x140] sm:$0xff] %v831
      %990 = vst [vmem:[%s260 + $0x148] sm:$0xff] %v836
      %991 = vst [vmem:[%s260 + $0x150] sm:$0xff] %v841
      %992 = vst [vmem:[%s260 + $0x158] sm:$0xff] %v846
      %993 = vst [vmem:[%s260 + $0x160] sm:$0xff] %v851
      %994 = vst [vmem:[%s260 + $0x168] sm:$0xff] %v856
      %995 = vst [vmem:[%s260 + $0x170] sm:$0xff] %v861
      %996 = vst [vmem:[%s260 + $0x178] sm:$0xff] %v866
      %997 = vst [vmem:[%s260 + $0x180] sm:$0xff] %v871
      %998 = vst [vmem:[%s260 + $0x188] sm:$0xff] %v876
      %999 = vst [vmem:[%s260 + $0x190] sm:$0xff] %v881
      %1000 = vst [vmem:[%s260 + $0x198] sm:$0xff] %v886
      %1001 = vst [vmem:[%s260 + $0x1a0] sm:$0xff] %v891
      %1002 = vst [vmem:[%s260 + $0x1a8] sm:$0xff] %v896
      %1003 = vst [vmem:[%s260 + $0x1b0] sm:$0xff] %v901
      %1004 = vst [vmem:[%s260 + $0x1b8] sm:$0xff] %v906
      %1005 = vst [vmem:[%s260 + $0x1c0] sm:$0xff] %v911
      %1006 = vst [vmem:[%s260 + $0x1c8] sm:$0xff] %v916
      %1007 = vst [vmem:[%s260 + $0x1d0] sm:$0xff] %v921
      %1008 = vst [vmem:[%s260 + $0x1d8] sm:$0xff] %v926
      %1009 = vst [vmem:[%s260 + $0x1e0] sm:$0xff] %v931
      %1010 = vst [vmem:[%s260 + $0x1e8] sm:$0xff] %v936
      %1011 = vst [vmem:[%s260 + $0x1f0] sm:$0xff] %v941
      %1012 = vst [vmem:[%s260 + $0x1f8] sm:$0xff] %v946
      %v1013 = vadd.f32 %v631, %v636
      %v1014 = vadd.f32 %v1013, %v641
      %v1015 = vadd.f32 %v1014, %v646
      %v1016 = vadd.f32 %v1015, %v651
      %v1017 = vadd.f32 %v1016, %v656
      %v1018 = vadd.f32 %v1017, %v661
      %v1019 = vadd.f32 %v1018, %v666
      %v1020 = vadd.f32 %v1019, %v671
      %v1021 = vadd.f32 %v1020, %v676
      %v1022 = vadd.f32 %v1021, %v681
      %v1023 = vadd.f32 %v1022, %v686
      %v1024 = vadd.f32 %v1023, %v691
      %v1025 = vadd.f32 %v1024, %v696
      %v1026 = vadd.f32 %v1025, %v701
      %v1027 = vadd.f32 %v1026, %v706
      %v1028 = vadd.f32 %v1027, %v711
      %v1029 = vadd.f32 %v1028, %v716
      %v1030 = vadd.f32 %v1029, %v721
      %v1031 = vadd.f32 %v1030, %v726
      %v1032 = vadd.f32 %v1031, %v731
      %v1033 = vadd.f32 %v1032, %v736
      %v1034 = vadd.f32 %v1033, %v741
      %v1035 = vadd.f32 %v1034, %v746
      %v1036 = vadd.f32 %v1035, %v751
      %v1037 = vadd.f32 %v1036, %v756
      %v1038 = vadd.f32 %v1037, %v761
      %v1039 = vadd.f32 %v1038, %v766
      %v1040 = vadd.f32 %v1039, %v771
      %v1041 = vadd.f32 %v1040, %v776
      %v1042 = vadd.f32 %v1041, %v781
      %v1043 = vadd.f32 %v1042, %v786
      %v1044 = vadd.f32 %v1043, %v791
      %v1045 = vadd.f32 %v1044, %v796
      %v1046 = vadd.f32 %v1045, %v801
      %v1047 = vadd.f32 %v1046, %v806
      %v1048 = vadd.f32 %v1047, %v811
      %v1049 = vadd.f32 %v1048, %v816
      %v1050 = vadd.f32 %v1049, %v821
      %v1051 = vadd.f32 %v1050, %v826
      %v1052 = vadd.f32 %v1051, %v831
      %v1053 = vadd.f32 %v1052, %v836
      %v1054 = vadd.f32 %v1053, %v841
      %v1055 = vadd.f32 %v1054, %v846
      %v1056 = vadd.f32 %v1055, %v851
      %v1057 = vadd.f32 %v1056, %v856
      %v1058 = vadd.f32 %v1057, %v861
      %v1059 = vadd.f32 %v1058, %v866
      %v1060 = vadd.f32 %v1059, %v871
      %v1061 = vadd.f32 %v1060, %v876
      %v1062 = vadd.f32 %v1061, %v881
      %v1063 = vadd.f32 %v1062, %v886
      %v1064 = vadd.f32 %v1063, %v891
      %v1065 = vadd.f32 %v1064, %v896
      %v1066 = vadd.f32 %v1065, %v901
      %v1067 = vadd.f32 %v1066, %v906
      %v1068 = vadd.f32 %v1067, %v911
      %v1069 = vadd.f32 %v1068, %v916
      %v1070 = vadd.f32 %v1069, %v921
      %v1071 = vadd.f32 %v1070, %v926
      %v1072 = vadd.f32 %v1071, %v931
      %v1073 = vadd.f32 %v1072, %v936
      %v1074 = vadd.f32 %v1073, %v941
      %v1075 = vadd.f32 %v1074, %v946
      %v1076 = vrot.slane %v1075, 4
      %v1077 = vadd.f32 %v1075, %v1076
      %v1078 = vrot.slane %v1077, 2
      %v1079 = vadd.f32 %v1077, %v1078
      %v1080 = vrot.slane %v1079, 1
      %v1081 = vadd.f32 %v1079, %v1080
      %v1082 = vmul.f32 %v631, %v631
      %v1083 = vmul.f32 %v636, %v636
      %v1084 = vmul.f32 %v641, %v641
      %v1085 = vmul.f32 %v646, %v646
      %v1086 = vmul.f32 %v651, %v651
      %v1087 = vmul.f32 %v656, %v656
      %v1088 = vmul.f32 %v661, %v661
      %v1089 = vmul.f32 %v666, %v666
      %v1090 = vmul.f32 %v671, %v671
      %v1091 = vmul.f32 %v676, %v676
      %v1092 = vmul.f32 %v681, %v681
      %v1093 = vmul.f32 %v686, %v686
      %v1094 = vmul.f32 %v691, %v691
      %v1095 = vmul.f32 %v696, %v696
      %v1096 = vmul.f32 %v701, %v701
      %v1097 = vmul.f32 %v706, %v706
      %v1098 = vmul.f32 %v711, %v711
      %v1099 = vmul.f32 %v716, %v716
      %v1100 = vmul.f32 %v721, %v721
      %v1101 = vmul.f32 %v726, %v726
      %v1102 = vmul.f32 %v731, %v731
      %v1103 = vmul.f32 %v736, %v736
      %v1104 = vmul.f32 %v741, %v741
      %v1105 = vmul.f32 %v746, %v746
      %v1106 = vmul.f32 %v751, %v751
      %v1107 = vmul.f32 %v756, %v756
      %v1108 = vmul.f32 %v761, %v761
      %v1109 = vmul.f32 %v766, %v766
      %v1110 = vmul.f32 %v771, %v771
      %v1111 = vmul.f32 %v776, %v776
      %v1112 = vmul.f32 %v781, %v781
      %v1113 = vmul.f32 %v786, %v786
      %v1114 = vmul.f32 %v791, %v791
      %v1115 = vmul.f32 %v796, %v796
      %v1116 = vmul.f32 %v801, %v801
      %v1117 = vmul.f32 %v806, %v806
      %v1118 = vmul.f32 %v811, %v811
      %v1119 = vmul.f32 %v816, %v816
      %v1120 = vmul.f32 %v821, %v821
      %v1121 = vmul.f32 %v826, %v826
      %v1122 = vmul.f32 %v831, %v831
      %v1123 = vmul.f32 %v836, %v836
      %v1124 = vmul.f32 %v841, %v841
      %v1125 = vmul.f32 %v846, %v846
      %v1126 = vmul.f32 %v851, %v851
      %v1127 = vmul.f32 %v856, %v856
      %v1128 = vmul.f32 %v861, %v861
      %v1129 = vmul.f32 %v866, %v866
      %v1130 = vmul.f32 %v871, %v871
      %v1131 = vmul.f32 %v876, %v876
      %v1132 = vmul.f32 %v881, %v881
      %v1133 = vmul.f32 %v886, %v886
      %v1134 = vmul.f32 %v891, %v891
      %v1135 = vmul.f32 %v896, %v896
      %v1136 = vmul.f32 %v901, %v901
      %v1137 = vmul.f32 %v906, %v906
      %v1138 = vmul.f32 %v911, %v911
      %v1139 = vmul.f32 %v916, %v916
      %v1140 = vmul.f32 %v921, %v921
      %v1141 = vmul.f32 %v926, %v926
      %v1142 = vmul.f32 %v931, %v931
      %v1143 = vmul.f32 %v936, %v936
      %v1144 = vmul.f32 %v941, %v941
      %v1145 = vmul.f32 %v946, %v946
      %v1146 = vadd.f32 %v1082, %v1083
      %v1147 = vadd.f32 %v1146, %v1084
      %v1148 = vadd.f32 %v1147, %v1085
      %v1149 = vadd.f32 %v1148, %v1086
      %v1150 = vadd.f32 %v1149, %v1087
      %v1151 = vadd.f32 %v1150, %v1088
      %v1152 = vadd.f32 %v1151, %v1089
      %v1153 = vadd.f32 %v1152, %v1090
      %v1154 = vadd.f32 %v1153, %v1091
      %v1155 = vadd.f32 %v1154, %v1092
      %v1156 = vadd.f32 %v1155, %v1093
      %v1157 = vadd.f32 %v1156, %v1094
      %v1158 = vadd.f32 %v1157, %v1095
      %v1159 = vadd.f32 %v1158, %v1096
      %v1160 = vadd.f32 %v1159, %v1097
      %v1161 = vadd.f32 %v1160, %v1098
      %v1162 = vadd.f32 %v1161, %v1099
      %v1163 = vadd.f32 %v1162, %v1100
      %v1164 = vadd.f32 %v1163, %v1101
      %v1165 = vadd.f32 %v1164, %v1102
      %v1166 = vadd.f32 %v1165, %v1103
      %v1167 = vadd.f32 %v1166, %v1104
      %v1168 = vadd.f32 %v1167, %v1105
      %v1169 = vadd.f32 %v1168, %v1106
      %v1170 = vadd.f32 %v1169, %v1107
      %v1171 = vadd.f32 %v1170, %v1108
      %v1172 = vadd.f32 %v1171, %v1109
      %v1173 = vadd.f32 %v1172, %v1110
      %v1174 = vadd.f32 %v1173, %v1111
      %v1175 = vadd.f32 %v1174, %v1112
      %v1176 = vadd.f32 %v1175, %v1113
      %v1177 = vadd.f32 %v1176, %v1114
      %v1178 = vadd.f32 %v1177, %v1115
      %v1179 = vadd.f32 %v1178, %v1116
      %v1180 = vadd.f32 %v1179, %v1117
      %v1181 = vadd.f32 %v1180, %v1118
      %v1182 = vadd.f32 %v1181, %v1119
      %v1183 = vadd.f32 %v1182, %v1120
      %v1184 = vadd.f32 %v1183, %v1121
      %v1185 = vadd.f32 %v1184, %v1122
      %v1186 = vadd.f32 %v1185, %v1123
      %v1187 = vadd.f32 %v1186, %v1124
      %v1188 = vadd.f32 %v1187, %v1125
      %v1189 = vadd.f32 %v1188, %v1126
      %v1190 = vadd.f32 %v1189, %v1127
      %v1191 = vadd.f32 %v1190, %v1128
      %v1192 = vadd.f32 %v1191, %v1129
      %v1193 = vadd.f32 %v1192, %v1130
      %v1194 = vadd.f32 %v1193, %v1131
      %v1195 = vadd.f32 %v1194, %v1132
      %v1196 = vadd.f32 %v1195, %v1133
      %v1197 = vadd.f32 %v1196, %v1134
      %v1198 = vadd.f32 %v1197, %v1135
      %v1199 = vadd.f32 %v1198, %v1136
      %v1200 = vadd.f32 %v1199, %v1137
      %v1201 = vadd.f32 %v1200, %v1138
      %v1202 = vadd.f32 %v1201, %v1139
      %v1203 = vadd.f32 %v1202, %v1140
      %v1204 = vadd.f32 %v1203, %v1141
      %v1205 = vadd.f32 %v1204, %v1142
      %v1206 = vadd.f32 %v1205, %v1143
      %v1207 = vadd.f32 %v1206, %v1144
      %v1208 = vadd.f32 %v1207, %v1145
      %v1209 = vrot.slane %v1208, 4
      %v1210 = vadd.f32 %v1208, %v1209
      %v1211 = vrot.slane %v1210, 2
      %v1212 = vadd.f32 %v1210, %v1211
      %v1213 = vrot.slane %v1212, 1
      %v1214 = vadd.f32 %v1212, %v1213
      %vm1215 = vcmask 1040384
      %v1216 = vsel %vm1215, %v1081, %v1214
      %1217 = vst [vmem:[%s265] sm:$0x3] %v1216
      %s1218 = smul.u32 64, %s18
      %p1219 = scmp.lt.s32.totalorder %s1218, 127
      %s1220 = scalar_select %p1219, %s1218, 127
      %s1221 = smul.addr %s1220, 8
      %s1222 = scalar_lea.vmem %s5, %s1221
      %p1223 = scmp.lt.s32.totalorder %s18, 1
      %s1224 = scalar_select %p1223, %s18, 1
      %s1225 = smul.addr %s1224, 2
      %s1226 = scalar_lea.vmem %s6, %s1225
      // Predicated region
      $region41: #{bottleneck_forward.6} parent=39 // pred_check
        %p1227 = pneg %p146
      $region42: #{bottleneck_forward.6} parent=39 // pred_check_branch
        %1229 = sbr.rel (%p1227) target = $region44
      $region43: #{bottleneck_forward.6} parent=39 // pred_region
        %s1230 = smul.u32 64, %s18
      $region44: #{bottleneck_forward.6} parent=39 // pred_fallthru
        _
      // Predicated region
      $region45: #{bottleneck_forward.6} parent=39 // pred_check
        %p1231 = pneg %p172
      $region46: #{bottleneck_forward.6} parent=39 // pred_check_branch
        %1233 = sbr.rel (%p1231) target = $region48
      $region47: #{bottleneck_forward.6} parent=39 // pred_region
        _
      $region48: #{bottleneck_forward.6} parent=39 // pred_fallthru
        _
    $region40: #{bottleneck_forward.6} parent=5 // pred_fallthru
      _
    %p1234 = scmp.le.s32.totalorder 2, %s13
    // Predicated region
    $region49: #{bottleneck_forward.6} parent=5 // pred_check
      %p1235 = pneg %p1234
    $region50: #{bottleneck_forward.6} parent=5 // pred_check_branch
      %1237 = sbr.rel (%p1235) target = $region52
    $region51: #{bottleneck_forward.6} parent=5 // pred_region
      %s1238 = ssub.s32 %s13, 2
      // Predicated region
      $region53: #{bottleneck_forward.6} parent=51 // pred_check
        %p1239 = pneg %p152
      $region54: #{bottleneck_forward.6} parent=51 // pred_check_branch
        %1241 = sbr.rel (%p1239) target = $region56
      $region55: #{bottleneck_forward.6} parent=51 // pred_region
        %s1242 = smul.u32 64, %s19
        %p1243 = scmp.lt.s32.totalorder %s1242, 127
        %s1244 = scalar_select %p1243, %s1242, 127
        %s1245 = smul.addr %s1244, 8
        %s1246 = scalar_lea.vmem %s5, %s1245
      $region56: #{bottleneck_forward.6} parent=51 // pred_fallthru
        _
      // Predicated region
      $region57: #{bottleneck_forward.6} parent=51 // pred_check
        %p1247 = pneg %p178
      $region58: #{bottleneck_forward.6} parent=51 // pred_check_branch
        %1249 = sbr.rel (%p1247) target = $region60
      $region59: #{bottleneck_forward.6} parent=51 // pred_region
        %p1250 = scmp.lt.s32.totalorder %s19, 1
        %s1251 = scalar_select %p1250, %s19, 1
        %s1252 = smul.addr %s1251, 2
        %s1253 = scalar_lea.vmem %s6, %s1252
      $region60: #{bottleneck_forward.6} parent=51 // pred_fallthru
        _
    $region52: #{bottleneck_forward.6} parent=5 // pred_fallthru
      _
  $region6: #{bottleneck_forward.6} parent=0 // loop_footer
    %s17 = sadd.s32 1, %s13
  $region7: #{bottleneck_forward.6} parent=0 // loop_footer_branch
    %12 = sbr.rel target = $region3
  $region8: #{bottleneck_forward.6} parent=0 // loop_exit
    _

// kernel: bottleneck_forward.7
$region0: #{bottleneck_forward.7}
  #allocation0 [shape = 'u32[]', space=smem, size = 0x4, offset = 0x4, fixed_abs, tag = 'smem constant byte address 0x4 - core index']
  #allocation1 [shape = 'u32[144,128]{1,0:T(1,128)}', space=vmem, size = 0x12000, scoped, tag = 'internal scratch']
  %s0 = inlined_call_operand.vmem [shape: f32[1024,128], index: 0, kind: input, shape index: {}]
  %s1 = inlined_call_operand.vmem [shape: f32[2,128], index: 1, kind: input, shape index: {}]
  %s2 = inlined_call_operand.vmem [shape: f32[1,128], index: 2, kind: input, shape index: {}]
  %s3 = inlined_call_operand.vmem [shape: f32[1,128], index: 3, kind: input, shape index: {}]
  %s4 = inlined_call_operand.vmem [shape: f32[1024,128], index: 4, kind: input, shape index: {}]
  %s5 = inlined_call_operand.hbm [shape: f32[1024,128], index: 5, kind: output, shape index: {}]
  %s6 = sld [smem:[#allocation0]]
  $region53: #{bottleneck_forward.7} parent=0
    _
  %s8 = ssub.s32 1, %s6
  %s9 = scalar_select 0, %s8, %s6
  $region1: #{bottleneck_forward.7} parent=0
    #allocation2 [shape = 'u8[524288]{0}', space=vmem, size = 0x80000, scoped, tag = 'output window, operand 0']
    #allocation3 [shape = 's32[2]{0}', space=sflag, size = 0x8, scoped, tag = 'scoped memory for bottleneck_forward.7']
    %10 = vsyncpa [#allocation3], 0
    %s11 = scalar_lea.sflag [#allocation3], 1
    %12 = vsyncpa %s11, 0
    loop: start=0, step=1, limit=4
    $region2: #{bottleneck_forward.7} parent=1 // loop_pre_header
      _
    $region3: #{bottleneck_forward.7} parent=1 // loop_header
      %s14 = sphi 0, %s18
      %p15 = scmp.ge.s32.totalorder %s14, 4
      %s24 = sphi 0, %s26
      %s27 = sphi 0, %s24
      %s28 = sphi 0, %s27
      %s44 = sphi 0, %s28
      %s48 = sphi 0, %s48
      %s50 = sphi 0, %s48
      %s51 = sphi 0, %s50
      %s65 = sphi 0, %s51
      %s69 = sphi 0, %s69
      %s71 = sphi 0, %s69
      %s72 = sphi 0, %s71
      %s86 = sphi 0, %s72
      %s90 = sphi 0, %s90
      %s92 = sphi 0, %s90
      %s93 = sphi 0, %s92
      %s107 = sphi 0, %s93
      %s113 = sphi 0, %s115
      %s116 = sphi 0, %s113
      %s117 = sphi 0, %s116
      %s133 = sphi 0, %s117
      %s139 = sphi 0, %s141
      %s142 = sphi 0, %s139
      %s143 = sphi 0, %s142
      %s159 = sphi 0, %s143
    $region4: #{bottleneck_forward.7} parent=1 // loop_header_branch
      %17 = sbr.rel (%p15) target = $region8
    $region5: #{bottleneck_forward.7} parent=1 // loop_body
      %s19 = ssub.s32 %s14, 1
      %s20 = ssub.s32 %s14, 2
      %s21 = sadd.s32 %s14, 1
      %s22 = ssub.s32 %s14, %s21
      %p23 = scmp.eq.s32.totalorder %s22, 0
      %s25 = sadd.s32 %s24, 1
      %s26 = scalar_select %p23, %s24, %s25
      %p29 = pneg %p23
      %p30 = scmp.eq.s32.totalorder %s14, 1
      %p31 = por %p29, %p30
      %p32 = scmp.ne.s32.totalorder %s24, %s27
      %p33 = scmp.eq.s32.totalorder %s14, 0
      %p34 = por %p32, %p33
      %p35 = scmp.ne.s32.totalorder %s24, %s27
      %p36 = scmp.eq.s32.totalorder %s19, 1
      %p37 = por %p35, %p36
      %p38 = scmp.ne.s32.totalorder %s27, %s28
      %p39 = scmp.eq.s32.totalorder %s19, 0
      %p40 = por %p38, %p39
      %p41 = scmp.ne.s32.totalorder %s27, %s28
      %p42 = scmp.eq.s32.totalorder %s20, 1
      %p43 = por %p41, %p42
      %p45 = scmp.ne.s32.totalorder %s28, %s44
      %p46 = scmp.eq.s32.totalorder %s20, 0
      %p47 = por %p45, %p46
      %s49 = sadd.s32 %s48, 1
      %p52 = scmp.eq.s32.totalorder %s14, 1
      %p53 = scmp.ne.s32.totalorder %s48, %s50
      %p54 = scmp.eq.s32.totalorder %s14, 0
      %p55 = por %p53, %p54
      %p56 = scmp.ne.s32.totalorder %s48, %s50
      %p57 = scmp.eq.s32.totalorder %s19, 1
      %p58 = por %p56, %p57
      %p59 = scmp.ne.s32.totalorder %s50, %s51
      %p60 = scmp.eq.s32.totalorder %s19, 0
      %p61 = por %p59, %p60
      %p62 = scmp.ne.s32.totalorder %s50, %s51
      %p63 = scmp.eq.s32.totalorder %s20, 1
      %p64 = por %p62, %p63
      %p66 = scmp.ne.s32.totalorder %s51, %s65
      %p67 = scmp.eq.s32.totalorder %s20, 0
      %p68 = por %p66, %p67
      %s70 = sadd.s32 %s69, 1
      %p73 = scmp.eq.s32.totalorder %s14, 1
      %p74 = scmp.ne.s32.totalorder %s69, %s71
      %p75 = scmp.eq.s32.totalorder %s14, 0
      %p76 = por %p74, %p75
      %p77 = scmp.ne.s32.totalorder %s69, %s71
      %p78 = scmp.eq.s32.totalorder %s19, 1
      %p79 = por %p77, %p78
      %p80 = scmp.ne.s32.totalorder %s71, %s72
      %p81 = scmp.eq.s32.totalorder %s19, 0
      %p82 = por %p80, %p81
      %p83 = scmp.ne.s32.totalorder %s71, %s72
      %p84 = scmp.eq.s32.totalorder %s20, 1
      %p85 = por %p83, %p84
      %p87 = scmp.ne.s32.totalorder %s72, %s86
      %p88 = scmp.eq.s32.totalorder %s20, 0
      %p89 = por %p87, %p88
      %s91 = sadd.s32 %s90, 1
      %p94 = scmp.eq.s32.totalorder %s14, 1
      %p95 = scmp.ne.s32.totalorder %s90, %s92
      %p96 = scmp.eq.s32.totalorder %s14, 0
      %p97 = por %p95, %p96
      %p98 = scmp.ne.s32.totalorder %s90, %s92
      %p99 = scmp.eq.s32.totalorder %s19, 1
      %p100 = por %p98, %p99
      %p101 = scmp.ne.s32.totalorder %s92, %s93
      %p102 = scmp.eq.s32.totalorder %s19, 0
      %p103 = por %p101, %p102
      %p104 = scmp.ne.s32.totalorder %s92, %s93
      %p105 = scmp.eq.s32.totalorder %s20, 1
      %p106 = por %p104, %p105
      %p108 = scmp.ne.s32.totalorder %s93, %s107
      %p109 = scmp.eq.s32.totalorder %s20, 0
      %p110 = por %p108, %p109
      %s111 = ssub.s32 %s14, %s21
      %p112 = scmp.eq.s32.totalorder %s111, 0
      %s114 = sadd.s32 %s113, 1
      %s115 = scalar_select %p112, %s113, %s114
      %p118 = pneg %p112
      %p119 = scmp.eq.s32.totalorder %s14, 1
      %p120 = por %p118, %p119
      %p121 = scmp.ne.s32.totalorder %s113, %s116
      %p122 = scmp.eq.s32.totalorder %s14, 0
      %p123 = por %p121, %p122
      %p124 = scmp.ne.s32.totalorder %s113, %s116
      %p125 = scmp.eq.s32.totalorder %s19, 1
      %p126 = por %p124, %p125
      %p127 = scmp.ne.s32.totalorder %s116, %s117
      %p128 = scmp.eq.s32.totalorder %s19, 0
      %p129 = por %p127, %p128
      %p130 = scmp.ne.s32.totalorder %s116, %s117
      %p131 = scmp.eq.s32.totalorder %s20, 1
      %p132 = por %p130, %p131
      %p134 = scmp.ne.s32.totalorder %s117, %s133
      %p135 = scmp.eq.s32.totalorder %s20, 0
      %p136 = por %p134, %p135
      %s137 = ssub.s32 %s14, %s21
      %p138 = scmp.eq.s32.totalorder %s137, 0
      %s140 = sadd.s32 %s139, 1
      %s141 = scalar_select %p138, %s139, %s140
      %p144 = pneg %p138
      %p145 = scmp.eq.s32.totalorder %s14, 1
      %p146 = por %p144, %p145
      %p147 = scmp.ne.s32.totalorder %s139, %s142
      %p148 = scmp.eq.s32.totalorder %s14, 0
      %p149 = por %p147, %p148
      %p150 = scmp.ne.s32.totalorder %s139, %s142
      %p151 = scmp.eq.s32.totalorder %s19, 1
      %p152 = por %p150, %p151
      %p153 = scmp.ne.s32.totalorder %s142, %s143
      %p154 = scmp.eq.s32.totalorder %s19, 0
      %p155 = por %p153, %p154
      %p156 = scmp.ne.s32.totalorder %s142, %s143
      %p157 = scmp.eq.s32.totalorder %s20, 1
      %p158 = por %p156, %p157
      %p160 = scmp.ne.s32.totalorder %s143, %s159
      %p161 = scmp.eq.s32.totalorder %s20, 0
      %p162 = por %p160, %p161
      %p163 = scmp.le.s32.totalorder 1, %s14
      %p164 = scmp.lt.s32.totalorder %s14, 3
      %p165 = pnand %p163, %p164
      %p166 = pneg %p165
      // Predicated region
      $region9: #{bottleneck_forward.7} parent=5 // pred_check
        _
      $region10: #{bottleneck_forward.7} parent=5 // pred_check_branch
        %168 = sbr.rel (%p165) target = $region12
      $region11: #{bottleneck_forward.7} parent=5 // pred_region
        %s169 = ssub.s32 %s14, 1
        // Predicated region
        $region13: #{bottleneck_forward.7} parent=11 // pred_check
          %p170 = pneg %p61
        $region14: #{bottleneck_forward.7} parent=11 // pred_check_branch
          %172 = sbr.rel (%p170) target = $region16
        $region15: #{bottleneck_forward.7} parent=11 // pred_region
          _
        $region16: #{bottleneck_forward.7} parent=11 // pred_fallthru
          _
        // Predicated region
        $region17: #{bottleneck_forward.7} parent=11 // pred_check
          %p173 = pneg %p82
        $region18: #{bottleneck_forward.7} parent=11 // pred_check_branch
          %175 = sbr.rel (%p173) target = $region20
        $region19: #{bottleneck_forward.7} parent=11 // pred_region
          _
        $region20: #{bottleneck_forward.7} parent=11 // pred_fallthru
          _
        // Predicated region
        $region21: #{bottleneck_forward.7} parent=11 // pred_check
          %p176 = pneg %p103
        $region22: #{bottleneck_forward.7} parent=11 // pred_check_branch
          %178 = sbr.rel (%p176) target = $region24
        $region23: #{bottleneck_forward.7} parent=11 // pred_region
          _
        $region24: #{bottleneck_forward.7} parent=11 // pred_fallthru
          _
      $region12: #{bottleneck_forward.7} parent=5 // pred_fallthru
        _
      %p179 = scmp.lt.s32.totalorder %s14, 2
      // Predicated region
      $region25: #{bottleneck_forward.7} parent=5 // pred_check
        %p180 = pneg %p179
      $region26: #{bottleneck_forward.7} parent=5 // pred_check_branch
        %182 = sbr.rel (%p180) target = $region28
      $region27: #{bottleneck_forward.7} parent=5 // pred_region
        // Predicated region
        $region29: #{bottleneck_forward.7} parent=27 // pred_check
          %p183 = pneg %p34
        $region30: #{bottleneck_forward.7} parent=27 // pred_check_branch
          %185 = sbr.rel (%p183) target = $region32
        $region31: #{bottleneck_forward.7} parent=27 // pred_region
          %s186 = smul.u32 64, %s14
          %p187 = scmp.lt.s32.totalorder %s186, 127
          %s188 = scalar_select %p187, %s186, 127
          %s189 = smul.addr %s188, 8
          %s190 = scalar_lea.vmem %s0, %s189
          %s191 = smul.u32 64, %s14
        $region32: #{bottleneck_forward.7} parent=27 // pred_fallthru
          _
        // Predicated region
        $region33: #{bottleneck_forward.7} parent=27 // pred_check
          %p192 = pneg %p123
        $region34: #{bottleneck_forward.7} parent=27 // pred_check_branch
          %194 = sbr.rel (%p192) target = $region36
        $region35: #{bottleneck_forward.7} parent=27 // pred_region
          %s195 = smul.u32 64, %s14
          %p196 = scmp.lt.s32.totalorder %s195, 127
          %s197 = scalar_select %p196, %s195, 127
          %s198 = smul.addr %s197, 8
          %s199 = scalar_lea.vmem %s4, %s198
          %s200 = smul.u32 64, %s14
        $region36: #{bottleneck_forward.7} parent=27 // pred_fallthru
          _
      $region28: #{bottleneck_forward.7} parent=5 // pred_fallthru
        _
      %p201 = scmp.le.s32.totalorder 1, %s14
      %p202 = scmp.lt.s32.totalorder %s14, 3
      %p203 = pnand %p201, %p202
      %p204 = pneg %p203
      // Predicated region
      $region37: #{bottleneck_forward.7} parent=5 // pred_check
        _
      $region38: #{bottleneck_forward.7} parent=5 // pred_check_branch
        %206 = sbr.rel (%p203) target = $region40
      $region39: #{bottleneck_forward.7} parent=5 // pred_region
        %s207 = ssub.s32 %s14, 1
        %s208 = smul.u32 64, %s19
        %p209 = scmp.lt.s32.totalorder %s208, 127
        %s210 = scalar_select %p209, %s208, 127
        %s211 = smul.addr %s210, 8
        %s212 = scalar_lea.vmem %s0, %s211
        %p213 = pneg %p40
        %p214 = pneg %p37
        %p215 = pneg %p61
        %p216 = pneg %p58
        %p217 = pneg %p82
        %p218 = pneg %p79
        %p219 = pneg %p103
        %p220 = pneg %p100
        %s221 = smul.u32 64, %s19
        %p222 = scmp.lt.s32.totalorder %s221, 127
        %s223 = scalar_select %p222, %s221, 127
        %s224 = smul.addr %s223, 8
        %s225 = scalar_lea.vmem %s4, %s224
        %p226 = pneg %p129
        %p227 = pneg %p126
        %p228 = pneg %p155
        %p229 = pneg %p152
        %s230 = sand.u32 %s142, 1
        %s231 = scalar_lea.sflag [#allocation3], %s230
        %s232 = sand.u32 %s142, 1
        %s233 = smul.addr %s232, 512
        %s234 = scalar_lea.vmem [#allocation2], %s233
        %s235 = smul.u32 64, %s19
        %p236 = scmp.lt.s32.totalorder %s235, 127
        %s237 = scalar_select %p236, %s235, 127
        %s238 = smul.addr %s237, 8
        %s239 = scalar_lea.vmem %s0, %s238
        %s240 = smul.u32 64, %s19
        %s241 = smul.u32 64, %s19
        %p242 = scmp.lt.s32.totalorder %s241, 127
        %s243 = scalar_select %p242, %s241, 127
        %s244 = smul.addr %s243, 8
        %s245 = scalar_lea.vmem %s4, %s244
        %s246 = smul.u32 64, %s19
        %s247 = smul.u32 64, %s19
        %v248 = vld [vmem:[%s1] sm:$0x1]
        %v249 = vmul.f32 %v248, 0.0009765625
        %v250 = vld [vmem:[%s1 + $0x1] sm:$0x1]
        %v251 = vmul.f32 %v250, 0.0009765625
        %v252 = vmul.f32 %v249, %v249
        %v253 = vsub.f32 %v251, %v252
        %v254 = vmax.f32 %v253, 0.0
        %v255 = vld [vmem:[%s2] sm:$0x1]
        %v256 = vadd.f32 %v254, 1e-05
        %v257 = vrsqrt.pop %v256
        %v258 = vmul.f32 %v255, %v257
        %v259 = vld [vmem:[%s3] sm:$0x1]
        %v260 = vmul.f32 %v249, %v258
        %v261 = vsub.f32 %v259, %v260
        %v262 = vld [vmem:[%s239] sm:$0xff]
        %v263 = vld [vmem:[%s239 + $0x8] sm:$0xff]
        %v264 = vld [vmem:[%s239 + $0x10] sm:$0xff]
        %v265 = vld [vmem:[%s239 + $0x18] sm:$0xff]
        %v266 = vld [vmem:[%s239 + $0x20] sm:$0xff]
        %v267 = vld [vmem:[%s239 + $0x28] sm:$0xff]
        %v268 = vld [vmem:[%s239 + $0x30] sm:$0xff]
        %v269 = vld [vmem:[%s239 + $0x38] sm:$0xff]
        %v270 = vld [vmem:[%s239 + $0x40] sm:$0xff]
        %v271 = vld [vmem:[%s239 + $0x48] sm:$0xff]
        %v272 = vld [vmem:[%s239 + $0x50] sm:$0xff]
        %v273 = vld [vmem:[%s239 + $0x58] sm:$0xff]
        %v274 = vld [vmem:[%s239 + $0x60] sm:$0xff]
        %v275 = vld [vmem:[%s239 + $0x68] sm:$0xff]
        %v276 = vld [vmem:[%s239 + $0x70] sm:$0xff]
        %v277 = vld [vmem:[%s239 + $0x78] sm:$0xff]
        %v278 = vld [vmem:[%s239 + $0x80] sm:$0xff]
        %v279 = vld [vmem:[%s239 + $0x88] sm:$0xff]
        %v280 = vld [vmem:[%s239 + $0x90] sm:$0xff]
        %v281 = vld [vmem:[%s239 + $0x98] sm:$0xff]
        %v282 = vld [vmem:[%s239 + $0xa0] sm:$0xff]
        %v283 = vld [vmem:[%s239 + $0xa8] sm:$0xff]
        %v284 = vld [vmem:[%s239 + $0xb0] sm:$0xff]
        %v285 = vld [vmem:[%s239 + $0xb8] sm:$0xff]
        %v286 = vld [vmem:[%s239 + $0xc0] sm:$0xff]
        %v287 = vld [vmem:[%s239 + $0xc8] sm:$0xff]
        %v288 = vld [vmem:[%s239 + $0xd0] sm:$0xff]
        %v289 = vld [vmem:[%s239 + $0xd8] sm:$0xff]
        %v290 = vld [vmem:[%s239 + $0xe0] sm:$0xff]
        %v291 = vld [vmem:[%s239 + $0xe8] sm:$0xff]
        %v292 = vld [vmem:[%s239 + $0xf0] sm:$0xff]
        %v293 = vld [vmem:[%s239 + $0xf8] sm:$0xff]
        %v294 = vld [vmem:[%s239 + $0x100] sm:$0xff]
        %v295 = vld [vmem:[%s239 + $0x108] sm:$0xff]
        %v296 = vld [vmem:[%s239 + $0x110] sm:$0xff]
        %v297 = vld [vmem:[%s239 + $0x118] sm:$0xff]
        %v298 = vld [vmem:[%s239 + $0x120] sm:$0xff]
        %v299 = vld [vmem:[%s239 + $0x128] sm:$0xff]
        %v300 = vld [vmem:[%s239 + $0x130] sm:$0xff]
        %v301 = vld [vmem:[%s239 + $0x138] sm:$0xff]
        %v302 = vld [vmem:[%s239 + $0x140] sm:$0xff]
        %v303 = vld [vmem:[%s239 + $0x148] sm:$0xff]
        %v304 = vld [vmem:[%s239 + $0x150] sm:$0xff]
        %v305 = vld [vmem:[%s239 + $0x158] sm:$0xff]
        %v306 = vld [vmem:[%s239 + $0x160] sm:$0xff]
        %v307 = vld [vmem:[%s239 + $0x168] sm:$0xff]
        %v308 = vld [vmem:[%s239 + $0x170] sm:$0xff]
        %v309 = vld [vmem:[%s239 + $0x178] sm:$0xff]
        %v310 = vld [vmem:[%s239 + $0x180] sm:$0xff]
        %v311 = vld [vmem:[%s239 + $0x188] sm:$0xff]
        %v312 = vld [vmem:[%s239 + $0x190] sm:$0xff]
        %v313 = vld [vmem:[%s239 + $0x198] sm:$0xff]
        %v314 = vld [vmem:[%s239 + $0x1a0] sm:$0xff]
        %v315 = vld [vmem:[%s239 + $0x1a8] sm:$0xff]
        %v316 = vld [vmem:[%s239 + $0x1b0] sm:$0xff]
        %v317 = vld [vmem:[%s239 + $0x1b8] sm:$0xff]
        %v318 = vld [vmem:[%s239 + $0x1c0] sm:$0xff]
        %v319 = vld [vmem:[%s239 + $0x1c8] sm:$0xff]
        %v320 = vld [vmem:[%s239 + $0x1d0] sm:$0xff]
        %v321 = vld [vmem:[%s239 + $0x1d8] sm:$0xff]
        %v322 = vld [vmem:[%s239 + $0x1e0] sm:$0xff]
        %v323 = vld [vmem:[%s239 + $0x1e8] sm:$0xff]
        %v324 = vld [vmem:[%s239 + $0x1f0] sm:$0xff]
        %v325 = vld [vmem:[%s239 + $0x1f8] sm:$0xff]
        %v327 = vlaneseq
        %v328 = vshrl.u32 %v327, 7
        %v329 = vsub.s32 0, %v328
        %v330 = vrot.slane %v258, %v329
        %v332 = vmul.f32 %v262, %v330
        %v333 = vmul.f32 %v263, %v330
        %v334 = vmul.f32 %v264, %v330
        %v335 = vmul.f32 %v265, %v330
        %v336 = vmul.f32 %v266, %v330
        %v337 = vmul.f32 %v267, %v330
        %v338 = vmul.f32 %v268, %v330
        %v339 = vmul.f32 %v269, %v330
        %v340 = vmul.f32 %v270, %v330
        %v341 = vmul.f32 %v271, %v330
        %v342 = vmul.f32 %v272, %v330
        %v343 = vmul.f32 %v273, %v330
        %v344 = vmul.f32 %v274, %v330
        %v345 = vmul.f32 %v275, %v330
        %v346 = vmul.f32 %v276, %v330
        %v347 = vmul.f32 %v277, %v330
        %v348 = vmul.f32 %v278, %v330
        %v349 = vmul.f32 %v279, %v330
        %v350 = vmul.f32 %v280, %v330
        %v351 = vmul.f32 %v281, %v330
        %v352 = vmul.f32 %v282, %v330
        %v353 = vmul.f32 %v283, %v330
        %v354 = vmul.f32 %v284, %v330
        %v355 = vmul.f32 %v285, %v330
        %v356 = vmul.f32 %v286, %v330
        %v357 = vmul.f32 %v287, %v330
        %v358 = vmul.f32 %v288, %v330
        %v359 = vmul.f32 %v289, %v330
        %v360 = vmul.f32 %v290, %v330
        %v361 = vmul.f32 %v291, %v330
        %v362 = vmul.f32 %v292, %v330
        %v363 = vmul.f32 %v293, %v330
        %v364 = vmul.f32 %v294, %v330
        %v365 = vmul.f32 %v295, %v330
        %v366 = vmul.f32 %v296, %v330
        %v367 = vmul.f32 %v297, %v330
        %v368 = vmul.f32 %v298, %v330
        %v369 = vmul.f32 %v299, %v330
        %v370 = vmul.f32 %v300, %v330
        %v371 = vmul.f32 %v301, %v330
        %v372 = vmul.f32 %v302, %v330
        %v373 = vmul.f32 %v303, %v330
        %v374 = vmul.f32 %v304, %v330
        %v375 = vmul.f32 %v305, %v330
        %v376 = vmul.f32 %v306, %v330
        %v377 = vmul.f32 %v307, %v330
        %v378 = vmul.f32 %v308, %v330
        %v379 = vmul.f32 %v309, %v330
        %v380 = vmul.f32 %v310, %v330
        %v381 = vmul.f32 %v311, %v330
        %v382 = vmul.f32 %v312, %v330
        %v383 = vmul.f32 %v313, %v330
        %v384 = vmul.f32 %v314, %v330
        %v385 = vmul.f32 %v315, %v330
        %v386 = vmul.f32 %v316, %v330
        %v387 = vmul.f32 %v317, %v330
        %v388 = vmul.f32 %v318, %v330
        %v389 = vmul.f32 %v319, %v330
        %v390 = vmul.f32 %v320, %v330
        %v391 = vmul.f32 %v321, %v330
        %v392 = vmul.f32 %v322, %v330
        %v393 = vmul.f32 %v323, %v330
        %v394 = vmul.f32 %v324, %v330
        %v395 = vmul.f32 %v325, %v330
        %v397 = vlaneseq
        %v398 = vshrl.u32 %v397, 7
        %v399 = vsub.s32 0, %v398
        %v400 = vrot.slane %v261, %v399
        %v402 = vadd.f32 %v332, %v400
        %v403 = vadd.f32 %v333, %v400
        %v404 = vadd.f32 %v334, %v400
        %v405 = vadd.f32 %v335, %v400
        %v406 = vadd.f32 %v336, %v400
        %v407 = vadd.f32 %v337, %v400
        %v408 = vadd.f32 %v338, %v400
        %v409 = vadd.f32 %v339, %v400
        %v410 = vadd.f32 %v340, %v400
        %v411 = vadd.f32 %v341, %v400
        %v412 = vadd.f32 %v342, %v400
        %v413 = vadd.f32 %v343, %v400
        %v414 = vadd.f32 %v344, %v400
        %v415 = vadd.f32 %v345, %v400
        %v416 = vadd.f32 %v346, %v400
        %v417 = vadd.f32 %v347, %v400
        %v418 = vadd.f32 %v348, %v400
        %v419 = vadd.f32 %v349, %v400
        %v420 = vadd.f32 %v350, %v400
        %v421 = vadd.f32 %v351, %v400
        %v422 = vadd.f32 %v352, %v400
        %v423 = vadd.f32 %v353, %v400
        %v424 = vadd.f32 %v354, %v400
        %v425 = vadd.f32 %v355, %v400
        %v426 = vadd.f32 %v356, %v400
        %v427 = vadd.f32 %v357, %v400
        %v428 = vadd.f32 %v358, %v400
        %v429 = vadd.f32 %v359, %v400
        %v430 = vadd.f32 %v360, %v400
        %v431 = vadd.f32 %v361, %v400
        %v432 = vadd.f32 %v362, %v400
        %v433 = vadd.f32 %v363, %v400
        %v434 = vadd.f32 %v364, %v400
        %v435 = vadd.f32 %v365, %v400
        %v436 = vadd.f32 %v366, %v400
        %v437 = vadd.f32 %v367, %v400
        %v438 = vadd.f32 %v368, %v400
        %v439 = vadd.f32 %v369, %v400
        %v440 = vadd.f32 %v370, %v400
        %v441 = vadd.f32 %v371, %v400
        %v442 = vadd.f32 %v372, %v400
        %v443 = vadd.f32 %v373, %v400
        %v444 = vadd.f32 %v374, %v400
        %v445 = vadd.f32 %v375, %v400
        %v446 = vadd.f32 %v376, %v400
        %v447 = vadd.f32 %v377, %v400
        %v448 = vadd.f32 %v378, %v400
        %v449 = vadd.f32 %v379, %v400
        %v450 = vadd.f32 %v380, %v400
        %v451 = vadd.f32 %v381, %v400
        %v452 = vadd.f32 %v382, %v400
        %v453 = vadd.f32 %v383, %v400
        %v454 = vadd.f32 %v384, %v400
        %v455 = vadd.f32 %v385, %v400
        %v456 = vadd.f32 %v386, %v400
        %v457 = vadd.f32 %v387, %v400
        %v458 = vadd.f32 %v388, %v400
        %v459 = vadd.f32 %v389, %v400
        %v460 = vadd.f32 %v390, %v400
        %v461 = vadd.f32 %v391, %v400
        %v462 = vadd.f32 %v392, %v400
        %v463 = vadd.f32 %v393, %v400
        %v464 = vadd.f32 %v394, %v400
        %v465 = vadd.f32 %v395, %v400
        %v466 = vld [vmem:[%s245] sm:$0xff]
        %v467 = vld [vmem:[%s245 + $0x8] sm:$0xff]
        %v468 = vld [vmem:[%s245 + $0x10] sm:$0xff]
        %v469 = vld [vmem:[%s245 + $0x18] sm:$0xff]
        %v470 = vld [vmem:[%s245 + $0x20] sm:$0xff]
        %v471 = vld [vmem:[%s245 + $0x28] sm:$0xff]
        %v472 = vld [vmem:[%s245 + $0x30] sm:$0xff]
        %v473 = vld [vmem:[%s245 + $0x38] sm:$0xff]
        %v474 = vld [vmem:[%s245 + $0x40] sm:$0xff]
        %v475 = vld [vmem:[%s245 + $0x48] sm:$0xff]
        %v476 = vld [vmem:[%s245 + $0x50] sm:$0xff]
        %v477 = vld [vmem:[%s245 + $0x58] sm:$0xff]
        %v478 = vld [vmem:[%s245 + $0x60] sm:$0xff]
        %v479 = vld [vmem:[%s245 + $0x68] sm:$0xff]
        %v480 = vld [vmem:[%s245 + $0x70] sm:$0xff]
        %v481 = vld [vmem:[%s245 + $0x78] sm:$0xff]
        %v482 = vld [vmem:[%s245 + $0x80] sm:$0xff]
        %v483 = vld [vmem:[%s245 + $0x88] sm:$0xff]
        %v484 = vld [vmem:[%s245 + $0x90] sm:$0xff]
        %v485 = vld [vmem:[%s245 + $0x98] sm:$0xff]
        %v486 = vld [vmem:[%s245 + $0xa0] sm:$0xff]
        %v487 = vld [vmem:[%s245 + $0xa8] sm:$0xff]
        %v488 = vld [vmem:[%s245 + $0xb0] sm:$0xff]
        %v489 = vld [vmem:[%s245 + $0xb8] sm:$0xff]
        %v490 = vld [vmem:[%s245 + $0xc0] sm:$0xff]
        %v491 = vld [vmem:[%s245 + $0xc8] sm:$0xff]
        %v492 = vld [vmem:[%s245 + $0xd0] sm:$0xff]
        %v493 = vld [vmem:[%s245 + $0xd8] sm:$0xff]
        %v494 = vld [vmem:[%s245 + $0xe0] sm:$0xff]
        %v495 = vld [vmem:[%s245 + $0xe8] sm:$0xff]
        %v496 = vld [vmem:[%s245 + $0xf0] sm:$0xff]
        %v497 = vld [vmem:[%s245 + $0xf8] sm:$0xff]
        %v498 = vld [vmem:[%s245 + $0x100] sm:$0xff]
        %v499 = vld [vmem:[%s245 + $0x108] sm:$0xff]
        %v500 = vld [vmem:[%s245 + $0x110] sm:$0xff]
        %v501 = vld [vmem:[%s245 + $0x118] sm:$0xff]
        %v502 = vld [vmem:[%s245 + $0x120] sm:$0xff]
        %v503 = vld [vmem:[%s245 + $0x128] sm:$0xff]
        %v504 = vld [vmem:[%s245 + $0x130] sm:$0xff]
        %v505 = vld [vmem:[%s245 + $0x138] sm:$0xff]
        %v506 = vld [vmem:[%s245 + $0x140] sm:$0xff]
        %v507 = vld [vmem:[%s245 + $0x148] sm:$0xff]
        %v508 = vld [vmem:[%s245 + $0x150] sm:$0xff]
        %v509 = vld [vmem:[%s245 + $0x158] sm:$0xff]
        %v510 = vld [vmem:[%s245 + $0x160] sm:$0xff]
        %v511 = vld [vmem:[%s245 + $0x168] sm:$0xff]
        %v512 = vld [vmem:[%s245 + $0x170] sm:$0xff]
        %v513 = vld [vmem:[%s245 + $0x178] sm:$0xff]
        %v514 = vld [vmem:[%s245 + $0x180] sm:$0xff]
        %v515 = vld [vmem:[%s245 + $0x188] sm:$0xff]
        %v516 = vld [vmem:[%s245 + $0x190] sm:$0xff]
        %v517 = vld [vmem:[%s245 + $0x198] sm:$0xff]
        %v518 = vld [vmem:[%s245 + $0x1a0] sm:$0xff]
        %v519 = vld [vmem:[%s245 + $0x1a8] sm:$0xff]
        %v520 = vld [vmem:[%s245 + $0x1b0] sm:$0xff]
        %v521 = vld [vmem:[%s245 + $0x1b8] sm:$0xff]
        %v522 = vld [vmem:[%s245 + $0x1c0] sm:$0xff]
        %v523 = vld [vmem:[%s245 + $0x1c8] sm:$0xff]
        %v524 = vld [vmem:[%s245 + $0x1d0] sm:$0xff]
        %v525 = vld [vmem:[%s245 + $0x1d8] sm:$0xff]
        %v526 = vld [vmem:[%s245 + $0x1e0] sm:$0xff]
        %v527 = vld [vmem:[%s245 + $0x1e8] sm:$0xff]
        %v528 = vld [vmem:[%s245 + $0x1f0] sm:$0xff]
        %v529 = vld [vmem:[%s245 + $0x1f8] sm:$0xff]
        %v530 = vadd.f32 %v402, %v466
        %v531 = vadd.f32 %v403, %v467
        %v532 = vadd.f32 %v404, %v468
        %v533 = vadd.f32 %v405, %v469
        %v534 = vadd.f32 %v406, %v470
        %v535 = vadd.f32 %v407, %v471
        %v536 = vadd.f32 %v408, %v472
        %v537 = vadd.f32 %v409, %v473
        %v538 = vadd.f32 %v410, %v474
        %v539 = vadd.f32 %v411, %v475
        %v540 = vadd.f32 %v412, %v476
        %v541 = vadd.f32 %v413, %v477
        %v542 = vadd.f32 %v414, %v478
        %v543 = vadd.f32 %v415, %v479
        %v544 = vadd.f32 %v416, %v480
        %v545 = vadd.f32 %v417, %v481
        %v546 = vadd.f32 %v418, %v482
        %v547 = vadd.f32 %v419, %v483
        %v548 = vadd.f32 %v420, %v484
        %v549 = vadd.f32 %v421, %v485
        %v550 = vadd.f32 %v422, %v486
        %v551 = vadd.f32 %v423, %v487
        %v552 = vadd.f32 %v424, %v488
        %v553 = vadd.f32 %v425, %v489
        %v554 = vadd.f32 %v426, %v490
        %v555 = vadd.f32 %v427, %v491
        %v556 = vadd.f32 %v428, %v492
        %v557 = vadd.f32 %v429, %v493
        %v558 = vadd.f32 %v430, %v494
        %v559 = vadd.f32 %v431, %v495
        %v560 = vadd.f32 %v432, %v496
        %v561 = vadd.f32 %v433, %v497
        %v562 = vadd.f32 %v434, %v498
        %v563 = vadd.f32 %v435, %v499
        %v564 = vadd.f32 %v436, %v500
        %v565 = vadd.f32 %v437, %v501
        %v566 = vadd.f32 %v438, %v502
        %v567 = vadd.f32 %v439, %v503
        %v568 = vadd.f32 %v440, %v504
        %v569 = vadd.f32 %v441, %v505
        %v570 = vadd.f32 %v442, %v506
        %v571 = vadd.f32 %v443, %v507
        %v572 = vadd.f32 %v444, %v508
        %v573 = vadd.f32 %v445, %v509
        %v574 = vadd.f32 %v446, %v510
        %v575 = vadd.f32 %v447, %v511
        %v576 = vadd.f32 %v448, %v512
        %v577 = vadd.f32 %v449, %v513
        %v578 = vadd.f32 %v450, %v514
        %v579 = vadd.f32 %v451, %v515
        %v580 = vadd.f32 %v452, %v516
        %v581 = vadd.f32 %v453, %v517
        %v582 = vadd.f32 %v454, %v518
        %v583 = vadd.f32 %v455, %v519
        %v584 = vadd.f32 %v456, %v520
        %v585 = vadd.f32 %v457, %v521
        %v586 = vadd.f32 %v458, %v522
        %v587 = vadd.f32 %v459, %v523
        %v588 = vadd.f32 %v460, %v524
        %v589 = vadd.f32 %v461, %v525
        %v590 = vadd.f32 %v462, %v526
        %v591 = vadd.f32 %v463, %v527
        %v592 = vadd.f32 %v464, %v528
        %v593 = vadd.f32 %v465, %v529
        %v594 = vmax.f32 %v530, 0.0
        %v595 = vmax.f32 %v531, 0.0
        %v596 = vmax.f32 %v532, 0.0
        %v597 = vmax.f32 %v533, 0.0
        %v598 = vmax.f32 %v534, 0.0
        %v599 = vmax.f32 %v535, 0.0
        %v600 = vmax.f32 %v536, 0.0
        %v601 = vmax.f32 %v537, 0.0
        %v602 = vmax.f32 %v538, 0.0
        %v603 = vmax.f32 %v539, 0.0
        %v604 = vmax.f32 %v540, 0.0
        %v605 = vmax.f32 %v541, 0.0
        %v606 = vmax.f32 %v542, 0.0
        %v607 = vmax.f32 %v543, 0.0
        %v608 = vmax.f32 %v544, 0.0
        %v609 = vmax.f32 %v545, 0.0
        %v610 = vmax.f32 %v546, 0.0
        %v611 = vmax.f32 %v547, 0.0
        %v612 = vmax.f32 %v548, 0.0
        %v613 = vmax.f32 %v549, 0.0
        %v614 = vmax.f32 %v550, 0.0
        %v615 = vmax.f32 %v551, 0.0
        %v616 = vmax.f32 %v552, 0.0
        %v617 = vmax.f32 %v553, 0.0
        %v618 = vmax.f32 %v554, 0.0
        %v619 = vmax.f32 %v555, 0.0
        %v620 = vmax.f32 %v556, 0.0
        %v621 = vmax.f32 %v557, 0.0
        %v622 = vmax.f32 %v558, 0.0
        %v623 = vmax.f32 %v559, 0.0
        %v624 = vmax.f32 %v560, 0.0
        %v625 = vmax.f32 %v561, 0.0
        %v626 = vmax.f32 %v562, 0.0
        %v627 = vmax.f32 %v563, 0.0
        %v628 = vmax.f32 %v564, 0.0
        %v629 = vmax.f32 %v565, 0.0
        %v630 = vmax.f32 %v566, 0.0
        %v631 = vmax.f32 %v567, 0.0
        %v632 = vmax.f32 %v568, 0.0
        %v633 = vmax.f32 %v569, 0.0
        %v634 = vmax.f32 %v570, 0.0
        %v635 = vmax.f32 %v571, 0.0
        %v636 = vmax.f32 %v572, 0.0
        %v637 = vmax.f32 %v573, 0.0
        %v638 = vmax.f32 %v574, 0.0
        %v639 = vmax.f32 %v575, 0.0
        %v640 = vmax.f32 %v576, 0.0
        %v641 = vmax.f32 %v577, 0.0
        %v642 = vmax.f32 %v578, 0.0
        %v643 = vmax.f32 %v579, 0.0
        %v644 = vmax.f32 %v580, 0.0
        %v645 = vmax.f32 %v581, 0.0
        %v646 = vmax.f32 %v582, 0.0
        %v647 = vmax.f32 %v583, 0.0
        %v648 = vmax.f32 %v584, 0.0
        %v649 = vmax.f32 %v585, 0.0
        %v650 = vmax.f32 %v586, 0.0
        %v651 = vmax.f32 %v587, 0.0
        %v652 = vmax.f32 %v588, 0.0
        %v653 = vmax.f32 %v589, 0.0
        %v654 = vmax.f32 %v590, 0.0
        %v655 = vmax.f32 %v591, 0.0
        %v656 = vmax.f32 %v592, 0.0
        %v657 = vmax.f32 %v593, 0.0
        %658 = vst [vmem:[%s234] sm:$0xff] %v594
        %659 = vst [vmem:[%s234 + $0x8] sm:$0xff] %v595
        %660 = vst [vmem:[%s234 + $0x10] sm:$0xff] %v596
        %661 = vst [vmem:[%s234 + $0x18] sm:$0xff] %v597
        %662 = vst [vmem:[%s234 + $0x20] sm:$0xff] %v598
        %663 = vst [vmem:[%s234 + $0x28] sm:$0xff] %v599
        %664 = vst [vmem:[%s234 + $0x30] sm:$0xff] %v600
        %665 = vst [vmem:[%s234 + $0x38] sm:$0xff] %v601
        %666 = vst [vmem:[%s234 + $0x40] sm:$0xff] %v602
        %667 = vst [vmem:[%s234 + $0x48] sm:$0xff] %v603
        %668 = vst [vmem:[%s234 + $0x50] sm:$0xff] %v604
        %669 = vst [vmem:[%s234 + $0x58] sm:$0xff] %v605
        %670 = vst [vmem:[%s234 + $0x60] sm:$0xff] %v606
        %671 = vst [vmem:[%s234 + $0x68] sm:$0xff] %v607
        %672 = vst [vmem:[%s234 + $0x70] sm:$0xff] %v608
        %673 = vst [vmem:[%s234 + $0x78] sm:$0xff] %v609
        %674 = vst [vmem:[%s234 + $0x80] sm:$0xff] %v610
        %675 = vst [vmem:[%s234 + $0x88] sm:$0xff] %v611
        %676 = vst [vmem:[%s234 + $0x90] sm:$0xff] %v612
        %677 = vst [vmem:[%s234 + $0x98] sm:$0xff] %v613
        %678 = vst [vmem:[%s234 + $0xa0] sm:$0xff] %v614
        %679 = vst [vmem:[%s234 + $0xa8] sm:$0xff] %v615
        %680 = vst [vmem:[%s234 + $0xb0] sm:$0xff] %v616
        %681 = vst [vmem:[%s234 + $0xb8] sm:$0xff] %v617
        %682 = vst [vmem:[%s234 + $0xc0] sm:$0xff] %v618
        %683 = vst [vmem:[%s234 + $0xc8] sm:$0xff] %v619
        %684 = vst [vmem:[%s234 + $0xd0] sm:$0xff] %v620
        %685 = vst [vmem:[%s234 + $0xd8] sm:$0xff] %v621
        %686 = vst [vmem:[%s234 + $0xe0] sm:$0xff] %v622
        %687 = vst [vmem:[%s234 + $0xe8] sm:$0xff] %v623
        %688 = vst [vmem:[%s234 + $0xf0] sm:$0xff] %v624
        %689 = vst [vmem:[%s234 + $0xf8] sm:$0xff] %v625
        %690 = vst [vmem:[%s234 + $0x100] sm:$0xff] %v626
        %691 = vst [vmem:[%s234 + $0x108] sm:$0xff] %v627
        %692 = vst [vmem:[%s234 + $0x110] sm:$0xff] %v628
        %693 = vst [vmem:[%s234 + $0x118] sm:$0xff] %v629
        %694 = vst [vmem:[%s234 + $0x120] sm:$0xff] %v630
        %695 = vst [vmem:[%s234 + $0x128] sm:$0xff] %v631
        %696 = vst [vmem:[%s234 + $0x130] sm:$0xff] %v632
        %697 = vst [vmem:[%s234 + $0x138] sm:$0xff] %v633
        %698 = vst [vmem:[%s234 + $0x140] sm:$0xff] %v634
        %699 = vst [vmem:[%s234 + $0x148] sm:$0xff] %v635
        %700 = vst [vmem:[%s234 + $0x150] sm:$0xff] %v636
        %701 = vst [vmem:[%s234 + $0x158] sm:$0xff] %v637
        %702 = vst [vmem:[%s234 + $0x160] sm:$0xff] %v638
        %703 = vst [vmem:[%s234 + $0x168] sm:$0xff] %v639
        %704 = vst [vmem:[%s234 + $0x170] sm:$0xff] %v640
        %705 = vst [vmem:[%s234 + $0x178] sm:$0xff] %v641
        %706 = vst [vmem:[%s234 + $0x180] sm:$0xff] %v642
        %707 = vst [vmem:[%s234 + $0x188] sm:$0xff] %v643
        %708 = vst [vmem:[%s234 + $0x190] sm:$0xff] %v644
        %709 = vst [vmem:[%s234 + $0x198] sm:$0xff] %v645
        %710 = vst [vmem:[%s234 + $0x1a0] sm:$0xff] %v646
        %711 = vst [vmem:[%s234 + $0x1a8] sm:$0xff] %v647
        %712 = vst [vmem:[%s234 + $0x1b0] sm:$0xff] %v648
        %713 = vst [vmem:[%s234 + $0x1b8] sm:$0xff] %v649
        %714 = vst [vmem:[%s234 + $0x1c0] sm:$0xff] %v650
        %715 = vst [vmem:[%s234 + $0x1c8] sm:$0xff] %v651
        %716 = vst [vmem:[%s234 + $0x1d0] sm:$0xff] %v652
        %717 = vst [vmem:[%s234 + $0x1d8] sm:$0xff] %v653
        %718 = vst [vmem:[%s234 + $0x1e0] sm:$0xff] %v654
        %719 = vst [vmem:[%s234 + $0x1e8] sm:$0xff] %v655
        %720 = vst [vmem:[%s234 + $0x1f0] sm:$0xff] %v656
        %721 = vst [vmem:[%s234 + $0x1f8] sm:$0xff] %v657
        %s722 = sand.u32 %s142, 1
        %s723 = scalar_lea.sflag [#allocation3], %s722
        %s724 = sand.u32 %s142, 1
        %s725 = smul.addr %s724, 512
        %s726 = scalar_lea.vmem [#allocation2], %s725
        // Predicated region
        $region41: #{bottleneck_forward.7} parent=39 // pred_check
          %p727 = pneg %p152
        $region42: #{bottleneck_forward.7} parent=39 // pred_check_branch
          %729 = sbr.rel (%p727) target = $region44
        $region43: #{bottleneck_forward.7} parent=39 // pred_region
          %s730 = smul.u32 64, %s19
          %s732 = ssub.s32 8192, 8192
          %733 = vsyncadd %s723, %s732
          %s734 = smul.addr %s730, 128
          %s735 = scalar_lea.hbm %s5, %s734
          %s736 = sshll.u32 %s726, 4
          %s737 = int_to_ptr.vmem [resolvable:$true] %s736
          %742 = dma.vmem_to_hbm [thread:$0]  %s737, 8192, %s735, %s723, 128, 128, 8
        $region44: #{bottleneck_forward.7} parent=39 // pred_fallthru
          _
      $region40: #{bottleneck_forward.7} parent=5 // pred_fallthru
        _
      %p743 = scmp.le.s32.totalorder 2, %s14
      // Predicated region
      $region45: #{bottleneck_forward.7} parent=5 // pred_check
        %p744 = pneg %p743
      $region46: #{bottleneck_forward.7} parent=5 // pred_check_branch
        %746 = sbr.rel (%p744) target = $region48
      $region47: #{bottleneck_forward.7} parent=5 // pred_region
        %s747 = ssub.s32 %s14, 2
        // Predicated region
        $region49: #{bottleneck_forward.7} parent=47 // pred_check
          %p748 = pneg %p158
        $region50: #{bottleneck_forward.7} parent=47 // pred_check_branch
          %750 = sbr.rel (%p748) target = $region52
        $region51: #{bottleneck_forward.7} parent=47 // pred_region
          %s751 = sand.u32 %s143, 1
          %s752 = scalar_lea.sflag [#allocation3], %s751
          %s753 = sand.u32 %s143, 1
          %s754 = smul.addr %s753, 512
          %s755 = scalar_lea.vmem [#allocation2], %s754
          %756 = dma.done %s752, 8192
        $region52: #{bottleneck_forward.7} parent=47 // pred_fallthru
          _
      $region48: #{bottleneck_forward.7} parent=5 // pred_fallthru
        _
    $region6: #{bottleneck_forward.7} parent=1 // loop_footer
      %s18 = sadd.s32 1, %s14
    $region7: #{bottleneck_forward.7} parent=1 // loop_footer_branch
      %13 = sbr.rel target = $region3
    $region8: #{bottleneck_forward.7} parent=1 // loop_exit
      _
    %757 = vsyncpa [#allocation3], 1
    %s758 = scalar_lea.sflag [#allocation3], 1
    %759 = vsyncpa %s758, 1

// kernel: bottleneck_forward.5
$region0: #{bottleneck_forward.5}
  #allocation0 [shape = 'u32[]', space=smem, size = 0x4, offset = 0x4, fixed_abs, tag = 'smem constant byte address 0x4 - core index']
  #allocation1 [shape = 'u32[144,128]{1,0:T(1,128)}', space=vmem, size = 0x12000, scoped, tag = 'internal scratch']
  #allocation2 [shape = 'f32[18,18,128]{2,1,0:T(8,128)}', space=vmem, size = 0x36000, scoped, tag = 'scratch operand']
  #allocation3 [shape = 'f32[256,128]{1,0:T(8,128)}', space=vmem, size = 0x20000, scoped, tag = 'scratch operand']
  %s0 = inlined_call_operand.vmem [shape: f32[4,16,16,128], index: 0, kind: input, shape index: {}]
  %s1 = inlined_call_operand.vmem [shape: f32[2,128], index: 1, kind: input, shape index: {}]
  %s2 = inlined_call_operand.vmem [shape: f32[1,128], index: 2, kind: input, shape index: {}]
  %s3 = inlined_call_operand.vmem [shape: f32[1,128], index: 3, kind: input, shape index: {}]
  %s4 = inlined_call_operand.vmem [shape: f32[3,3,128,128], index: 4, kind: input, shape index: {}]
  %s5 = inlined_call_operand.vmem [shape: f32[4,256,128], index: 5, kind: output, shape index: {0}]
  %s6 = inlined_call_operand.vmem [shape: f32[4,2,128], index: 6, kind: output, shape index: {1}]
  %7 = xla_tuple %s5, %s6
  %s8 = sld [smem:[#allocation0]]
  $region61: #{bottleneck_forward.5} parent=0
    _
  %s10 = ssub.s32 1, %s8
  %s11 = scalar_select 0, %s10, %s8
  loop: start=0, step=1, limit=6
  $region2: #{bottleneck_forward.5} parent=0 // loop_pre_header
    _
  $region3: #{bottleneck_forward.5} parent=0 // loop_header
    %s13 = sphi 0, %s17
    %p14 = scmp.ge.s32.totalorder %s13, 6
    %s23 = sphi 0, %s25
    %s26 = sphi 0, %s23
    %s27 = sphi 0, %s26
    %s43 = sphi 0, %s27
    %s47 = sphi 0, %s47
    %s49 = sphi 0, %s47
    %s50 = sphi 0, %s49
    %s64 = sphi 0, %s50
    %s68 = sphi 0, %s68
    %s70 = sphi 0, %s68
    %s71 = sphi 0, %s70
    %s85 = sphi 0, %s71
    %s89 = sphi 0, %s89
    %s91 = sphi 0, %s89
    %s92 = sphi 0, %s91
    %s106 = sphi 0, %s92
    %s110 = sphi 0, %s110
    %s112 = sphi 0, %s110
    %s113 = sphi 0, %s112
    %s127 = sphi 0, %s113
    %s133 = sphi 0, %s135
    %s136 = sphi 0, %s133
    %s137 = sphi 0, %s136
    %s153 = sphi 0, %s137
    %s159 = sphi 0, %s161
    %s162 = sphi 0, %s159
    %s163 = sphi 0, %s162
    %s179 = sphi 0, %s163
  $region4: #{bottleneck_forward.5} parent=0 // loop_header_branch
    %16 = sbr.rel (%p14) target = $region8
  $region5: #{bottleneck_forward.5} parent=0 // loop_body
    %s18 = ssub.s32 %s13, 1
    %s19 = ssub.s32 %s13, 2
    %s20 = sadd.s32 %s13, 1
    %s21 = ssub.s32 %s13, %s20
    %p22 = scmp.eq.s32.totalorder %s21, 0
    %s24 = sadd.s32 %s23, 1
    %s25 = scalar_select %p22, %s23, %s24
    %p28 = pneg %p22
    %p29 = scmp.eq.s32.totalorder %s13, 3
    %p30 = por %p28, %p29
    %p31 = scmp.ne.s32.totalorder %s23, %s26
    %p32 = scmp.eq.s32.totalorder %s13, 0
    %p33 = por %p31, %p32
    %p34 = scmp.ne.s32.totalorder %s23, %s26
    %p35 = scmp.eq.s32.totalorder %s18, 3
    %p36 = por %p34, %p35
    %p37 = scmp.ne.s32.totalorder %s26, %s27
    %p38 = scmp.eq.s32.totalorder %s18, 0
    %p39 = por %p37, %p38
    %p40 = scmp.ne.s32.totalorder %s26, %s27
    %p41 = scmp.eq.s32.totalorder %s19, 3
    %p42 = por %p40, %p41
    %p44 = scmp.ne.s32.totalorder %s27, %s43
    %p45 = scmp.eq.s32.totalorder %s19, 0
    %p46 = por %p44, %p45
    %s48 = sadd.s32 %s47, 1
    %p51 = scmp.eq.s32.totalorder %s13, 3
    %p52 = scmp.ne.s32.totalorder %s47, %s49
    %p53 = scmp.eq.s32.totalorder %s13, 0
    %p54 = por %p52, %p53
    %p55 = scmp.ne.s32.totalorder %s47, %s49
    %p56 = scmp.eq.s32.totalorder %s18, 3
    %p57 = por %p55, %p56
    %p58 = scmp.ne.s32.totalorder %s49, %s50
    %p59 = scmp.eq.s32.totalorder %s18, 0
    %p60 = por %p58, %p59
    %p61 = scmp.ne.s32.totalorder %s49, %s50
    %p62 = scmp.eq.s32.totalorder %s19, 3
    %p63 = por %p61, %p62
    %p65 = scmp.ne.s32.totalorder %s50, %s64
    %p66 = scmp.eq.s32.totalorder %s19, 0
    %p67 = por %p65, %p66
    %s69 = sadd.s32 %s68, 1
    %p72 = scmp.eq.s32.totalorder %s13, 3
    %p73 = scmp.ne.s32.totalorder %s68, %s70
    %p74 = scmp.eq.s32.totalorder %s13, 0
    %p75 = por %p73, %p74
    %p76 = scmp.ne.s32.totalorder %s68, %s70
    %p77 = scmp.eq.s32.totalorder %s18, 3
    %p78 = por %p76, %p77
    %p79 = scmp.ne.s32.totalorder %s70, %s71
    %p80 = scmp.eq.s32.totalorder %s18, 0
    %p81 = por %p79, %p80
    %p82 = scmp.ne.s32.totalorder %s70, %s71
    %p83 = scmp.eq.s32.totalorder %s19, 3
    %p84 = por %p82, %p83
    %p86 = scmp.ne.s32.totalorder %s71, %s85
    %p87 = scmp.eq.s32.totalorder %s19, 0
    %p88 = por %p86, %p87
    %s90 = sadd.s32 %s89, 1
    %p93 = scmp.eq.s32.totalorder %s13, 3
    %p94 = scmp.ne.s32.totalorder %s89, %s91
    %p95 = scmp.eq.s32.totalorder %s13, 0
    %p96 = por %p94, %p95
    %p97 = scmp.ne.s32.totalorder %s89, %s91
    %p98 = scmp.eq.s32.totalorder %s18, 3
    %p99 = por %p97, %p98
    %p100 = scmp.ne.s32.totalorder %s91, %s92
    %p101 = scmp.eq.s32.totalorder %s18, 0
    %p102 = por %p100, %p101
    %p103 = scmp.ne.s32.totalorder %s91, %s92
    %p104 = scmp.eq.s32.totalorder %s19, 3
    %p105 = por %p103, %p104
    %p107 = scmp.ne.s32.totalorder %s92, %s106
    %p108 = scmp.eq.s32.totalorder %s19, 0
    %p109 = por %p107, %p108
    %s111 = sadd.s32 %s110, 1
    %p114 = scmp.eq.s32.totalorder %s13, 3
    %p115 = scmp.ne.s32.totalorder %s110, %s112
    %p116 = scmp.eq.s32.totalorder %s13, 0
    %p117 = por %p115, %p116
    %p118 = scmp.ne.s32.totalorder %s110, %s112
    %p119 = scmp.eq.s32.totalorder %s18, 3
    %p120 = por %p118, %p119
    %p121 = scmp.ne.s32.totalorder %s112, %s113
    %p122 = scmp.eq.s32.totalorder %s18, 0
    %p123 = por %p121, %p122
    %p124 = scmp.ne.s32.totalorder %s112, %s113
    %p125 = scmp.eq.s32.totalorder %s19, 3
    %p126 = por %p124, %p125
    %p128 = scmp.ne.s32.totalorder %s113, %s127
    %p129 = scmp.eq.s32.totalorder %s19, 0
    %p130 = por %p128, %p129
    %s131 = ssub.s32 %s13, %s20
    %p132 = scmp.eq.s32.totalorder %s131, 0
    %s134 = sadd.s32 %s133, 1
    %s135 = scalar_select %p132, %s133, %s134
    %p138 = pneg %p132
    %p139 = scmp.eq.s32.totalorder %s13, 3
    %p140 = por %p138, %p139
    %p141 = scmp.ne.s32.totalorder %s133, %s136
    %p142 = scmp.eq.s32.totalorder %s13, 0
    %p143 = por %p141, %p142
    %p144 = scmp.ne.s32.totalorder %s133, %s136
    %p145 = scmp.eq.s32.totalorder %s18, 3
    %p146 = por %p144, %p145
    %p147 = scmp.ne.s32.totalorder %s136, %s137
    %p148 = scmp.eq.s32.totalorder %s18, 0
    %p149 = por %p147, %p148
    %p150 = scmp.ne.s32.totalorder %s136, %s137
    %p151 = scmp.eq.s32.totalorder %s19, 3
    %p152 = por %p150, %p151
    %p154 = scmp.ne.s32.totalorder %s137, %s153
    %p155 = scmp.eq.s32.totalorder %s19, 0
    %p156 = por %p154, %p155
    %s157 = ssub.s32 %s13, %s20
    %p158 = scmp.eq.s32.totalorder %s157, 0
    %s160 = sadd.s32 %s159, 1
    %s161 = scalar_select %p158, %s159, %s160
    %p164 = pneg %p158
    %p165 = scmp.eq.s32.totalorder %s13, 3
    %p166 = por %p164, %p165
    %p167 = scmp.ne.s32.totalorder %s159, %s162
    %p168 = scmp.eq.s32.totalorder %s13, 0
    %p169 = por %p167, %p168
    %p170 = scmp.ne.s32.totalorder %s159, %s162
    %p171 = scmp.eq.s32.totalorder %s18, 3
    %p172 = por %p170, %p171
    %p173 = scmp.ne.s32.totalorder %s162, %s163
    %p174 = scmp.eq.s32.totalorder %s18, 0
    %p175 = por %p173, %p174
    %p176 = scmp.ne.s32.totalorder %s162, %s163
    %p177 = scmp.eq.s32.totalorder %s19, 3
    %p178 = por %p176, %p177
    %p180 = scmp.ne.s32.totalorder %s163, %s179
    %p181 = scmp.eq.s32.totalorder %s19, 0
    %p182 = por %p180, %p181
    %p183 = scmp.le.s32.totalorder 1, %s13
    %p184 = scmp.lt.s32.totalorder %s13, 5
    %p185 = pnand %p183, %p184
    %p186 = pneg %p185
    // Predicated region
    $region9: #{bottleneck_forward.5} parent=5 // pred_check
      _
    $region10: #{bottleneck_forward.5} parent=5 // pred_check_branch
      %188 = sbr.rel (%p185) target = $region12
    $region11: #{bottleneck_forward.5} parent=5 // pred_region
      %s189 = ssub.s32 %s13, 1
      // Predicated region
      $region13: #{bottleneck_forward.5} parent=11 // pred_check
        %p190 = pneg %p60
      $region14: #{bottleneck_forward.5} parent=11 // pred_check_branch
        %192 = sbr.rel (%p190) target = $region16
      $region15: #{bottleneck_forward.5} parent=11 // pred_region
        _
      $region16: #{bottleneck_forward.5} parent=11 // pred_fallthru
        _
      // Predicated region
      $region17: #{bottleneck_forward.5} parent=11 // pred_check
        %p193 = pneg %p81
      $region18: #{bottleneck_forward.5} parent=11 // pred_check_branch
        %195 = sbr.rel (%p193) target = $region20
      $region19: #{bottleneck_forward.5} parent=11 // pred_region
        _
      $region20: #{bottleneck_forward.5} parent=11 // pred_fallthru
        _
      // Predicated region
      $region21: #{bottleneck_forward.5} parent=11 // pred_check
        %p196 = pneg %p102
      $region22: #{bottleneck_forward.5} parent=11 // pred_check_branch
        %198 = sbr.rel (%p196) target = $region24
      $region23: #{bottleneck_forward.5} parent=11 // pred_region
        _
      $region24: #{bottleneck_forward.5} parent=11 // pred_fallthru
        _
      // Predicated region
      $region25: #{bottleneck_forward.5} parent=11 // pred_check
        %p199 = pneg %p123
      $region26: #{bottleneck_forward.5} parent=11 // pred_check_branch
        %201 = sbr.rel (%p199) target = $region28
      $region27: #{bottleneck_forward.5} parent=11 // pred_region
        _
      $region28: #{bottleneck_forward.5} parent=11 // pred_fallthru
        _
    $region12: #{bottleneck_forward.5} parent=5 // pred_fallthru
      _
    %p202 = scmp.lt.s32.totalorder %s13, 4
    // Predicated region
    $region29: #{bottleneck_forward.5} parent=5 // pred_check
      %p203 = pneg %p202
    $region30: #{bottleneck_forward.5} parent=5 // pred_check_branch
      %205 = sbr.rel (%p203) target = $region32
    $region31: #{bottleneck_forward.5} parent=5 // pred_region
      // Predicated region
      $region33: #{bottleneck_forward.5} parent=31 // pred_check
        %p206 = pneg %p33
      $region34: #{bottleneck_forward.5} parent=31 // pred_check_branch
        %208 = sbr.rel (%p206) target = $region36
      $region35: #{bottleneck_forward.5} parent=31 // pred_region
        %p209 = scmp.lt.s32.totalorder %s13, 3
        %s210 = scalar_select %p209, %s13, 3
        %s211 = smul.addr %s210, 32
        %s212 = smul.addr %s211, 8
        %s213 = scalar_lea.vmem %s0, %s212
      $region36: #{bottleneck_forward.5} parent=31 // pred_fallthru
        _
    $region32: #{bottleneck_forward.5} parent=5 // pred_fallthru
      _
    %p214 = scmp.le.s32.totalorder 1, %s13
    %p215 = scmp.lt.s32.totalorder %s13, 5
    %p216 = pnand %p214, %p215
    %p217 = pneg %p216
    // Predicated region
    $region37: #{bottleneck_forward.5} parent=5 // pred_check
      _
    $region38: #{bottleneck_forward.5} parent=5 // pred_check_branch
      %219 = sbr.rel (%p216) target = $region40
    $region39: #{bottleneck_forward.5} parent=5 // pred_region
      %s220 = ssub.s32 %s13, 1
      %p221 = scmp.lt.s32.totalorder %s18, 3
      %s222 = scalar_select %p221, %s18, 3
      %s223 = smul.addr %s222, 32
      %s224 = smul.addr %s223, 8
      %s225 = scalar_lea.vmem %s0, %s224
      %p226 = pneg %p39
      %p227 = pneg %p36
      %p228 = pneg %p60
      %p229 = pneg %p57
      %p230 = pneg %p81
      %p231 = pneg %p78
      %p232 = pneg %p102
      %p233 = pneg %p99
      %p234 = pneg %p123
      %p235 = pneg %p120
      %p236 = pneg %p149
      %p237 = pneg %p146
      %p238 = scmp.lt.s32.totalorder %s18, 3
      %s239 = scalar_select %p238, %s18, 3
      %s240 = smul.addr %s239, 32
      %s241 = smul.addr %s240, 8
      %s242 = scalar_lea.vmem %s5, %s241
      %p243 = pneg %p175
      %p244 = pneg %p172
      %p245 = scmp.lt.s32.totalorder %s18, 3
      %s246 = scalar_select %p245, %s18, 3
      %s247 = smul.addr %s246, 2
      %s248 = scalar_lea.vmem %s6, %s247
      %p249 = scmp.lt.s32.totalorder %s18, 3
      %s250 = scalar_select %p249, %s18, 3
      %s251 = smul.addr %s250, 32
      %s252 = smul.addr %s251, 8
      %s253 = scalar_lea.vmem %s0, %s252
      %p254 = scmp.lt.s32.totalorder %s18, 3
      %s255 = scalar_select %p254, %s18, 3
      %s256 = smul.addr %s255, 32
      %s257 = smul.addr %s256, 8
      %s258 = scalar_lea.vmem %s5, %s257
      %p259 = scmp.lt.s32.totalorder %s18, 3
      %s260 = scalar_select %p259, %s18, 3
      %s261 = smul.addr %s260, 2
      %s262 = scalar_lea.vmem %s6, %s261
      %v263 = vld [vmem:[%s1] sm:$0x1]
      %v264 = vmul.f32 %v263, 0.0009765625
      %v265 = vld [vmem:[%s1 + $0x1] sm:$0x1]
      %v266 = vmul.f32 %v265, 0.0009765625
      %v267 = vmul.f32 %v264, %v264
      %v268 = vsub.f32 %v266, %v267
      %v269 = vmax.f32 %v268, 0.0
      %v270 = vld [vmem:[%s2] sm:$0x1]
      %v271 = vadd.f32 %v269, 1e-05
      %v272 = vrsqrt.pop %v271
      %v273 = vmul.f32 %v270, %v272
      %v274 = vld [vmem:[%s3] sm:$0x1]
      %v275 = vmul.f32 %v264, %v273
      %v276 = vsub.f32 %v274, %v275
      %v277 = vld [vmem:[%s253] sm:$0xff]
      %v278 = vld [vmem:[%s253 + $0x8] sm:$0xff]
      %v279 = vld [vmem:[%s253 + $0x10] sm:$0xff]
      %v280 = vld [vmem:[%s253 + $0x18] sm:$0xff]
      %v281 = vld [vmem:[%s253 + $0x20] sm:$0xff]
      %v282 = vld [vmem:[%s253 + $0x28] sm:$0xff]
      %v283 = vld [vmem:[%s253 + $0x30] sm:$0xff]
      %v284 = vld [vmem:[%s253 + $0x38] sm:$0xff]
      %v285 = vld [vmem:[%s253 + $0x40] sm:$0xff]
      %v286 = vld [vmem:[%s253 + $0x48] sm:$0xff]
      %v287 = vld [vmem:[%s253 + $0x50] sm:$0xff]
      %v288 = vld [vmem:[%s253 + $0x58] sm:$0xff]
      %v289 = vld [vmem:[%s253 + $0x60] sm:$0xff]
      %v290 = vld [vmem:[%s253 + $0x68] sm:$0xff]
      %v291 = vld [vmem:[%s253 + $0x70] sm:$0xff]
      %v292 = vld [vmem:[%s253 + $0x78] sm:$0xff]
      %v293 = vld [vmem:[%s253 + $0x80] sm:$0xff]
      %v294 = vld [vmem:[%s253 + $0x88] sm:$0xff]
      %v295 = vld [vmem:[%s253 + $0x90] sm:$0xff]
      %v296 = vld [vmem:[%s253 + $0x98] sm:$0xff]
      %v297 = vld [vmem:[%s253 + $0xa0] sm:$0xff]
      %v298 = vld [vmem:[%s253 + $0xa8] sm:$0xff]
      %v299 = vld [vmem:[%s253 + $0xb0] sm:$0xff]
      %v300 = vld [vmem:[%s253 + $0xb8] sm:$0xff]
      %v301 = vld [vmem:[%s253 + $0xc0] sm:$0xff]
      %v302 = vld [vmem:[%s253 + $0xc8] sm:$0xff]
      %v303 = vld [vmem:[%s253 + $0xd0] sm:$0xff]
      %v304 = vld [vmem:[%s253 + $0xd8] sm:$0xff]
      %v305 = vld [vmem:[%s253 + $0xe0] sm:$0xff]
      %v306 = vld [vmem:[%s253 + $0xe8] sm:$0xff]
      %v307 = vld [vmem:[%s253 + $0xf0] sm:$0xff]
      %v308 = vld [vmem:[%s253 + $0xf8] sm:$0xff]
      %v310 = vlaneseq
      %v311 = vshrl.u32 %v310, 7
      %v312 = vsub.s32 0, %v311
      %v313 = vrot.slane %v273, %v312
      %v315 = vmul.f32 %v277, %v313
      %v316 = vmul.f32 %v278, %v313
      %v317 = vmul.f32 %v279, %v313
      %v318 = vmul.f32 %v280, %v313
      %v319 = vmul.f32 %v281, %v313
      %v320 = vmul.f32 %v282, %v313
      %v321 = vmul.f32 %v283, %v313
      %v322 = vmul.f32 %v284, %v313
      %v323 = vmul.f32 %v285, %v313
      %v324 = vmul.f32 %v286, %v313
      %v325 = vmul.f32 %v287, %v313
      %v326 = vmul.f32 %v288, %v313
      %v327 = vmul.f32 %v289, %v313
      %v328 = vmul.f32 %v290, %v313
      %v329 = vmul.f32 %v291, %v313
      %v330 = vmul.f32 %v292, %v313
      %v331 = vmul.f32 %v293, %v313
      %v332 = vmul.f32 %v294, %v313
      %v333 = vmul.f32 %v295, %v313
      %v334 = vmul.f32 %v296, %v313
      %v335 = vmul.f32 %v297, %v313
      %v336 = vmul.f32 %v298, %v313
      %v337 = vmul.f32 %v299, %v313
      %v338 = vmul.f32 %v300, %v313
      %v339 = vmul.f32 %v301, %v313
      %v340 = vmul.f32 %v302, %v313
      %v341 = vmul.f32 %v303, %v313
      %v342 = vmul.f32 %v304, %v313
      %v343 = vmul.f32 %v305, %v313
      %v344 = vmul.f32 %v306, %v313
      %v345 = vmul.f32 %v307, %v313
      %v346 = vmul.f32 %v308, %v313
      %v348 = vlaneseq
      %v349 = vshrl.u32 %v348, 7
      %v350 = vsub.s32 0, %v349
      %v351 = vrot.slane %v276, %v350
      %v353 = vadd.f32 %v315, %v351
      %v354 = vadd.f32 %v316, %v351
      %v355 = vadd.f32 %v317, %v351
      %v356 = vadd.f32 %v318, %v351
      %v357 = vadd.f32 %v319, %v351
      %v358 = vadd.f32 %v320, %v351
      %v359 = vadd.f32 %v321, %v351
      %v360 = vadd.f32 %v322, %v351
      %v361 = vadd.f32 %v323, %v351
      %v362 = vadd.f32 %v324, %v351
      %v363 = vadd.f32 %v325, %v351
      %v364 = vadd.f32 %v326, %v351
      %v365 = vadd.f32 %v327, %v351
      %v366 = vadd.f32 %v328, %v351
      %v367 = vadd.f32 %v329, %v351
      %v368 = vadd.f32 %v330, %v351
      %v369 = vadd.f32 %v331, %v351
      %v370 = vadd.f32 %v332, %v351
      %v371 = vadd.f32 %v333, %v351
      %v372 = vadd.f32 %v334, %v351
      %v373 = vadd.f32 %v335, %v351
      %v374 = vadd.f32 %v336, %v351
      %v375 = vadd.f32 %v337, %v351
      %v376 = vadd.f32 %v338, %v351
      %v377 = vadd.f32 %v339, %v351
      %v378 = vadd.f32 %v340, %v351
      %v379 = vadd.f32 %v341, %v351
      %v380 = vadd.f32 %v342, %v351
      %v381 = vadd.f32 %v343, %v351
      %v382 = vadd.f32 %v344, %v351
      %v383 = vadd.f32 %v345, %v351
      %v384 = vadd.f32 %v346, %v351
      %v385 = vmax.f32 %v353, 0.0
      %v386 = vmax.f32 %v354, 0.0
      %v387 = vmax.f32 %v355, 0.0
      %v388 = vmax.f32 %v356, 0.0
      %v389 = vmax.f32 %v357, 0.0
      %v390 = vmax.f32 %v358, 0.0
      %v391 = vmax.f32 %v359, 0.0
      %v392 = vmax.f32 %v360, 0.0
      %v393 = vmax.f32 %v361, 0.0
      %v394 = vmax.f32 %v362, 0.0
      %v395 = vmax.f32 %v363, 0.0
      %v396 = vmax.f32 %v364, 0.0
      %v397 = vmax.f32 %v365, 0.0
      %v398 = vmax.f32 %v366, 0.0
      %v399 = vmax.f32 %v367, 0.0
      %v400 = vmax.f32 %v368, 0.0
      %v401 = vmax.f32 %v369, 0.0
      %v402 = vmax.f32 %v370, 0.0
      %v403 = vmax.f32 %v371, 0.0
      %v404 = vmax.f32 %v372, 0.0
      %v405 = vmax.f32 %v373, 0.0
      %v406 = vmax.f32 %v374, 0.0
      %v407 = vmax.f32 %v375, 0.0
      %v408 = vmax.f32 %v376, 0.0
      %v409 = vmax.f32 %v377, 0.0
      %v410 = vmax.f32 %v378, 0.0
      %v411 = vmax.f32 %v379, 0.0
      %v412 = vmax.f32 %v380, 0.0
      %v413 = vmax.f32 %v381, 0.0
      %v414 = vmax.f32 %v382, 0.0
      %v415 = vmax.f32 %v383, 0.0
      %v416 = vmax.f32 %v384, 0.0
      %417 = vst [vmem:[#allocation2] sm:$0xff] 0.0
      %418 = vst [vmem:[#allocation2 + $0x8] sm:$0xff] 0.0
      %419 = vst [vmem:[#allocation2 + $0x10] sm:$0x3] 0.0
      %420 = vst [vmem:[#allocation2 + $0x18] sm:$0xff] 0.0
      %421 = vst [vmem:[#allocation2 + $0x20] sm:$0xff] 0.0
      %422 = vst [vmem:[#allocation2 + $0x28] sm:$0x3] 0.0
      %423 = vst [vmem:[#allocation2 + $0x30] sm:$0xff] 0.0
      %424 = vst [vmem:[#allocation2 + $0x38] sm:$0xff] 0.0
      %425 = vst [vmem:[#allocation2 + $0x40] sm:$0x3] 0.0
      %426 = vst [vmem:[#allocation2 + $0x48] sm:$0xff] 0.0
      %427 = vst [vmem:[#allocation2 + $0x50] sm:$0xff] 0.0
      %428 = vst [vmem:[#allocation2 + $0x58] sm:$0x3] 0.0
      %429 = vst [vmem:[#allocation2 + $0x60] sm:$0xff] 0.0
      %430 = vst [vmem:[#allocation2 + $0x68] sm:$0xff] 0.0
      %431 = vst [vmem:[#allocation2 + $0x70] sm:$0x3] 0.0
      %432 = vst [vmem:[#allocation2 + $0x78] sm:$0xff] 0.0
      %433 = vst [vmem:[#allocation2 + $0x80] sm:$0xff] 0.0
      %434 = vst [vmem:[#allocation2 + $0x88] sm:$0x3] 0.0
      %435 = vst [vmem:[#allocation2 + $0x90] sm:$0xff] 0.0
      %436 = vst [vmem:[#allocation2 + $0x98] sm:$0xff] 0.0
      %437 = vst [vmem:[#allocation2 + $0xa0] sm:$0x3] 0.0
      %438 = vst [vmem:[#allocation2 + $0xa8] sm:$0xff] 0.0
      %439 = vst [vmem:[#allocation2 + $0xb0] sm:$0xff] 0.0
      %440 = vst [vmem:[#allocation2 + $0xb8] sm:$0x3] 0.0
      %441 = vst [vmem:[#allocation2 + $0xc0] sm:$0xff] 0.0
      %442 = vst [vmem:[#allocation2 + $0xc8] sm:$0xff] 0.0
      %443 = vst [vmem:[#allocation2 + $0xd0] sm:$0x3] 0.0
      %444 = vst [vmem:[#allocation2 + $0xd8] sm:$0xff] 0.0
      %445 = vst [vmem:[#allocation2 + $0xe0] sm:$0xff] 0.0
      %446 = vst [vmem:[#allocation2 + $0xe8] sm:$0x3] 0.0
      %447 = vst [vmem:[#allocation2 + $0xf0] sm:$0xff] 0.0
      %448 = vst [vmem:[#allocation2 + $0xf8] sm:$0xff] 0.0
      %449 = vst [vmem:[#allocation2 + $0x100] sm:$0x3] 0.0
      %450 = vst [vmem:[#allocation2 + $0x108] sm:$0xff] 0.0
      %451 = vst [vmem:[#allocation2 + $0x110] sm:$0xff] 0.0
      %452 = vst [vmem:[#allocation2 + $0x118] sm:$0x3] 0.0
      %453 = vst [vmem:[#allocation2 + $0x120] sm:$0xff] 0.0
      %454 = vst [vmem:[#allocation2 + $0x128] sm:$0xff] 0.0
      %455 = vst [vmem:[#allocation2 + $0x130] sm:$0x3] 0.0
      %456 = vst [vmem:[#allocation2 + $0x138] sm:$0xff] 0.0
      %457 = vst [vmem:[#allocation2 + $0x140] sm:$0xff] 0.0
      %458 = vst [vmem:[#allocation2 + $0x148] sm:$0x3] 0.0
      %459 = vst [vmem:[#allocation2 + $0x150] sm:$0xff] 0.0
      %460 = vst [vmem:[#allocation2 + $0x158] sm:$0xff] 0.0
      %461 = vst [vmem:[#allocation2 + $0x160] sm:$0x3] 0.0
      %462 = vst [vmem:[#allocation2 + $0x168] sm:$0xff] 0.0
      %463 = vst [vmem:[#allocation2 + $0x170] sm:$0xff] 0.0
      %464 = vst [vmem:[#allocation2 + $0x178] sm:$0x3] 0.0
      %465 = vst [vmem:[#allocation2 + $0x180] sm:$0xff] 0.0
      %466 = vst [vmem:[#allocation2 + $0x188] sm:$0xff] 0.0
      %467 = vst [vmem:[#allocation2 + $0x190] sm:$0x3] 0.0
      %468 = vst [vmem:[#allocation2 + $0x198] sm:$0xff] 0.0
      %469 = vst [vmem:[#allocation2 + $0x1a0] sm:$0xff] 0.0
      %470 = vst [vmem:[#allocation2 + $0x1a8] sm:$0x3] 0.0
      %s471 = scalar_lea.vmem [#allocation2], 24
      %472 = vst [vmem:[%s471 + $0x1] sm:$0xff] %v385
      %473 = vst [vmem:[%s471 + $0x9] sm:$0xff] %v386
      %474 = vst [vmem:[%s471 + $0x19] sm:$0xff] %v387
      %475 = vst [vmem:[%s471 + $0x21] sm:$0xff] %v388
      %476 = vst [vmem:[%s471 + $0x31] sm:$0xff] %v389
      %477 = vst [vmem:[%s471 + $0x39] sm:$0xff] %v390
      %478 = vst [vmem:[%s471 + $0x49] sm:$0xff] %v391
      %479 = vst [vmem:[%s471 + $0x51] sm:$0xff] %v392
      %480 = vst [vmem:[%s471 + $0x61] sm:$0xff] %v393
      %481 = vst [vmem:[%s471 + $0x69] sm:$0xff] %v394
      %482 = vst [vmem:[%s471 + $0x79] sm:$0xff] %v395
      %483 = vst [vmem:[%s471 + $0x81] sm:$0xff] %v396
      %484 = vst [vmem:[%s471 + $0x91] sm:$0xff] %v397
      %485 = vst [vmem:[%s471 + $0x99] sm:$0xff] %v398
      %486 = vst [vmem:[%s471 + $0xa9] sm:$0xff] %v399
      %487 = vst [vmem:[%s471 + $0xb1] sm:$0xff] %v400
      %488 = vst [vmem:[%s471 + $0xc1] sm:$0xff] %v401
      %489 = vst [vmem:[%s471 + $0xc9] sm:$0xff] %v402
      %490 = vst [vmem:[%s471 + $0xd9] sm:$0xff] %v403
      %491 = vst [vmem:[%s471 + $0xe1] sm:$0xff] %v404
      %492 = vst [vmem:[%s471 + $0xf1] sm:$0xff] %v405
      %493 = vst [vmem:[%s471 + $0xf9] sm:$0xff] %v406
      %494 = vst [vmem:[%s471 + $0x109] sm:$0xff] %v407
      %495 = vst [vmem:[%s471 + $0x111] sm:$0xff] %v408
      %496 = vst [vmem:[%s471 + $0x121] sm:$0xff] %v409
      %497 = vst [vmem:[%s471 + $0x129] sm:$0xff] %v410
      %498 = vst [vmem:[%s471 + $0x139] sm:$0xff] %v411
      %499 = vst [vmem:[%s471 + $0x141] sm:$0xff] %v412
      %500 = vst [vmem:[%s471 + $0x151] sm:$0xff] %v413
      %501 = vst [vmem:[%s471 + $0x159] sm:$0xff] %v414
      %502 = vst [vmem:[%s471 + $0x169] sm:$0xff] %v415
      %503 = vst [vmem:[%s471 + $0x171] sm:$0xff] %v416
      %504 = vst [vmem:[#allocation3] sm:$0xff] 0.0
      %505 = vst [vmem:[#allocation3 + $0x8] sm:$0xff] 0.0
      %506 = vst [vmem:[#allocation3 + $0x10] sm:$0xff] 0.0
      %507 = vst [vmem:[#allocation3 + $0x18] sm:$0xff] 0.0
      %508 = vst [vmem:[#allocation3 + $0x20] sm:$0xff] 0.0
      %509 = vst [vmem:[#allocation3 + $0x28] sm:$0xff] 0.0
      %510 = vst [vmem:[#allocation3 + $0x30] sm:$0xff] 0.0
      %511 = vst [vmem:[#allocation3 + $0x38] sm:$0xff] 0.0
      %512 = vst [vmem:[#allocation3 + $0x40] sm:$0xff] 0.0
      %513 = vst [vmem:[#allocation3 + $0x48] sm:$0xff] 0.0
      %514 = vst [vmem:[#allocation3 + $0x50] sm:$0xff] 0.0
      %515 = vst [vmem:[#allocation3 + $0x58] sm:$0xff] 0.0
      %516 = vst [vmem:[#allocation3 + $0x60] sm:$0xff] 0.0
      %517 = vst [vmem:[#allocation3 + $0x68] sm:$0xff] 0.0
      %518 = vst [vmem:[#allocation3 + $0x70] sm:$0xff] 0.0
      %519 = vst [vmem:[#allocation3 + $0x78] sm:$0xff] 0.0
      %520 = vst [vmem:[#allocation3 + $0x80] sm:$0xff] 0.0
      %521 = vst [vmem:[#allocation3 + $0x88] sm:$0xff] 0.0
      %522 = vst [vmem:[#allocation3 + $0x90] sm:$0xff] 0.0
      %523 = vst [vmem:[#allocation3 + $0x98] sm:$0xff] 0.0
      %524 = vst [vmem:[#allocation3 + $0xa0] sm:$0xff] 0.0
      %525 = vst [vmem:[#allocation3 + $0xa8] sm:$0xff] 0.0
      %526 = vst [vmem:[#allocation3 + $0xb0] sm:$0xff] 0.0
      %527 = vst [vmem:[#allocation3 + $0xb8] sm:$0xff] 0.0
      %528 = vst [vmem:[#allocation3 + $0xc0] sm:$0xff] 0.0
      %529 = vst [vmem:[#allocation3 + $0xc8] sm:$0xff] 0.0
      %530 = vst [vmem:[#allocation3 + $0xd0] sm:$0xff] 0.0
      %531 = vst [vmem:[#allocation3 + $0xd8] sm:$0xff] 0.0
      %532 = vst [vmem:[#allocation3 + $0xe0] sm:$0xff] 0.0
      %533 = vst [vmem:[#allocation3 + $0xe8] sm:$0xff] 0.0
      %534 = vst [vmem:[#allocation3 + $0xf0] sm:$0xff] 0.0
      %535 = vst [vmem:[#allocation3 + $0xf8] sm:$0xff] 0.0
      %v536 = vld [vmem:[#allocation2] sm:$0xff]
      %v537 = vld [vmem:[#allocation2 + $0x8] sm:$0xff]
      %v538 = vld [vmem:[#allocation2 + $0x18] sm:$0xff]
      %v539 = vld [vmem:[#allocation2 + $0x20] sm:$0xff]
      %v540 = vld [vmem:[#allocation2 + $0x30] sm:$0xff]
      %v541 = vld [vmem:[#allocation2 + $0x38] sm:$0xff]
      %v542 = vld [vmem:[#allocation2 + $0x48] sm:$0xff]
      %v543 = vld [vmem:[#allocation2 + $0x50] sm:$0xff]
      %v544 = vld [vmem:[#allocation2 + $0x60] sm:$0xff]
      %v545 = vld [vmem:[#allocation2 + $0x68] sm:$0xff]
      %v546 = vld [vmem:[#allocation2 + $0x78] sm:$0xff]
      %v547 = vld [vmem:[#allocation2 + $0x80] sm:$0xff]
      %v548 = vld [vmem:[#allocation2 + $0x90] sm:$0xff]
      %v549 = vld [vmem:[#allocation2 + $0x98] sm:$0xff]
      %v550 = vld [vmem:[#allocation2 + $0xa8] sm:$0xff]
      %v551 = vld [vmem:[#allocation2 + $0xb0] sm:$0xff]
      %v552 = vld [vmem:[#allocation2 + $0xc0] sm:$0xff]
      %v553 = vld [vmem:[#allocation2 + $0xc8] sm:$0xff]
      %v554 = vld [vmem:[#allocation2 + $0xd8] sm:$0xff]
      %v555 = vld [vmem:[#allocation2 + $0xe0] sm:$0xff]
      %v556 = vld [vmem:[#allocation2 + $0xf0] sm:$0xff]
      %v557 = vld [vmem:[#allocation2 + $0xf8] sm:$0xff]
      %v558 = vld [vmem:[#allocation2 + $0x108] sm:$0xff]
      %v559 = vld [vmem:[#allocation2 + $0x110] sm:$0xff]
      %v560 = vld [vmem:[#allocation2 + $0x120] sm:$0xff]
      %v561 = vld [vmem:[#allocation2 + $0x128] sm:$0xff]
      %v562 = vld [vmem:[#allocation2 + $0x138] sm:$0xff]
      %v563 = vld [vmem:[#allocation2 + $0x140] sm:$0xff]
      %v564 = vld [vmem:[#allocation2 + $0x150] sm:$0xff]
      %v565 = vld [vmem:[#allocation2 + $0x158] sm:$0xff]
      %v566 = vld [vmem:[#allocation2 + $0x168] sm:$0xff]
      %v567 = vld [vmem:[#allocation2 + $0x170] sm:$0xff]
      %v568 = vld [vmem:[#allocation3] sm:$0xff]
      %v569 = vld [vmem:[#allocation3 + $0x8] sm:$0xff]
      %v570 = vld [vmem:[#allocation3 + $0x10] sm:$0xff]
      %v571 = vld [vmem:[#allocation3 + $0x18] sm:$0xff]
      %v572 = vld [vmem:[#allocation3 + $0x20] sm:$0xff]
      %v573 = vld [vmem:[#allocation3 + $0x28] sm:$0xff]
      %v574 = vld [vmem:[#allocation3 + $0x30] sm:$0xff]
      %v575 = vld [vmem:[#allocation3 + $0x38] sm:$0xff]
      %v576 = vld [vmem:[#allocation3 + $0x40] sm:$0xff]
      %v577 = vld [vmem:[#allocation3 + $0x48] sm:$0xff]
      %v578 = vld [vmem:[#allocation3 + $0x50] sm:$0xff]
      %v579 = vld [vmem:[#allocation3 + $0x58] sm:$0xff]
      %v580 = vld [vmem:[#allocation3 + $0x60] sm:$0xff]
      %v581 = vld [vmem:[#allocation3 + $0x68] sm:$0xff]
      %v582 = vld [vmem:[#allocation3 + $0x70] sm:$0xff]
      %v583 = vld [vmem:[#allocation3 + $0x78] sm:$0xff]
      %v584 = vld [vmem:[#allocation3 + $0x80] sm:$0xff]
      %v585 = vld [vmem:[#allocation3 + $0x88] sm:$0xff]
      %v586 = vld [vmem:[#allocation3 + $0x90] sm:$0xff]
      %v587 = vld [vmem:[#allocation3 + $0x98] sm:$0xff]
      %v588 = vld [vmem:[#allocation3 + $0xa0] sm:$0xff]
      %v589 = vld [vmem:[#allocation3 + $0xa8] sm:$0xff]
      %v590 = vld [vmem:[#allocation3 + $0xb0] sm:$0xff]
      %v591 = vld [vmem:[#allocation3 + $0xb8] sm:$0xff]
      %v592 = vld [vmem:[#allocation3 + $0xc0] sm:$0xff]
      %v593 = vld [vmem:[#allocation3 + $0xc8] sm:$0xff]
      %v594 = vld [vmem:[#allocation3 + $0xd0] sm:$0xff]
      %v595 = vld [vmem:[#allocation3 + $0xd8] sm:$0xff]
      %v596 = vld [vmem:[#allocation3 + $0xe0] sm:$0xff]
      %v597 = vld [vmem:[#allocation3 + $0xe8] sm:$0xff]
      %v598 = vld [vmem:[#allocation3 + $0xf0] sm:$0xff]
      %v599 = vld [vmem:[#allocation3 + $0xf8] sm:$0xff]
      %v600 = vld [vmem:[%s4] sm:$0xff]
      %v601 = vld [vmem:[%s4 + $0x8] sm:$0xff]
      %v602 = vld [vmem:[%s4 + $0x10] sm:$0xff]
      %v603 = vld [vmem:[%s4 + $0x18] sm:$0xff]
      %v604 = vld [vmem:[%s4 + $0x20] sm:$0xff]
      %v605 = vld [vmem:[%s4 + $0x28] sm:$0xff]
      %v606 = vld [vmem:[%s4 + $0x30] sm:$0xff]
      %v607 = vld [vmem:[%s4 + $0x38] sm:$0xff]
      %v608 = vld [vmem:[%s4 + $0x40] sm:$0xff]
      %v609 = vld [vmem:[%s4 + $0x48] sm:$0xff]
      %v610 = vld [vmem:[%s4 + $0x50] sm:$0xff]
      %v611 = vld [vmem:[%s4 + $0x58] sm:$0xff]
      %v612 = vld [vmem:[%s4 + $0x60] sm:$0xff]
      %v613 = vld [vmem:[%s4 + $0x68] sm:$0xff]
      %v614 = vld [vmem:[%s4 + $0x70] sm:$0xff]
      %v615 = vld [vmem:[%s4 + $0x78] sm:$0xff]
      %616 = vmatprep.subr.mxu0 0.0
      %617 = vmatpush1.msra.mxu0 %v615
      %618 = vmatprep.subr.mxu0 0.0
      %619 = vmatpush1.msra.mxu0 %v614
      %620 = vmatprep.subr.mxu0 0.0
      %621 = vmatpush1.msra.mxu0 %v613
      %622 = vmatprep.subr.mxu0 0.0
      %623 = vmatpush1.msra.mxu0 %v612
      %624 = vmatprep.subr.mxu0 0.0
      %625 = vmatpush1.msra.mxu0 %v611
      %626 = vmatprep.subr.mxu0 0.0
      %627 = vmatpush1.msra.mxu0 %v610
      %628 = vmatprep.subr.mxu0 0.0
      %629 = vmatpush1.msra.mxu0 %v609
      %630 = vmatprep.subr.mxu0 0.0
      %631 = vmatpush1.msra.mxu0 %v608
      %632 = vmatprep.subr.mxu0 0.0
      %633 = vmatpush1.msra.mxu0 %v607
      %634 = vmatprep.subr.mxu0 0.0
      %635 = vmatpush1.msra.mxu0 %v606
      %636 = vmatprep.subr.mxu0 0.0
      %637 = vmatpush1.msra.mxu0 %v605
      %638 = vmatprep.subr.mxu0 0.0
      %639 = vmatpush1.msra.mxu0 %v604
      %640 = vmatprep.subr.mxu0 0.0
      %641 = vmatpush1.msra.mxu0 %v603
      %642 = vmatprep.subr.mxu0 0.0
      %643 = vmatpush1.msra.mxu0 %v602
      %644 = vmatprep.subr.mxu0 0.0
      %645 = vmatpush1.msra.mxu0 %v601
      %646 = vmatprep.subr.mxu0 0.0
      %647 = vmatpush1.msra.mxu0 %v600
      %648 = vmatprep.subr.mxu0 0.0
      %649 = vmatpush2.msra.mxu0 0.0
      %650 = vmatprep.subr.mxu0 0.0
      %651 = vmatpush2.msra.mxu0 0.0
      %652 = vmatprep.subr.mxu0 0.0
      %653 = vmatpush2.msra.mxu0 0.0
      %654 = vmatprep.subr.mxu0 0.0
      %655 = vmatpush2.msra.mxu0 0.0
      %656 = vmatprep.subr.mxu0 0.0
      %657 = vmatpush2.msra.mxu0 0.0
      %658 = vmatprep.subr.mxu0 0.0
      %659 = vmatpush2.msra.mxu0 0.0
      %660 = vmatprep.subr.mxu0 0.0
      %661 = vmatpush2.msra.mxu0 0.0
      %662 = vmatprep.subr.mxu0 0.0
      %663 = vmatpush2.msra.mxu0 0.0
      %664 = vmatprep.subr.mxu0 0.0
      %665 = vmatpush2.msra.mxu0 0.0
      %666 = vmatprep.subr.mxu0 0.0
      %667 = vmatpush2.msra.mxu0 0.0
      %668 = vmatprep.subr.mxu0 0.0
      %669 = vmatpush2.msra.mxu0 0.0
      %670 = vmatprep.subr.mxu0 0.0
      %671 = vmatpush2.msra.mxu0 0.0
      %672 = vmatprep.subr.mxu0 0.0
      %673 = vmatpush2.msra.mxu0 0.0
      %674 = vmatprep.subr.mxu0 0.0
      %675 = vmatpush2.msra.mxu0 0.0
      %676 = vmatprep.subr.mxu0 0.0
      %677 = vmatpush2.msra.mxu0 0.0
      %678 = vmatprep.subr.mxu0 0.0
      %679 = vmatpush2.msra.mxu0 0.0
      %680 = vmatprep.mubr.f32.mxu0 0.0
      %681 = vmatmul.mubr.f32.gmra.mxu0 %v536
      %v682 = vpop.f32.mrf.mxu0
      %v683 = vadd.f32 0.0, %v682
      %v684 = vpop.f32.mrf.mxu0
      %685 = vmatprep.mubr.f32.mxu0 0.0
      %686 = vmatmul.mubr.f32.gmra.mxu0 %v537
      %v687 = vpop.f32.mrf.mxu0
      %v688 = vadd.f32 0.0, %v687
      %v689 = vpop.f32.mrf.mxu0
      %690 = vmatprep.mubr.f32.mxu0 0.0
      %691 = vmatmul.mubr.f32.gmra.mxu0 %v538
      %v692 = vpop.f32.mrf.mxu0
      %v693 = vadd.f32 0.0, %v692
      %v694 = vpop.f32.mrf.mxu0
      %695 = vmatprep.mubr.f32.mxu0 0.0
      %696 = vmatmul.mubr.f32.gmra.mxu0 %v539
      %v697 = vpop.f32.mrf.mxu0
      %v698 = vadd.f32 0.0, %v697
      %v699 = vpop.f32.mrf.mxu0
      %700 = vmatprep.mubr.f32.mxu0 0.0
      %701 = vmatmul.mubr.f32.gmra.mxu0 %v540
      %v702 = vpop.f32.mrf.mxu0
      %v703 = vadd.f32 0.0, %v702
      %v704 = vpop.f32.mrf.mxu0
      %705 = vmatprep.mubr.f32.mxu0 0.0
      %706 = vmatmul.mubr.f32.gmra.mxu0 %v541
      %v707 = vpop.f32.mrf.mxu0
      %v708 = vadd.f32 0.0, %v707
      %v709 = vpop.f32.mrf.mxu0
      %710 = vmatprep.mubr.f32.mxu0 0.0
      %711 = vmatmul.mubr.f32.gmra.mxu0 %v542
      %v712 = vpop.f32.mrf.mxu0
      %v713 = vadd.f32 0.0, %v712
      %v714 = vpop.f32.mrf.mxu0
      %715 = vmatprep.mubr.f32.mxu0 0.0
      %716 = vmatmul.mubr.f32.gmra.mxu0 %v543
      %v717 = vpop.f32.mrf.mxu0
      %v718 = vadd.f32 0.0, %v717
      %v719 = vpop.f32.mrf.mxu0
      %720 = vmatprep.mubr.f32.mxu0 0.0
      %721 = vmatmul.mubr.f32.gmra.mxu0 %v544
      %v722 = vpop.f32.mrf.mxu0
      %v723 = vadd.f32 0.0, %v722
      %v724 = vpop.f32.mrf.mxu0
      %725 = vmatprep.mubr.f32.mxu0 0.0
      %726 = vmatmul.mubr.f32.gmra.mxu0 %v545
      %v727 = vpop.f32.mrf.mxu0
      %v728 = vadd.f32 0.0, %v727
      %v729 = vpop.f32.mrf.mxu0
      %730 = vmatprep.mubr.f32.mxu0 0.0
      %731 = vmatmul.mubr.f32.gmra.mxu0 %v546
      %v732 = vpop.f32.mrf.mxu0
      %v733 = vadd.f32 0.0, %v732
      %v734 = vpop.f32.mrf.mxu0
      %735 = vmatprep.mubr.f32.mxu0 0.0
      %736 = vmatmul.mubr.f32.gmra.mxu0 %v547
      %v737 = vpop.f32.mrf.mxu0
      %v738 = vadd.f32 0.0, %v737
      %v739 = vpop.f32.mrf.mxu0
      %740 = vmatprep.mubr.f32.mxu0 0.0
      %741 = vmatmul.mubr.f32.gmra.mxu0 %v548
      %v742 = vpop.f32.mrf.mxu0
      %v743 = vadd.f32 0.0, %v742
      %v744 = vpop.f32.mrf.mxu0
      %745 = vmatprep.mubr.f32.mxu0 0.0
      %746 = vmatmul.mubr.f32.gmra.mxu0 %v549
      %v747 = vpop.f32.mrf.mxu0
      %v748 = vadd.f32 0.0, %v747
      %v749 = vpop.f32.mrf.mxu0
      %750 = vmatprep.mubr.f32.mxu0 0.0
      %751 = vmatmul.mubr.f32.gmra.mxu0 %v550
      %v752 = vpop.f32.mrf.mxu0
      %v753 = vadd.f32 0.0, %v752
      %v754 = vpop.f32.mrf.mxu0
      %755 = vmatprep.mubr.f32.mxu0 0.0
      %756 = vmatmul.mubr.f32.gmra.mxu0 %v551
      %v757 = vpop.f32.mrf.mxu0
      %v758 = vadd.f32 0.0, %v757
      %v759 = vpop.f32.mrf.mxu0
      %760 = vmatprep.mubr.f32.mxu0 0.0
      %761 = vmatmul.mubr.f32.gmra.mxu0 %v552
      %v762 = vpop.f32.mrf.mxu0
      %v763 = vadd.f32 0.0, %v762
      %v764 = vpop.f32.mrf.mxu0
      %765 = vmatprep.mubr.f32.mxu0 0.0
      %766 = vmatmul.mubr.f32.gmra.mxu0 %v553
      %v767 = vpop.f32.mrf.mxu0
      %v768 = vadd.f32 0.0, %v767
      %v769 = vpop.f32.mrf.mxu0
      %770 = vmatprep.mubr.f32.mxu0 0.0
      %771 = vmatmul.mubr.f32.gmra.mxu0 %v554
      %v772 = vpop.f32.mrf.mxu0
      %v773 = vadd.f32 0.0, %v772
      %v774 = vpop.f32.mrf.mxu0
      %775 = vmatprep.mubr.f32.mxu0 0.0
      %776 = vmatmul.mubr.f32.gmra.mxu0 %v555
      %v777 = vpop.f32.mrf.mxu0
      %v778 = vadd.f32 0.0, %v777
      %v779 = vpop.f32.mrf.mxu0
      %780 = vmatprep.mubr.f32.mxu0 0.0
      %781 = vmatmul.mubr.f32.gmra.mxu0 %v556
      %v782 = vpop.f32.mrf.mxu0
      %v783 = vadd.f32 0.0, %v782
      %v784 = vpop.f32.mrf.mxu0
      %785 = vmatprep.mubr.f32.mxu0 0.0
      %786 = vmatmul.mubr.f32.gmra.mxu0 %v557
      %v787 = vpop.f32.mrf.mxu0
      %v788 = vadd.f32 0.0, %v787
      %v789 = vpop.f32.mrf.mxu0
      %790 = vmatprep.mubr.f32.mxu0 0.0
      %791 = vmatmul.mubr.f32.gmra.mxu0 %v558
      %v792 = vpop.f32.mrf.mxu0
      %v793 = vadd.f32 0.0, %v792
      %v794 = vpop.f32.mrf.mxu0
      %795 = vmatprep.mubr.f32.mxu0 0.0
      %796 = vmatmul.mubr.f32.gmra.mxu0 %v559
      %v797 = vpop.f32.mrf.mxu0
      %v798 = vadd.f32 0.0, %v797
      %v799 = vpop.f32.mrf.mxu0
      %800 = vmatprep.mubr.f32.mxu0 0.0
      %801 = vmatmul.mubr.f32.gmra.mxu0 %v560
      %v802 = vpop.f32.mrf.mxu0
      %v803 = vadd.f32 0.0, %v802
      %v804 = vpop.f32.mrf.mxu0
      %805 = vmatprep.mubr.f32.mxu0 0.0
      %806 = vmatmul.mubr.f32.gmra.mxu0 %v561
      %v807 = vpop.f32.mrf.mxu0
      %v808 = vadd.f32 0.0, %v807
      %v809 = vpop.f32.mrf.mxu0
      %810 = vmatprep.mubr.f32.mxu0 0.0
      %811 = vmatmul.mubr.f32.gmra.mxu0 %v562
      %v812 = vpop.f32.mrf.mxu0
      %v813 = vadd.f32 0.0, %v812
      %v814 = vpop.f32.mrf.mxu0
      %815 = vmatprep.mubr.f32.mxu0 0.0
      %816 = vmatmul.mubr.f32.gmra.mxu0 %v563
      %v817 = vpop.f32.mrf.mxu0
      %v818 = vadd.f32 0.0, %v817
      %v819 = vpop.f32.mrf.mxu0
      %820 = vmatprep.mubr.f32.mxu0 0.0
      %821 = vmatmul.mubr.f32.gmra.mxu0 %v564
      %v822 = vpop.f32.mrf.mxu0
      %v823 = vadd.f32 0.0, %v822
      %v824 = vpop.f32.mrf.mxu0
      %825 = vmatprep.mubr.f32.mxu0 0.0
      %826 = vmatmul.mubr.f32.gmra.mxu0 %v565
      %v827 = vpop.f32.mrf.mxu0
      %v828 = vadd.f32 0.0, %v827
      %v829 = vpop.f32.mrf.mxu0
      %830 = vmatprep.mubr.f32.mxu0 0.0
      %831 = vmatmul.mubr.f32.gmra.mxu0 %v566
      %v832 = vpop.f32.mrf.mxu0
      %v833 = vadd.f32 0.0, %v832
      %v834 = vpop.f32.mrf.mxu0
      %835 = vmatprep.mubr.f32.mxu0 0.0
      %836 = vmatmul.mubr.f32.gmra.mxu0 %v567
      %v837 = vpop.f32.mrf.mxu0
      %v838 = vadd.f32 0.0, %v837
      %v839 = vpop.f32.mrf.mxu0
      %840 = vdwg.mxu0
      %v841 = vadd.f32 %v568, %v683
      %v842 = vadd.f32 %v569, %v688
      %v843 = vadd.f32 %v570, %v693
      %v844 = vadd.f32 %v571, %v698
      %v845 = vadd.f32 %v572, %v703
      %v846 = vadd.f32 %v573, %v708
      %v847 = vadd.f32 %v574, %v713
      %v848 = vadd.f32 %v575, %v718
      %v849 = vadd.f32 %v576, %v723
      %v850 = vadd.f32 %v577, %v728
      %v851 = vadd.f32 %v578, %v733
      %v852 = vadd.f32 %v579, %v738
      %v853 = vadd.f32 %v580, %v743
      %v854 = vadd.f32 %v581, %v748
      %v855 = vadd.f32 %v582, %v753
      %v856 = vadd.f32 %v583, %v758
      %v857 = vadd.f32 %v584, %v763
      %v858 = vadd.f32 %v585, %v768
      %v859 = vadd.f32 %v586, %v773
      %v860 = vadd.f32 %v587, %v778
      %v861 = vadd.f32 %v588, %v783
      %v862 = vadd.f32 %v589, %v788
      %v863 = vadd.f32 %v590, %v793
      %v864 = vadd.f32 %v591, %v798
      %v865 = vadd.f32 %v592, %v803
      %v866 = vadd.f32 %v593, %v808
      %v867 = vadd.f32 %v594, %v813
      %v868 = vadd.f32 %v595, %v818
      %v869 = vadd.f32 %v596, %v823
      %v870 = vadd.f32 %v597, %v828
      %v871 = vadd.f32 %v598, %v833
      %v872 = vadd.f32 %v599, %v838
      %873 = vst [vmem:[#allocation3] sm:$0xff] %v841
      %874 = vst [vmem:[#allocation3 + $0x8] sm:$0xff] %v842
      %875 = vst [vmem:[#allocation3 + $0x10] sm:$0xff] %v843
      %876 = vst [vmem:[#allocation3 + $0x18] sm:$0xff] %v844
      %877 = vst [vmem:[#allocation3 + $0x20] sm:$0xff] %v845
      %878 = vst [vmem:[#allocation3 + $0x28] sm:$0xff] %v846
      %879 = vst [vmem:[#allocation3 + $0x30] sm:$0xff] %v847
      %880 = vst [vmem:[#allocation3 + $0x38] sm:$0xff] %v848
      %881 = vst [vmem:[#allocation3 + $0x40] sm:$0xff] %v849
      %882 = vst [vmem:[#allocation3 + $0x48] sm:$0xff] %v850
      %883 = vst [vmem:[#allocation3 + $0x50] sm:$0xff] %v851
      %884 = vst [vmem:[#allocation3 + $0x58] sm:$0xff] %v852
      %885 = vst [vmem:[#allocation3 + $0x60] sm:$0xff] %v853
      %886 = vst [vmem:[#allocation3 + $0x68] sm:$0xff] %v854
      %887 = vst [vmem:[#allocation3 + $0x70] sm:$0xff] %v855
      %888 = vst [vmem:[#allocation3 + $0x78] sm:$0xff] %v856
      %889 = vst [vmem:[#allocation3 + $0x80] sm:$0xff] %v857
      %890 = vst [vmem:[#allocation3 + $0x88] sm:$0xff] %v858
      %891 = vst [vmem:[#allocation3 + $0x90] sm:$0xff] %v859
      %892 = vst [vmem:[#allocation3 + $0x98] sm:$0xff] %v860
      %893 = vst [vmem:[#allocation3 + $0xa0] sm:$0xff] %v861
      %894 = vst [vmem:[#allocation3 + $0xa8] sm:$0xff] %v862
      %895 = vst [vmem:[#allocation3 + $0xb0] sm:$0xff] %v863
      %896 = vst [vmem:[#allocation3 + $0xb8] sm:$0xff] %v864
      %897 = vst [vmem:[#allocation3 + $0xc0] sm:$0xff] %v865
      %898 = vst [vmem:[#allocation3 + $0xc8] sm:$0xff] %v866
      %899 = vst [vmem:[#allocation3 + $0xd0] sm:$0xff] %v867
      %900 = vst [vmem:[#allocation3 + $0xd8] sm:$0xff] %v868
      %901 = vst [vmem:[#allocation3 + $0xe0] sm:$0xff] %v869
      %902 = vst [vmem:[#allocation3 + $0xe8] sm:$0xff] %v870
      %903 = vst [vmem:[#allocation3 + $0xf0] sm:$0xff] %v871
      %904 = vst [vmem:[#allocation3 + $0xf8] sm:$0xff] %v872
      %v905 = vld [vmem:[#allocation2 + $0x1] sm:$0xff]
      %v906 = vld [vmem:[#allocation2 + $0x9] sm:$0xff]
      %v907 = vld [vmem:[#allocation2 + $0x19] sm:$0xff]
      %v908 = vld [vmem:[#allocation2 + $0x21] sm:$0xff]
      %v909 = vld [vmem:[#allocation2 + $0x31] sm:$0xff]
      %v910 = vld [vmem:[#allocation2 + $0x39] sm:$0xff]
      %v911 = vld [vmem:[#allocation2 + $0x49] sm:$0xff]
      %v912 = vld [vmem:[#allocation2 + $0x51] sm:$0xff]
      %v913 = vld [vmem:[#allocation2 + $0x61] sm:$0xff]
      %v914 = vld [vmem:[#allocation2 + $0x69] sm:$0xff]
      %v915 = vld [vmem:[#allocation2 + $0x79] sm:$0xff]
      %v916 = vld [vmem:[#allocation2 + $0x81] sm:$0xff]
      %v917 = vld [vmem:[#allocation2 + $0x91] sm:$0xff]
      %v918 = vld [vmem:[#allocation2 + $0x99] sm:$0xff]
      %v919 = vld [vmem:[#allocation2 + $0xa9] sm:$0xff]
      %v920 = vld [vmem:[#allocation2 + $0xb1] sm:$0xff]
      %v921 = vld [vmem:[#allocation2 + $0xc1] sm:$0xff]
      %v922 = vld [vmem:[#allocation2 + $0xc9] sm:$0xff]
      %v923 = vld [vmem:[#allocation2 + $0xd9] sm:$0xff]
      %v924 = vld [vmem:[#allocation2 + $0xe1] sm:$0xff]
      %v925 = vld [vmem:[#allocation2 + $0xf1] sm:$0xff]
      %v926 = vld [vmem:[#allocation2 + $0xf9] sm:$0xff]
      %v927 = vld [vmem:[#allocation2 + $0x109] sm:$0xff]
      %v928 = vld [vmem:[#allocation2 + $0x111] sm:$0xff]
      %v929 = vld [vmem:[#allocation2 + $0x121] sm:$0xff]
      %v930 = vld [vmem:[#allocation2 + $0x129] sm:$0xff]
      %v931 = vld [vmem:[#allocation2 + $0x139] sm:$0xff]
      %v932 = vld [vmem:[#allocation2 + $0x141] sm:$0xff]
      %v933 = vld [vmem:[#allocation2 + $0x151] sm:$0xff]
      %v934 = vld [vmem:[#allocation2 + $0x159] sm:$0xff]
      %v935 = vld [vmem:[#allocation2 + $0x169] sm:$0xff]
      %v936 = vld [vmem:[#allocation2 + $0x171] sm:$0xff]
      %v937 = vld [vmem:[#allocation3] sm:$0xff]
      %v938 = vld [vmem:[#allocation3 + $0x8] sm:$0xff]
      %v939 = vld [vmem:[#allocation3 + $0x10] sm:$0xff]
      %v940 = vld [vmem:[#allocation3 + $0x18] sm:$0xff]
      %v941 = vld [vmem:[#allocation3 + $0x20] sm:$0xff]
      %v942 = vld [vmem:[#allocation3 + $0x28] sm:$0xff]
      %v943 = vld [vmem:[#allocation3 + $0x30] sm:$0xff]
      %v944 = vld [vmem:[#allocation3 + $0x38] sm:$0xff]
      %v945 = vld [vmem:[#allocation3 + $0x40] sm:$0xff]
      %v946 = vld [vmem:[#allocation3 + $0x48] sm:$0xff]
      %v947 = vld [vmem:[#allocation3 + $0x50] sm:$0xff]
      %v948 = vld [vmem:[#allocation3 + $0x58] sm:$0xff]
      %v949 = vld [vmem:[#allocation3 + $0x60] sm:$0xff]
      %v950 = vld [vmem:[#allocation3 + $0x68] sm:$0xff]
      %v951 = vld [vmem:[#allocation3 + $0x70] sm:$0xff]
      %v952 = vld [vmem:[#allocation3 + $0x78] sm:$0xff]
      %v953 = vld [vmem:[#allocation3 + $0x80] sm:$0xff]
      %v954 = vld [vmem:[#allocation3 + $0x88] sm:$0xff]
      %v955 = vld [vmem:[#allocation3 + $0x90] sm:$0xff]
      %v956 = vld [vmem:[#allocation3 + $0x98] sm:$0xff]
      %v957 = vld [vmem:[#allocation3 + $0xa0] sm:$0xff]
      %v958 = vld [vmem:[#allocation3 + $0xa8] sm:$0xff]
      %v959 = vld [vmem:[#allocation3 + $0xb0] sm:$0xff]
      %v960 = vld [vmem:[#allocation3 + $0xb8] sm:$0xff]
      %v961 = vld [vmem:[#allocation3 + $0xc0] sm:$0xff]
      %v962 = vld [vmem:[#allocation3 + $0xc8] sm:$0xff]
      %v963 = vld [vmem:[#allocation3 + $0xd0] sm:$0xff]
      %v964 = vld [vmem:[#allocation3 + $0xd8] sm:$0xff]
      %v965 = vld [vmem:[#allocation3 + $0xe0] sm:$0xff]
      %v966 = vld [vmem:[#allocation3 + $0xe8] sm:$0xff]
      %v967 = vld [vmem:[#allocation3 + $0xf0] sm:$0xff]
      %v968 = vld [vmem:[#allocation3 + $0xf8] sm:$0xff]
      %s969 = scalar_lea.vmem %s4, 128
      %v970 = vld [vmem:[%s969] sm:$0xff]
      %v971 = vld [vmem:[%s969 + $0x8] sm:$0xff]
      %v972 = vld [vmem:[%s969 + $0x10] sm:$0xff]
      %v973 = vld [vmem:[%s969 + $0x18] sm:$0xff]
      %v974 = vld [vmem:[%s969 + $0x20] sm:$0xff]
      %v975 = vld [vmem:[%s969 + $0x28] sm:$0xff]
      %v976 = vld [vmem:[%s969 + $0x30] sm:$0xff]
      %v977 = vld [vmem:[%s969 + $0x38] sm:$0xff]
      %v978 = vld [vmem:[%s969 + $0x40] sm:$0xff]
      %v979 = vld [vmem:[%s969 + $0x48] sm:$0xff]
      %v980 = vld [vmem:[%s969 + $0x50] sm:$0xff]
      %v981 = vld [vmem:[%s969 + $0x58] sm:$0xff]
      %v982 = vld [vmem:[%s969 + $0x60] sm:$0xff]
      %v983 = vld [vmem:[%s969 + $0x68] sm:$0xff]
      %v984 = vld [vmem:[%s969 + $0x70] sm:$0xff]
      %v985 = vld [vmem:[%s969 + $0x78] sm:$0xff]
      %986 = vmatprep.subr.mxu0 0.0
      %987 = vmatpush1.msra.mxu0 %v985
      %988 = vmatprep.subr.mxu0 0.0
      %989 = vmatpush1.msra.mxu0 %v984
      %990 = vmatprep.subr.mxu0 0.0
      %991 = vmatpush1.msra.mxu0 %v983
      %992 = vmatprep.subr.mxu0 0.0
      %993 = vmatpush1.msra.mxu0 %v982
      %994 = vmatprep.subr.mxu0 0.0
      %995 = vmatpush1.msra.mxu0 %v981
      %996 = vmatprep.subr.mxu0 0.0
      %997 = vmatpush1.msra.mxu0 %v980
      %998 = vmatprep.subr.mxu0 0.0
      %999 = vmatpush1.msra.mxu0 %v979
      %1000 = vmatprep.subr.mxu0 0.0
      %1001 = vmatpush1.msra.mxu0 %v978
      %1002 = vmatprep.subr.mxu0 0.0
      %1003 = vmatpush1.msra.mxu0 %v977
      %1004 = vmatprep.subr.mxu0 0.0
      %1005 = vmatpush1.msra.mxu0 %v976
      %1006 = vmatprep.subr.mxu0 0.0
      %1007 = vmatpush1.msra.mxu0 %v975
      %1008 = vmatprep.subr.mxu0 0.0
      %1009 = vmatpush1.msra.mxu0 %v974
      %1010 = vmatprep.subr.mxu0 0.0
      %1011 = vmatpush1.msra.mxu0 %v973
      %1012 = vmatprep.subr.mxu0 0.0
      %1013 = vmatpush1.msra.mxu0 %v972
      %1014 = vmatprep.subr.mxu0 0.0
      %1015 = vmatpush1.msra.mxu0 %v971
      %1016 = vmatprep.subr.mxu0 0.0
      %1017 = vmatpush1.msra.mxu0 %v970
      %1018 = vmatprep.subr.mxu0 0.0
      %1019 = vmatpush2.msra.mxu0 0.0
      %1020 = vmatprep.subr.mxu0 0.0
      %1021 = vmatpush2.msra.mxu0 0.0
      %1022 = vmatprep.subr.mxu0 0.0
      %1023 = vmatpush2.msra.mxu0 0.0
      %1024 = vmatprep.subr.mxu0 0.0
      %1025 = vmatpush2.msra.mxu0 0.0
      %1026 = vmatprep.subr.mxu0 0.0
      %1027 = vmatpush2.msra.mxu0 0.0
      %1028 = vmatprep.subr.mxu0 0.0
      %1029 = vmatpush2.msra.mxu0 0.0
      %1030 = vmatprep.subr.mxu0 0.0
      %1031 = vmatpush2.msra.mxu0 0.0
      %1032 = vmatprep.subr.mxu0 0.0
      %1033 = vmatpush2.msra.mxu0 0.0
      %1034 = vmatprep.subr.mxu0 0.0
      %1035 = vmatpush2.msra.mxu0 0.0
      %1036 = vmatprep.subr.mxu0 0.0
      %1037 = vmatpush2.msra.mxu0 0.0
      %1038 = vmatprep.subr.mxu0 0.0
      %1039 = vmatpush2.msra.mxu0 0.0
      %1040 = vmatprep.subr.mxu0 0.0
      %1041 = vmatpush2.msra.mxu0 0.0
      %1042 = vmatprep.subr.mxu0 0.0
      %1043 = vmatpush2.msra.mxu0 0.0
      %1044 = vmatprep.subr.mxu0 0.0
      %1045 = vmatpush2.msra.mxu0 0.0
      %1046 = vmatprep.subr.mxu0 0.0
      %1047 = vmatpush2.msra.mxu0 0.0
      %1048 = vmatprep.subr.mxu0 0.0
      %1049 = vmatpush2.msra.mxu0 0.0
      %1050 = vmatprep.mubr.f32.mxu0 0.0
      %1051 = vmatmul.mubr.f32.gmra.mxu0 %v905
      %v1052 = vpop.f32.mrf.mxu0
      %v1053 = vadd.f32 0.0, %v1052
      %v1054 = vpop.f32.mrf.mxu0
      %1055 = vmatprep.mubr.f32.mxu0 0.0
      %1056 = vmatmul.mubr.f32.gmra.mxu0 %v906
      %v1057 = vpop.f32.mrf.mxu0
      %v1058 = vadd.f32 0.0, %v1057
      %v1059 = vpop.f32.mrf.mxu0
      %1060 = vmatprep.mubr.f32.mxu0 0.0
      %1061 = vmatmul.mubr.f32.gmra.mxu0 %v907
      %v1062 = vpop.f32.mrf.mxu0
      %v1063 = vadd.f32 0.0, %v1062
      %v1064 = vpop.f32.mrf.mxu0
      %1065 = vmatprep.mubr.f32.mxu0 0.0
      %1066 = vmatmul.mubr.f32.gmra.mxu0 %v908
      %v1067 = vpop.f32.mrf.mxu0
      %v1068 = vadd.f32 0.0, %v1067
      %v1069 = vpop.f32.mrf.mxu0
      %1070 = vmatprep.mubr.f32.mxu0 0.0
      %1071 = vmatmul.mubr.f32.gmra.mxu0 %v909
      %v1072 = vpop.f32.mrf.mxu0
      %v1073 = vadd.f32 0.0, %v1072
      %v1074 = vpop.f32.mrf.mxu0
      %1075 = vmatprep.mubr.f32.mxu0 0.0
      %1076 = vmatmul.mubr.f32.gmra.mxu0 %v910
      %v1077 = vpop.f32.mrf.mxu0
      %v1078 = vadd.f32 0.0, %v1077
      %v1079 = vpop.f32.mrf.mxu0
      %1080 = vmatprep.mubr.f32.mxu0 0.0
      %1081 = vmatmul.mubr.f32.gmra.mxu0 %v911
      %v1082 = vpop.f32.mrf.mxu0
      %v1083 = vadd.f32 0.0, %v1082
      %v1084 = vpop.f32.mrf.mxu0
      %1085 = vmatprep.mubr.f32.mxu0 0.0
      %1086 = vmatmul.mubr.f32.gmra.mxu0 %v912
      %v1087 = vpop.f32.mrf.mxu0
      %v1088 = vadd.f32 0.0, %v1087
      %v1089 = vpop.f32.mrf.mxu0
      %1090 = vmatprep.mubr.f32.mxu0 0.0
      %1091 = vmatmul.mubr.f32.gmra.mxu0 %v913
      %v1092 = vpop.f32.mrf.mxu0
      %v1093 = vadd.f32 0.0, %v1092
      %v1094 = vpop.f32.mrf.mxu0
      %1095 = vmatprep.mubr.f32.mxu0 0.0
      %1096 = vmatmul.mubr.f32.gmra.mxu0 %v914
      %v1097 = vpop.f32.mrf.mxu0
      %v1098 = vadd.f32 0.0, %v1097
      %v1099 = vpop.f32.mrf.mxu0
      %1100 = vmatprep.mubr.f32.mxu0 0.0
      %1101 = vmatmul.mubr.f32.gmra.mxu0 %v915
      %v1102 = vpop.f32.mrf.mxu0
      %v1103 = vadd.f32 0.0, %v1102
      %v1104 = vpop.f32.mrf.mxu0
      %1105 = vmatprep.mubr.f32.mxu0 0.0
      %1106 = vmatmul.mubr.f32.gmra.mxu0 %v916
      %v1107 = vpop.f32.mrf.mxu0
      %v1108 = vadd.f32 0.0, %v1107
      %v1109 = vpop.f32.mrf.mxu0
      %1110 = vmatprep.mubr.f32.mxu0 0.0
      %1111 = vmatmul.mubr.f32.gmra.mxu0 %v917
      %v1112 = vpop.f32.mrf.mxu0
      %v1113 = vadd.f32 0.0, %v1112
      %v1114 = vpop.f32.mrf.mxu0
      %1115 = vmatprep.mubr.f32.mxu0 0.0
      %1116 = vmatmul.mubr.f32.gmra.mxu0 %v918
      %v1117 = vpop.f32.mrf.mxu0
      %v1118 = vadd.f32 0.0, %v1117
      %v1119 = vpop.f32.mrf.mxu0
      %1120 = vmatprep.mubr.f32.mxu0 0.0
      %1121 = vmatmul.mubr.f32.gmra.mxu0 %v919
      %v1122 = vpop.f32.mrf.mxu0
      %v1123 = vadd.f32 0.0, %v1122
      %v1124 = vpop.f32.mrf.mxu0
      %1125 = vmatprep.mubr.f32.mxu0 0.0
      %1126 = vmatmul.mubr.f32.gmra.mxu0 %v920
      %v1127 = vpop.f32.mrf.mxu0
      %v1128 = vadd.f32 0.0, %v1127
      %v1129 = vpop.f32.mrf.mxu0
      %1130 = vmatprep.mubr.f32.mxu0 0.0
      %1131 = vmatmul.mubr.f32.gmra.mxu0 %v921
      %v1132 = vpop.f32.mrf.mxu0
      %v1133 = vadd.f32 0.0, %v1132
      %v1134 = vpop.f32.mrf.mxu0
      %1135 = vmatprep.mubr.f32.mxu0 0.0
      %1136 = vmatmul.mubr.f32.gmra.mxu0 %v922
      %v1137 = vpop.f32.mrf.mxu0
      %v1138 = vadd.f32 0.0, %v1137
      %v1139 = vpop.f32.mrf.mxu0
      %1140 = vmatprep.mubr.f32.mxu0 0.0
      %1141 = vmatmul.mubr.f32.gmra.mxu0 %v923
      %v1142 = vpop.f32.mrf.mxu0
      %v1143 = vadd.f32 0.0, %v1142
      %v1144 = vpop.f32.mrf.mxu0
      %1145 = vmatprep.mubr.f32.mxu0 0.0
      %1146 = vmatmul.mubr.f32.gmra.mxu0 %v924
      %v1147 = vpop.f32.mrf.mxu0
      %v1148 = vadd.f32 0.0, %v1147
      %v1149 = vpop.f32.mrf.mxu0
      %1150 = vmatprep.mubr.f32.mxu0 0.0
      %1151 = vmatmul.mubr.f32.gmra.mxu0 %v925
      %v1152 = vpop.f32.mrf.mxu0
      %v1153 = vadd.f32 0.0, %v1152
      %v1154 = vpop.f32.mrf.mxu0
      %1155 = vmatprep.mubr.f32.mxu0 0.0
      %1156 = vmatmul.mubr.f32.gmra.mxu0 %v926
      %v1157 = vpop.f32.mrf.mxu0
      %v1158 = vadd.f32 0.0, %v1157
      %v1159 = vpop.f32.mrf.mxu0
      %1160 = vmatprep.mubr.f32.mxu0 0.0
      %1161 = vmatmul.mubr.f32.gmra.mxu0 %v927
      %v1162 = vpop.f32.mrf.mxu0
      %v1163 = vadd.f32 0.0, %v1162
      %v1164 = vpop.f32.mrf.mxu0
      %1165 = vmatprep.mubr.f32.mxu0 0.0
      %1166 = vmatmul.mubr.f32.gmra.mxu0 %v928
      %v1167 = vpop.f32.mrf.mxu0
      %v1168 = vadd.f32 0.0, %v1167
      %v1169 = vpop.f32.mrf.mxu0
      %1170 = vmatprep.mubr.f32.mxu0 0.0
      %1171 = vmatmul.mubr.f32.gmra.mxu0 %v929
      %v1172 = vpop.f32.mrf.mxu0
      %v1173 = vadd.f32 0.0, %v1172
      %v1174 = vpop.f32.mrf.mxu0
      %1175 = vmatprep.mubr.f32.mxu0 0.0
      %1176 = vmatmul.mubr.f32.gmra.mxu0 %v930
      %v1177 = vpop.f32.mrf.mxu0
      %v1178 = vadd.f32 0.0, %v1177
      %v1179 = vpop.f32.mrf.mxu0
      %1180 = vmatprep.mubr.f32.mxu0 0.0
      %1181 = vmatmul.mubr.f32.gmra.mxu0 %v931
      %v1182 = vpop.f32.mrf.mxu0
      %v1183 = vadd.f32 0.0, %v1182
      %v1184 = vpop.f32.mrf.mxu0
      %1185 = vmatprep.mubr.f32.mxu0 0.0
      %1186 = vmatmul.mubr.f32.gmra.mxu0 %v932
      %v1187 = vpop.f32.mrf.mxu0
      %v1188 = vadd.f32 0.0, %v1187
      %v1189 = vpop.f32.mrf.mxu0
      %1190 = vmatprep.mubr.f32.mxu0 0.0
      %1191 = vmatmul.mubr.f32.gmra.mxu0 %v933
      %v1192 = vpop.f32.mrf.mxu0
      %v1193 = vadd.f32 0.0, %v1192
      %v1194 = vpop.f32.mrf.mxu0
      %1195 = vmatprep.mubr.f32.mxu0 0.0
      %1196 = vmatmul.mubr.f32.gmra.mxu0 %v934
      %v1197 = vpop.f32.mrf.mxu0
      %v1198 = vadd.f32 0.0, %v1197
      %v1199 = vpop.f32.mrf.mxu0
      %1200 = vmatprep.mubr.f32.mxu0 0.0
      %1201 = vmatmul.mubr.f32.gmra.mxu0 %v935
      %v1202 = vpop.f32.mrf.mxu0
      %v1203 = vadd.f32 0.0, %v1202
      %v1204 = vpop.f32.mrf.mxu0
      %1205 = vmatprep.mubr.f32.mxu0 0.0
      %1206 = vmatmul.mubr.f32.gmra.mxu0 %v936
      %v1207 = vpop.f32.mrf.mxu0
      %v1208 = vadd.f32 0.0, %v1207
      %v1209 = vpop.f32.mrf.mxu0
      %1210 = vdwg.mxu0
      %v1211 = vadd.f32 %v937, %v1053
      %v1212 = vadd.f32 %v938, %v1058
      %v1213 = vadd.f32 %v939, %v1063
      %v1214 = vadd.f32 %v940, %v1068
      %v1215 = vadd.f32 %v941, %v1073
      %v1216 = vadd.f32 %v942, %v1078
      %v1217 = vadd.f32 %v943, %v1083
      %v1218 = vadd.f32 %v944, %v1088
      %v1219 = vadd.f32 %v945, %v1093
      %v1220 = vadd.f32 %v946, %v1098
      %v1221 = vadd.f32 %v947, %v1103
      %v1222 = vadd.f32 %v948, %v1108
      %v1223 = vadd.f32 %v949, %v1113
      %v1224 = vadd.f32 %v950, %v1118
      %v1225 = vadd.f32 %v951, %v1123
      %v1226 = vadd.f32 %v952, %v1128
      %v1227 = vadd.f32 %v953, %v1133
      %v1228 = vadd.f32 %v954, %v1138
      %v1229 = vadd.f32 %v955, %v1143
      %v1230 = vadd.f32 %v956, %v1148
      %v1231 = vadd.f32 %v957, %v1153
      %v1232 = vadd.f32 %v958, %v1158
      %v1233 = vadd.f32 %v959, %v1163
      %v1234 = vadd.f32 %v960, %v1168
      %v1235 = vadd.f32 %v961, %v1173
      %v1236 = vadd.f32 %v962, %v1178
      %v1237 = vadd.f32 %v963, %v1183
      %v1238 = vadd.f32 %v964, %v1188
      %v1239 = vadd.f32 %v965, %v1193
      %v1240 = vadd.f32 %v966, %v1198
      %v1241 = vadd.f32 %v967, %v1203
      %v1242 = vadd.f32 %v968, %v1208
      %1243 = vst [vmem:[#allocation3] sm:$0xff] %v1211
      %1244 = vst [vmem:[#allocation3 + $0x8] sm:$0xff] %v1212
      %1245 = vst [vmem:[#allocation3 + $0x10] sm:$0xff] %v1213
      %1246 = vst [vmem:[#allocation3 + $0x18] sm:$0xff] %v1214
      %1247 = vst [vmem:[#allocation3 + $0x20] sm:$0xff] %v1215
      %1248 = vst [vmem:[#allocation3 + $0x28] sm:$0xff] %v1216
      %1249 = vst [vmem:[#allocation3 + $0x30] sm:$0xff] %v1217
      %1250 = vst [vmem:[#allocation3 + $0x38] sm:$0xff] %v1218
      %1251 = vst [vmem:[#allocation3 + $0x40] sm:$0xff] %v1219
      %1252 = vst [vmem:[#allocation3 + $0x48] sm:$0xff] %v1220
      %1253 = vst [vmem:[#allocation3 + $0x50] sm:$0xff] %v1221
      %1254 = vst [vmem:[#allocation3 + $0x58] sm:$0xff] %v1222
      %1255 = vst [vmem:[#allocation3 + $0x60] sm:$0xff] %v1223
      %1256 = vst [vmem:[#allocation3 + $0x68] sm:$0xff] %v1224
      %1257 = vst [vmem:[#allocation3 + $0x70] sm:$0xff] %v1225
      %1258 = vst [vmem:[#allocation3 + $0x78] sm:$0xff] %v1226
      %1259 = vst [vmem:[#allocation3 + $0x80] sm:$0xff] %v1227
      %1260 = vst [vmem:[#allocation3 + $0x88] sm:$0xff] %v1228
      %1261 = vst [vmem:[#allocation3 + $0x90] sm:$0xff] %v1229
      %1262 = vst [vmem:[#allocation3 + $0x98] sm:$0xff] %v1230
      %1263 = vst [vmem:[#allocation3 + $0xa0] sm:$0xff] %v1231
      %1264 = vst [vmem:[#allocation3 + $0xa8] sm:$0xff] %v1232
      %1265 = vst [vmem:[#allocation3 + $0xb0] sm:$0xff] %v1233
      %1266 = vst [vmem:[#allocation3 + $0xb8] sm:$0xff] %v1234
      %1267 = vst [vmem:[#allocation3 + $0xc0] sm:$0xff] %v1235
      %1268 = vst [vmem:[#allocation3 + $0xc8] sm:$0xff] %v1236
      %1269 = vst [vmem:[#allocation3 + $0xd0] sm:$0xff] %v1237
      %1270 = vst [vmem:[#allocation3 + $0xd8] sm:$0xff] %v1238
      %1271 = vst [vmem:[#allocation3 + $0xe0] sm:$0xff] %v1239
      %1272 = vst [vmem:[#allocation3 + $0xe8] sm:$0xff] %v1240
      %1273 = vst [vmem:[#allocation3 + $0xf0] sm:$0xff] %v1241
      %1274 = vst [vmem:[#allocation3 + $0xf8] sm:$0xff] %v1242
      %v1275 = vld [vmem:[#allocation2 + $0x2] sm:$0xff]
      %v1276 = vld [vmem:[#allocation2 + $0xa] sm:$0xff]
      %v1277 = vld [vmem:[#allocation2 + $0x1a] sm:$0xff]
      %v1278 = vld [vmem:[#allocation2 + $0x22] sm:$0xff]
      %v1279 = vld [vmem:[#allocation2 + $0x32] sm:$0xff]
      %v1280 = vld [vmem:[#allocation2 + $0x3a] sm:$0xff]
      %v1281 = vld [vmem:[#allocation2 + $0x4a] sm:$0xff]
      %v1282 = vld [vmem:[#allocation2 + $0x52] sm:$0xff]
      %v1283 = vld [vmem:[#allocation2 + $0x62] sm:$0xff]
      %v1284 = vld [vmem:[#allocation2 + $0x6a] sm:$0xff]
      %v1285 = vld [vmem:[#allocation2 + $0x7a] sm:$0xff]
      %v1286 = vld [vmem:[#allocation2 + $0x82] sm:$0xff]
      %v1287 = vld [vmem:[#allocation2 + $0x92] sm:$0xff]
      %v1288 = vld [vmem:[#allocation2 + $0x9a] sm:$0xff]
      %v1289 = vld [vmem:[#allocation2 + $0xaa] sm:$0xff]
      %v1290 = vld [vmem:[#allocation2 + $0xb2] sm:$0xff]
      %v1291 = vld [vmem:[#allocation2 + $0xc2] sm:$0xff]
      %v1292 = vld [vmem:[#allocation2 + $0xca] sm:$0xff]
      %v1293 = vld [vmem:[#allocation2 + $0xda] sm:$0xff]
      %v1294 = vld [vmem:[#allocation2 + $0xe2] sm:$0xff]
      %v1295 = vld [vmem:[#allocation2 + $0xf2] sm:$0xff]
      %v1296 = vld [vmem:[#allocation2 + $0xfa] sm:$0xff]
      %v1297 = vld [vmem:[#allocation2 + $0x10a] sm:$0xff]
      %v1298 = vld [vmem:[#allocation2 + $0x112] sm:$0xff]
      %v1299 = vld [vmem:[#allocation2 + $0x122] sm:$0xff]
      %v1300 = vld [vmem:[#allocation2 + $0x12a] sm:$0xff]
      %v1301 = vld [vmem:[#allocation2 + $0x13a] sm:$0xff]
      %v1302 = vld [vmem:[#allocation2 + $0x142] sm:$0xff]
      %v1303 = vld [vmem:[#allocation2 + $0x152] sm:$0xff]
      %v1304 = vld [vmem:[#allocation2 + $0x15a] sm:$0xff]
      %v1305 = vld [vmem:[#allocation2 + $0x16a] sm:$0xff]
      %v1306 = vld [vmem:[#allocation2 + $0x172] sm:$0xff]
      %v1307 = vld [vmem:[#allocation3] sm:$0xff]
      %v1308 = vld [vmem:[#allocation3 + $0x8] sm:$0xff]
      %v1309 = vld [vmem:[#allocation3 + $0x10] sm:$0xff]
      %v1310 = vld [vmem:[#allocation3 + $0x18] sm:$0xff]
      %v1311 = vld [vmem:[#allocation3 + $0x20] sm:$0xff]
      %v1312 = vld [vmem:[#allocation3 + $0x28] sm:$0xff]
      %v1313 = vld [vmem:[#allocation3 + $0x30] sm:$0xff]
      %v1314 = vld [vmem:[#allocation3 + $0x38] sm:$0xff]
      %v1315 = vld [vmem:[#allocation3 + $0x40] sm:$0xff]
      %v1316 = vld [vmem:[#allocation3 + $0x48] sm:$0xff]
      %v1317 = vld [vmem:[#allocation3 + $0x50] sm:$0xff]
      %v1318 = vld [vmem:[#allocation3 + $0x58] sm:$0xff]
      %v1319 = vld [vmem:[#allocation3 + $0x60] sm:$0xff]
      %v1320 = vld [vmem:[#allocation3 + $0x68] sm:$0xff]
      %v1321 = vld [vmem:[#allocation3 + $0x70] sm:$0xff]
      %v1322 = vld [vmem:[#allocation3 + $0x78] sm:$0xff]
      %v1323 = vld [vmem:[#allocation3 + $0x80] sm:$0xff]
      %v1324 = vld [vmem:[#allocation3 + $0x88] sm:$0xff]
      %v1325 = vld [vmem:[#allocation3 + $0x90] sm:$0xff]
      %v1326 = vld [vmem:[#allocation3 + $0x98] sm:$0xff]
      %v1327 = vld [vmem:[#allocation3 + $0xa0] sm:$0xff]
      %v1328 = vld [vmem:[#allocation3 + $0xa8] sm:$0xff]
      %v1329 = vld [vmem:[#allocation3 + $0xb0] sm:$0xff]
      %v1330 = vld [vmem:[#allocation3 + $0xb8] sm:$0xff]
      %v1331 = vld [vmem:[#allocation3 + $0xc0] sm:$0xff]
      %v1332 = vld [vmem:[#allocation3 + $0xc8] sm:$0xff]
      %v1333 = vld [vmem:[#allocation3 + $0xd0] sm:$0xff]
      %v1334 = vld [vmem:[#allocation3 + $0xd8] sm:$0xff]
      %v1335 = vld [vmem:[#allocation3 + $0xe0] sm:$0xff]
      %v1336 = vld [vmem:[#allocation3 + $0xe8] sm:$0xff]
      %v1337 = vld [vmem:[#allocation3 + $0xf0] sm:$0xff]
      %v1338 = vld [vmem:[#allocation3 + $0xf8] sm:$0xff]
      %s1339 = scalar_lea.vmem %s4, 256
      %v1340 = vld [vmem:[%s1339] sm:$0xff]
      %v1341 = vld [vmem:[%s1339 + $0x8] sm:$0xff]
      %v1342 = vld [vmem:[%s1339 + $0x10] sm:$0xff]
      %v1343 = vld [vmem:[%s1339 + $0x18] sm:$0xff]
      %v1344 = vld [vmem:[%s1339 + $0x20] sm:$0xff]
      %v1345 = vld [vmem:[%s1339 + $0x28] sm:$0xff]
      %v1346 = vld [vmem:[%s1339 + $0x30] sm:$0xff]
      %v1347 = vld [vmem:[%s1339 + $0x38] sm:$0xff]
      %v1348 = vld [vmem:[%s1339 + $0x40] sm:$0xff]
      %v1349 = vld [vmem:[%s1339 + $0x48] sm:$0xff]
      %v1350 = vld [vmem:[%s1339 + $0x50] sm:$0xff]
      %v1351 = vld [vmem:[%s1339 + $0x58] sm:$0xff]
      %v1352 = vld [vmem:[%s1339 + $0x60] sm:$0xff]
      %v1353 = vld [vmem:[%s1339 + $0x68] sm:$0xff]
      %v1354 = vld [vmem:[%s1339 + $0x70] sm:$0xff]
      %v1355 = vld [vmem:[%s1339 + $0x78] sm:$0xff]
      %1356 = vmatprep.subr.mxu0 0.0
      %1357 = vmatpush1.msra.mxu0 %v1355
      %1358 = vmatprep.subr.mxu0 0.0
      %1359 = vmatpush1.msra.mxu0 %v1354
      %1360 = vmatprep.subr.mxu0 0.0
      %1361 = vmatpush1.msra.mxu0 %v1353
      %1362 = vmatprep.subr.mxu0 0.0
      %1363 = vmatpush1.msra.mxu0 %v1352
      %1364 = vmatprep.subr.mxu0 0.0
      %1365 = vmatpush1.msra.mxu0 %v1351
      %1366 = vmatprep.subr.mxu0 0.0
      %1367 = vmatpush1.msra.mxu0 %v1350
      %1368 = vmatprep.subr.mxu0 0.0
      %1369 = vmatpush1.msra.mxu0 %v1349
      %1370 = vmatprep.subr.mxu0 0.0
      %1371 = vmatpush1.msra.mxu0 %v1348
      %1372 = vmatprep.subr.mxu0 0.0
      %1373 = vmatpush1.msra.mxu0 %v1347
      %1374 = vmatprep.subr.mxu0 0.0
      %1375 = vmatpush1.msra.mxu0 %v1346
      %1376 = vmatprep.subr.mxu0 0.0
      %1377 = vmatpush1.msra.mxu0 %v1345
      %1378 = vmatprep.subr.mxu0 0.0
      %1379 = vmatpush1.msra.mxu0 %v1344
      %1380 = vmatprep.subr.mxu0 0.0
      %1381 = vmatpush1.msra.mxu0 %v1343
      %1382 = vmatprep.subr.mxu0 0.0
      %1383 = vmatpush1.msra.mxu0 %v1342
      %1384 = vmatprep.subr.mxu0 0.0
      %1385 = vmatpush1.msra.mxu0 %v1341
      %1386 = vmatprep.subr.mxu0 0.0
      %1387 = vmatpush1.msra.mxu0 %v1340
      %1388 = vmatprep.subr.mxu0 0.0
      %1389 = vmatpush2.msra.mxu0 0.0
      %1390 = vmatprep.subr.mxu0 0.0
      %1391 = vmatpush2.msra.mxu0 0.0
      %1392 = vmatprep.subr.mxu0 0.0
      %1393 = vmatpush2.msra.mxu0 0.0
      %1394 = vmatprep.subr.mxu0 0.0
      %1395 = vmatpush2.msra.mxu0 0.0
      %1396 = vmatprep.subr.mxu0 0.0
      %1397 = vmatpush2.msra.mxu0 0.0
      %1398 = vmatprep.subr.mxu0 0.0
      %1399 = vmatpush2.msra.mxu0 0.0
      %1400 = vmatprep.subr.mxu0 0.0
      %1401 = vmatpush2.msra.mxu0 0.0
      %1402 = vmatprep.subr.mxu0 0.0
      %1403 = vmatpush2.msra.mxu0 0.0
      %1404 = vmatprep.subr.mxu0 0.0
      %1405 = vmatpush2.msra.mxu0 0.0
      %1406 = vmatprep.subr.mxu0 0.0
      %1407 = vmatpush2.msra.mxu0 0.0
      %1408 = vmatprep.subr.mxu0 0.0
      %1409 = vmatpush2.msra.mxu0 0.0
      %1410 = vmatprep.subr.mxu0 0.0
      %1411 = vmatpush2.msra.mxu0 0.0
      %1412 = vmatprep.subr.mxu0 0.0
      %1413 = vmatpush2.msra.mxu0 0.0
      %1414 = vmatprep.subr.mxu0 0.0
      %1415 = vmatpush2.msra.mxu0 0.0
      %1416 = vmatprep.subr.mxu0 0.0
      %1417 = vmatpush2.msra.mxu0 0.0
      %1418 = vmatprep.subr.mxu0 0.0
      %1419 = vmatpush2.msra.mxu0 0.0
      %1420 = vmatprep.mubr.f32.mxu0 0.0
      %1421 = vmatmul.mubr.f32.gmra.mxu0 %v1275
      %v1422 = vpop.f32.mrf.mxu0
      %v1423 = vadd.f32 0.0, %v1422
      %v1424 = vpop.f32.mrf.mxu0
      %1425 = vmatprep.mubr.f32.mxu0 0.0
      %1426 = vmatmul.mubr.f32.gmra.mxu0 %v1276
      %v1427 = vpop.f32.mrf.mxu0
      %v1428 = vadd.f32 0.0, %v1427
      %v1429 = vpop.f32.mrf.mxu0
      %1430 = vmatprep.mubr.f32.mxu0 0.0
      %1431 = vmatmul.mubr.f32.gmra.mxu0 %v1277
      %v1432 = vpop.f32.mrf.mxu0
      %v1433 = vadd.f32 0.0, %v1432
      %v1434 = vpop.f32.mrf.mxu0
      %1435 = vmatprep.mubr.f32.mxu0 0.0
      %1436 = vmatmul.mubr.f32.gmra.mxu0 %v1278
      %v1437 = vpop.f32.mrf.mxu0
      %v1438 = vadd.f32 0.0, %v1437
      %v1439 = vpop.f32.mrf.mxu0
      %1440 = vmatprep.mubr.f32.mxu0 0.0
      %1441 = vmatmul.mubr.f32.gmra.mxu0 %v1279
      %v1442 = vpop.f32.mrf.mxu0
      %v1443 = vadd.f32 0.0, %v1442
      %v1444 = vpop.f32.mrf.mxu0
      %1445 = vmatprep.mubr.f32.mxu0 0.0
      %1446 = vmatmul.mubr.f32.gmra.mxu0 %v1280
      %v1447 = vpop.f32.mrf.mxu0
      %v1448 = vadd.f32 0.0, %v1447
      %v1449 = vpop.f32.mrf.mxu0
      %1450 = vmatprep.mubr.f32.mxu0 0.0
      %1451 = vmatmul.mubr.f32.gmra.mxu0 %v1281
      %v1452 = vpop.f32.mrf.mxu0
      %v1453 = vadd.f32 0.0, %v1452
      %v1454 = vpop.f32.mrf.mxu0
      %1455 = vmatprep.mubr.f32.mxu0 0.0
      %1456 = vmatmul.mubr.f32.gmra.mxu0 %v1282
      %v1457 = vpop.f32.mrf.mxu0
      %v1458 = vadd.f32 0.0, %v1457
      %v1459 = vpop.f32.mrf.mxu0
      %1460 = vmatprep.mubr.f32.mxu0 0.0
      %1461 = vmatmul.mubr.f32.gmra.mxu0 %v1283
      %v1462 = vpop.f32.mrf.mxu0
      %v1463 = vadd.f32 0.0, %v1462
      %v1464 = vpop.f32.mrf.mxu0
      %1465 = vmatprep.mubr.f32.mxu0 0.0
      %1466 = vmatmul.mubr.f32.gmra.mxu0 %v1284
      %v1467 = vpop.f32.mrf.mxu0
      %v1468 = vadd.f32 0.0, %v1467
      %v1469 = vpop.f32.mrf.mxu0
      %1470 = vmatprep.mubr.f32.mxu0 0.0
      %1471 = vmatmul.mubr.f32.gmra.mxu0 %v1285
      %v1472 = vpop.f32.mrf.mxu0
      %v1473 = vadd.f32 0.0, %v1472
      %v1474 = vpop.f32.mrf.mxu0
      %1475 = vmatprep.mubr.f32.mxu0 0.0
      %1476 = vmatmul.mubr.f32.gmra.mxu0 %v1286
      %v1477 = vpop.f32.mrf.mxu0
      %v1478 = vadd.f32 0.0, %v1477
      %v1479 = vpop.f32.mrf.mxu0
      %1480 = vmatprep.mubr.f32.mxu0 0.0
      %1481 = vmatmul.mubr.f32.gmra.mxu0 %v1287
      %v1482 = vpop.f32.mrf.mxu0
      %v1483 = vadd.f32 0.0, %v1482
      %v1484 = vpop.f32.mrf.mxu0
      %1485 = vmatprep.mubr.f32.mxu0 0.0
      %1486 = vmatmul.mubr.f32.gmra.mxu0 %v1288
      %v1487 = vpop.f32.mrf.mxu0
      %v1488 = vadd.f32 0.0, %v1487
      %v1489 = vpop.f32.mrf.mxu0
      %1490 = vmatprep.mubr.f32.mxu0 0.0
      %1491 = vmatmul.mubr.f32.gmra.mxu0 %v1289
      %v1492 = vpop.f32.mrf.mxu0
      %v1493 = vadd.f32 0.0, %v1492
      %v1494 = vpop.f32.mrf.mxu0
      %1495 = vmatprep.mubr.f32.mxu0 0.0
      %1496 = vmatmul.mubr.f32.gmra.mxu0 %v1290
      %v1497 = vpop.f32.mrf.mxu0
      %v1498 = vadd.f32 0.0, %v1497
      %v1499 = vpop.f32.mrf.mxu0
      %1500 = vmatprep.mubr.f32.mxu0 0.0
      %1501 = vmatmul.mubr.f32.gmra.mxu0 %v1291
      %v1502 = vpop.f32.mrf.mxu0
      %v1503 = vadd.f32 0.0, %v1502
      %v1504 = vpop.f32.mrf.mxu0
      %1505 = vmatprep.mubr.f32.mxu0 0.0
      %1506 = vmatmul.mubr.f32.gmra.mxu0 %v1292
      %v1507 = vpop.f32.mrf.mxu0
      %v1508 = vadd.f32 0.0, %v1507
      %v1509 = vpop.f32.mrf.mxu0
      %1510 = vmatprep.mubr.f32.mxu0 0.0
      %1511 = vmatmul.mubr.f32.gmra.mxu0 %v1293
      %v1512 = vpop.f32.mrf.mxu0
      %v1513 = vadd.f32 0.0, %v1512
      %v1514 = vpop.f32.mrf.mxu0
      %1515 = vmatprep.mubr.f32.mxu0 0.0
      %1516 = vmatmul.mubr.f32.gmra.mxu0 %v1294
      %v1517 = vpop.f32.mrf.mxu0
      %v1518 = vadd.f32 0.0, %v1517
      %v1519 = vpop.f32.mrf.mxu0
      %1520 = vmatprep.mubr.f32.mxu0 0.0
      %1521 = vmatmul.mubr.f32.gmra.mxu0 %v1295
      %v1522 = vpop.f32.mrf.mxu0
      %v1523 = vadd.f32 0.0, %v1522
      %v1524 = vpop.f32.mrf.mxu0
      %1525 = vmatprep.mubr.f32.mxu0 0.0
      %1526 = vmatmul.mubr.f32.gmra.mxu0 %v1296
      %v1527 = vpop.f32.mrf.mxu0
      %v1528 = vadd.f32 0.0, %v1527
      %v1529 = vpop.f32.mrf.mxu0
      %1530 = vmatprep.mubr.f32.mxu0 0.0
      %1531 = vmatmul.mubr.f32.gmra.mxu0 %v1297
      %v1532 = vpop.f32.mrf.mxu0
      %v1533 = vadd.f32 0.0, %v1532
      %v1534 = vpop.f32.mrf.mxu0
      %1535 = vmatprep.mubr.f32.mxu0 0.0
      %1536 = vmatmul.mubr.f32.gmra.mxu0 %v1298
      %v1537 = vpop.f32.mrf.mxu0
      %v1538 = vadd.f32 0.0, %v1537
      %v1539 = vpop.f32.mrf.mxu0
      %1540 = vmatprep.mubr.f32.mxu0 0.0
      %1541 = vmatmul.mubr.f32.gmra.mxu0 %v1299
      %v1542 = vpop.f32.mrf.mxu0
      %v1543 = vadd.f32 0.0, %v1542
      %v1544 = vpop.f32.mrf.mxu0
      %1545 = vmatprep.mubr.f32.mxu0 0.0
      %1546 = vmatmul.mubr.f32.gmra.mxu0 %v1300
      %v1547 = vpop.f32.mrf.mxu0
      %v1548 = vadd.f32 0.0, %v1547
      %v1549 = vpop.f32.mrf.mxu0
      %1550 = vmatprep.mubr.f32.mxu0 0.0
      %1551 = vmatmul.mubr.f32.gmra.mxu0 %v1301
      %v1552 = vpop.f32.mrf.mxu0
      %v1553 = vadd.f32 0.0, %v1552
      %v1554 = vpop.f32.mrf.mxu0
      %1555 = vmatprep.mubr.f32.mxu0 0.0
      %1556 = vmatmul.mubr.f32.gmra.mxu0 %v1302
      %v1557 = vpop.f32.mrf.mxu0
      %v1558 = vadd.f32 0.0, %v1557
      %v1559 = vpop.f32.mrf.mxu0
      %1560 = vmatprep.mubr.f32.mxu0 0.0
      %1561 = vmatmul.mubr.f32.gmra.mxu0 %v1303
      %v1562 = vpop.f32.mrf.mxu0
      %v1563 = vadd.f32 0.0, %v1562
      %v1564 = vpop.f32.mrf.mxu0
      %1565 = vmatprep.mubr.f32.mxu0 0.0
      %1566 = vmatmul.mubr.f32.gmra.mxu0 %v1304
      %v1567 = vpop.f32.mrf.mxu0
      %v1568 = vadd.f32 0.0, %v1567
      %v1569 = vpop.f32.mrf.mxu0
      %1570 = vmatprep.mubr.f32.mxu0 0.0
      %1571 = vmatmul.mubr.f32.gmra.mxu0 %v1305
      %v1572 = vpop.f32.mrf.mxu0
      %v1573 = vadd.f32 0.0, %v1572
      %v1574 = vpop.f32.mrf.mxu0
      %1575 = vmatprep.mubr.f32.mxu0 0.0
      %1576 = vmatmul.mubr.f32.gmra.mxu0 %v1306
      %v1577 = vpop.f32.mrf.mxu0
      %v1578 = vadd.f32 0.0, %v1577
      %v1579 = vpop.f32.mrf.mxu0
      %1580 = vdwg.mxu0
      %v1581 = vadd.f32 %v1307, %v1423
      %v1582 = vadd.f32 %v1308, %v1428
      %v1583 = vadd.f32 %v1309, %v1433
      %v1584 = vadd.f32 %v1310, %v1438
      %v1585 = vadd.f32 %v1311, %v1443
      %v1586 = vadd.f32 %v1312, %v1448
      %v1587 = vadd.f32 %v1313, %v1453
      %v1588 = vadd.f32 %v1314, %v1458
      %v1589 = vadd.f32 %v1315, %v1463
      %v1590 = vadd.f32 %v1316, %v1468
      %v1591 = vadd.f32 %v1317, %v1473
      %v1592 = vadd.f32 %v1318, %v1478
      %v1593 = vadd.f32 %v1319, %v1483
      %v1594 = vadd.f32 %v1320, %v1488
      %v1595 = vadd.f32 %v1321, %v1493
      %v1596 = vadd.f32 %v1322, %v1498
      %v1597 = vadd.f32 %v1323, %v1503
      %v1598 = vadd.f32 %v1324, %v1508
      %v1599 = vadd.f32 %v1325, %v1513
      %v1600 = vadd.f32 %v1326, %v1518
      %v1601 = vadd.f32 %v1327, %v1523
      %v1602 = vadd.f32 %v1328, %v1528
      %v1603 = vadd.f32 %v1329, %v1533
      %v1604 = vadd.f32 %v1330, %v1538
      %v1605 = vadd.f32 %v1331, %v1543
      %v1606 = vadd.f32 %v1332, %v1548
      %v1607 = vadd.f32 %v1333, %v1553
      %v1608 = vadd.f32 %v1334, %v1558
      %v1609 = vadd.f32 %v1335, %v1563
      %v1610 = vadd.f32 %v1336, %v1568
      %v1611 = vadd.f32 %v1337, %v1573
      %v1612 = vadd.f32 %v1338, %v1578
      %1613 = vst [vmem:[#allocation3] sm:$0xff] %v1581
      %1614 = vst [vmem:[#allocation3 + $0x8] sm:$0xff] %v1582
      %1615 = vst [vmem:[#allocation3 + $0x10] sm:$0xff] %v1583
      %1616 = vst [vmem:[#allocation3 + $0x18] sm:$0xff] %v1584
      %1617 = vst [vmem:[#allocation3 + $0x20] sm:$0xff] %v1585
      %1618 = vst [vmem:[#allocation3 + $0x28] sm:$0xff] %v1586
      %1619 = vst [vmem:[#allocation3 + $0x30] sm:$0xff] %v1587
      %1620 = vst [vmem:[#allocation3 + $0x38] sm:$0xff] %v1588
      %1621 = vst [vmem:[#allocation3 + $0x40] sm:$0xff] %v1589
      %1622 = vst [vmem:[#allocation3 + $0x48] sm:$0xff] %v1590
      %1623 = vst [vmem:[#allocation3 + $0x50] sm:$0xff] %v1591
      %1624 = vst [vmem:[#allocation3 + $0x58] sm:$0xff] %v1592
      %1625 = vst [vmem:[#allocation3 + $0x60] sm:$0xff] %v1593
      %1626 = vst [vmem:[#allocation3 + $0x68] sm:$0xff] %v1594
      %1627 = vst [vmem:[#allocation3 + $0x70] sm:$0xff] %v1595
      %1628 = vst [vmem:[#allocation3 + $0x78] sm:$0xff] %v1596
      %1629 = vst [vmem:[#allocation3 + $0x80] sm:$0xff] %v1597
      %1630 = vst [vmem:[#allocation3 + $0x88] sm:$0xff] %v1598
      %1631 = vst [vmem:[#allocation3 + $0x90] sm:$0xff] %v1599
      %1632 = vst [vmem:[#allocation3 + $0x98] sm:$0xff] %v1600
      %1633 = vst [vmem:[#allocation3 + $0xa0] sm:$0xff] %v1601
      %1634 = vst [vmem:[#allocation3 + $0xa8] sm:$0xff] %v1602
      %1635 = vst [vmem:[#allocation3 + $0xb0] sm:$0xff] %v1603
      %1636 = vst [vmem:[#allocation3 + $0xb8] sm:$0xff] %v1604
      %1637 = vst [vmem:[#allocation3 + $0xc0] sm:$0xff] %v1605
      %1638 = vst [vmem:[#allocation3 + $0xc8] sm:$0xff] %v1606
      %1639 = vst [vmem:[#allocation3 + $0xd0] sm:$0xff] %v1607
      %1640 = vst [vmem:[#allocation3 + $0xd8] sm:$0xff] %v1608
      %1641 = vst [vmem:[#allocation3 + $0xe0] sm:$0xff] %v1609
      %1642 = vst [vmem:[#allocation3 + $0xe8] sm:$0xff] %v1610
      %1643 = vst [vmem:[#allocation3 + $0xf0] sm:$0xff] %v1611
      %1644 = vst [vmem:[#allocation3 + $0xf8] sm:$0xff] %v1612
      %v1645 = vld [vmem:[%s471] sm:$0xff]
      %v1646 = vld [vmem:[%s471 + $0x8] sm:$0xff]
      %v1647 = vld [vmem:[%s471 + $0x18] sm:$0xff]
      %v1648 = vld [vmem:[%s471 + $0x20] sm:$0xff]
      %v1649 = vld [vmem:[%s471 + $0x30] sm:$0xff]
      %v1650 = vld [vmem:[%s471 + $0x38] sm:$0xff]
      %v1651 = vld [vmem:[%s471 + $0x48] sm:$0xff]
      %v1652 = vld [vmem:[%s471 + $0x50] sm:$0xff]
      %v1653 = vld [vmem:[%s471 + $0x60] sm:$0xff]
      %v1654 = vld [vmem:[%s471 + $0x68] sm:$0xff]
      %v1655 = vld [vmem:[%s471 + $0x78] sm:$0xff]
      %v1656 = vld [vmem:[%s471 + $0x80] sm:$0xff]
      %v1657 = vld [vmem:[%s471 + $0x90] sm:$0xff]
      %v1658 = vld [vmem:[%s471 + $0x98] sm:$0xff]
      %v1659 = vld [vmem:[%s471 + $0xa8] sm:$0xff]
      %v1660 = vld [vmem:[%s471 + $0xb0] sm:$0xff]
      %v1661 = vld [vmem:[%s471 + $0xc0] sm:$0xff]
      %v1662 = vld [vmem:[%s471 + $0xc8] sm:$0xff]
      %v1663 = vld [vmem:[%s471 + $0xd8] sm:$0xff]
      %v1664 = vld [vmem:[%s471 + $0xe0] sm:$0xff]
      %v1665 = vld [vmem:[%s471 + $0xf0] sm:$0xff]
      %v1666 = vld [vmem:[%s471 + $0xf8] sm:$0xff]
      %v1667 = vld [vmem:[%s471 + $0x108] sm:$0xff]
      %v1668 = vld [vmem:[%s471 + $0x110] sm:$0xff]
      %v1669 = vld [vmem:[%s471 + $0x120] sm:$0xff]
      %v1670 = vld [vmem:[%s471 + $0x128] sm:$0xff]
      %v1671 = vld [vmem:[%s471 + $0x138] sm:$0xff]
      %v1672 = vld [vmem:[%s471 + $0x140] sm:$0xff]
      %v1673 = vld [vmem:[%s471 + $0x150] sm:$0xff]
      %v1674 = vld [vmem:[%s471 + $0x158] sm:$0xff]
      %v1675 = vld [vmem:[%s471 + $0x168] sm:$0xff]
      %v1676 = vld [vmem:[%s471 + $0x170] sm:$0xff]
      %v1677 = vld [vmem:[#allocation3] sm:$0xff]
      %v1678 = vld [vmem:[#allocation3 + $0x8] sm:$0xff]
      %v1679 = vld [vmem:[#allocation3 + $0x10] sm:$0xff]
      %v1680 = vld [vmem:[#allocation3 + $0x18] sm:$0xff]
      %v1681 = vld [vmem:[#allocation3 + $0x20] sm:$0xff]
      %v1682 = vld [vmem:[#allocation3 + $0x28] sm:$0xff]
      %v1683 = vld [vmem:[#allocation3 + $0x30] sm:$0xff]
      %v1684 = vld [vmem:[#allocation3 + $0x38] sm:$0xff]
      %v1685 = vld [vmem:[#allocation3 + $0x40] sm:$0xff]
      %v1686 = vld [vmem:[#allocation3 + $0x48] sm:$0xff]
      %v1687 = vld [vmem:[#allocation3 + $0x50] sm:$0xff]
      %v1688 = vld [vmem:[#allocation3 + $0x58] sm:$0xff]
      %v1689 = vld [vmem:[#allocation3 + $0x60] sm:$0xff]
      %v1690 = vld [vmem:[#allocation3 + $0x68] sm:$0xff]
      %v1691 = vld [vmem:[#allocation3 + $0x70] sm:$0xff]
      %v1692 = vld [vmem:[#allocation3 + $0x78] sm:$0xff]
      %v1693 = vld [vmem:[#allocation3 + $0x80] sm:$0xff]
      %v1694 = vld [vmem:[#allocation3 + $0x88] sm:$0xff]
      %v1695 = vld [vmem:[#allocation3 + $0x90] sm:$0xff]
      %v1696 = vld [vmem:[#allocation3 + $0x98] sm:$0xff]
      %v1697 = vld [vmem:[#allocation3 + $0xa0] sm:$0xff]
      %v1698 = vld [vmem:[#allocation3 + $0xa8] sm:$0xff]
      %v1699 = vld [vmem:[#allocation3 + $0xb0] sm:$0xff]
      %v1700 = vld [vmem:[#allocation3 + $0xb8] sm:$0xff]
      %v1701 = vld [vmem:[#allocation3 + $0xc0] sm:$0xff]
      %v1702 = vld [vmem:[#allocation3 + $0xc8] sm:$0xff]
      %v1703 = vld [vmem:[#allocation3 + $0xd0] sm:$0xff]
      %v1704 = vld [vmem:[#allocation3 + $0xd8] sm:$0xff]
      %v1705 = vld [vmem:[#allocation3 + $0xe0] sm:$0xff]
      %v1706 = vld [vmem:[#allocation3 + $0xe8] sm:$0xff]
      %v1707 = vld [vmem:[#allocation3 + $0xf0] sm:$0xff]
      %v1708 = vld [vmem:[#allocation3 + $0xf8] sm:$0xff]
      %s1709 = scalar_lea.vmem %s4, 384
      %v1710 = vld [vmem:[%s1709] sm:$0xff]
      %v1711 = vld [vmem:[%s1709 + $0x8] sm:$0xff]
      %v1712 = vld [vmem:[%s1709 + $0x10] sm:$0xff]
      %v1713 = vld [vmem:[%s1709 + $0x18] sm:$0xff]
      %v1714 = vld [vmem:[%s1709 + $0x20] sm:$0xff]
      %v1715 = vld [vmem:[%s1709 + $0x28] sm:$0xff]
      %v1716 = vld [vmem:[%s1709 + $0x30] sm:$0xff]
      %v1717 = vld [vmem:[%s1709 + $0x38] sm:$0xff]
      %v1718 = vld [vmem:[%s1709 + $0x40] sm:$0xff]
      %v1719 = vld [vmem:[%s1709 + $0x48] sm:$0xff]
      %v1720 = vld [vmem:[%s1709 + $0x50] sm:$0xff]
      %v1721 = vld [vmem:[%s1709 + $0x58] sm:$0xff]
      %v1722 = vld [vmem:[%s1709 + $0x60] sm:$0xff]
      %v1723 = vld [vmem:[%s1709 + $0x68] sm:$0xff]
      %v1724 = vld [vmem:[%s1709 + $0x70] sm:$0xff]
      %v1725 = vld [vmem:[%s1709 + $0x78] sm:$0xff]
      %1726 = vmatprep.subr.mxu0 0.0
      %1727 = vmatpush1.msra.mxu0 %v1725
      %1728 = vmatprep.subr.mxu0 0.0
      %1729 = vmatpush1.msra.mxu0 %v1724
      %1730 = vmatprep.subr.mxu0 0.0
      %1731 = vmatpush1.msra.mxu0 %v1723
      %1732 = vmatprep.subr.mxu0 0.0
      %1733 = vmatpush1.msra.mxu0 %v1722
      %1734 = vmatprep.subr.mxu0 0.0
      %1735 = vmatpush1.msra.mxu0 %v1721
      %1736 = vmatprep.subr.mxu0 0.0
      %1737 = vmatpush1.msra.mxu0 %v1720
      %1738 = vmatprep.subr.mxu0 0.0
      %1739 = vmatpush1.msra.mxu0 %v1719
      %1740 = vmatprep.subr.mxu0 0.0
      %1741 = vmatpush1.msra.mxu0 %v1718
      %1742 = vmatprep.subr.mxu0 0.0
      %1743 = vmatpush1.msra.mxu0 %v1717
      %1744 = vmatprep.subr.mxu0 0.0
      %1745 = vmatpush1.msra.mxu0 %v1716
      %1746 = vmatprep.subr.mxu0 0.0
      %1747 = vmatpush1.msra.mxu0 %v1715
      %1748 = vmatprep.subr.mxu0 0.0
      %1749 = vmatpush1.msra.mxu0 %v1714
      %1750 = vmatprep.subr.mxu0 0.0
      %1751 = vmatpush1.msra.mxu0 %v1713
      %1752 = vmatprep.subr.mxu0 0.0
      %1753 = vmatpush1.msra.mxu0 %v1712
      %1754 = vmatprep.subr.mxu0 0.0
      %1755 = vmatpush1.msra.mxu0 %v1711
      %1756 = vmatprep.subr.mxu0 0.0
      %1757 = vmatpush1.msra.mxu0 %v1710
      %1758 = vmatprep.subr.mxu0 0.0
      %1759 = vmatpush2.msra.mxu0 0.0
      %1760 = vmatprep.subr.mxu0 0.0
      %1761 = vmatpush2.msra.mxu0 0.0
      %1762 = vmatprep.subr.mxu0 0.0
      %1763 = vmatpush2.msra.mxu0 0.0
      %1764 = vmatprep.subr.mxu0 0.0
      %1765 = vmatpush2.msra.mxu0 0.0
      %1766 = vmatprep.subr.mxu0 0.0
      %1767 = vmatpush2.msra.mxu0 0.0
      %1768 = vmatprep.subr.mxu0 0.0
      %1769 = vmatpush2.msra.mxu0 0.0
      %1770 = vmatprep.subr.mxu0 0.0
      %1771 = vmatpush2.msra.mxu0 0.0
      %1772 = vmatprep.subr.mxu0 0.0
      %1773 = vmatpush2.msra.mxu0 0.0
      %1774 = vmatprep.subr.mxu0 0.0
      %1775 = vmatpush2.msra.mxu0 0.0
      %1776 = vmatprep.subr.mxu0 0.0
      %1777 = vmatpush2.msra.mxu0 0.0
      %1778 = vmatprep.subr.mxu0 0.0
      %1779 = vmatpush2.msra.mxu0 0.0
      %1780 = vmatprep.subr.mxu0 0.0
      %1781 = vmatpush2.msra.mxu0 0.0
      %1782 = vmatprep.subr.mxu0 0.0
      %1783 = vmatpush2.msra.mxu0 0.0
      %1784 = vmatprep.subr.mxu0 0.0
      %1785 = vmatpush2.msra.mxu0 0.0
      %1786 = vmatprep.subr.mxu0 0.0
      %1787 = vmatpush2.msra.mxu0 0.0
      %1788 = vmatprep.subr.mxu0 0.0
      %1789 = vmatpush2.msra.mxu0 0.0
      %1790 = vmatprep.mubr.f32.mxu0 0.0
      %1791 = vmatmul.mubr.f32.gmra.mxu0 %v1645
      %v1792 = vpop.f32.mrf.mxu0
      %v1793 = vadd.f32 0.0, %v1792
      %v1794 = vpop.f32.mrf.mxu0
      %1795 = vmatprep.mubr.f32.mxu0 0.0
      %1796 = vmatmul.mubr.f32.gmra.mxu0 %v1646
      %v1797 = vpop.f32.mrf.mxu0
      %v1798 = vadd.f32 0.0, %v1797
      %v1799 = vpop.f32.mrf.mxu0
      %1800 = vmatprep.mubr.f32.mxu0 0.0
      %1801 = vmatmul.mubr.f32.gmra.mxu0 %v1647
      %v1802 = vpop.f32.mrf.mxu0
      %v1803 = vadd.f32 0.0, %v1802
      %v1804 = vpop.f32.mrf.mxu0
      %1805 = vmatprep.mubr.f32.mxu0 0.0
      %1806 = vmatmul.mubr.f32.gmra.mxu0 %v1648
      %v1807 = vpop.f32.mrf.mxu0
      %v1808 = vadd.f32 0.0, %v1807
      %v1809 = vpop.f32.mrf.mxu0
      %1810 = vmatprep.mubr.f32.mxu0 0.0
      %1811 = vmatmul.mubr.f32.gmra.mxu0 %v1649
      %v1812 = vpop.f32.mrf.mxu0
      %v1813 = vadd.f32 0.0, %v1812
      %v1814 = vpop.f32.mrf.mxu0
      %1815 = vmatprep.mubr.f32.mxu0 0.0
      %1816 = vmatmul.mubr.f32.gmra.mxu0 %v1650
      %v1817 = vpop.f32.mrf.mxu0
      %v1818 = vadd.f32 0.0, %v1817
      %v1819 = vpop.f32.mrf.mxu0
      %1820 = vmatprep.mubr.f32.mxu0 0.0
      %1821 = vmatmul.mubr.f32.gmra.mxu0 %v1651
      %v1822 = vpop.f32.mrf.mxu0
      %v1823 = vadd.f32 0.0, %v1822
      %v1824 = vpop.f32.mrf.mxu0
      %1825 = vmatprep.mubr.f32.mxu0 0.0
      %1826 = vmatmul.mubr.f32.gmra.mxu0 %v1652
      %v1827 = vpop.f32.mrf.mxu0
      %v1828 = vadd.f32 0.0, %v1827
      %v1829 = vpop.f32.mrf.mxu0
      %1830 = vmatprep.mubr.f32.mxu0 0.0
      %1831 = vmatmul.mubr.f32.gmra.mxu0 %v1653
      %v1832 = vpop.f32.mrf.mxu0
      %v1833 = vadd.f32 0.0, %v1832
      %v1834 = vpop.f32.mrf.mxu0
      %1835 = vmatprep.mubr.f32.mxu0 0.0
      %1836 = vmatmul.mubr.f32.gmra.mxu0 %v1654
      %v1837 = vpop.f32.mrf.mxu0
      %v1838 = vadd.f32 0.0, %v1837
      %v1839 = vpop.f32.mrf.mxu0
      %1840 = vmatprep.mubr.f32.mxu0 0.0
      %1841 = vmatmul.mubr.f32.gmra.mxu0 %v1655
      %v1842 = vpop.f32.mrf.mxu0
      %v1843 = vadd.f32 0.0, %v1842
      %v1844 = vpop.f32.mrf.mxu0
      %1845 = vmatprep.mubr.f32.mxu0 0.0
      %1846 = vmatmul.mubr.f32.gmra.mxu0 %v1656
      %v1847 = vpop.f32.mrf.mxu0
      %v1848 = vadd.f32 0.0, %v1847
      %v1849 = vpop.f32.mrf.mxu0
      %1850 = vmatprep.mubr.f32.mxu0 0.0
      %1851 = vmatmul.mubr.f32.gmra.mxu0 %v1657
      %v1852 = vpop.f32.mrf.mxu0
      %v1853 = vadd.f32 0.0, %v1852
      %v1854 = vpop.f32.mrf.mxu0
      %1855 = vmatprep.mubr.f32.mxu0 0.0
      %1856 = vmatmul.mubr.f32.gmra.mxu0 %v1658
      %v1857 = vpop.f32.mrf.mxu0
      %v1858 = vadd.f32 0.0, %v1857
      %v1859 = vpop.f32.mrf.mxu0
      %1860 = vmatprep.mubr.f32.mxu0 0.0
      %1861 = vmatmul.mubr.f32.gmra.mxu0 %v1659
      %v1862 = vpop.f32.mrf.mxu0
      %v1863 = vadd.f32 0.0, %v1862
      %v1864 = vpop.f32.mrf.mxu0
      %1865 = vmatprep.mubr.f32.mxu0 0.0
      %1866 = vmatmul.mubr.f32.gmra.mxu0 %v1660
      %v1867 = vpop.f32.mrf.mxu0
      %v1868 = vadd.f32 0.0, %v1867
      %v1869 = vpop.f32.mrf.mxu0
      %1870 = vmatprep.mubr.f32.mxu0 0.0
      %1871 = vmatmul.mubr.f32.gmra.mxu0 %v1661
      %v1872 = vpop.f32.mrf.mxu0
      %v1873 = vadd.f32 0.0, %v1872
      %v1874 = vpop.f32.mrf.mxu0
      %1875 = vmatprep.mubr.f32.mxu0 0.0
      %1876 = vmatmul.mubr.f32.gmra.mxu0 %v1662
      %v1877 = vpop.f32.mrf.mxu0
      %v1878 = vadd.f32 0.0, %v1877
      %v1879 = vpop.f32.mrf.mxu0
      %1880 = vmatprep.mubr.f32.mxu0 0.0
      %1881 = vmatmul.mubr.f32.gmra.mxu0 %v1663
      %v1882 = vpop.f32.mrf.mxu0
      %v1883 = vadd.f32 0.0, %v1882
      %v1884 = vpop.f32.mrf.mxu0
      %1885 = vmatprep.mubr.f32.mxu0 0.0
      %1886 = vmatmul.mubr.f32.gmra.mxu0 %v1664
      %v1887 = vpop.f32.mrf.mxu0
      %v1888 = vadd.f32 0.0, %v1887
      %v1889 = vpop.f32.mrf.mxu0
      %1890 = vmatprep.mubr.f32.mxu0 0.0
      %1891 = vmatmul.mubr.f32.gmra.mxu0 %v1665
      %v1892 = vpop.f32.mrf.mxu0
      %v1893 = vadd.f32 0.0, %v1892
      %v1894 = vpop.f32.mrf.mxu0
      %1895 = vmatprep.mubr.f32.mxu0 0.0
      %1896 = vmatmul.mubr.f32.gmra.mxu0 %v1666
      %v1897 = vpop.f32.mrf.mxu0
      %v1898 = vadd.f32 0.0, %v1897
      %v1899 = vpop.f32.mrf.mxu0
      %1900 = vmatprep.mubr.f32.mxu0 0.0
      %1901 = vmatmul.mubr.f32.gmra.mxu0 %v1667
      %v1902 = vpop.f32.mrf.mxu0
      %v1903 = vadd.f32 0.0, %v1902
      %v1904 = vpop.f32.mrf.mxu0
      %1905 = vmatprep.mubr.f32.mxu0 0.0
      %1906 = vmatmul.mubr.f32.gmra.mxu0 %v1668
      %v1907 = vpop.f32.mrf.mxu0
      %v1908 = vadd.f32 0.0, %v1907
      %v1909 = vpop.f32.mrf.mxu0
      %1910 = vmatprep.mubr.f32.mxu0 0.0
      %1911 = vmatmul.mubr.f32.gmra.mxu0 %v1669
      %v1912 = vpop.f32.mrf.mxu0
      %v1913 = vadd.f32 0.0, %v1912
      %v1914 = vpop.f32.mrf.mxu0
      %1915 = vmatprep.mubr.f32.mxu0 0.0
      %1916 = vmatmul.mubr.f32.gmra.mxu0 %v1670
      %v1917 = vpop.f32.mrf.mxu0
      %v1918 = vadd.f32 0.0, %v1917
      %v1919 = vpop.f32.mrf.mxu0
      %1920 = vmatprep.mubr.f32.mxu0 0.0
      %1921 = vmatmul.mubr.f32.gmra.mxu0 %v1671
      %v1922 = vpop.f32.mrf.mxu0
      %v1923 = vadd.f32 0.0, %v1922
      %v1924 = vpop.f32.mrf.mxu0
      %1925 = vmatprep.mubr.f32.mxu0 0.0
      %1926 = vmatmul.mubr.f32.gmra.mxu0 %v1672
      %v1927 = vpop.f32.mrf.mxu0
      %v1928 = vadd.f32 0.0, %v1927
      %v1929 = vpop.f32.mrf.mxu0
      %1930 = vmatprep.mubr.f32.mxu0 0.0
      %1931 = vmatmul.mubr.f32.gmra.mxu0 %v1673
      %v1932 = vpop.f32.mrf.mxu0
      %v1933 = vadd.f32 0.0, %v1932
      %v1934 = vpop.f32.mrf.mxu0
      %1935 = vmatprep.mubr.f32.mxu0 0.0
      %1936 = vmatmul.mubr.f32.gmra.mxu0 %v1674
      %v1937 = vpop.f32.mrf.mxu0
      %v1938 = vadd.f32 0.0, %v1937
      %v1939 = vpop.f32.mrf.mxu0
      %1940 = vmatprep.mubr.f32.mxu0 0.0
      %1941 = vmatmul.mubr.f32.gmra.mxu0 %v1675
      %v1942 = vpop.f32.mrf.mxu0
      %v1943 = vadd.f32 0.0, %v1942
      %v1944 = vpop.f32.mrf.mxu0
      %1945 = vmatprep.mubr.f32.mxu0 0.0
      %1946 = vmatmul.mubr.f32.gmra.mxu0 %v1676
      %v1947 = vpop.f32.mrf.mxu0
      %v1948 = vadd.f32 0.0, %v1947
      %v1949 = vpop.f32.mrf.mxu0
      %1950 = vdwg.mxu0
      %v1951 = vadd.f32 %v1677, %v1793
      %v1952 = vadd.f32 %v1678, %v1798
      %v1953 = vadd.f32 %v1679, %v1803
      %v1954 = vadd.f32 %v1680, %v1808
      %v1955 = vadd.f32 %v1681, %v1813
      %v1956 = vadd.f32 %v1682, %v1818
      %v1957 = vadd.f32 %v1683, %v1823
      %v1958 = vadd.f32 %v1684, %v1828
      %v1959 = vadd.f32 %v1685, %v1833
      %v1960 = vadd.f32 %v1686, %v1838
      %v1961 = vadd.f32 %v1687, %v1843
      %v1962 = vadd.f32 %v1688, %v1848
      %v1963 = vadd.f32 %v1689, %v1853
      %v1964 = vadd.f32 %v1690, %v1858
      %v1965 = vadd.f32 %v1691, %v1863
      %v1966 = vadd.f32 %v1692, %v1868
      %v1967 = vadd.f32 %v1693, %v1873
      %v1968 = vadd.f32 %v1694, %v1878
      %v1969 = vadd.f32 %v1695, %v1883
      %v1970 = vadd.f32 %v1696, %v1888
      %v1971 = vadd.f32 %v1697, %v1893
      %v1972 = vadd.f32 %v1698, %v1898
      %v1973 = vadd.f32 %v1699, %v1903
      %v1974 = vadd.f32 %v1700, %v1908
      %v1975 = vadd.f32 %v1701, %v1913
      %v1976 = vadd.f32 %v1702, %v1918
      %v1977 = vadd.f32 %v1703, %v1923
      %v1978 = vadd.f32 %v1704, %v1928
      %v1979 = vadd.f32 %v1705, %v1933
      %v1980 = vadd.f32 %v1706, %v1938
      %v1981 = vadd.f32 %v1707, %v1943
      %v1982 = vadd.f32 %v1708, %v1948
      %1983 = vst [vmem:[#allocation3] sm:$0xff] %v1951
      %1984 = vst [vmem:[#allocation3 + $0x8] sm:$0xff] %v1952
      %1985 = vst [vmem:[#allocation3 + $0x10] sm:$0xff] %v1953
      %1986 = vst [vmem:[#allocation3 + $0x18] sm:$0xff] %v1954
      %1987 = vst [vmem:[#allocation3 + $0x20] sm:$0xff] %v1955
      %1988 = vst [vmem:[#allocation3 + $0x28] sm:$0xff] %v1956
      %1989 = vst [vmem:[#allocation3 + $0x30] sm:$0xff] %v1957
      %1990 = vst [vmem:[#allocation3 + $0x38] sm:$0xff] %v1958
      %1991 = vst [vmem:[#allocation3 + $0x40] sm:$0xff] %v1959
      %1992 = vst [vmem:[#allocation3 + $0x48] sm:$0xff] %v1960
      %1993 = vst [vmem:[#allocation3 + $0x50] sm:$0xff] %v1961
      %1994 = vst [vmem:[#allocation3 + $0x58] sm:$0xff] %v1962
      %1995 = vst [vmem:[#allocation3 + $0x60] sm:$0xff] %v1963
      %1996 = vst [vmem:[#allocation3 + $0x68] sm:$0xff] %v1964
      %1997 = vst [vmem:[#allocation3 + $0x70] sm:$0xff] %v1965
      %1998 = vst [vmem:[#allocation3 + $0x78] sm:$0xff] %v1966
      %1999 = vst [vmem:[#allocation3 + $0x80] sm:$0xff] %v1967
      %2000 = vst [vmem:[#allocation3 + $0x88] sm:$0xff] %v1968
      %2001 = vst [vmem:[#allocation3 + $0x90] sm:$0xff] %v1969
      %2002 = vst [vmem:[#allocation3 + $0x98] sm:$0xff] %v1970
      %2003 = vst [vmem:[#allocation3 + $0xa0] sm:$0xff] %v1971
      %2004 = vst [vmem:[#allocation3 + $0xa8] sm:$0xff] %v1972
      %2005 = vst [vmem:[#allocation3 + $0xb0] sm:$0xff] %v1973
      %2006 = vst [vmem:[#allocation3 + $0xb8] sm:$0xff] %v1974
      %2007 = vst [vmem:[#allocation3 + $0xc0] sm:$0xff] %v1975
      %2008 = vst [vmem:[#allocation3 + $0xc8] sm:$0xff] %v1976
      %2009 = vst [vmem:[#allocation3 + $0xd0] sm:$0xff] %v1977
      %2010 = vst [vmem:[#allocation3 + $0xd8] sm:$0xff] %v1978
      %2011 = vst [vmem:[#allocation3 + $0xe0] sm:$0xff] %v1979
      %2012 = vst [vmem:[#allocation3 + $0xe8] sm:$0xff] %v1980
      %2013 = vst [vmem:[#allocation3 + $0xf0] sm:$0xff] %v1981
      %2014 = vst [vmem:[#allocation3 + $0xf8] sm:$0xff] %v1982
      %v2015 = vld [vmem:[%s471 + $0x1] sm:$0xff]
      %v2016 = vld [vmem:[%s471 + $0x9] sm:$0xff]
      %v2017 = vld [vmem:[%s471 + $0x19] sm:$0xff]
      %v2018 = vld [vmem:[%s471 + $0x21] sm:$0xff]
      %v2019 = vld [vmem:[%s471 + $0x31] sm:$0xff]
      %v2020 = vld [vmem:[%s471 + $0x39] sm:$0xff]
      %v2021 = vld [vmem:[%s471 + $0x49] sm:$0xff]
      %v2022 = vld [vmem:[%s471 + $0x51] sm:$0xff]
      %v2023 = vld [vmem:[%s471 + $0x61] sm:$0xff]
      %v2024 = vld [vmem:[%s471 + $0x69] sm:$0xff]
      %v2025 = vld [vmem:[%s471 + $0x79] sm:$0xff]
      %v2026 = vld [vmem:[%s471 + $0x81] sm:$0xff]
      %v2027 = vld [vmem:[%s471 + $0x91] sm:$0xff]
      %v2028 = vld [vmem:[%s471 + $0x99] sm:$0xff]
      %v2029 = vld [vmem:[%s471 + $0xa9] sm:$0xff]
      %v2030 = vld [vmem:[%s471 + $0xb1] sm:$0xff]
      %v2031 = vld [vmem:[%s471 + $0xc1] sm:$0xff]
      %v2032 = vld [vmem:[%s471 + $0xc9] sm:$0xff]
      %v2033 = vld [vmem:[%s471 + $0xd9] sm:$0xff]
      %v2034 = vld [vmem:[%s471 + $0xe1] sm:$0xff]
      %v2035 = vld [vmem:[%s471 + $0xf1] sm:$0xff]
      %v2036 = vld [vmem:[%s471 + $0xf9] sm:$0xff]
      %v2037 = vld [vmem:[%s471 + $0x109] sm:$0xff]
      %v2038 = vld [vmem:[%s471 + $0x111] sm:$0xff]
      %v2039 = vld [vmem:[%s471 + $0x121] sm:$0xff]
      %v2040 = vld [vmem:[%s471 + $0x129] sm:$0xff]
      %v2041 = vld [vmem:[%s471 + $0x139] sm:$0xff]
      %v2042 = vld [vmem:[%s471 + $0x141] sm:$0xff]
      %v2043 = vld [vmem:[%s471 + $0x151] sm:$0xff]
      %v2044 = vld [vmem:[%s471 + $0x159] sm:$0xff]
      %v2045 = vld [vmem:[%s471 + $0x169] sm:$0xff]
      %v2046 = vld [vmem:[%s471 + $0x171] sm:$0xff]
      %v2047 = vld [vmem:[#allocation3] sm:$0xff]
      %v2048 = vld [vmem:[#allocation3 + $0x8] sm:$0xff]
      %v2049 = vld [vmem:[#allocation3 + $0x10] sm:$0xff]
      %v2050 = vld [vmem:[#allocation3 + $0x18] sm:$0xff]
      %v2051 = vld [vmem:[#allocation3 + $0x20] sm:$0xff]
      %v2052 = vld [vmem:[#allocation3 + $0x28] sm:$0xff]
      %v2053 = vld [vmem:[#allocation3 + $0x30] sm:$0xff]
      %v2054 = vld [vmem:[#allocation3 + $0x38] sm:$0xff]
      %v2055 = vld [vmem:[#allocation3 + $0x40] sm:$0xff]
      %v2056 = vld [vmem:[#allocation3 + $0x48] sm:$0xff]
      %v2057 = vld [vmem:[#allocation3 + $0x50] sm:$0xff]
      %v2058 = vld [vmem:[#allocation3 + $0x58] sm:$0xff]
      %v2059 = vld [vmem:[#allocation3 + $0x60] sm:$0xff]
      %v2060 = vld [vmem:[#allocation3 + $0x68] sm:$0xff]
      %v2061 = vld [vmem:[#allocation3 + $0x70] sm:$0xff]
      %v2062 = vld [vmem:[#allocation3 + $0x78] sm:$0xff]
      %v2063 = vld [vmem:[#allocation3 + $0x80] sm:$0xff]
      %v2064 = vld [vmem:[#allocation3 + $0x88] sm:$0xff]
      %v2065 = vld [vmem:[#allocation3 + $0x90] sm:$0xff]
      %v2066 = vld [vmem:[#allocation3 + $0x98] sm:$0xff]
      %v2067 = vld [vmem:[#allocation3 + $0xa0] sm:$0xff]
      %v2068 = vld [vmem:[#allocation3 + $0xa8] sm:$0xff]
      %v2069 = vld [vmem:[#allocation3 + $0xb0] sm:$0xff]
      %v2070 = vld [vmem:[#allocation3 + $0xb8] sm:$0xff]
      %v2071 = vld [vmem:[#allocation3 + $0xc0] sm:$0xff]
      %v2072 = vld [vmem:[#allocation3 + $0xc8] sm:$0xff]
      %v2073 = vld [vmem:[#allocation3 + $0xd0] sm:$0xff]
      %v2074 = vld [vmem:[#allocation3 + $0xd8] sm:$0xff]
      %v2075 = vld [vmem:[#allocation3 + $0xe0] sm:$0xff]
      %v2076 = vld [vmem:[#allocation3 + $0xe8] sm:$0xff]
      %v2077 = vld [vmem:[#allocation3 + $0xf0] sm:$0xff]
      %v2078 = vld [vmem:[#allocation3 + $0xf8] sm:$0xff]
      %s2079 = scalar_lea.vmem %s4, 512
      %v2080 = vld [vmem:[%s2079] sm:$0xff]
      %v2081 = vld [vmem:[%s2079 + $0x8] sm:$0xff]
      %v2082 = vld [vmem:[%s2079 + $0x10] sm:$0xff]
      %v2083 = vld [vmem:[%s2079 + $0x18] sm:$0xff]
      %v2084 = vld [vmem:[%s2079 + $0x20] sm:$0xff]
      %v2085 = vld [vmem:[%s2079 + $0x28] sm:$0xff]
      %v2086 = vld [vmem:[%s2079 + $0x30] sm:$0xff]
      %v2087 = vld [vmem:[%s2079 + $0x38] sm:$0xff]
      %v2088 = vld [vmem:[%s2079 + $0x40] sm:$0xff]
      %v2089 = vld [vmem:[%s2079 + $0x48] sm:$0xff]
      %v2090 = vld [vmem:[%s2079 + $0x50] sm:$0xff]
      %v2091 = vld [vmem:[%s2079 + $0x58] sm:$0xff]
      %v2092 = vld [vmem:[%s2079 + $0x60] sm:$0xff]
      %v2093 = vld [vmem:[%s2079 + $0x68] sm:$0xff]
      %v2094 = vld [vmem:[%s2079 + $0x70] sm:$0xff]
      %v2095 = vld [vmem:[%s2079 + $0x78] sm:$0xff]
      %2096 = vmatprep.subr.mxu0 0.0
      %2097 = vmatpush1.msra.mxu0 %v2095
      %2098 = vmatprep.subr.mxu0 0.0
      %2099 = vmatpush1.msra.mxu0 %v2094
      %2100 = vmatprep.subr.mxu0 0.0
      %2101 = vmatpush1.msra.mxu0 %v2093
      %2102 = vmatprep.subr.mxu0 0.0
      %2103 = vmatpush1.msra.mxu0 %v2092
      %2104 = vmatprep.subr.mxu0 0.0
      %2105 = vmatpush1.msra.mxu0 %v2091
      %2106 = vmatprep.subr.mxu0 0.0
      %2107 = vmatpush1.msra.mxu0 %v2090
      %2108 = vmatprep.subr.mxu0 0.0
      %2109 = vmatpush1.msra.mxu0 %v2089
      %2110 = vmatprep.subr.mxu0 0.0
      %2111 = vmatpush1.msra.mxu0 %v2088
      %2112 = vmatprep.subr.mxu0 0.0
      %2113 = vmatpush1.msra.mxu0 %v2087
      %2114 = vmatprep.subr.mxu0 0.0
      %2115 = vmatpush1.msra.mxu0 %v2086
      %2116 = vmatprep.subr.mxu0 0.0
      %2117 = vmatpush1.msra.mxu0 %v2085
      %2118 = vmatprep.subr.mxu0 0.0
      %2119 = vmatpush1.msra.mxu0 %v2084
      %2120 = vmatprep.subr.mxu0 0.0
      %2121 = vmatpush1.msra.mxu0 %v2083
      %2122 = vmatprep.subr.mxu0 0.0
      %2123 = vmatpush1.msra.mxu0 %v2082
      %2124 = vmatprep.subr.mxu0 0.0
      %2125 = vmatpush1.msra.mxu0 %v2081
      %2126 = vmatprep.subr.mxu0 0.0
      %2127 = vmatpush1.msra.mxu0 %v2080
      %2128 = vmatprep.subr.mxu0 0.0
      %2129 = vmatpush2.msra.mxu0 0.0
      %2130 = vmatprep.subr.mxu0 0.0
      %2131 = vmatpush2.msra.mxu0 0.0
      %2132 = vmatprep.subr.mxu0 0.0
      %2133 = vmatpush2.msra.mxu0 0.0
      %2134 = vmatprep.subr.mxu0 0.0
      %2135 = vmatpush2.msra.mxu0 0.0
      %2136 = vmatprep.subr.mxu0 0.0
      %2137 = vmatpush2.msra.mxu0 0.0
      %2138 = vmatprep.subr.mxu0 0.0
      %2139 = vmatpush2.msra.mxu0 0.0
      %2140 = vmatprep.subr.mxu0 0.0
      %2141 = vmatpush2.msra.mxu0 0.0
      %2142 = vmatprep.subr.mxu0 0.0
      %2143 = vmatpush2.msra.mxu0 0.0
      %2144 = vmatprep.subr.mxu0 0.0
      %2145 = vmatpush2.msra.mxu0 0.0
      %2146 = vmatprep.subr.mxu0 0.0
      %2147 = vmatpush2.msra.mxu0 0.0
      %2148 = vmatprep.subr.mxu0 0.0
      %2149 = vmatpush2.msra.mxu0 0.0
      %2150 = vmatprep.subr.mxu0 0.0
      %2151 = vmatpush2.msra.mxu0 0.0
      %2152 = vmatprep.subr.mxu0 0.0
      %2153 = vmatpush2.msra.mxu0 0.0
      %2154 = vmatprep.subr.mxu0 0.0
      %2155 = vmatpush2.msra.mxu0 0.0
      %2156 = vmatprep.subr.mxu0 0.0
      %2157 = vmatpush2.msra.mxu0 0.0
      %2158 = vmatprep.subr.mxu0 0.0
      %2159 = vmatpush2.msra.mxu0 0.0
      %2160 = vmatprep.mubr.f32.mxu0 0.0
      %2161 = vmatmul.mubr.f32.gmra.mxu0 %v2015
      %v2162 = vpop.f32.mrf.mxu0
      %v2163 = vadd.f32 0.0, %v2162
      %v2164 = vpop.f32.mrf.mxu0
      %2165 = vmatprep.mubr.f32.mxu0 0.0
      %2166 = vmatmul.mubr.f32.gmra.mxu0 %v2016
      %v2167 = vpop.f32.mrf.mxu0
      %v2168 = vadd.f32 0.0, %v2167
      %v2169 = vpop.f32.mrf.mxu0
      %2170 = vmatprep.mubr.f32.mxu0 0.0
      %2171 = vmatmul.mubr.f32.gmra.mxu0 %v2017
      %v2172 = vpop.f32.mrf.mxu0
      %v2173 = vadd.f32 0.0, %v2172
      %v2174 = vpop.f32.mrf.mxu0
      %2175 = vmatprep.mubr.f32.mxu0 0.0
      %2176 = vmatmul.mubr.f32.gmra.mxu0 %v2018
      %v2177 = vpop.f32.mrf.mxu0
      %v2178 = vadd.f32 0.0, %v2177
      %v2179 = vpop.f32.mrf.mxu0
      %2180 = vmatprep.mubr.f32.mxu0 0.0
      %2181 = vmatmul.mubr.f32.gmra.mxu0 %v2019
      %v2182 = vpop.f32.mrf.mxu0
      %v2183 = vadd.f32 0.0, %v2182
      %v2184 = vpop.f32.mrf.mxu0
      %2185 = vmatprep.mubr.f32.mxu0 0.0
      %2186 = vmatmul.mubr.f32.gmra.mxu0 %v2020
      %v2187 = vpop.f32.mrf.mxu0
      %v2188 = vadd.f32 0.0, %v2187
      %v2189 = vpop.f32.mrf.mxu0
      %2190 = vmatprep.mubr.f32.mxu0 0.0
      %2191 = vmatmul.mubr.f32.gmra.mxu0 %v2021
      %v2192 = vpop.f32.mrf.mxu0
      %v2193 = vadd.f32 0.0, %v2192
      %v2194 = vpop.f32.mrf.mxu0
      %2195 = vmatprep.mubr.f32.mxu0 0.0
      %2196 = vmatmul.mubr.f32.gmra.mxu0 %v2022
      %v2197 = vpop.f32.mrf.mxu0
      %v2198 = vadd.f32 0.0, %v2197
      %v2199 = vpop.f32.mrf.mxu0
      %2200 = vmatprep.mubr.f32.mxu0 0.0
      %2201 = vmatmul.mubr.f32.gmra.mxu0 %v2023
      %v2202 = vpop.f32.mrf.mxu0
      %v2203 = vadd.f32 0.0, %v2202
      %v2204 = vpop.f32.mrf.mxu0
      %2205 = vmatprep.mubr.f32.mxu0 0.0
      %2206 = vmatmul.mubr.f32.gmra.mxu0 %v2024
      %v2207 = vpop.f32.mrf.mxu0
      %v2208 = vadd.f32 0.0, %v2207
      %v2209 = vpop.f32.mrf.mxu0
      %2210 = vmatprep.mubr.f32.mxu0 0.0
      %2211 = vmatmul.mubr.f32.gmra.mxu0 %v2025
      %v2212 = vpop.f32.mrf.mxu0
      %v2213 = vadd.f32 0.0, %v2212
      %v2214 = vpop.f32.mrf.mxu0
      %2215 = vmatprep.mubr.f32.mxu0 0.0
      %2216 = vmatmul.mubr.f32.gmra.mxu0 %v2026
      %v2217 = vpop.f32.mrf.mxu0
      %v2218 = vadd.f32 0.0, %v2217
      %v2219 = vpop.f32.mrf.mxu0
      %2220 = vmatprep.mubr.f32.mxu0 0.0
      %2221 = vmatmul.mubr.f32.gmra.mxu0 %v2027
      %v2222 = vpop.f32.mrf.mxu0
      %v2223 = vadd.f32 0.0, %v2222
      %v2224 = vpop.f32.mrf.mxu0
      %2225 = vmatprep.mubr.f32.mxu0 0.0
      %2226 = vmatmul.mubr.f32.gmra.mxu0 %v2028
      %v2227 = vpop.f32.mrf.mxu0
      %v2228 = vadd.f32 0.0, %v2227
      %v2229 = vpop.f32.mrf.mxu0
      %2230 = vmatprep.mubr.f32.mxu0 0.0
      %2231 = vmatmul.mubr.f32.gmra.mxu0 %v2029
      %v2232 = vpop.f32.mrf.mxu0
      %v2233 = vadd.f32 0.0, %v2232
      %v2234 = vpop.f32.mrf.mxu0
      %2235 = vmatprep.mubr.f32.mxu0 0.0
      %2236 = vmatmul.mubr.f32.gmra.mxu0 %v2030
      %v2237 = vpop.f32.mrf.mxu0
      %v2238 = vadd.f32 0.0, %v2237
      %v2239 = vpop.f32.mrf.mxu0
      %2240 = vmatprep.mubr.f32.mxu0 0.0
      %2241 = vmatmul.mubr.f32.gmra.mxu0 %v2031
      %v2242 = vpop.f32.mrf.mxu0
      %v2243 = vadd.f32 0.0, %v2242
      %v2244 = vpop.f32.mrf.mxu0
      %2245 = vmatprep.mubr.f32.mxu0 0.0
      %2246 = vmatmul.mubr.f32.gmra.mxu0 %v2032
      %v2247 = vpop.f32.mrf.mxu0
      %v2248 = vadd.f32 0.0, %v2247
      %v2249 = vpop.f32.mrf.mxu0
      %2250 = vmatprep.mubr.f32.mxu0 0.0
      %2251 = vmatmul.mubr.f32.gmra.mxu0 %v2033
      %v2252 = vpop.f32.mrf.mxu0
      %v2253 = vadd.f32 0.0, %v2252
      %v2254 = vpop.f32.mrf.mxu0
      %2255 = vmatprep.mubr.f32.mxu0 0.0
      %2256 = vmatmul.mubr.f32.gmra.mxu0 %v2034
      %v2257 = vpop.f32.mrf.mxu0
      %v2258 = vadd.f32 0.0, %v2257
      %v2259 = vpop.f32.mrf.mxu0
      %2260 = vmatprep.mubr.f32.mxu0 0.0
      %2261 = vmatmul.mubr.f32.gmra.mxu0 %v2035
      %v2262 = vpop.f32.mrf.mxu0
      %v2263 = vadd.f32 0.0, %v2262
      %v2264 = vpop.f32.mrf.mxu0
      %2265 = vmatprep.mubr.f32.mxu0 0.0
      %2266 = vmatmul.mubr.f32.gmra.mxu0 %v2036
      %v2267 = vpop.f32.mrf.mxu0
      %v2268 = vadd.f32 0.0, %v2267
      %v2269 = vpop.f32.mrf.mxu0
      %2270 = vmatprep.mubr.f32.mxu0 0.0
      %2271 = vmatmul.mubr.f32.gmra.mxu0 %v2037
      %v2272 = vpop.f32.mrf.mxu0
      %v2273 = vadd.f32 0.0, %v2272
      %v2274 = vpop.f32.mrf.mxu0
      %2275 = vmatprep.mubr.f32.mxu0 0.0
      %2276 = vmatmul.mubr.f32.gmra.mxu0 %v2038
      %v2277 = vpop.f32.mrf.mxu0
      %v2278 = vadd.f32 0.0, %v2277
      %v2279 = vpop.f32.mrf.mxu0
      %2280 = vmatprep.mubr.f32.mxu0 0.0
      %2281 = vmatmul.mubr.f32.gmra.mxu0 %v2039
      %v2282 = vpop.f32.mrf.mxu0
      %v2283 = vadd.f32 0.0, %v2282
      %v2284 = vpop.f32.mrf.mxu0
      %2285 = vmatprep.mubr.f32.mxu0 0.0
      %2286 = vmatmul.mubr.f32.gmra.mxu0 %v2040
      %v2287 = vpop.f32.mrf.mxu0
      %v2288 = vadd.f32 0.0, %v2287
      %v2289 = vpop.f32.mrf.mxu0
      %2290 = vmatprep.mubr.f32.mxu0 0.0
      %2291 = vmatmul.mubr.f32.gmra.mxu0 %v2041
      %v2292 = vpop.f32.mrf.mxu0
      %v2293 = vadd.f32 0.0, %v2292
      %v2294 = vpop.f32.mrf.mxu0
      %2295 = vmatprep.mubr.f32.mxu0 0.0
      %2296 = vmatmul.mubr.f32.gmra.mxu0 %v2042
      %v2297 = vpop.f32.mrf.mxu0
      %v2298 = vadd.f32 0.0, %v2297
      %v2299 = vpop.f32.mrf.mxu0
      %2300 = vmatprep.mubr.f32.mxu0 0.0
      %2301 = vmatmul.mubr.f32.gmra.mxu0 %v2043
      %v2302 = vpop.f32.mrf.mxu0
      %v2303 = vadd.f32 0.0, %v2302
      %v2304 = vpop.f32.mrf.mxu0
      %2305 = vmatprep.mubr.f32.mxu0 0.0
      %2306 = vmatmul.mubr.f32.gmra.mxu0 %v2044
      %v2307 = vpop.f32.mrf.mxu0
      %v2308 = vadd.f32 0.0, %v2307
      %v2309 = vpop.f32.mrf.mxu0
      %2310 = vmatprep.mubr.f32.mxu0 0.0
      %2311 = vmatmul.mubr.f32.gmra.mxu0 %v2045
      %v2312 = vpop.f32.mrf.mxu0
      %v2313 = vadd.f32 0.0, %v2312
      %v2314 = vpop.f32.mrf.mxu0
      %2315 = vmatprep.mubr.f32.mxu0 0.0
      %2316 = vmatmul.mubr.f32.gmra.mxu0 %v2046
      %v2317 = vpop.f32.mrf.mxu0
      %v2318 = vadd.f32 0.0, %v2317
      %v2319 = vpop.f32.mrf.mxu0
      %2320 = vdwg.mxu0
      %v2321 = vadd.f32 %v2047, %v2163
      %v2322 = vadd.f32 %v2048, %v2168
      %v2323 = vadd.f32 %v2049, %v2173
      %v2324 = vadd.f32 %v2050, %v2178
      %v2325 = vadd.f32 %v2051, %v2183
      %v2326 = vadd.f32 %v2052, %v2188
      %v2327 = vadd.f32 %v2053, %v2193
      %v2328 = vadd.f32 %v2054, %v2198
      %v2329 = vadd.f32 %v2055, %v2203
      %v2330 = vadd.f32 %v2056, %v2208
      %v2331 = vadd.f32 %v2057, %v2213
      %v2332 = vadd.f32 %v2058, %v2218
      %v2333 = vadd.f32 %v2059, %v2223
      %v2334 = vadd.f32 %v2060, %v2228
      %v2335 = vadd.f32 %v2061, %v2233
      %v2336 = vadd.f32 %v2062, %v2238
      %v2337 = vadd.f32 %v2063, %v2243
      %v2338 = vadd.f32 %v2064, %v2248
      %v2339 = vadd.f32 %v2065, %v2253
      %v2340 = vadd.f32 %v2066, %v2258
      %v2341 = vadd.f32 %v2067, %v2263
      %v2342 = vadd.f32 %v2068, %v2268
      %v2343 = vadd.f32 %v2069, %v2273
      %v2344 = vadd.f32 %v2070, %v2278
      %v2345 = vadd.f32 %v2071, %v2283
      %v2346 = vadd.f32 %v2072, %v2288
      %v2347 = vadd.f32 %v2073, %v2293
      %v2348 = vadd.f32 %v2074, %v2298
      %v2349 = vadd.f32 %v2075, %v2303
      %v2350 = vadd.f32 %v2076, %v2308
      %v2351 = vadd.f32 %v2077, %v2313
      %v2352 = vadd.f32 %v2078, %v2318
      %2353 = vst [vmem:[#allocation3] sm:$0xff] %v2321
      %2354 = vst [vmem:[#allocation3 + $0x8] sm:$0xff] %v2322
      %2355 = vst [vmem:[#allocation3 + $0x10] sm:$0xff] %v2323
      %2356 = vst [vmem:[#allocation3 + $0x18] sm:$0xff] %v2324
      %2357 = vst [vmem:[#allocation3 + $0x20] sm:$0xff] %v2325
      %2358 = vst [vmem:[#allocation3 + $0x28] sm:$0xff] %v2326
      %2359 = vst [vmem:[#allocation3 + $0x30] sm:$0xff] %v2327
      %2360 = vst [vmem:[#allocation3 + $0x38] sm:$0xff] %v2328
      %2361 = vst [vmem:[#allocation3 + $0x40] sm:$0xff] %v2329
      %2362 = vst [vmem:[#allocation3 + $0x48] sm:$0xff] %v2330
      %2363 = vst [vmem:[#allocation3 + $0x50] sm:$0xff] %v2331
      %2364 = vst [vmem:[#allocation3 + $0x58] sm:$0xff] %v2332
      %2365 = vst [vmem:[#allocation3 + $0x60] sm:$0xff] %v2333
      %2366 = vst [vmem:[#allocation3 + $0x68] sm:$0xff] %v2334
      %2367 = vst [vmem:[#allocation3 + $0x70] sm:$0xff] %v2335
      %2368 = vst [vmem:[#allocation3 + $0x78] sm:$0xff] %v2336
      %2369 = vst [vmem:[#allocation3 + $0x80] sm:$0xff] %v2337
      %2370 = vst [vmem:[#allocation3 + $0x88] sm:$0xff] %v2338
      %2371 = vst [vmem:[#allocation3 + $0x90] sm:$0xff] %v2339
      %2372 = vst [vmem:[#allocation3 + $0x98] sm:$0xff] %v2340
      %2373 = vst [vmem:[#allocation3 + $0xa0] sm:$0xff] %v2341
      %2374 = vst [vmem:[#allocation3 + $0xa8] sm:$0xff] %v2342
      %2375 = vst [vmem:[#allocation3 + $0xb0] sm:$0xff] %v2343
      %2376 = vst [vmem:[#allocation3 + $0xb8] sm:$0xff] %v2344
      %2377 = vst [vmem:[#allocation3 + $0xc0] sm:$0xff] %v2345
      %2378 = vst [vmem:[#allocation3 + $0xc8] sm:$0xff] %v2346
      %2379 = vst [vmem:[#allocation3 + $0xd0] sm:$0xff] %v2347
      %2380 = vst [vmem:[#allocation3 + $0xd8] sm:$0xff] %v2348
      %2381 = vst [vmem:[#allocation3 + $0xe0] sm:$0xff] %v2349
      %2382 = vst [vmem:[#allocation3 + $0xe8] sm:$0xff] %v2350
      %2383 = vst [vmem:[#allocation3 + $0xf0] sm:$0xff] %v2351
      %2384 = vst [vmem:[#allocation3 + $0xf8] sm:$0xff] %v2352
      %v2385 = vld [vmem:[%s471 + $0x2] sm:$0xff]
      %v2386 = vld [vmem:[%s471 + $0xa] sm:$0xff]
      %v2387 = vld [vmem:[%s471 + $0x1a] sm:$0xff]
      %v2388 = vld [vmem:[%s471 + $0x22] sm:$0xff]
      %v2389 = vld [vmem:[%s471 + $0x32] sm:$0xff]
      %v2390 = vld [vmem:[%s471 + $0x3a] sm:$0xff]
      %v2391 = vld [vmem:[%s471 + $0x4a] sm:$0xff]
      %v2392 = vld [vmem:[%s471 + $0x52] sm:$0xff]
      %v2393 = vld [vmem:[%s471 + $0x62] sm:$0xff]
      %v2394 = vld [vmem:[%s471 + $0x6a] sm:$0xff]
      %v2395 = vld [vmem:[%s471 + $0x7a] sm:$0xff]
      %v2396 = vld [vmem:[%s471 + $0x82] sm:$0xff]
      %v2397 = vld [vmem:[%s471 + $0x92] sm:$0xff]
      %v2398 = vld [vmem:[%s471 + $0x9a] sm:$0xff]
      %v2399 = vld [vmem:[%s471 + $0xaa] sm:$0xff]
      %v2400 = vld [vmem:[%s471 + $0xb2] sm:$0xff]
      %v2401 = vld [vmem:[%s471 + $0xc2] sm:$0xff]
      %v2402 = vld [vmem:[%s471 + $0xca] sm:$0xff]
      %v2403 = vld [vmem:[%s471 + $0xda] sm:$0xff]
      %v2404 = vld [vmem:[%s471 + $0xe2] sm:$0xff]
      %v2405 = vld [vmem:[%s471 + $0xf2] sm:$0xff]
      %v2406 = vld [vmem:[%s471 + $0xfa] sm:$0xff]
      %v2407 = vld [vmem:[%s471 + $0x10a] sm:$0xff]
      %v2408 = vld [vmem:[%s471 + $0x112] sm:$0xff]
      %v2409 = vld [vmem:[%s471 + $0x122] sm:$0xff]
      %v2410 = vld [vmem:[%s471 + $0x12a] sm:$0xff]
      %v2411 = vld [vmem:[%s471 + $0x13a] sm:$0xff]
      %v2412 = vld [vmem:[%s471 + $0x142] sm:$0xff]
      %v2413 = vld [vmem:[%s471 + $0x152] sm:$0xff]
      %v2414 = vld [vmem:[%s471 + $0x15a] sm:$0xff]
      %v2415 = vld [vmem:[%s471 + $0x16a] sm:$0xff]
      %v2416 = vld [vmem:[%s471 + $0x172] sm:$0xff]
      %v2417 = vld [vmem:[#allocation3] sm:$0xff]
      %v2418 = vld [vmem:[#allocation3 + $0x8] sm:$0xff]
      %v2419 = vld [vmem:[#allocation3 + $0x10] sm:$0xff]
      %v2420 = vld [vmem:[#allocation3 + $0x18] sm:$0xff]
      %v2421 = vld [vmem:[#allocation3 + $0x20] sm:$0xff]
      %v2422 = vld [vmem:[#allocation3 + $0x28] sm:$0xff]
      %v2423 = vld [vmem:[#allocation3 + $0x30] sm:$0xff]
      %v2424 = vld [vmem:[#allocation3 + $0x38] sm:$0xff]
      %v2425 = vld [vmem:[#allocation3 + $0x40] sm:$0xff]
      %v2426 = vld [vmem:[#allocation3 + $0x48] sm:$0xff]
      %v2427 = vld [vmem:[#allocation3 + $0x50] sm:$0xff]
      %v2428 = vld [vmem:[#allocation3 + $0x58] sm:$0xff]
      %v2429 = vld [vmem:[#allocation3 + $0x60] sm:$0xff]
      %v2430 = vld [vmem:[#allocation3 + $0x68] sm:$0xff]
      %v2431 = vld [vmem:[#allocation3 + $0x70] sm:$0xff]
      %v2432 = vld [vmem:[#allocation3 + $0x78] sm:$0xff]
      %v2433 = vld [vmem:[#allocation3 + $0x80] sm:$0xff]
      %v2434 = vld [vmem:[#allocation3 + $0x88] sm:$0xff]
      %v2435 = vld [vmem:[#allocation3 + $0x90] sm:$0xff]
      %v2436 = vld [vmem:[#allocation3 + $0x98] sm:$0xff]
      %v2437 = vld [vmem:[#allocation3 + $0xa0] sm:$0xff]
      %v2438 = vld [vmem:[#allocation3 + $0xa8] sm:$0xff]
      %v2439 = vld [vmem:[#allocation3 + $0xb0] sm:$0xff]
      %v2440 = vld [vmem:[#allocation3 + $0xb8] sm:$0xff]
      %v2441 = vld [vmem:[#allocation3 + $0xc0] sm:$0xff]
      %v2442 = vld [vmem:[#allocation3 + $0xc8] sm:$0xff]
      %v2443 = vld [vmem:[#allocation3 + $0xd0] sm:$0xff]
      %v2444 = vld [vmem:[#allocation3 + $0xd8] sm:$0xff]
      %v2445 = vld [vmem:[#allocation3 + $0xe0] sm:$0xff]
      %v2446 = vld [vmem:[#allocation3 + $0xe8] sm:$0xff]
      %v2447 = vld [vmem:[#allocation3 + $0xf0] sm:$0xff]
      %v2448 = vld [vmem:[#allocation3 + $0xf8] sm:$0xff]
      %s2449 = scalar_lea.vmem %s4, 640
      %v2450 = vld [vmem:[%s2449] sm:$0xff]
      %v2451 = vld [vmem:[%s2449 + $0x8] sm:$0xff]
      %v2452 = vld [vmem:[%s2449 + $0x10] sm:$0xff]
      %v2453 = vld [vmem:[%s2449 + $0x18] sm:$0xff]
      %v2454 = vld [vmem:[%s2449 + $0x20] sm:$0xff]
      %v2455 = vld [vmem:[%s2449 + $0x28] sm:$0xff]
      %v2456 = vld [vmem:[%s2449 + $0x30] sm:$0xff]
      %v2457 = vld [vmem:[%s2449 + $0x38] sm:$0xff]
      %v2458 = vld [vmem:[%s2449 + $0x40] sm:$0xff]
      %v2459 = vld [vmem:[%s2449 + $0x48] sm:$0xff]
      %v2460 = vld [vmem:[%s2449 + $0x50] sm:$0xff]
      %v2461 = vld [vmem:[%s2449 + $0x58] sm:$0xff]
      %v2462 = vld [vmem:[%s2449 + $0x60] sm:$0xff]
      %v2463 = vld [vmem:[%s2449 + $0x68] sm:$0xff]
      %v2464 = vld [vmem:[%s2449 + $0x70] sm:$0xff]
      %v2465 = vld [vmem:[%s2449 + $0x78] sm:$0xff]
      %2466 = vmatprep.subr.mxu0 0.0
      %2467 = vmatpush1.msra.mxu0 %v2465
      %2468 = vmatprep.subr.mxu0 0.0
      %2469 = vmatpush1.msra.mxu0 %v2464
      %2470 = vmatprep.subr.mxu0 0.0
      %2471 = vmatpush1.msra.mxu0 %v2463
      %2472 = vmatprep.subr.mxu0 0.0
      %2473 = vmatpush1.msra.mxu0 %v2462
      %2474 = vmatprep.subr.mxu0 0.0
      %2475 = vmatpush1.msra.mxu0 %v2461
      %2476 = vmatprep.subr.mxu0 0.0
      %2477 = vmatpush1.msra.mxu0 %v2460
      %2478 = vmatprep.subr.mxu0 0.0
      %2479 = vmatpush1.msra.mxu0 %v2459
      %2480 = vmatprep.subr.mxu0 0.0
      %2481 = vmatpush1.msra.mxu0 %v2458
      %2482 = vmatprep.subr.mxu0 0.0
      %2483 = vmatpush1.msra.mxu0 %v2457
      %2484 = vmatprep.subr.mxu0 0.0
      %2485 = vmatpush1.msra.mxu0 %v2456
      %2486 = vmatprep.subr.mxu0 0.0
      %2487 = vmatpush1.msra.mxu0 %v2455
      %2488 = vmatprep.subr.mxu0 0.0
      %2489 = vmatpush1.msra.mxu0 %v2454
      %2490 = vmatprep.subr.mxu0 0.0
      %2491 = vmatpush1.msra.mxu0 %v2453
      %2492 = vmatprep.subr.mxu0 0.0
      %2493 = vmatpush1.msra.mxu0 %v2452
      %2494 = vmatprep.subr.mxu0 0.0
      %2495 = vmatpush1.msra.mxu0 %v2451
      %2496 = vmatprep.subr.mxu0 0.0
      %2497 = vmatpush1.msra.mxu0 %v2450
      %2498 = vmatprep.subr.mxu0 0.0
      %2499 = vmatpush2.msra.mxu0 0.0
      %2500 = vmatprep.subr.mxu0 0.0
      %2501 = vmatpush2.msra.mxu0 0.0
      %2502 = vmatprep.subr.mxu0 0.0
      %2503 = vmatpush2.msra.mxu0 0.0
      %2504 = vmatprep.subr.mxu0 0.0
      %2505 = vmatpush2.msra.mxu0 0.0
      %2506 = vmatprep.subr.mxu0 0.0
      %2507 = vmatpush2.msra.mxu0 0.0
      %2508 = vmatprep.subr.mxu0 0.0
      %2509 = vmatpush2.msra.mxu0 0.0
      %2510 = vmatprep.subr.mxu0 0.0
      %2511 = vmatpush2.msra.mxu0 0.0
      %2512 = vmatprep.subr.mxu0 0.0
      %2513 = vmatpush2.msra.mxu0 0.0
      %2514 = vmatprep.subr.mxu0 0.0
      %2515 = vmatpush2.msra.mxu0 0.0
      %2516 = vmatprep.subr.mxu0 0.0
      %2517 = vmatpush2.msra.mxu0 0.0
      %2518 = vmatprep.subr.mxu0 0.0
      %2519 = vmatpush2.msra.mxu0 0.0
      %2520 = vmatprep.subr.mxu0 0.0
      %2521 = vmatpush2.msra.mxu0 0.0
      %2522 = vmatprep.subr.mxu0 0.0
      %2523 = vmatpush2.msra.mxu0 0.0
      %2524 = vmatprep.subr.mxu0 0.0
      %2525 = vmatpush2.msra.mxu0 0.0
      %2526 = vmatprep.subr.mxu0 0.0
      %2527 = vmatpush2.msra.mxu0 0.0
      %2528 = vmatprep.subr.mxu0 0.0
      %2529 = vmatpush2.msra.mxu0 0.0
      %2530 = vmatprep.mubr.f32.mxu0 0.0
      %2531 = vmatmul.mubr.f32.gmra.mxu0 %v2385
      %v2532 = vpop.f32.mrf.mxu0
      %v2533 = vadd.f32 0.0, %v2532
      %v2534 = vpop.f32.mrf.mxu0
      %2535 = vmatprep.mubr.f32.mxu0 0.0
      %2536 = vmatmul.mubr.f32.gmra.mxu0 %v2386
      %v2537 = vpop.f32.mrf.mxu0
      %v2538 = vadd.f32 0.0, %v2537
      %v2539 = vpop.f32.mrf.mxu0
      %2540 = vmatprep.mubr.f32.mxu0 0.0
      %2541 = vmatmul.mubr.f32.gmra.mxu0 %v2387
      %v2542 = vpop.f32.mrf.mxu0
      %v2543 = vadd.f32 0.0, %v2542
      %v2544 = vpop.f32.mrf.mxu0
      %2545 = vmatprep.mubr.f32.mxu0 0.0
      %2546 = vmatmul.mubr.f32.gmra.mxu0 %v2388
      %v2547 = vpop.f32.mrf.mxu0
      %v2548 = vadd.f32 0.0, %v2547
      %v2549 = vpop.f32.mrf.mxu0
      %2550 = vmatprep.mubr.f32.mxu0 0.0
      %2551 = vmatmul.mubr.f32.gmra.mxu0 %v2389
      %v2552 = vpop.f32.mrf.mxu0
      %v2553 = vadd.f32 0.0, %v2552
      %v2554 = vpop.f32.mrf.mxu0
      %2555 = vmatprep.mubr.f32.mxu0 0.0
      %2556 = vmatmul.mubr.f32.gmra.mxu0 %v2390
      %v2557 = vpop.f32.mrf.mxu0
      %v2558 = vadd.f32 0.0, %v2557
      %v2559 = vpop.f32.mrf.mxu0
      %2560 = vmatprep.mubr.f32.mxu0 0.0
      %2561 = vmatmul.mubr.f32.gmra.mxu0 %v2391
      %v2562 = vpop.f32.mrf.mxu0
      %v2563 = vadd.f32 0.0, %v2562
      %v2564 = vpop.f32.mrf.mxu0
      %2565 = vmatprep.mubr.f32.mxu0 0.0
      %2566 = vmatmul.mubr.f32.gmra.mxu0 %v2392
      %v2567 = vpop.f32.mrf.mxu0
      %v2568 = vadd.f32 0.0, %v2567
      %v2569 = vpop.f32.mrf.mxu0
      %2570 = vmatprep.mubr.f32.mxu0 0.0
      %2571 = vmatmul.mubr.f32.gmra.mxu0 %v2393
      %v2572 = vpop.f32.mrf.mxu0
      %v2573 = vadd.f32 0.0, %v2572
      %v2574 = vpop.f32.mrf.mxu0
      %2575 = vmatprep.mubr.f32.mxu0 0.0
      %2576 = vmatmul.mubr.f32.gmra.mxu0 %v2394
      %v2577 = vpop.f32.mrf.mxu0
      %v2578 = vadd.f32 0.0, %v2577
      %v2579 = vpop.f32.mrf.mxu0
      %2580 = vmatprep.mubr.f32.mxu0 0.0
      %2581 = vmatmul.mubr.f32.gmra.mxu0 %v2395
      %v2582 = vpop.f32.mrf.mxu0
      %v2583 = vadd.f32 0.0, %v2582
      %v2584 = vpop.f32.mrf.mxu0
      %2585 = vmatprep.mubr.f32.mxu0 0.0
      %2586 = vmatmul.mubr.f32.gmra.mxu0 %v2396
      %v2587 = vpop.f32.mrf.mxu0
      %v2588 = vadd.f32 0.0, %v2587
      %v2589 = vpop.f32.mrf.mxu0
      %2590 = vmatprep.mubr.f32.mxu0 0.0
      %2591 = vmatmul.mubr.f32.gmra.mxu0 %v2397
      %v2592 = vpop.f32.mrf.mxu0
      %v2593 = vadd.f32 0.0, %v2592
      %v2594 = vpop.f32.mrf.mxu0
      %2595 = vmatprep.mubr.f32.mxu0 0.0
      %2596 = vmatmul.mubr.f32.gmra.mxu0 %v2398
      %v2597 = vpop.f32.mrf.mxu0
      %v2598 = vadd.f32 0.0, %v2597
      %v2599 = vpop.f32.mrf.mxu0
      %2600 = vmatprep.mubr.f32.mxu0 0.0
      %2601 = vmatmul.mubr.f32.gmra.mxu0 %v2399
      %v2602 = vpop.f32.mrf.mxu0
      %v2603 = vadd.f32 0.0, %v2602
      %v2604 = vpop.f32.mrf.mxu0
      %2605 = vmatprep.mubr.f32.mxu0 0.0
      %2606 = vmatmul.mubr.f32.gmra.mxu0 %v2400
      %v2607 = vpop.f32.mrf.mxu0
      %v2608 = vadd.f32 0.0, %v2607
      %v2609 = vpop.f32.mrf.mxu0
      %2610 = vmatprep.mubr.f32.mxu0 0.0
      %2611 = vmatmul.mubr.f32.gmra.mxu0 %v2401
      %v2612 = vpop.f32.mrf.mxu0
      %v2613 = vadd.f32 0.0, %v2612
      %v2614 = vpop.f32.mrf.mxu0
      %2615 = vmatprep.mubr.f32.mxu0 0.0
      %2616 = vmatmul.mubr.f32.gmra.mxu0 %v2402
      %v2617 = vpop.f32.mrf.mxu0
      %v2618 = vadd.f32 0.0, %v2617
      %v2619 = vpop.f32.mrf.mxu0
      %2620 = vmatprep.mubr.f32.mxu0 0.0
      %2621 = vmatmul.mubr.f32.gmra.mxu0 %v2403
      %v2622 = vpop.f32.mrf.mxu0
      %v2623 = vadd.f32 0.0, %v2622
      %v2624 = vpop.f32.mrf.mxu0
      %2625 = vmatprep.mubr.f32.mxu0 0.0
      %2626 = vmatmul.mubr.f32.gmra.mxu0 %v2404
      %v2627 = vpop.f32.mrf.mxu0
      %v2628 = vadd.f32 0.0, %v2627
      %v2629 = vpop.f32.mrf.mxu0
      %2630 = vmatprep.mubr.f32.mxu0 0.0
      %2631 = vmatmul.mubr.f32.gmra.mxu0 %v2405
      %v2632 = vpop.f32.mrf.mxu0
      %v2633 = vadd.f32 0.0, %v2632
      %v2634 = vpop.f32.mrf.mxu0
      %2635 = vmatprep.mubr.f32.mxu0 0.0
      %2636 = vmatmul.mubr.f32.gmra.mxu0 %v2406
      %v2637 = vpop.f32.mrf.mxu0
      %v2638 = vadd.f32 0.0, %v2637
      %v2639 = vpop.f32.mrf.mxu0
      %2640 = vmatprep.mubr.f32.mxu0 0.0
      %2641 = vmatmul.mubr.f32.gmra.mxu0 %v2407
      %v2642 = vpop.f32.mrf.mxu0
      %v2643 = vadd.f32 0.0, %v2642
      %v2644 = vpop.f32.mrf.mxu0
      %2645 = vmatprep.mubr.f32.mxu0 0.0
      %2646 = vmatmul.mubr.f32.gmra.mxu0 %v2408
      %v2647 = vpop.f32.mrf.mxu0
      %v2648 = vadd.f32 0.0, %v2647
      %v2649 = vpop.f32.mrf.mxu0
      %2650 = vmatprep.mubr.f32.mxu0 0.0
      %2651 = vmatmul.mubr.f32.gmra.mxu0 %v2409
      %v2652 = vpop.f32.mrf.mxu0
      %v2653 = vadd.f32 0.0, %v2652
      %v2654 = vpop.f32.mrf.mxu0
      %2655 = vmatprep.mubr.f32.mxu0 0.0
      %2656 = vmatmul.mubr.f32.gmra.mxu0 %v2410
      %v2657 = vpop.f32.mrf.mxu0
      %v2658 = vadd.f32 0.0, %v2657
      %v2659 = vpop.f32.mrf.mxu0
      %2660 = vmatprep.mubr.f32.mxu0 0.0
      %2661 = vmatmul.mubr.f32.gmra.mxu0 %v2411
      %v2662 = vpop.f32.mrf.mxu0
      %v2663 = vadd.f32 0.0, %v2662
      %v2664 = vpop.f32.mrf.mxu0
      %2665 = vmatprep.mubr.f32.mxu0 0.0
      %2666 = vmatmul.mubr.f32.gmra.mxu0 %v2412
      %v2667 = vpop.f32.mrf.mxu0
      %v2668 = vadd.f32 0.0, %v2667
      %v2669 = vpop.f32.mrf.mxu0
      %2670 = vmatprep.mubr.f32.mxu0 0.0
      %2671 = vmatmul.mubr.f32.gmra.mxu0 %v2413
      %v2672 = vpop.f32.mrf.mxu0
      %v2673 = vadd.f32 0.0, %v2672
      %v2674 = vpop.f32.mrf.mxu0
      %2675 = vmatprep.mubr.f32.mxu0 0.0
      %2676 = vmatmul.mubr.f32.gmra.mxu0 %v2414
      %v2677 = vpop.f32.mrf.mxu0
      %v2678 = vadd.f32 0.0, %v2677
      %v2679 = vpop.f32.mrf.mxu0
      %2680 = vmatprep.mubr.f32.mxu0 0.0
      %2681 = vmatmul.mubr.f32.gmra.mxu0 %v2415
      %v2682 = vpop.f32.mrf.mxu0
      %v2683 = vadd.f32 0.0, %v2682
      %v2684 = vpop.f32.mrf.mxu0
      %2685 = vmatprep.mubr.f32.mxu0 0.0
      %2686 = vmatmul.mubr.f32.gmra.mxu0 %v2416
      %v2687 = vpop.f32.mrf.mxu0
      %v2688 = vadd.f32 0.0, %v2687
      %v2689 = vpop.f32.mrf.mxu0
      %2690 = vdwg.mxu0
      %v2691 = vadd.f32 %v2417, %v2533
      %v2692 = vadd.f32 %v2418, %v2538
      %v2693 = vadd.f32 %v2419, %v2543
      %v2694 = vadd.f32 %v2420, %v2548
      %v2695 = vadd.f32 %v2421, %v2553
      %v2696 = vadd.f32 %v2422, %v2558
      %v2697 = vadd.f32 %v2423, %v2563
      %v2698 = vadd.f32 %v2424, %v2568
      %v2699 = vadd.f32 %v2425, %v2573
      %v2700 = vadd.f32 %v2426, %v2578
      %v2701 = vadd.f32 %v2427, %v2583
      %v2702 = vadd.f32 %v2428, %v2588
      %v2703 = vadd.f32 %v2429, %v2593
      %v2704 = vadd.f32 %v2430, %v2598
      %v2705 = vadd.f32 %v2431, %v2603
      %v2706 = vadd.f32 %v2432, %v2608
      %v2707 = vadd.f32 %v2433, %v2613
      %v2708 = vadd.f32 %v2434, %v2618
      %v2709 = vadd.f32 %v2435, %v2623
      %v2710 = vadd.f32 %v2436, %v2628
      %v2711 = vadd.f32 %v2437, %v2633
      %v2712 = vadd.f32 %v2438, %v2638
      %v2713 = vadd.f32 %v2439, %v2643
      %v2714 = vadd.f32 %v2440, %v2648
      %v2715 = vadd.f32 %v2441, %v2653
      %v2716 = vadd.f32 %v2442, %v2658
      %v2717 = vadd.f32 %v2443, %v2663
      %v2718 = vadd.f32 %v2444, %v2668
      %v2719 = vadd.f32 %v2445, %v2673
      %v2720 = vadd.f32 %v2446, %v2678
      %v2721 = vadd.f32 %v2447, %v2683
      %v2722 = vadd.f32 %v2448, %v2688
      %2723 = vst [vmem:[#allocation3] sm:$0xff] %v2691
      %2724 = vst [vmem:[#allocation3 + $0x8] sm:$0xff] %v2692
      %2725 = vst [vmem:[#allocation3 + $0x10] sm:$0xff] %v2693
      %2726 = vst [vmem:[#allocation3 + $0x18] sm:$0xff] %v2694
      %2727 = vst [vmem:[#allocation3 + $0x20] sm:$0xff] %v2695
      %2728 = vst [vmem:[#allocation3 + $0x28] sm:$0xff] %v2696
      %2729 = vst [vmem:[#allocation3 + $0x30] sm:$0xff] %v2697
      %2730 = vst [vmem:[#allocation3 + $0x38] sm:$0xff] %v2698
      %2731 = vst [vmem:[#allocation3 + $0x40] sm:$0xff] %v2699
      %2732 = vst [vmem:[#allocation3 + $0x48] sm:$0xff] %v2700
      %2733 = vst [vmem:[#allocation3 + $0x50] sm:$0xff] %v2701
      %2734 = vst [vmem:[#allocation3 + $0x58] sm:$0xff] %v2702
      %2735 = vst [vmem:[#allocation3 + $0x60] sm:$0xff] %v2703
      %2736 = vst [vmem:[#allocation3 + $0x68] sm:$0xff] %v2704
      %2737 = vst [vmem:[#allocation3 + $0x70] sm:$0xff] %v2705
      %2738 = vst [vmem:[#allocation3 + $0x78] sm:$0xff] %v2706
      %2739 = vst [vmem:[#allocation3 + $0x80] sm:$0xff] %v2707
      %2740 = vst [vmem:[#allocation3 + $0x88] sm:$0xff] %v2708
      %2741 = vst [vmem:[#allocation3 + $0x90] sm:$0xff] %v2709
      %2742 = vst [vmem:[#allocation3 + $0x98] sm:$0xff] %v2710
      %2743 = vst [vmem:[#allocation3 + $0xa0] sm:$0xff] %v2711
      %2744 = vst [vmem:[#allocation3 + $0xa8] sm:$0xff] %v2712
      %2745 = vst [vmem:[#allocation3 + $0xb0] sm:$0xff] %v2713
      %2746 = vst [vmem:[#allocation3 + $0xb8] sm:$0xff] %v2714
      %2747 = vst [vmem:[#allocation3 + $0xc0] sm:$0xff] %v2715
      %2748 = vst [vmem:[#allocation3 + $0xc8] sm:$0xff] %v2716
      %2749 = vst [vmem:[#allocation3 + $0xd0] sm:$0xff] %v2717
      %2750 = vst [vmem:[#allocation3 + $0xd8] sm:$0xff] %v2718
      %2751 = vst [vmem:[#allocation3 + $0xe0] sm:$0xff] %v2719
      %2752 = vst [vmem:[#allocation3 + $0xe8] sm:$0xff] %v2720
      %2753 = vst [vmem:[#allocation3 + $0xf0] sm:$0xff] %v2721
      %2754 = vst [vmem:[#allocation3 + $0xf8] sm:$0xff] %v2722
      %s2755 = scalar_lea.vmem [#allocation2], 48
      %v2756 = vld [vmem:[%s2755] sm:$0xff]
      %v2757 = vld [vmem:[%s2755 + $0x8] sm:$0xff]
      %v2758 = vld [vmem:[%s2755 + $0x18] sm:$0xff]
      %v2759 = vld [vmem:[%s2755 + $0x20] sm:$0xff]
      %v2760 = vld [vmem:[%s2755 + $0x30] sm:$0xff]
      %v2761 = vld [vmem:[%s2755 + $0x38] sm:$0xff]
      %v2762 = vld [vmem:[%s2755 + $0x48] sm:$0xff]
      %v2763 = vld [vmem:[%s2755 + $0x50] sm:$0xff]
      %v2764 = vld [vmem:[%s2755 + $0x60] sm:$0xff]
      %v2765 = vld [vmem:[%s2755 + $0x68] sm:$0xff]
      %v2766 = vld [vmem:[%s2755 + $0x78] sm:$0xff]
      %v2767 = vld [vmem:[%s2755 + $0x80] sm:$0xff]
      %v2768 = vld [vmem:[%s2755 + $0x90] sm:$0xff]
      %v2769 = vld [vmem:[%s2755 + $0x98] sm:$0xff]
      %v2770 = vld [vmem:[%s2755 + $0xa8] sm:$0xff]
      %v2771 = vld [vmem:[%s2755 + $0xb0] sm:$0xff]
      %v2772 = vld [vmem:[%s2755 + $0xc0] sm:$0xff]
      %v2773 = vld [vmem:[%s2755 + $0xc8] sm:$0xff]
      %v2774 = vld [vmem:[%s2755 + $0xd8] sm:$0xff]
      %v2775 = vld [vmem:[%s2755 + $0xe0] sm:$0xff]
      %v2776 = vld [vmem:[%s2755 + $0xf0] sm:$0xff]
      %v2777 = vld [vmem:[%s2755 + $0xf8] sm:$0xff]
      %v2778 = vld [vmem:[%s2755 + $0x108] sm:$0xff]
      %v2779 = vld [vmem:[%s2755 + $0x110] sm:$0xff]
      %v2780 = vld [vmem:[%s2755 + $0x120] sm:$0xff]
      %v2781 = vld [vmem:[%s2755 + $0x128] sm:$0xff]
      %v2782 = vld [vmem:[%s2755 + $0x138] sm:$0xff]
      %v2783 = vld [vmem:[%s2755 + $0x140] sm:$0xff]
      %v2784 = vld [vmem:[%s2755 + $0x150] sm:$0xff]
      %v2785 = vld [vmem:[%s2755 + $0x158] sm:$0xff]
      %v2786 = vld [vmem:[%s2755 + $0x168] sm:$0xff]
      %v2787 = vld [vmem:[%s2755 + $0x170] sm:$0xff]
      %v2788 = vld [vmem:[#allocation3] sm:$0xff]
      %v2789 = vld [vmem:[#allocation3 + $0x8] sm:$0xff]
      %v2790 = vld [vmem:[#allocation3 + $0x10] sm:$0xff]
      %v2791 = vld [vmem:[#allocation3 + $0x18] sm:$0xff]
      %v2792 = vld [vmem:[#allocation3 + $0x20] sm:$0xff]
      %v2793 = vld [vmem:[#allocation3 + $0x28] sm:$0xff]
      %v2794 = vld [vmem:[#allocation3 + $0x30] sm:$0xff]
      %v2795 = vld [vmem:[#allocation3 + $0x38] sm:$0xff]
      %v2796 = vld [vmem:[#allocation3 + $0x40] sm:$0xff]
      %v2797 = vld [vmem:[#allocation3 + $0x48] sm:$0xff]
      %v2798 = vld [vmem:[#allocation3 + $0x50] sm:$0xff]
      %v2799 = vld [vmem:[#allocation3 + $0x58] sm:$0xff]
      %v2800 = vld [vmem:[#allocation3 + $0x60] sm:$0xff]
      %v2801 = vld [vmem:[#allocation3 + $0x68] sm:$0xff]
      %v2802 = vld [vmem:[#allocation3 + $0x70] sm:$0xff]
      %v2803 = vld [vmem:[#allocation3 + $0x78] sm:$0xff]
      %v2804 = vld [vmem:[#allocation3 + $0x80] sm:$0xff]
      %v2805 = vld [vmem:[#allocation3 + $0x88] sm:$0xff]
      %v2806 = vld [vmem:[#allocation3 + $0x90] sm:$0xff]
      %v2807 = vld [vmem:[#allocation3 + $0x98] sm:$0xff]
      %v2808 = vld [vmem:[#allocation3 + $0xa0] sm:$0xff]
      %v2809 = vld [vmem:[#allocation3 + $0xa8] sm:$0xff]
      %v2810 = vld [vmem:[#allocation3 + $0xb0] sm:$0xff]
      %v2811 = vld [vmem:[#allocation3 + $0xb8] sm:$0xff]
      %v2812 = vld [vmem:[#allocation3 + $0xc0] sm:$0xff]
      %v2813 = vld [vmem:[#allocation3 + $0xc8] sm:$0xff]
      %v2814 = vld [vmem:[#allocation3 + $0xd0] sm:$0xff]
      %v2815 = vld [vmem:[#allocation3 + $0xd8] sm:$0xff]
      %v2816 = vld [vmem:[#allocation3 + $0xe0] sm:$0xff]
      %v2817 = vld [vmem:[#allocation3 + $0xe8] sm:$0xff]
      %v2818 = vld [vmem:[#allocation3 + $0xf0] sm:$0xff]
      %v2819 = vld [vmem:[#allocation3 + $0xf8] sm:$0xff]
      %s2820 = scalar_lea.vmem %s4, 768
      %v2821 = vld [vmem:[%s2820] sm:$0xff]
      %v2822 = vld [vmem:[%s2820 + $0x8] sm:$0xff]
      %v2823 = vld [vmem:[%s2820 + $0x10] sm:$0xff]
      %v2824 = vld [vmem:[%s2820 + $0x18] sm:$0xff]
      %v2825 = vld [vmem:[%s2820 + $0x20] sm:$0xff]
      %v2826 = vld [vmem:[%s2820 + $0x28] sm:$0xff]
      %v2827 = vld [vmem:[%s2820 + $0x30] sm:$0xff]
      %v2828 = vld [vmem:[%s2820 + $0x38] sm:$0xff]
      %v2829 = vld [vmem:[%s2820 + $0x40] sm:$0xff]
      %v2830 = vld [vmem:[%s2820 + $0x48] sm:$0xff]
      %v2831 = vld [vmem:[%s2820 + $0x50] sm:$0xff]
      %v2832 = vld [vmem:[%s2820 + $0x58] sm:$0xff]
      %v2833 = vld [vmem:[%s2820 + $0x60] sm:$0xff]
      %v2834 = vld [vmem:[%s2820 + $0x68] sm:$0xff]
      %v2835 = vld [vmem:[%s2820 + $0x70] sm:$0xff]
      %v2836 = vld [vmem:[%s2820 + $0x78] sm:$0xff]
      %2837 = vmatprep.subr.mxu0 0.0
      %2838 = vmatpush1.msra.mxu0 %v2836
      %2839 = vmatprep.subr.mxu0 0.0
      %2840 = vmatpush1.msra.mxu0 %v2835
      %2841 = vmatprep.subr.mxu0 0.0
      %2842 = vmatpush1.msra.mxu0 %v2834
      %2843 = vmatprep.subr.mxu0 0.0
      %2844 = vmatpush1.msra.mxu0 %v2833
      %2845 = vmatprep.subr.mxu0 0.0
      %2846 = vmatpush1.msra.mxu0 %v2832
      %2847 = vmatprep.subr.mxu0 0.0
      %2848 = vmatpush1.msra.mxu0 %v2831
      %2849 = vmatprep.subr.mxu0 0.0
      %2850 = vmatpush1.msra.mxu0 %v2830
      %2851 = vmatprep.subr.mxu0 0.0
      %2852 = vmatpush1.msra.mxu0 %v2829
      %2853 = vmatprep.subr.mxu0 0.0
      %2854 = vmatpush1.msra.mxu0 %v2828
      %2855 = vmatprep.subr.mxu0 0.0
      %2856 = vmatpush1.msra.mxu0 %v2827
      %2857 = vmatprep.subr.mxu0 0.0
      %2858 = vmatpush1.msra.mxu0 %v2826
      %2859 = vmatprep.subr.mxu0 0.0
      %2860 = vmatpush1.msra.mxu0 %v2825
      %2861 = vmatprep.subr.mxu0 0.0
      %2862 = vmatpush1.msra.mxu0 %v2824
      %2863 = vmatprep.subr.mxu0 0.0
      %2864 = vmatpush1.msra.mxu0 %v2823
      %2865 = vmatprep.subr.mxu0 0.0
      %2866 = vmatpush1.msra.mxu0 %v2822
      %2867 = vmatprep.subr.mxu0 0.0
      %2868 = vmatpush1.msra.mxu0 %v2821
      %2869 = vmatprep.subr.mxu0 0.0
      %2870 = vmatpush2.msra.mxu0 0.0
      %2871 = vmatprep.subr.mxu0 0.0
      %2872 = vmatpush2.msra.mxu0 0.0
      %2873 = vmatprep.subr.mxu0 0.0
      %2874 = vmatpush2.msra.mxu0 0.0
      %2875 = vmatprep.subr.mxu0 0.0
      %2876 = vmatpush2.msra.mxu0 0.0
      %2877 = vmatprep.subr.mxu0 0.0
      %2878 = vmatpush2.msra.mxu0 0.0
      %2879 = vmatprep.subr.mxu0 0.0
      %2880 = vmatpush2.msra.mxu0 0.0
      %2881 = vmatprep.subr.mxu0 0.0
      %2882 = vmatpush2.msra.mxu0 0.0
      %2883 = vmatprep.subr.mxu0 0.0
      %2884 = vmatpush2.msra.mxu0 0.0
      %2885 = vmatprep.subr.mxu0 0.0
      %2886 = vmatpush2.msra.mxu0 0.0
      %2887 = vmatprep.subr.mxu0 0.0
      %2888 = vmatpush2.msra.mxu0 0.0
      %2889 = vmatprep.subr.mxu0 0.0
      %2890 = vmatpush2.msra.mxu0 0.0
      %2891 = vmatprep.subr.mxu0 0.0
      %2892 = vmatpush2.msra.mxu0 0.0
      %2893 = vmatprep.subr.mxu0 0.0
      %2894 = vmatpush2.msra.mxu0 0.0
      %2895 = vmatprep.subr.mxu0 0.0
      %2896 = vmatpush2.msra.mxu0 0.0
      %2897 = vmatprep.subr.mxu0 0.0
      %2898 = vmatpush2.msra.mxu0 0.0
      %2899 = vmatprep.subr.mxu0 0.0
      %2900 = vmatpush2.msra.mxu0 0.0
      %2901 = vmatprep.mubr.f32.mxu0 0.0
      %2902 = vmatmul.mubr.f32.gmra.mxu0 %v2756
      %v2903 = vpop.f32.mrf.mxu0
      %v2904 = vadd.f32 0.0, %v2903
      %v2905 = vpop.f32.mrf.mxu0
      %2906 = vmatprep.mubr.f32.mxu0 0.0
      %2907 = vmatmul.mubr.f32.gmra.mxu0 %v2757
      %v2908 = vpop.f32.mrf.mxu0
      %v2909 = vadd.f32 0.0, %v2908
      %v2910 = vpop.f32.mrf.mxu0
      %2911 = vmatprep.mubr.f32.mxu0 0.0
      %2912 = vmatmul.mubr.f32.gmra.mxu0 %v2758
      %v2913 = vpop.f32.mrf.mxu0
      %v2914 = vadd.f32 0.0, %v2913
      %v2915 = vpop.f32.mrf.mxu0
      %2916 = vmatprep.mubr.f32.mxu0 0.0
      %2917 = vmatmul.mubr.f32.gmra.mxu0 %v2759
      %v2918 = vpop.f32.mrf.mxu0
      %v2919 = vadd.f32 0.0, %v2918
      %v2920 = vpop.f32.mrf.mxu0
      %2921 = vmatprep.mubr.f32.mxu0 0.0
      %2922 = vmatmul.mubr.f32.gmra.mxu0 %v2760
      %v2923 = vpop.f32.mrf.mxu0
      %v2924 = vadd.f32 0.0, %v2923
      %v2925 = vpop.f32.mrf.mxu0
      %2926 = vmatprep.mubr.f32.mxu0 0.0
      %2927 = vmatmul.mubr.f32.gmra.mxu0 %v2761
      %v2928 = vpop.f32.mrf.mxu0
      %v2929 = vadd.f32 0.0, %v2928
      %v2930 = vpop.f32.mrf.mxu0
      %2931 = vmatprep.mubr.f32.mxu0 0.0
      %2932 = vmatmul.mubr.f32.gmra.mxu0 %v2762
      %v2933 = vpop.f32.mrf.mxu0
      %v2934 = vadd.f32 0.0, %v2933
      %v2935 = vpop.f32.mrf.mxu0
      %2936 = vmatprep.mubr.f32.mxu0 0.0
      %2937 = vmatmul.mubr.f32.gmra.mxu0 %v2763
      %v2938 = vpop.f32.mrf.mxu0
      %v2939 = vadd.f32 0.0, %v2938
      %v2940 = vpop.f32.mrf.mxu0
      %2941 = vmatprep.mubr.f32.mxu0 0.0
      %2942 = vmatmul.mubr.f32.gmra.mxu0 %v2764
      %v2943 = vpop.f32.mrf.mxu0
      %v2944 = vadd.f32 0.0, %v2943
      %v2945 = vpop.f32.mrf.mxu0
      %2946 = vmatprep.mubr.f32.mxu0 0.0
      %2947 = vmatmul.mubr.f32.gmra.mxu0 %v2765
      %v2948 = vpop.f32.mrf.mxu0
      %v2949 = vadd.f32 0.0, %v2948
      %v2950 = vpop.f32.mrf.mxu0
      %2951 = vmatprep.mubr.f32.mxu0 0.0
      %2952 = vmatmul.mubr.f32.gmra.mxu0 %v2766
      %v2953 = vpop.f32.mrf.mxu0
      %v2954 = vadd.f32 0.0, %v2953
      %v2955 = vpop.f32.mrf.mxu0
      %2956 = vmatprep.mubr.f32.mxu0 0.0
      %2957 = vmatmul.mubr.f32.gmra.mxu0 %v2767
      %v2958 = vpop.f32.mrf.mxu0
      %v2959 = vadd.f32 0.0, %v2958
      %v2960 = vpop.f32.mrf.mxu0
      %2961 = vmatprep.mubr.f32.mxu0 0.0
      %2962 = vmatmul.mubr.f32.gmra.mxu0 %v2768
      %v2963 = vpop.f32.mrf.mxu0
      %v2964 = vadd.f32 0.0, %v2963
      %v2965 = vpop.f32.mrf.mxu0
      %2966 = vmatprep.mubr.f32.mxu0 0.0
      %2967 = vmatmul.mubr.f32.gmra.mxu0 %v2769
      %v2968 = vpop.f32.mrf.mxu0
      %v2969 = vadd.f32 0.0, %v2968
      %v2970 = vpop.f32.mrf.mxu0
      %2971 = vmatprep.mubr.f32.mxu0 0.0
      %2972 = vmatmul.mubr.f32.gmra.mxu0 %v2770
      %v2973 = vpop.f32.mrf.mxu0
      %v2974 = vadd.f32 0.0, %v2973
      %v2975 = vpop.f32.mrf.mxu0
      %2976 = vmatprep.mubr.f32.mxu0 0.0
      %2977 = vmatmul.mubr.f32.gmra.mxu0 %v2771
      %v2978 = vpop.f32.mrf.mxu0
      %v2979 = vadd.f32 0.0, %v2978
      %v2980 = vpop.f32.mrf.mxu0
      %2981 = vmatprep.mubr.f32.mxu0 0.0
      %2982 = vmatmul.mubr.f32.gmra.mxu0 %v2772
      %v2983 = vpop.f32.mrf.mxu0
      %v2984 = vadd.f32 0.0, %v2983
      %v2985 = vpop.f32.mrf.mxu0
      %2986 = vmatprep.mubr.f32.mxu0 0.0
      %2987 = vmatmul.mubr.f32.gmra.mxu0 %v2773
      %v2988 = vpop.f32.mrf.mxu0
      %v2989 = vadd.f32 0.0, %v2988
      %v2990 = vpop.f32.mrf.mxu0
      %2991 = vmatprep.mubr.f32.mxu0 0.0
      %2992 = vmatmul.mubr.f32.gmra.mxu0 %v2774
      %v2993 = vpop.f32.mrf.mxu0
      %v2994 = vadd.f32 0.0, %v2993
      %v2995 = vpop.f32.mrf.mxu0
      %2996 = vmatprep.mubr.f32.mxu0 0.0
      %2997 = vmatmul.mubr.f32.gmra.mxu0 %v2775
      %v2998 = vpop.f32.mrf.mxu0
      %v2999 = vadd.f32 0.0, %v2998
      %v3000 = vpop.f32.mrf.mxu0
      %3001 = vmatprep.mubr.f32.mxu0 0.0
      %3002 = vmatmul.mubr.f32.gmra.mxu0 %v2776
      %v3003 = vpop.f32.mrf.mxu0
      %v3004 = vadd.f32 0.0, %v3003
      %v3005 = vpop.f32.mrf.mxu0
      %3006 = vmatprep.mubr.f32.mxu0 0.0
      %3007 = vmatmul.mubr.f32.gmra.mxu0 %v2777
      %v3008 = vpop.f32.mrf.mxu0
      %v3009 = vadd.f32 0.0, %v3008
      %v3010 = vpop.f32.mrf.mxu0
      %3011 = vmatprep.mubr.f32.mxu0 0.0
      %3012 = vmatmul.mubr.f32.gmra.mxu0 %v2778
      %v3013 = vpop.f32.mrf.mxu0
      %v3014 = vadd.f32 0.0, %v3013
      %v3015 = vpop.f32.mrf.mxu0
      %3016 = vmatprep.mubr.f32.mxu0 0.0
      %3017 = vmatmul.mubr.f32.gmra.mxu0 %v2779
      %v3018 = vpop.f32.mrf.mxu0
      %v3019 = vadd.f32 0.0, %v3018
      %v3020 = vpop.f32.mrf.mxu0
      %3021 = vmatprep.mubr.f32.mxu0 0.0
      %3022 = vmatmul.mubr.f32.gmra.mxu0 %v2780
      %v3023 = vpop.f32.mrf.mxu0
      %v3024 = vadd.f32 0.0, %v3023
      %v3025 = vpop.f32.mrf.mxu0
      %3026 = vmatprep.mubr.f32.mxu0 0.0
      %3027 = vmatmul.mubr.f32.gmra.mxu0 %v2781
      %v3028 = vpop.f32.mrf.mxu0
      %v3029 = vadd.f32 0.0, %v3028
      %v3030 = vpop.f32.mrf.mxu0
      %3031 = vmatprep.mubr.f32.mxu0 0.0
      %3032 = vmatmul.mubr.f32.gmra.mxu0 %v2782
      %v3033 = vpop.f32.mrf.mxu0
      %v3034 = vadd.f32 0.0, %v3033
      %v3035 = vpop.f32.mrf.mxu0
      %3036 = vmatprep.mubr.f32.mxu0 0.0
      %3037 = vmatmul.mubr.f32.gmra.mxu0 %v2783
      %v3038 = vpop.f32.mrf.mxu0
      %v3039 = vadd.f32 0.0, %v3038
      %v3040 = vpop.f32.mrf.mxu0
      %3041 = vmatprep.mubr.f32.mxu0 0.0
      %3042 = vmatmul.mubr.f32.gmra.mxu0 %v2784
      %v3043 = vpop.f32.mrf.mxu0
      %v3044 = vadd.f32 0.0, %v3043
      %v3045 = vpop.f32.mrf.mxu0
      %3046 = vmatprep.mubr.f32.mxu0 0.0
      %3047 = vmatmul.mubr.f32.gmra.mxu0 %v2785
      %v3048 = vpop.f32.mrf.mxu0
      %v3049 = vadd.f32 0.0, %v3048
      %v3050 = vpop.f32.mrf.mxu0
      %3051 = vmatprep.mubr.f32.mxu0 0.0
      %3052 = vmatmul.mubr.f32.gmra.mxu0 %v2786
      %v3053 = vpop.f32.mrf.mxu0
      %v3054 = vadd.f32 0.0, %v3053
      %v3055 = vpop.f32.mrf.mxu0
      %3056 = vmatprep.mubr.f32.mxu0 0.0
      %3057 = vmatmul.mubr.f32.gmra.mxu0 %v2787
      %v3058 = vpop.f32.mrf.mxu0
      %v3059 = vadd.f32 0.0, %v3058
      %v3060 = vpop.f32.mrf.mxu0
      %3061 = vdwg.mxu0
      %v3062 = vadd.f32 %v2788, %v2904
      %v3063 = vadd.f32 %v2789, %v2909
      %v3064 = vadd.f32 %v2790, %v2914
      %v3065 = vadd.f32 %v2791, %v2919
      %v3066 = vadd.f32 %v2792, %v2924
      %v3067 = vadd.f32 %v2793, %v2929
      %v3068 = vadd.f32 %v2794, %v2934
      %v3069 = vadd.f32 %v2795, %v2939
      %v3070 = vadd.f32 %v2796, %v2944
      %v3071 = vadd.f32 %v2797, %v2949
      %v3072 = vadd.f32 %v2798, %v2954
      %v3073 = vadd.f32 %v2799, %v2959
      %v3074 = vadd.f32 %v2800, %v2964
      %v3075 = vadd.f32 %v2801, %v2969
      %v3076 = vadd.f32 %v2802, %v2974
      %v3077 = vadd.f32 %v2803, %v2979
      %v3078 = vadd.f32 %v2804, %v2984
      %v3079 = vadd.f32 %v2805, %v2989
      %v3080 = vadd.f32 %v2806, %v2994
      %v3081 = vadd.f32 %v2807, %v2999
      %v3082 = vadd.f32 %v2808, %v3004
      %v3083 = vadd.f32 %v2809, %v3009
      %v3084 = vadd.f32 %v2810, %v3014
      %v3085 = vadd.f32 %v2811, %v3019
      %v3086 = vadd.f32 %v2812, %v3024
      %v3087 = vadd.f32 %v2813, %v3029
      %v3088 = vadd.f32 %v2814, %v3034
      %v3089 = vadd.f32 %v2815, %v3039
      %v3090 = vadd.f32 %v2816, %v3044
      %v3091 = vadd.f32 %v2817, %v3049
      %v3092 = vadd.f32 %v2818, %v3054
      %v3093 = vadd.f32 %v2819, %v3059
      %3094 = vst [vmem:[#allocation3] sm:$0xff] %v3062
      %3095 = vst [vmem:[#allocation3 + $0x8] sm:$0xff] %v3063
      %3096 = vst [vmem:[#allocation3 + $0x10] sm:$0xff] %v3064
      %3097 = vst [vmem:[#allocation3 + $0x18] sm:$0xff] %v3065
      %3098 = vst [vmem:[#allocation3 + $0x20] sm:$0xff] %v3066
      %3099 = vst [vmem:[#allocation3 + $0x28] sm:$0xff] %v3067
      %3100 = vst [vmem:[#allocation3 + $0x30] sm:$0xff] %v3068
      %3101 = vst [vmem:[#allocation3 + $0x38] sm:$0xff] %v3069
      %3102 = vst [vmem:[#allocation3 + $0x40] sm:$0xff] %v3070
      %3103 = vst [vmem:[#allocation3 + $0x48] sm:$0xff] %v3071
      %3104 = vst [vmem:[#allocation3 + $0x50] sm:$0xff] %v3072
      %3105 = vst [vmem:[#allocation3 + $0x58] sm:$0xff] %v3073
      %3106 = vst [vmem:[#allocation3 + $0x60] sm:$0xff] %v3074
      %3107 = vst [vmem:[#allocation3 + $0x68] sm:$0xff] %v3075
      %3108 = vst [vmem:[#allocation3 + $0x70] sm:$0xff] %v3076
      %3109 = vst [vmem:[#allocation3 + $0x78] sm:$0xff] %v3077
      %3110 = vst [vmem:[#allocation3 + $0x80] sm:$0xff] %v3078
      %3111 = vst [vmem:[#allocation3 + $0x88] sm:$0xff] %v3079
      %3112 = vst [vmem:[#allocation3 + $0x90] sm:$0xff] %v3080
      %3113 = vst [vmem:[#allocation3 + $0x98] sm:$0xff] %v3081
      %3114 = vst [vmem:[#allocation3 + $0xa0] sm:$0xff] %v3082
      %3115 = vst [vmem:[#allocation3 + $0xa8] sm:$0xff] %v3083
      %3116 = vst [vmem:[#allocation3 + $0xb0] sm:$0xff] %v3084
      %3117 = vst [vmem:[#allocation3 + $0xb8] sm:$0xff] %v3085
      %3118 = vst [vmem:[#allocation3 + $0xc0] sm:$0xff] %v3086
      %3119 = vst [vmem:[#allocation3 + $0xc8] sm:$0xff] %v3087
      %3120 = vst [vmem:[#allocation3 + $0xd0] sm:$0xff] %v3088
      %3121 = vst [vmem:[#allocation3 + $0xd8] sm:$0xff] %v3089
      %3122 = vst [vmem:[#allocation3 + $0xe0] sm:$0xff] %v3090
      %3123 = vst [vmem:[#allocation3 + $0xe8] sm:$0xff] %v3091
      %3124 = vst [vmem:[#allocation3 + $0xf0] sm:$0xff] %v3092
      %3125 = vst [vmem:[#allocation3 + $0xf8] sm:$0xff] %v3093
      %v3126 = vld [vmem:[%s2755 + $0x1] sm:$0xff]
      %v3127 = vld [vmem:[%s2755 + $0x9] sm:$0xff]
      %v3128 = vld [vmem:[%s2755 + $0x19] sm:$0xff]
      %v3129 = vld [vmem:[%s2755 + $0x21] sm:$0xff]
      %v3130 = vld [vmem:[%s2755 + $0x31] sm:$0xff]
      %v3131 = vld [vmem:[%s2755 + $0x39] sm:$0xff]
      %v3132 = vld [vmem:[%s2755 + $0x49] sm:$0xff]
      %v3133 = vld [vmem:[%s2755 + $0x51] sm:$0xff]
      %v3134 = vld [vmem:[%s2755 + $0x61] sm:$0xff]
      %v3135 = vld [vmem:[%s2755 + $0x69] sm:$0xff]
      %v3136 = vld [vmem:[%s2755 + $0x79] sm:$0xff]
      %v3137 = vld [vmem:[%s2755 + $0x81] sm:$0xff]
      %v3138 = vld [vmem:[%s2755 + $0x91] sm:$0xff]
      %v3139 = vld [vmem:[%s2755 + $0x99] sm:$0xff]
      %v3140 = vld [vmem:[%s2755 + $0xa9] sm:$0xff]
      %v3141 = vld [vmem:[%s2755 + $0xb1] sm:$0xff]
      %v3142 = vld [vmem:[%s2755 + $0xc1] sm:$0xff]
      %v3143 = vld [vmem:[%s2755 + $0xc9] sm:$0xff]
      %v3144 = vld [vmem:[%s2755 + $0xd9] sm:$0xff]
      %v3145 = vld [vmem:[%s2755 + $0xe1] sm:$0xff]
      %v3146 = vld [vmem:[%s2755 + $0xf1] sm:$0xff]
      %v3147 = vld [vmem:[%s2755 + $0xf9] sm:$0xff]
      %v3148 = vld [vmem:[%s2755 + $0x109] sm:$0xff]
      %v3149 = vld [vmem:[%s2755 + $0x111] sm:$0xff]
      %v3150 = vld [vmem:[%s2755 + $0x121] sm:$0xff]
      %v3151 = vld [vmem:[%s2755 + $0x129] sm:$0xff]
      %v3152 = vld [vmem:[%s2755 + $0x139] sm:$0xff]
      %v3153 = vld [vmem:[%s2755 + $0x141] sm:$0xff]
      %v3154 = vld [vmem:[%s2755 + $0x151] sm:$0xff]
      %v3155 = vld [vmem:[%s2755 + $0x159] sm:$0xff]
      %v3156 = vld [vmem:[%s2755 + $0x169] sm:$0xff]
      %v3157 = vld [vmem:[%s2755 + $0x171] sm:$0xff]
      %v3158 = vld [vmem:[#allocation3] sm:$0xff]
      %v3159 = vld [vmem:[#allocation3 + $0x8] sm:$0xff]
      %v3160 = vld [vmem:[#allocation3 + $0x10] sm:$0xff]
      %v3161 = vld [vmem:[#allocation3 + $0x18] sm:$0xff]
      %v3162 = vld [vmem:[#allocation3 + $0x20] sm:$0xff]
      %v3163 = vld [vmem:[#allocation3 + $0x28] sm:$0xff]
      %v3164 = vld [vmem:[#allocation3 + $0x30] sm:$0xff]
      %v3165 = vld [vmem:[#allocation3 + $0x38] sm:$0xff]
      %v3166 = vld [vmem:[#allocation3 + $0x40] sm:$0xff]
      %v3167 = vld [vmem:[#allocation3 + $0x48] sm:$0xff]
      %v3168 = vld [vmem:[#allocation3 + $0x50] sm:$0xff]
      %v3169 = vld [vmem:[#allocation3 + $0x58] sm:$0xff]
      %v3170 = vld [vmem:[#allocation3 + $0x60] sm:$0xff]
      %v3171 = vld [vmem:[#allocation3 + $0x68] sm:$0xff]
      %v3172 = vld [vmem:[#allocation3 + $0x70] sm:$0xff]
      %v3173 = vld [vmem:[#allocation3 + $0x78] sm:$0xff]
      %v3174 = vld [vmem:[#allocation3 + $0x80] sm:$0xff]
      %v3175 = vld [vmem:[#allocation3 + $0x88] sm:$0xff]
      %v3176 = vld [vmem:[#allocation3 + $0x90] sm:$0xff]
      %v3177 = vld [vmem:[#allocation3 + $0x98] sm:$0xff]
      %v3178 = vld [vmem:[#allocation3 + $0xa0] sm:$0xff]
      %v3179 = vld [vmem:[#allocation3 + $0xa8] sm:$0xff]
      %v3180 = vld [vmem:[#allocation3 + $0xb0] sm:$0xff]
      %v3181 = vld [vmem:[#allocation3 + $0xb8] sm:$0xff]
      %v3182 = vld [vmem:[#allocation3 + $0xc0] sm:$0xff]
      %v3183 = vld [vmem:[#allocation3 + $0xc8] sm:$0xff]
      %v3184 = vld [vmem:[#allocation3 + $0xd0] sm:$0xff]
      %v3185 = vld [vmem:[#allocation3 + $0xd8] sm:$0xff]
      %v3186 = vld [vmem:[#allocation3 + $0xe0] sm:$0xff]
      %v3187 = vld [vmem:[#allocation3 + $0xe8] sm:$0xff]
      %v3188 = vld [vmem:[#allocation3 + $0xf0] sm:$0xff]
      %v3189 = vld [vmem:[#allocation3 + $0xf8] sm:$0xff]
      %s3190 = scalar_lea.vmem %s4, 896
      %v3191 = vld [vmem:[%s3190] sm:$0xff]
      %v3192 = vld [vmem:[%s3190 + $0x8] sm:$0xff]
      %v3193 = vld [vmem:[%s3190 + $0x10] sm:$0xff]
      %v3194 = vld [vmem:[%s3190 + $0x18] sm:$0xff]
      %v3195 = vld [vmem:[%s3190 + $0x20] sm:$0xff]
      %v3196 = vld [vmem:[%s3190 + $0x28] sm:$0xff]
      %v3197 = vld [vmem:[%s3190 + $0x30] sm:$0xff]
      %v3198 = vld [vmem:[%s3190 + $0x38] sm:$0xff]
      %v3199 = vld [vmem:[%s3190 + $0x40] sm:$0xff]
      %v3200 = vld [vmem:[%s3190 + $0x48] sm:$0xff]
      %v3201 = vld [vmem:[%s3190 + $0x50] sm:$0xff]
      %v3202 = vld [vmem:[%s3190 + $0x58] sm:$0xff]
      %v3203 = vld [vmem:[%s3190 + $0x60] sm:$0xff]
      %v3204 = vld [vmem:[%s3190 + $0x68] sm:$0xff]
      %v3205 = vld [vmem:[%s3190 + $0x70] sm:$0xff]
      %v3206 = vld [vmem:[%s3190 + $0x78] sm:$0xff]
      %3207 = vmatprep.subr.mxu0 0.0
      %3208 = vmatpush1.msra.mxu0 %v3206
      %3209 = vmatprep.subr.mxu0 0.0
      %3210 = vmatpush1.msra.mxu0 %v3205
      %3211 = vmatprep.subr.mxu0 0.0
      %3212 = vmatpush1.msra.mxu0 %v3204
      %3213 = vmatprep.subr.mxu0 0.0
      %3214 = vmatpush1.msra.mxu0 %v3203
      %3215 = vmatprep.subr.mxu0 0.0
      %3216 = vmatpush1.msra.mxu0 %v3202
      %3217 = vmatprep.subr.mxu0 0.0
      %3218 = vmatpush1.msra.mxu0 %v3201
      %3219 = vmatprep.subr.mxu0 0.0
      %3220 = vmatpush1.msra.mxu0 %v3200
      %3221 = vmatprep.subr.mxu0 0.0
      %3222 = vmatpush1.msra.mxu0 %v3199
      %3223 = vmatprep.subr.mxu0 0.0
      %3224 = vmatpush1.msra.mxu0 %v3198
      %3225 = vmatprep.subr.mxu0 0.0
      %3226 = vmatpush1.msra.mxu0 %v3197
      %3227 = vmatprep.subr.mxu0 0.0
      %3228 = vmatpush1.msra.mxu0 %v3196
      %3229 = vmatprep.subr.mxu0 0.0
      %3230 = vmatpush1.msra.mxu0 %v3195
      %3231 = vmatprep.subr.mxu0 0.0
      %3232 = vmatpush1.msra.mxu0 %v3194
      %3233 = vmatprep.subr.mxu0 0.0
      %3234 = vmatpush1.msra.mxu0 %v3193
      %3235 = vmatprep.subr.mxu0 0.0
      %3236 = vmatpush1.msra.mxu0 %v3192
      %3237 = vmatprep.subr.mxu0 0.0
      %3238 = vmatpush1.msra.mxu0 %v3191
      %3239 = vmatprep.subr.mxu0 0.0
      %3240 = vmatpush2.msra.mxu0 0.0
      %3241 = vmatprep.subr.mxu0 0.0
      %3242 = vmatpush2.msra.mxu0 0.0
      %3243 = vmatprep.subr.mxu0 0.0
      %3244 = vmatpush2.msra.mxu0 0.0
      %3245 = vmatprep.subr.mxu0 0.0
      %3246 = vmatpush2.msra.mxu0 0.0
      %3247 = vmatprep.subr.mxu0 0.0
      %3248 = vmatpush2.msra.mxu0 0.0
      %3249 = vmatprep.subr.mxu0 0.0
      %3250 = vmatpush2.msra.mxu0 0.0
      %3251 = vmatprep.subr.mxu0 0.0
      %3252 = vmatpush2.msra.mxu0 0.0
      %3253 = vmatprep.subr.mxu0 0.0
      %3254 = vmatpush2.msra.mxu0 0.0
      %3255 = vmatprep.subr.mxu0 0.0
      %3256 = vmatpush2.msra.mxu0 0.0
      %3257 = vmatprep.subr.mxu0 0.0
      %3258 = vmatpush2.msra.mxu0 0.0
      %3259 = vmatprep.subr.mxu0 0.0
      %3260 = vmatpush2.msra.mxu0 0.0
      %3261 = vmatprep.subr.mxu0 0.0
      %3262 = vmatpush2.msra.mxu0 0.0
      %3263 = vmatprep.subr.mxu0 0.0
      %3264 = vmatpush2.msra.mxu0 0.0
      %3265 = vmatprep.subr.mxu0 0.0
      %3266 = vmatpush2.msra.mxu0 0.0
      %3267 = vmatprep.subr.mxu0 0.0
      %3268 = vmatpush2.msra.mxu0 0.0
      %3269 = vmatprep.subr.mxu0 0.0
      %3270 = vmatpush2.msra.mxu0 0.0
      %3271 = vmatprep.mubr.f32.mxu0 0.0
      %3272 = vmatmul.mubr.f32.gmra.mxu0 %v3126
      %v3273 = vpop.f32.mrf.mxu0
      %v3274 = vadd.f32 0.0, %v3273
      %v3275 = vpop.f32.mrf.mxu0
      %3276 = vmatprep.mubr.f32.mxu0 0.0
      %3277 = vmatmul.mubr.f32.gmra.mxu0 %v3127
      %v3278 = vpop.f32.mrf.mxu0
      %v3279 = vadd.f32 0.0, %v3278
      %v3280 = vpop.f32.mrf.mxu0
      %3281 = vmatprep.mubr.f32.mxu0 0.0
      %3282 = vmatmul.mubr.f32.gmra.mxu0 %v3128
      %v3283 = vpop.f32.mrf.mxu0
      %v3284 = vadd.f32 0.0, %v3283
      %v3285 = vpop.f32.mrf.mxu0
      %3286 = vmatprep.mubr.f32.mxu0 0.0
      %3287 = vmatmul.mubr.f32.gmra.mxu0 %v3129
      %v3288 = vpop.f32.mrf.mxu0
      %v3289 = vadd.f32 0.0, %v3288
      %v3290 = vpop.f32.mrf.mxu0
      %3291 = vmatprep.mubr.f32.mxu0 0.0
      %3292 = vmatmul.mubr.f32.gmra.mxu0 %v3130
      %v3293 = vpop.f32.mrf.mxu0
      %v3294 = vadd.f32 0.0, %v3293
      %v3295 = vpop.f32.mrf.mxu0
      %3296 = vmatprep.mubr.f32.mxu0 0.0
      %3297 = vmatmul.mubr.f32.gmra.mxu0 %v3131
      %v3298 = vpop.f32.mrf.mxu0
      %v3299 = vadd.f32 0.0, %v3298
      %v3300 = vpop.f32.mrf.mxu0
      %3301 = vmatprep.mubr.f32.mxu0 0.0
      %3302 = vmatmul.mubr.f32.gmra.mxu0 %v3132
      %v3303 = vpop.f32.mrf.mxu0
      %v3304 = vadd.f32 0.0, %v3303
      %v3305 = vpop.f32.mrf.mxu0
      %3306 = vmatprep.mubr.f32.mxu0 0.0
      %3307 = vmatmul.mubr.f32.gmra.mxu0 %v3133
      %v3308 = vpop.f32.mrf.mxu0
      %v3309 = vadd.f32 0.0, %v3308
      %v3310 = vpop.f32.mrf.mxu0
      %3311 = vmatprep.mubr.f32.mxu0 0.0
      %3312 = vmatmul.mubr.f32.gmra.mxu0 %v3134
      %v3313 = vpop.f32.mrf.mxu0
      %v3314 = vadd.f32 0.0, %v3313
      %v3315 = vpop.f32.mrf.mxu0
      %3316 = vmatprep.mubr.f32.mxu0 0.0
      %3317 = vmatmul.mubr.f32.gmra.mxu0 %v3135
      %v3318 = vpop.f32.mrf.mxu0
      %v3319 = vadd.f32 0.0, %v3318
      %v3320 = vpop.f32.mrf.mxu0
      %3321 = vmatprep.mubr.f32.mxu0 0.0
      %3322 = vmatmul.mubr.f32.gmra.mxu0 %v3136
      %v3323 = vpop.f32.mrf.mxu0
      %v3324 = vadd.f32 0.0, %v3323
      %v3325 = vpop.f32.mrf.mxu0
      %3326 = vmatprep.mubr.f32.mxu0 0.0
      %3327 = vmatmul.mubr.f32.gmra.mxu0 %v3137
      %v3328 = vpop.f32.mrf.mxu0
      %v3329 = vadd.f32 0.0, %v3328
      %v3330 = vpop.f32.mrf.mxu0
      %3331 = vmatprep.mubr.f32.mxu0 0.0
      %3332 = vmatmul.mubr.f32.gmra.mxu0 %v3138
      %v3333 = vpop.f32.mrf.mxu0
      %v3334 = vadd.f32 0.0, %v3333
      %v3335 = vpop.f32.mrf.mxu0
      %3336 = vmatprep.mubr.f32.mxu0 0.0
      %3337 = vmatmul.mubr.f32.gmra.mxu0 %v3139
      %v3338 = vpop.f32.mrf.mxu0
      %v3339 = vadd.f32 0.0, %v3338
      %v3340 = vpop.f32.mrf.mxu0
      %3341 = vmatprep.mubr.f32.mxu0 0.0
      %3342 = vmatmul.mubr.f32.gmra.mxu0 %v3140
      %v3343 = vpop.f32.mrf.mxu0
      %v3344 = vadd.f32 0.0, %v3343
      %v3345 = vpop.f32.mrf.mxu0
      %3346 = vmatprep.mubr.f32.mxu0 0.0
      %3347 = vmatmul.mubr.f32.gmra.mxu0 %v3141
      %v3348 = vpop.f32.mrf.mxu0
      %v3349 = vadd.f32 0.0, %v3348
      %v3350 = vpop.f32.mrf.mxu0
      %3351 = vmatprep.mubr.f32.mxu0 0.0
      %3352 = vmatmul.mubr.f32.gmra.mxu0 %v3142
      %v3353 = vpop.f32.mrf.mxu0
      %v3354 = vadd.f32 0.0, %v3353
      %v3355 = vpop.f32.mrf.mxu0
      %3356 = vmatprep.mubr.f32.mxu0 0.0
      %3357 = vmatmul.mubr.f32.gmra.mxu0 %v3143
      %v3358 = vpop.f32.mrf.mxu0
      %v3359 = vadd.f32 0.0, %v3358
      %v3360 = vpop.f32.mrf.mxu0
      %3361 = vmatprep.mubr.f32.mxu0 0.0
      %3362 = vmatmul.mubr.f32.gmra.mxu0 %v3144
      %v3363 = vpop.f32.mrf.mxu0
      %v3364 = vadd.f32 0.0, %v3363
      %v3365 = vpop.f32.mrf.mxu0
      %3366 = vmatprep.mubr.f32.mxu0 0.0
      %3367 = vmatmul.mubr.f32.gmra.mxu0 %v3145
      %v3368 = vpop.f32.mrf.mxu0
      %v3369 = vadd.f32 0.0, %v3368
      %v3370 = vpop.f32.mrf.mxu0
      %3371 = vmatprep.mubr.f32.mxu0 0.0
      %3372 = vmatmul.mubr.f32.gmra.mxu0 %v3146
      %v3373 = vpop.f32.mrf.mxu0
      %v3374 = vadd.f32 0.0, %v3373
      %v3375 = vpop.f32.mrf.mxu0
      %3376 = vmatprep.mubr.f32.mxu0 0.0
      %3377 = vmatmul.mubr.f32.gmra.mxu0 %v3147
      %v3378 = vpop.f32.mrf.mxu0
      %v3379 = vadd.f32 0.0, %v3378
      %v3380 = vpop.f32.mrf.mxu0
      %3381 = vmatprep.mubr.f32.mxu0 0.0
      %3382 = vmatmul.mubr.f32.gmra.mxu0 %v3148
      %v3383 = vpop.f32.mrf.mxu0
      %v3384 = vadd.f32 0.0, %v3383
      %v3385 = vpop.f32.mrf.mxu0
      %3386 = vmatprep.mubr.f32.mxu0 0.0
      %3387 = vmatmul.mubr.f32.gmra.mxu0 %v3149
      %v3388 = vpop.f32.mrf.mxu0
      %v3389 = vadd.f32 0.0, %v3388
      %v3390 = vpop.f32.mrf.mxu0
      %3391 = vmatprep.mubr.f32.mxu0 0.0
      %3392 = vmatmul.mubr.f32.gmra.mxu0 %v3150
      %v3393 = vpop.f32.mrf.mxu0
      %v3394 = vadd.f32 0.0, %v3393
      %v3395 = vpop.f32.mrf.mxu0
      %3396 = vmatprep.mubr.f32.mxu0 0.0
      %3397 = vmatmul.mubr.f32.gmra.mxu0 %v3151
      %v3398 = vpop.f32.mrf.mxu0
      %v3399 = vadd.f32 0.0, %v3398
      %v3400 = vpop.f32.mrf.mxu0
      %3401 = vmatprep.mubr.f32.mxu0 0.0
      %3402 = vmatmul.mubr.f32.gmra.mxu0 %v3152
      %v3403 = vpop.f32.mrf.mxu0
      %v3404 = vadd.f32 0.0, %v3403
      %v3405 = vpop.f32.mrf.mxu0
      %3406 = vmatprep.mubr.f32.mxu0 0.0
      %3407 = vmatmul.mubr.f32.gmra.mxu0 %v3153
      %v3408 = vpop.f32.mrf.mxu0
      %v3409 = vadd.f32 0.0, %v3408
      %v3410 = vpop.f32.mrf.mxu0
      %3411 = vmatprep.mubr.f32.mxu0 0.0
      %3412 = vmatmul.mubr.f32.gmra.mxu0 %v3154
      %v3413 = vpop.f32.mrf.mxu0
      %v3414 = vadd.f32 0.0, %v3413
      %v3415 = vpop.f32.mrf.mxu0
      %3416 = vmatprep.mubr.f32.mxu0 0.0
      %3417 = vmatmul.mubr.f32.gmra.mxu0 %v3155
      %v3418 = vpop.f32.mrf.mxu0
      %v3419 = vadd.f32 0.0, %v3418
      %v3420 = vpop.f32.mrf.mxu0
      %3421 = vmatprep.mubr.f32.mxu0 0.0
      %3422 = vmatmul.mubr.f32.gmra.mxu0 %v3156
      %v3423 = vpop.f32.mrf.mxu0
      %v3424 = vadd.f32 0.0, %v3423
      %v3425 = vpop.f32.mrf.mxu0
      %3426 = vmatprep.mubr.f32.mxu0 0.0
      %3427 = vmatmul.mubr.f32.gmra.mxu0 %v3157
      %v3428 = vpop.f32.mrf.mxu0
      %v3429 = vadd.f32 0.0, %v3428
      %v3430 = vpop.f32.mrf.mxu0
      %3431 = vdwg.mxu0
      %v3432 = vadd.f32 %v3158, %v3274
      %v3433 = vadd.f32 %v3159, %v3279
      %v3434 = vadd.f32 %v3160, %v3284
      %v3435 = vadd.f32 %v3161, %v3289
      %v3436 = vadd.f32 %v3162, %v3294
      %v3437 = vadd.f32 %v3163, %v3299
      %v3438 = vadd.f32 %v3164, %v3304
      %v3439 = vadd.f32 %v3165, %v3309
      %v3440 = vadd.f32 %v3166, %v3314
      %v3441 = vadd.f32 %v3167, %v3319
      %v3442 = vadd.f32 %v3168, %v3324
      %v3443 = vadd.f32 %v3169, %v3329
      %v3444 = vadd.f32 %v3170, %v3334
      %v3445 = vadd.f32 %v3171, %v3339
      %v3446 = vadd.f32 %v3172, %v3344
      %v3447 = vadd.f32 %v3173, %v3349
      %v3448 = vadd.f32 %v3174, %v3354
      %v3449 = vadd.f32 %v3175, %v3359
      %v3450 = vadd.f32 %v3176, %v3364
      %v3451 = vadd.f32 %v3177, %v3369
      %v3452 = vadd.f32 %v3178, %v3374
      %v3453 = vadd.f32 %v3179, %v3379
      %v3454 = vadd.f32 %v3180, %v3384
      %v3455 = vadd.f32 %v3181, %v3389
      %v3456 = vadd.f32 %v3182, %v3394
      %v3457 = vadd.f32 %v3183, %v3399
      %v3458 = vadd.f32 %v3184, %v3404
      %v3459 = vadd.f32 %v3185, %v3409
      %v3460 = vadd.f32 %v3186, %v3414
      %v3461 = vadd.f32 %v3187, %v3419
      %v3462 = vadd.f32 %v3188, %v3424
      %v3463 = vadd.f32 %v3189, %v3429
      %3464 = vst [vmem:[#allocation3] sm:$0xff] %v3432
      %3465 = vst [vmem:[#allocation3 + $0x8] sm:$0xff] %v3433
      %3466 = vst [vmem:[#allocation3 + $0x10] sm:$0xff] %v3434
      %3467 = vst [vmem:[#allocation3 + $0x18] sm:$0xff] %v3435
      %3468 = vst [vmem:[#allocation3 + $0x20] sm:$0xff] %v3436
      %3469 = vst [vmem:[#allocation3 + $0x28] sm:$0xff] %v3437
      %3470 = vst [vmem:[#allocation3 + $0x30] sm:$0xff] %v3438
      %3471 = vst [vmem:[#allocation3 + $0x38] sm:$0xff] %v3439
      %3472 = vst [vmem:[#allocation3 + $0x40] sm:$0xff] %v3440
      %3473 = vst [vmem:[#allocation3 + $0x48] sm:$0xff] %v3441
      %3474 = vst [vmem:[#allocation3 + $0x50] sm:$0xff] %v3442
      %3475 = vst [vmem:[#allocation3 + $0x58] sm:$0xff] %v3443
      %3476 = vst [vmem:[#allocation3 + $0x60] sm:$0xff] %v3444
      %3477 = vst [vmem:[#allocation3 + $0x68] sm:$0xff] %v3445
      %3478 = vst [vmem:[#allocation3 + $0x70] sm:$0xff] %v3446
      %3479 = vst [vmem:[#allocation3 + $0x78] sm:$0xff] %v3447
      %3480 = vst [vmem:[#allocation3 + $0x80] sm:$0xff] %v3448
      %3481 = vst [vmem:[#allocation3 + $0x88] sm:$0xff] %v3449
      %3482 = vst [vmem:[#allocation3 + $0x90] sm:$0xff] %v3450
      %3483 = vst [vmem:[#allocation3 + $0x98] sm:$0xff] %v3451
      %3484 = vst [vmem:[#allocation3 + $0xa0] sm:$0xff] %v3452
      %3485 = vst [vmem:[#allocation3 + $0xa8] sm:$0xff] %v3453
      %3486 = vst [vmem:[#allocation3 + $0xb0] sm:$0xff] %v3454
      %3487 = vst [vmem:[#allocation3 + $0xb8] sm:$0xff] %v3455
      %3488 = vst [vmem:[#allocation3 + $0xc0] sm:$0xff] %v3456
      %3489 = vst [vmem:[#allocation3 + $0xc8] sm:$0xff] %v3457
      %3490 = vst [vmem:[#allocation3 + $0xd0] sm:$0xff] %v3458
      %3491 = vst [vmem:[#allocation3 + $0xd8] sm:$0xff] %v3459
      %3492 = vst [vmem:[#allocation3 + $0xe0] sm:$0xff] %v3460
      %3493 = vst [vmem:[#allocation3 + $0xe8] sm:$0xff] %v3461
      %3494 = vst [vmem:[#allocation3 + $0xf0] sm:$0xff] %v3462
      %3495 = vst [vmem:[#allocation3 + $0xf8] sm:$0xff] %v3463
      %v3496 = vld [vmem:[%s2755 + $0x2] sm:$0xff]
      %v3497 = vld [vmem:[%s2755 + $0xa] sm:$0xff]
      %v3498 = vld [vmem:[%s2755 + $0x1a] sm:$0xff]
      %v3499 = vld [vmem:[%s2755 + $0x22] sm:$0xff]
      %v3500 = vld [vmem:[%s2755 + $0x32] sm:$0xff]
      %v3501 = vld [vmem:[%s2755 + $0x3a] sm:$0xff]
      %v3502 = vld [vmem:[%s2755 + $0x4a] sm:$0xff]
      %v3503 = vld [vmem:[%s2755 + $0x52] sm:$0xff]
      %v3504 = vld [vmem:[%s2755 + $0x62] sm:$0xff]
      %v3505 = vld [vmem:[%s2755 + $0x6a] sm:$0xff]
      %v3506 = vld [vmem:[%s2755 + $0x7a] sm:$0xff]
      %v3507 = vld [vmem:[%s2755 + $0x82] sm:$0xff]
      %v3508 = vld [vmem:[%s2755 + $0x92] sm:$0xff]
      %v3509 = vld [vmem:[%s2755 + $0x9a] sm:$0xff]
      %v3510 = vld [vmem:[%s2755 + $0xaa] sm:$0xff]
      %v3511 = vld [vmem:[%s2755 + $0xb2] sm:$0xff]
      %v3512 = vld [vmem:[%s2755 + $0xc2] sm:$0xff]
      %v3513 = vld [vmem:[%s2755 + $0xca] sm:$0xff]
      %v3514 = vld [vmem:[%s2755 + $0xda] sm:$0xff]
      %v3515 = vld [vmem:[%s2755 + $0xe2] sm:$0xff]
      %v3516 = vld [vmem:[%s2755 + $0xf2] sm:$0xff]
      %v3517 = vld [vmem:[%s2755 + $0xfa] sm:$0xff]
      %v3518 = vld [vmem:[%s2755 + $0x10a] sm:$0xff]
      %v3519 = vld [vmem:[%s2755 + $0x112] sm:$0xff]
      %v3520 = vld [vmem:[%s2755 + $0x122] sm:$0xff]
      %v3521 = vld [vmem:[%s2755 + $0x12a] sm:$0xff]
      %v3522 = vld [vmem:[%s2755 + $0x13a] sm:$0xff]
      %v3523 = vld [vmem:[%s2755 + $0x142] sm:$0xff]
      %v3524 = vld [vmem:[%s2755 + $0x152] sm:$0xff]
      %v3525 = vld [vmem:[%s2755 + $0x15a] sm:$0xff]
      %v3526 = vld [vmem:[%s2755 + $0x16a] sm:$0xff]
      %v3527 = vld [vmem:[%s2755 + $0x172] sm:$0xff]
      %v3528 = vld [vmem:[#allocation3] sm:$0xff]
      %v3529 = vld [vmem:[#allocation3 + $0x8] sm:$0xff]
      %v3530 = vld [vmem:[#allocation3 + $0x10] sm:$0xff]
      %v3531 = vld [vmem:[#allocation3 + $0x18] sm:$0xff]
      %v3532 = vld [vmem:[#allocation3 + $0x20] sm:$0xff]
      %v3533 = vld [vmem:[#allocation3 + $0x28] sm:$0xff]
      %v3534 = vld [vmem:[#allocation3 + $0x30] sm:$0xff]
      %v3535 = vld [vmem:[#allocation3 + $0x38] sm:$0xff]
      %v3536 = vld [vmem:[#allocation3 + $0x40] sm:$0xff]
      %v3537 = vld [vmem:[#allocation3 + $0x48] sm:$0xff]
      %v3538 = vld [vmem:[#allocation3 + $0x50] sm:$0xff]
      %v3539 = vld [vmem:[#allocation3 + $0x58] sm:$0xff]
      %v3540 = vld [vmem:[#allocation3 + $0x60] sm:$0xff]
      %v3541 = vld [vmem:[#allocation3 + $0x68] sm:$0xff]
      %v3542 = vld [vmem:[#allocation3 + $0x70] sm:$0xff]
      %v3543 = vld [vmem:[#allocation3 + $0x78] sm:$0xff]
      %v3544 = vld [vmem:[#allocation3 + $0x80] sm:$0xff]
      %v3545 = vld [vmem:[#allocation3 + $0x88] sm:$0xff]
      %v3546 = vld [vmem:[#allocation3 + $0x90] sm:$0xff]
      %v3547 = vld [vmem:[#allocation3 + $0x98] sm:$0xff]
      %v3548 = vld [vmem:[#allocation3 + $0xa0] sm:$0xff]
      %v3549 = vld [vmem:[#allocation3 + $0xa8] sm:$0xff]
      %v3550 = vld [vmem:[#allocation3 + $0xb0] sm:$0xff]
      %v3551 = vld [vmem:[#allocation3 + $0xb8] sm:$0xff]
      %v3552 = vld [vmem:[#allocation3 + $0xc0] sm:$0xff]
      %v3553 = vld [vmem:[#allocation3 + $0xc8] sm:$0xff]
      %v3554 = vld [vmem:[#allocation3 + $0xd0] sm:$0xff]
      %v3555 = vld [vmem:[#allocation3 + $0xd8] sm:$0xff]
      %v3556 = vld [vmem:[#allocation3 + $0xe0] sm:$0xff]
      %v3557 = vld [vmem:[#allocation3 + $0xe8] sm:$0xff]
      %v3558 = vld [vmem:[#allocation3 + $0xf0] sm:$0xff]
      %v3559 = vld [vmem:[#allocation3 + $0xf8] sm:$0xff]
      %s3560 = scalar_lea.vmem %s4, 1024
      %v3561 = vld [vmem:[%s3560] sm:$0xff]
      %v3562 = vld [vmem:[%s3560 + $0x8] sm:$0xff]
      %v3563 = vld [vmem:[%s3560 + $0x10] sm:$0xff]
      %v3564 = vld [vmem:[%s3560 + $0x18] sm:$0xff]
      %v3565 = vld [vmem:[%s3560 + $0x20] sm:$0xff]
      %v3566 = vld [vmem:[%s3560 + $0x28] sm:$0xff]
      %v3567 = vld [vmem:[%s3560 + $0x30] sm:$0xff]
      %v3568 = vld [vmem:[%s3560 + $0x38] sm:$0xff]
      %v3569 = vld [vmem:[%s3560 + $0x40] sm:$0xff]
      %v3570 = vld [vmem:[%s3560 + $0x48] sm:$0xff]
      %v3571 = vld [vmem:[%s3560 + $0x50] sm:$0xff]
      %v3572 = vld [vmem:[%s3560 + $0x58] sm:$0xff]
      %v3573 = vld [vmem:[%s3560 + $0x60] sm:$0xff]
      %v3574 = vld [vmem:[%s3560 + $0x68] sm:$0xff]
      %v3575 = vld [vmem:[%s3560 + $0x70] sm:$0xff]
      %v3576 = vld [vmem:[%s3560 + $0x78] sm:$0xff]
      %3577 = vmatprep.subr.mxu0 0.0
      %3578 = vmatpush1.msra.mxu0 %v3576
      %3579 = vmatprep.subr.mxu0 0.0
      %3580 = vmatpush1.msra.mxu0 %v3575
      %3581 = vmatprep.subr.mxu0 0.0
      %3582 = vmatpush1.msra.mxu0 %v3574
      %3583 = vmatprep.subr.mxu0 0.0
      %3584 = vmatpush1.msra.mxu0 %v3573
      %3585 = vmatprep.subr.mxu0 0.0
      %3586 = vmatpush1.msra.mxu0 %v3572
      %3587 = vmatprep.subr.mxu0 0.0
      %3588 = vmatpush1.msra.mxu0 %v3571
      %3589 = vmatprep.subr.mxu0 0.0
      %3590 = vmatpush1.msra.mxu0 %v3570
      %3591 = vmatprep.subr.mxu0 0.0
      %3592 = vmatpush1.msra.mxu0 %v3569
      %3593 = vmatprep.subr.mxu0 0.0
      %3594 = vmatpush1.msra.mxu0 %v3568
      %3595 = vmatprep.subr.mxu0 0.0
      %3596 = vmatpush1.msra.mxu0 %v3567
      %3597 = vmatprep.subr.mxu0 0.0
      %3598 = vmatpush1.msra.mxu0 %v3566
      %3599 = vmatprep.subr.mxu0 0.0
      %3600 = vmatpush1.msra.mxu0 %v3565
      %3601 = vmatprep.subr.mxu0 0.0
      %3602 = vmatpush1.msra.mxu0 %v3564
      %3603 = vmatprep.subr.mxu0 0.0
      %3604 = vmatpush1.msra.mxu0 %v3563
      %3605 = vmatprep.subr.mxu0 0.0
      %3606 = vmatpush1.msra.mxu0 %v3562
      %3607 = vmatprep.subr.mxu0 0.0
      %3608 = vmatpush1.msra.mxu0 %v3561
      %3609 = vmatprep.subr.mxu0 0.0
      %3610 = vmatpush2.msra.mxu0 0.0
      %3611 = vmatprep.subr.mxu0 0.0
      %3612 = vmatpush2.msra.mxu0 0.0
      %3613 = vmatprep.subr.mxu0 0.0
      %3614 = vmatpush2.msra.mxu0 0.0
      %3615 = vmatprep.subr.mxu0 0.0
      %3616 = vmatpush2.msra.mxu0 0.0
      %3617 = vmatprep.subr.mxu0 0.0
      %3618 = vmatpush2.msra.mxu0 0.0
      %3619 = vmatprep.subr.mxu0 0.0
      %3620 = vmatpush2.msra.mxu0 0.0
      %3621 = vmatprep.subr.mxu0 0.0
      %3622 = vmatpush2.msra.mxu0 0.0
      %3623 = vmatprep.subr.mxu0 0.0
      %3624 = vmatpush2.msra.mxu0 0.0
      %3625 = vmatprep.subr.mxu0 0.0
      %3626 = vmatpush2.msra.mxu0 0.0
      %3627 = vmatprep.subr.mxu0 0.0
      %3628 = vmatpush2.msra.mxu0 0.0
      %3629 = vmatprep.subr.mxu0 0.0
      %3630 = vmatpush2.msra.mxu0 0.0
      %3631 = vmatprep.subr.mxu0 0.0
      %3632 = vmatpush2.msra.mxu0 0.0
      %3633 = vmatprep.subr.mxu0 0.0
      %3634 = vmatpush2.msra.mxu0 0.0
      %3635 = vmatprep.subr.mxu0 0.0
      %3636 = vmatpush2.msra.mxu0 0.0
      %3637 = vmatprep.subr.mxu0 0.0
      %3638 = vmatpush2.msra.mxu0 0.0
      %3639 = vmatprep.subr.mxu0 0.0
      %3640 = vmatpush2.msra.mxu0 0.0
      %3641 = vmatprep.mubr.f32.mxu0 0.0
      %3642 = vmatmul.mubr.f32.gmra.mxu0 %v3496
      %v3643 = vpop.f32.mrf.mxu0
      %v3644 = vadd.f32 0.0, %v3643
      %v3645 = vpop.f32.mrf.mxu0
      %3646 = vmatprep.mubr.f32.mxu0 0.0
      %3647 = vmatmul.mubr.f32.gmra.mxu0 %v3497
      %v3648 = vpop.f32.mrf.mxu0
      %v3649 = vadd.f32 0.0, %v3648
      %v3650 = vpop.f32.mrf.mxu0
      %3651 = vmatprep.mubr.f32.mxu0 0.0
      %3652 = vmatmul.mubr.f32.gmra.mxu0 %v3498
      %v3653 = vpop.f32.mrf.mxu0
      %v3654 = vadd.f32 0.0, %v3653
      %v3655 = vpop.f32.mrf.mxu0
      %3656 = vmatprep.mubr.f32.mxu0 0.0
      %3657 = vmatmul.mubr.f32.gmra.mxu0 %v3499
      %v3658 = vpop.f32.mrf.mxu0
      %v3659 = vadd.f32 0.0, %v3658
      %v3660 = vpop.f32.mrf.mxu0
      %3661 = vmatprep.mubr.f32.mxu0 0.0
      %3662 = vmatmul.mubr.f32.gmra.mxu0 %v3500
      %v3663 = vpop.f32.mrf.mxu0
      %v3664 = vadd.f32 0.0, %v3663
      %v3665 = vpop.f32.mrf.mxu0
      %3666 = vmatprep.mubr.f32.mxu0 0.0
      %3667 = vmatmul.mubr.f32.gmra.mxu0 %v3501
      %v3668 = vpop.f32.mrf.mxu0
      %v3669 = vadd.f32 0.0, %v3668
      %v3670 = vpop.f32.mrf.mxu0
      %3671 = vmatprep.mubr.f32.mxu0 0.0
      %3672 = vmatmul.mubr.f32.gmra.mxu0 %v3502
      %v3673 = vpop.f32.mrf.mxu0
      %v3674 = vadd.f32 0.0, %v3673
      %v3675 = vpop.f32.mrf.mxu0
      %3676 = vmatprep.mubr.f32.mxu0 0.0
      %3677 = vmatmul.mubr.f32.gmra.mxu0 %v3503
      %v3678 = vpop.f32.mrf.mxu0
      %v3679 = vadd.f32 0.0, %v3678
      %v3680 = vpop.f32.mrf.mxu0
      %3681 = vmatprep.mubr.f32.mxu0 0.0
      %3682 = vmatmul.mubr.f32.gmra.mxu0 %v3504
      %v3683 = vpop.f32.mrf.mxu0
      %v3684 = vadd.f32 0.0, %v3683
      %v3685 = vpop.f32.mrf.mxu0
      %3686 = vmatprep.mubr.f32.mxu0 0.0
      %3687 = vmatmul.mubr.f32.gmra.mxu0 %v3505
      %v3688 = vpop.f32.mrf.mxu0
      %v3689 = vadd.f32 0.0, %v3688
      %v3690 = vpop.f32.mrf.mxu0
      %3691 = vmatprep.mubr.f32.mxu0 0.0
      %3692 = vmatmul.mubr.f32.gmra.mxu0 %v3506
      %v3693 = vpop.f32.mrf.mxu0
      %v3694 = vadd.f32 0.0, %v3693
      %v3695 = vpop.f32.mrf.mxu0
      %3696 = vmatprep.mubr.f32.mxu0 0.0
      %3697 = vmatmul.mubr.f32.gmra.mxu0 %v3507
      %v3698 = vpop.f32.mrf.mxu0
      %v3699 = vadd.f32 0.0, %v3698
      %v3700 = vpop.f32.mrf.mxu0
      %3701 = vmatprep.mubr.f32.mxu0 0.0
      %3702 = vmatmul.mubr.f32.gmra.mxu0 %v3508
      %v3703 = vpop.f32.mrf.mxu0
      %v3704 = vadd.f32 0.0, %v3703
      %v3705 = vpop.f32.mrf.mxu0
      %3706 = vmatprep.mubr.f32.mxu0 0.0
      %3707 = vmatmul.mubr.f32.gmra.mxu0 %v3509
      %v3708 = vpop.f32.mrf.mxu0
      %v3709 = vadd.f32 0.0, %v3708
      %v3710 = vpop.f32.mrf.mxu0
      %3711 = vmatprep.mubr.f32.mxu0 0.0
      %3712 = vmatmul.mubr.f32.gmra.mxu0 %v3510
      %v3713 = vpop.f32.mrf.mxu0
      %v3714 = vadd.f32 0.0, %v3713
      %v3715 = vpop.f32.mrf.mxu0
      %3716 = vmatprep.mubr.f32.mxu0 0.0
      %3717 = vmatmul.mubr.f32.gmra.mxu0 %v3511
      %v3718 = vpop.f32.mrf.mxu0
      %v3719 = vadd.f32 0.0, %v3718
      %v3720 = vpop.f32.mrf.mxu0
      %3721 = vmatprep.mubr.f32.mxu0 0.0
      %3722 = vmatmul.mubr.f32.gmra.mxu0 %v3512
      %v3723 = vpop.f32.mrf.mxu0
      %v3724 = vadd.f32 0.0, %v3723
      %v3725 = vpop.f32.mrf.mxu0
      %3726 = vmatprep.mubr.f32.mxu0 0.0
      %3727 = vmatmul.mubr.f32.gmra.mxu0 %v3513
      %v3728 = vpop.f32.mrf.mxu0
      %v3729 = vadd.f32 0.0, %v3728
      %v3730 = vpop.f32.mrf.mxu0
      %3731 = vmatprep.mubr.f32.mxu0 0.0
      %3732 = vmatmul.mubr.f32.gmra.mxu0 %v3514
      %v3733 = vpop.f32.mrf.mxu0
      %v3734 = vadd.f32 0.0, %v3733
      %v3735 = vpop.f32.mrf.mxu0
      %3736 = vmatprep.mubr.f32.mxu0 0.0
      %3737 = vmatmul.mubr.f32.gmra.mxu0 %v3515
      %v3738 = vpop.f32.mrf.mxu0
      %v3739 = vadd.f32 0.0, %v3738
      %v3740 = vpop.f32.mrf.mxu0
      %3741 = vmatprep.mubr.f32.mxu0 0.0
      %3742 = vmatmul.mubr.f32.gmra.mxu0 %v3516
      %v3743 = vpop.f32.mrf.mxu0
      %v3744 = vadd.f32 0.0, %v3743
      %v3745 = vpop.f32.mrf.mxu0
      %3746 = vmatprep.mubr.f32.mxu0 0.0
      %3747 = vmatmul.mubr.f32.gmra.mxu0 %v3517
      %v3748 = vpop.f32.mrf.mxu0
      %v3749 = vadd.f32 0.0, %v3748
      %v3750 = vpop.f32.mrf.mxu0
      %3751 = vmatprep.mubr.f32.mxu0 0.0
      %3752 = vmatmul.mubr.f32.gmra.mxu0 %v3518
      %v3753 = vpop.f32.mrf.mxu0
      %v3754 = vadd.f32 0.0, %v3753
      %v3755 = vpop.f32.mrf.mxu0
      %3756 = vmatprep.mubr.f32.mxu0 0.0
      %3757 = vmatmul.mubr.f32.gmra.mxu0 %v3519
      %v3758 = vpop.f32.mrf.mxu0
      %v3759 = vadd.f32 0.0, %v3758
      %v3760 = vpop.f32.mrf.mxu0
      %3761 = vmatprep.mubr.f32.mxu0 0.0
      %3762 = vmatmul.mubr.f32.gmra.mxu0 %v3520
      %v3763 = vpop.f32.mrf.mxu0
      %v3764 = vadd.f32 0.0, %v3763
      %v3765 = vpop.f32.mrf.mxu0
      %3766 = vmatprep.mubr.f32.mxu0 0.0
      %3767 = vmatmul.mubr.f32.gmra.mxu0 %v3521
      %v3768 = vpop.f32.mrf.mxu0
      %v3769 = vadd.f32 0.0, %v3768
      %v3770 = vpop.f32.mrf.mxu0
      %3771 = vmatprep.mubr.f32.mxu0 0.0
      %3772 = vmatmul.mubr.f32.gmra.mxu0 %v3522
      %v3773 = vpop.f32.mrf.mxu0
      %v3774 = vadd.f32 0.0, %v3773
      %v3775 = vpop.f32.mrf.mxu0
      %3776 = vmatprep.mubr.f32.mxu0 0.0
      %3777 = vmatmul.mubr.f32.gmra.mxu0 %v3523
      %v3778 = vpop.f32.mrf.mxu0
      %v3779 = vadd.f32 0.0, %v3778
      %v3780 = vpop.f32.mrf.mxu0
      %3781 = vmatprep.mubr.f32.mxu0 0.0
      %3782 = vmatmul.mubr.f32.gmra.mxu0 %v3524
      %v3783 = vpop.f32.mrf.mxu0
      %v3784 = vadd.f32 0.0, %v3783
      %v3785 = vpop.f32.mrf.mxu0
      %3786 = vmatprep.mubr.f32.mxu0 0.0
      %3787 = vmatmul.mubr.f32.gmra.mxu0 %v3525
      %v3788 = vpop.f32.mrf.mxu0
      %v3789 = vadd.f32 0.0, %v3788
      %v3790 = vpop.f32.mrf.mxu0
      %3791 = vmatprep.mubr.f32.mxu0 0.0
      %3792 = vmatmul.mubr.f32.gmra.mxu0 %v3526
      %v3793 = vpop.f32.mrf.mxu0
      %v3794 = vadd.f32 0.0, %v3793
      %v3795 = vpop.f32.mrf.mxu0
      %3796 = vmatprep.mubr.f32.mxu0 0.0
      %3797 = vmatmul.mubr.f32.gmra.mxu0 %v3527
      %v3798 = vpop.f32.mrf.mxu0
      %v3799 = vadd.f32 0.0, %v3798
      %v3800 = vpop.f32.mrf.mxu0
      %3801 = vdwg.mxu0
      %v3802 = vadd.f32 %v3528, %v3644
      %v3803 = vadd.f32 %v3529, %v3649
      %v3804 = vadd.f32 %v3530, %v3654
      %v3805 = vadd.f32 %v3531, %v3659
      %v3806 = vadd.f32 %v3532, %v3664
      %v3807 = vadd.f32 %v3533, %v3669
      %v3808 = vadd.f32 %v3534, %v3674
      %v3809 = vadd.f32 %v3535, %v3679
      %v3810 = vadd.f32 %v3536, %v3684
      %v3811 = vadd.f32 %v3537, %v3689
      %v3812 = vadd.f32 %v3538, %v3694
      %v3813 = vadd.f32 %v3539, %v3699
      %v3814 = vadd.f32 %v3540, %v3704
      %v3815 = vadd.f32 %v3541, %v3709
      %v3816 = vadd.f32 %v3542, %v3714
      %v3817 = vadd.f32 %v3543, %v3719
      %v3818 = vadd.f32 %v3544, %v3724
      %v3819 = vadd.f32 %v3545, %v3729
      %v3820 = vadd.f32 %v3546, %v3734
      %v3821 = vadd.f32 %v3547, %v3739
      %v3822 = vadd.f32 %v3548, %v3744
      %v3823 = vadd.f32 %v3549, %v3749
      %v3824 = vadd.f32 %v3550, %v3754
      %v3825 = vadd.f32 %v3551, %v3759
      %v3826 = vadd.f32 %v3552, %v3764
      %v3827 = vadd.f32 %v3553, %v3769
      %v3828 = vadd.f32 %v3554, %v3774
      %v3829 = vadd.f32 %v3555, %v3779
      %v3830 = vadd.f32 %v3556, %v3784
      %v3831 = vadd.f32 %v3557, %v3789
      %v3832 = vadd.f32 %v3558, %v3794
      %v3833 = vadd.f32 %v3559, %v3799
      %3834 = vst [vmem:[#allocation3] sm:$0xff] %v3802
      %3835 = vst [vmem:[#allocation3 + $0x8] sm:$0xff] %v3803
      %3836 = vst [vmem:[#allocation3 + $0x10] sm:$0xff] %v3804
      %3837 = vst [vmem:[#allocation3 + $0x18] sm:$0xff] %v3805
      %3838 = vst [vmem:[#allocation3 + $0x20] sm:$0xff] %v3806
      %3839 = vst [vmem:[#allocation3 + $0x28] sm:$0xff] %v3807
      %3840 = vst [vmem:[#allocation3 + $0x30] sm:$0xff] %v3808
      %3841 = vst [vmem:[#allocation3 + $0x38] sm:$0xff] %v3809
      %3842 = vst [vmem:[#allocation3 + $0x40] sm:$0xff] %v3810
      %3843 = vst [vmem:[#allocation3 + $0x48] sm:$0xff] %v3811
      %3844 = vst [vmem:[#allocation3 + $0x50] sm:$0xff] %v3812
      %3845 = vst [vmem:[#allocation3 + $0x58] sm:$0xff] %v3813
      %3846 = vst [vmem:[#allocation3 + $0x60] sm:$0xff] %v3814
      %3847 = vst [vmem:[#allocation3 + $0x68] sm:$0xff] %v3815
      %3848 = vst [vmem:[#allocation3 + $0x70] sm:$0xff] %v3816
      %3849 = vst [vmem:[#allocation3 + $0x78] sm:$0xff] %v3817
      %3850 = vst [vmem:[#allocation3 + $0x80] sm:$0xff] %v3818
      %3851 = vst [vmem:[#allocation3 + $0x88] sm:$0xff] %v3819
      %3852 = vst [vmem:[#allocation3 + $0x90] sm:$0xff] %v3820
      %3853 = vst [vmem:[#allocation3 + $0x98] sm:$0xff] %v3821
      %3854 = vst [vmem:[#allocation3 + $0xa0] sm:$0xff] %v3822
      %3855 = vst [vmem:[#allocation3 + $0xa8] sm:$0xff] %v3823
      %3856 = vst [vmem:[#allocation3 + $0xb0] sm:$0xff] %v3824
      %3857 = vst [vmem:[#allocation3 + $0xb8] sm:$0xff] %v3825
      %3858 = vst [vmem:[#allocation3 + $0xc0] sm:$0xff] %v3826
      %3859 = vst [vmem:[#allocation3 + $0xc8] sm:$0xff] %v3827
      %3860 = vst [vmem:[#allocation3 + $0xd0] sm:$0xff] %v3828
      %3861 = vst [vmem:[#allocation3 + $0xd8] sm:$0xff] %v3829
      %3862 = vst [vmem:[#allocation3 + $0xe0] sm:$0xff] %v3830
      %3863 = vst [vmem:[#allocation3 + $0xe8] sm:$0xff] %v3831
      %3864 = vst [vmem:[#allocation3 + $0xf0] sm:$0xff] %v3832
      %3865 = vst [vmem:[#allocation3 + $0xf8] sm:$0xff] %v3833
      %v3866 = vld [vmem:[#allocation3] sm:$0xff]
      %v3867 = vld [vmem:[#allocation3 + $0x8] sm:$0xff]
      %v3868 = vld [vmem:[#allocation3 + $0x10] sm:$0xff]
      %v3869 = vld [vmem:[#allocation3 + $0x18] sm:$0xff]
      %v3870 = vld [vmem:[#allocation3 + $0x20] sm:$0xff]
      %v3871 = vld [vmem:[#allocation3 + $0x28] sm:$0xff]
      %v3872 = vld [vmem:[#allocation3 + $0x30] sm:$0xff]
      %v3873 = vld [vmem:[#allocation3 + $0x38] sm:$0xff]
      %v3874 = vld [vmem:[#allocation3 + $0x40] sm:$0xff]
      %v3875 = vld [vmem:[#allocation3 + $0x48] sm:$0xff]
      %v3876 = vld [vmem:[#allocation3 + $0x50] sm:$0xff]
      %v3877 = vld [vmem:[#allocation3 + $0x58] sm:$0xff]
      %v3878 = vld [vmem:[#allocation3 + $0x60] sm:$0xff]
      %v3879 = vld [vmem:[#allocation3 + $0x68] sm:$0xff]
      %v3880 = vld [vmem:[#allocation3 + $0x70] sm:$0xff]
      %v3881 = vld [vmem:[#allocation3 + $0x78] sm:$0xff]
      %v3882 = vld [vmem:[#allocation3 + $0x80] sm:$0xff]
      %v3883 = vld [vmem:[#allocation3 + $0x88] sm:$0xff]
      %v3884 = vld [vmem:[#allocation3 + $0x90] sm:$0xff]
      %v3885 = vld [vmem:[#allocation3 + $0x98] sm:$0xff]
      %v3886 = vld [vmem:[#allocation3 + $0xa0] sm:$0xff]
      %v3887 = vld [vmem:[#allocation3 + $0xa8] sm:$0xff]
      %v3888 = vld [vmem:[#allocation3 + $0xb0] sm:$0xff]
      %v3889 = vld [vmem:[#allocation3 + $0xb8] sm:$0xff]
      %v3890 = vld [vmem:[#allocation3 + $0xc0] sm:$0xff]
      %v3891 = vld [vmem:[#allocation3 + $0xc8] sm:$0xff]
      %v3892 = vld [vmem:[#allocation3 + $0xd0] sm:$0xff]
      %v3893 = vld [vmem:[#allocation3 + $0xd8] sm:$0xff]
      %v3894 = vld [vmem:[#allocation3 + $0xe0] sm:$0xff]
      %v3895 = vld [vmem:[#allocation3 + $0xe8] sm:$0xff]
      %v3896 = vld [vmem:[#allocation3 + $0xf0] sm:$0xff]
      %v3897 = vld [vmem:[#allocation3 + $0xf8] sm:$0xff]
      %3898 = vst [vmem:[%s258] sm:$0xff] %v3866
      %3899 = vst [vmem:[%s258 + $0x8] sm:$0xff] %v3867
      %3900 = vst [vmem:[%s258 + $0x10] sm:$0xff] %v3868
      %3901 = vst [vmem:[%s258 + $0x18] sm:$0xff] %v3869
      %3902 = vst [vmem:[%s258 + $0x20] sm:$0xff] %v3870
      %3903 = vst [vmem:[%s258 + $0x28] sm:$0xff] %v3871
      %3904 = vst [vmem:[%s258 + $0x30] sm:$0xff] %v3872
      %3905 = vst [vmem:[%s258 + $0x38] sm:$0xff] %v3873
      %3906 = vst [vmem:[%s258 + $0x40] sm:$0xff] %v3874
      %3907 = vst [vmem:[%s258 + $0x48] sm:$0xff] %v3875
      %3908 = vst [vmem:[%s258 + $0x50] sm:$0xff] %v3876
      %3909 = vst [vmem:[%s258 + $0x58] sm:$0xff] %v3877
      %3910 = vst [vmem:[%s258 + $0x60] sm:$0xff] %v3878
      %3911 = vst [vmem:[%s258 + $0x68] sm:$0xff] %v3879
      %3912 = vst [vmem:[%s258 + $0x70] sm:$0xff] %v3880
      %3913 = vst [vmem:[%s258 + $0x78] sm:$0xff] %v3881
      %3914 = vst [vmem:[%s258 + $0x80] sm:$0xff] %v3882
      %3915 = vst [vmem:[%s258 + $0x88] sm:$0xff] %v3883
      %3916 = vst [vmem:[%s258 + $0x90] sm:$0xff] %v3884
      %3917 = vst [vmem:[%s258 + $0x98] sm:$0xff] %v3885
      %3918 = vst [vmem:[%s258 + $0xa0] sm:$0xff] %v3886
      %3919 = vst [vmem:[%s258 + $0xa8] sm:$0xff] %v3887
      %3920 = vst [vmem:[%s258 + $0xb0] sm:$0xff] %v3888
      %3921 = vst [vmem:[%s258 + $0xb8] sm:$0xff] %v3889
      %3922 = vst [vmem:[%s258 + $0xc0] sm:$0xff] %v3890
      %3923 = vst [vmem:[%s258 + $0xc8] sm:$0xff] %v3891
      %3924 = vst [vmem:[%s258 + $0xd0] sm:$0xff] %v3892
      %3925 = vst [vmem:[%s258 + $0xd8] sm:$0xff] %v3893
      %3926 = vst [vmem:[%s258 + $0xe0] sm:$0xff] %v3894
      %3927 = vst [vmem:[%s258 + $0xe8] sm:$0xff] %v3895
      %3928 = vst [vmem:[%s258 + $0xf0] sm:$0xff] %v3896
      %3929 = vst [vmem:[%s258 + $0xf8] sm:$0xff] %v3897
      %v3930 = vadd.f32 %v3866, %v3867
      %v3931 = vadd.f32 %v3930, %v3868
      %v3932 = vadd.f32 %v3931, %v3869
      %v3933 = vadd.f32 %v3932, %v3870
      %v3934 = vadd.f32 %v3933, %v3871
      %v3935 = vadd.f32 %v3934, %v3872
      %v3936 = vadd.f32 %v3935, %v3873
      %v3937 = vadd.f32 %v3936, %v3874
      %v3938 = vadd.f32 %v3937, %v3875
      %v3939 = vadd.f32 %v3938, %v3876
      %v3940 = vadd.f32 %v3939, %v3877
      %v3941 = vadd.f32 %v3940, %v3878
      %v3942 = vadd.f32 %v3941, %v3879
      %v3943 = vadd.f32 %v3942, %v3880
      %v3944 = vadd.f32 %v3943, %v3881
      %v3945 = vadd.f32 %v3944, %v3882
      %v3946 = vadd.f32 %v3945, %v3883
      %v3947 = vadd.f32 %v3946, %v3884
      %v3948 = vadd.f32 %v3947, %v3885
      %v3949 = vadd.f32 %v3948, %v3886
      %v3950 = vadd.f32 %v3949, %v3887
      %v3951 = vadd.f32 %v3950, %v3888
      %v3952 = vadd.f32 %v3951, %v3889
      %v3953 = vadd.f32 %v3952, %v3890
      %v3954 = vadd.f32 %v3953, %v3891
      %v3955 = vadd.f32 %v3954, %v3892
      %v3956 = vadd.f32 %v3955, %v3893
      %v3957 = vadd.f32 %v3956, %v3894
      %v3958 = vadd.f32 %v3957, %v3895
      %v3959 = vadd.f32 %v3958, %v3896
      %v3960 = vadd.f32 %v3959, %v3897
      %v3961 = vrot.slane %v3960, 4
      %v3962 = vadd.f32 %v3960, %v3961
      %v3963 = vrot.slane %v3962, 2
      %v3964 = vadd.f32 %v3962, %v3963
      %v3965 = vrot.slane %v3964, 1
      %v3966 = vadd.f32 %v3964, %v3965
      %v3967 = vmul.f32 %v3866, %v3866
      %v3968 = vmul.f32 %v3867, %v3867
      %v3969 = vmul.f32 %v3868, %v3868
      %v3970 = vmul.f32 %v3869, %v3869
      %v3971 = vmul.f32 %v3870, %v3870
      %v3972 = vmul.f32 %v3871, %v3871
      %v3973 = vmul.f32 %v3872, %v3872
      %v3974 = vmul.f32 %v3873, %v3873
      %v3975 = vmul.f32 %v3874, %v3874
      %v3976 = vmul.f32 %v3875, %v3875
      %v3977 = vmul.f32 %v3876, %v3876
      %v3978 = vmul.f32 %v3877, %v3877
      %v3979 = vmul.f32 %v3878, %v3878
      %v3980 = vmul.f32 %v3879, %v3879
      %v3981 = vmul.f32 %v3880, %v3880
      %v3982 = vmul.f32 %v3881, %v3881
      %v3983 = vmul.f32 %v3882, %v3882
      %v3984 = vmul.f32 %v3883, %v3883
      %v3985 = vmul.f32 %v3884, %v3884
      %v3986 = vmul.f32 %v3885, %v3885
      %v3987 = vmul.f32 %v3886, %v3886
      %v3988 = vmul.f32 %v3887, %v3887
      %v3989 = vmul.f32 %v3888, %v3888
      %v3990 = vmul.f32 %v3889, %v3889
      %v3991 = vmul.f32 %v3890, %v3890
      %v3992 = vmul.f32 %v3891, %v3891
      %v3993 = vmul.f32 %v3892, %v3892
      %v3994 = vmul.f32 %v3893, %v3893
      %v3995 = vmul.f32 %v3894, %v3894
      %v3996 = vmul.f32 %v3895, %v3895
      %v3997 = vmul.f32 %v3896, %v3896
      %v3998 = vmul.f32 %v3897, %v3897
      %v3999 = vadd.f32 %v3967, %v3968
      %v4000 = vadd.f32 %v3999, %v3969
      %v4001 = vadd.f32 %v4000, %v3970
      %v4002 = vadd.f32 %v4001, %v3971
      %v4003 = vadd.f32 %v4002, %v3972
      %v4004 = vadd.f32 %v4003, %v3973
      %v4005 = vadd.f32 %v4004, %v3974
      %v4006 = vadd.f32 %v4005, %v3975
      %v4007 = vadd.f32 %v4006, %v3976
      %v4008 = vadd.f32 %v4007, %v3977
      %v4009 = vadd.f32 %v4008, %v3978
      %v4010 = vadd.f32 %v4009, %v3979
      %v4011 = vadd.f32 %v4010, %v3980
      %v4012 = vadd.f32 %v4011, %v3981
      %v4013 = vadd.f32 %v4012, %v3982
      %v4014 = vadd.f32 %v4013, %v3983
      %v4015 = vadd.f32 %v4014, %v3984
      %v4016 = vadd.f32 %v4015, %v3985
      %v4017 = vadd.f32 %v4016, %v3986
      %v4018 = vadd.f32 %v4017, %v3987
      %v4019 = vadd.f32 %v4018, %v3988
      %v4020 = vadd.f32 %v4019, %v3989
      %v4021 = vadd.f32 %v4020, %v3990
      %v4022 = vadd.f32 %v4021, %v3991
      %v4023 = vadd.f32 %v4022, %v3992
      %v4024 = vadd.f32 %v4023, %v3993
      %v4025 = vadd.f32 %v4024, %v3994
      %v4026 = vadd.f32 %v4025, %v3995
      %v4027 = vadd.f32 %v4026, %v3996
      %v4028 = vadd.f32 %v4027, %v3997
      %v4029 = vadd.f32 %v4028, %v3998
      %v4030 = vrot.slane %v4029, 4
      %v4031 = vadd.f32 %v4029, %v4030
      %v4032 = vrot.slane %v4031, 2
      %v4033 = vadd.f32 %v4031, %v4032
      %v4034 = vrot.slane %v4033, 1
      %v4035 = vadd.f32 %v4033, %v4034
      %vm4036 = vcmask 1040384
      %v4037 = vsel %vm4036, %v3966, %v4035
      %4038 = vst [vmem:[%s262] sm:$0x3] %v4037
      %p4039 = scmp.lt.s32.totalorder %s18, 3
      %s4040 = scalar_select %p4039, %s18, 3
      %s4041 = smul.addr %s4040, 32
      %s4042 = smul.addr %s4041, 8
      %s4043 = scalar_lea.vmem %s5, %s4042
      %p4044 = scmp.lt.s32.totalorder %s18, 3
      %s4045 = scalar_select %p4044, %s18, 3
      %s4046 = smul.addr %s4045, 2
      %s4047 = scalar_lea.vmem %s6, %s4046
      // Predicated region
      $region41: #{bottleneck_forward.5} parent=39 // pred_check
        %p4048 = pneg %p146
      $region42: #{bottleneck_forward.5} parent=39 // pred_check_branch
        %4050 = sbr.rel (%p4048) target = $region44
      $region43: #{bottleneck_forward.5} parent=39 // pred_region
        _
      $region44: #{bottleneck_forward.5} parent=39 // pred_fallthru
        _
      // Predicated region
      $region45: #{bottleneck_forward.5} parent=39 // pred_check
        %p4051 = pneg %p172
      $region46: #{bottleneck_forward.5} parent=39 // pred_check_branch
        %4053 = sbr.rel (%p4051) target = $region48
      $region47: #{bottleneck_forward.5} parent=39 // pred_region
        _
      $region48: #{bottleneck_forward.5} parent=39 // pred_fallthru
        _
    $region40: #{bottleneck_forward.5} parent=5 // pred_fallthru
      _
    %p4054 = scmp.le.s32.totalorder 2, %s13
    // Predicated region
    $region49: #{bottleneck_forward.5} parent=5 // pred_check
      %p4055 = pneg %p4054
    $region50: #{bottleneck_forward.5} parent=5 // pred_check_branch
      %4057 = sbr.rel (%p4055) target = $region52
    $region51: #{bottleneck_forward.5} parent=5 // pred_region
      %s4058 = ssub.s32 %s13, 2
      // Predicated region
      $region53: #{bottleneck_forward.5} parent=51 // pred_check
        %p4059 = pneg %p152
      $region54: #{bottleneck_forward.5} parent=51 // pred_check_branch
        %4061 = sbr.rel (%p4059) target = $region56
      $region55: #{bottleneck_forward.5} parent=51 // pred_region
        %p4062 = scmp.lt.s32.totalorder %s19, 3
        %s4063 = scalar_select %p4062, %s19, 3
        %s4064 = smul.addr %s4063, 32
        %s4065 = smul.addr %s4064, 8
        %s4066 = scalar_lea.vmem %s5, %s4065
      $region56: #{bottleneck_forward.5} parent=51 // pred_fallthru
        _
      // Predicated region
      $region57: #{bottleneck_forward.5} parent=51 // pred_check
        %p4067 = pneg %p178
      $region58: #{bottleneck_forward.5} parent=51 // pred_check_branch
        %4069 = sbr.rel (%p4067) target = $region60
      $region59: #{bottleneck_forward.5} parent=51 // pred_region
        %p4070 = scmp.lt.s32.totalorder %s19, 3
        %s4071 = scalar_select %p4070, %s19, 3
        %s4072 = smul.addr %s4071, 2
        %s4073 = scalar_lea.vmem %s6, %s4072
      $region60: #{bottleneck_forward.5} parent=51 // pred_fallthru
        _
    $region52: #{bottleneck_forward.5} parent=5 // pred_fallthru
      _
  $region6: #{bottleneck_forward.5} parent=0 // loop_footer
    %s17 = sadd.s32 1, %s13
  $region7: #{bottleneck_forward.5} parent=0 // loop_footer_branch
    %12 = sbr.rel target = $region3
  $region8: #{bottleneck_forward.5} parent=0 // loop_exit
    _

</llo_original>
